<compile_context>
chip_gen: v7x
topology: tpu7x:2x2x1
jax: 0.10.0
libtpu: 0.0.40
codegen_flags: <defaults>
</compile_context>

<pallas_src>
import jax
import jax.numpy as jnp
from jax.experimental import pallas as pl
from jax.experimental.pallas import tpu as pltpu

MIN_STD = 0.1
LN_EPS = 1e-5


# ----------------------------- shared math helpers ---------------------------
def _elu(x):
    # exp on a clamped arg avoids the discarded-inf on the positive branch.
    return jnp.where(x > 0.0, x, jnp.exp(jnp.minimum(x, 0.0)) - 1.0)


def _sigmoid(x):
    return 1.0 / (1.0 + jnp.exp(-x))


def _softplus(x):
    # Stable softplus using only exp/log (no log1p/logaddexp dependence).
    return jnp.maximum(x, 0.0) + jnp.log(1.0 + jnp.exp(-jnp.abs(x)))


def _layer_norm(x, g, b):
    mu = jnp.mean(x, axis=-1, keepdims=True)
    xc = x - mu
    var = jnp.mean(xc * xc, axis=-1, keepdims=True)
    return xc * jax.lax.rsqrt(var + LN_EPS) * g + b


# ----------------------------------- kernel ----------------------------------
def _make_kernel(T, B, A, E, S, D, H, P):
    P_raw = 6 * S + D

    def kernel(
        # per-step inputs (whole (T,B,*) arrays, resident in VMEM)
        act_ref, obs_ref, eps_p_ref, eps_q_ref,
        # initial recurrent state
        stoch0_ref, deter0_ref,
        # fused transition params
        w_ri_a_ref, w_ri_s_ref, b_ri_ref,
        w_ih_ref, w_hh_ref, b_ih_ref, b_hh_ref,
        g_deter_ref, bt_deter_ref,
        # fused head params
        w_pq1_ref, w_q1e_ref, b_p1_ref, b_q1_ref,
        g_p_ref, bt_p_ref, g_q_ref, bt_q_ref,
        w_p2_ref, b_p2_ref, w_q2_ref, b_q2_ref,
        g_st_ref, bt_st_ref, g_sr_ref, bt_sr_ref,
        # packed output (T, B, P)
        out_ref,
    ):
        dot = lambda x, w: jnp.dot(x, w, preferred_element_type=jnp.float32)

        # Hoist all weights once (reused by every unrolled step).
        w_ri_a = w_ri_a_ref[...]; w_ri_s = w_ri_s_ref[...]; b_ri = b_ri_ref[...]
        w_ih = w_ih_ref[...]; w_hh = w_hh_ref[...]
        b_ih = b_ih_ref[...]; b_hh = b_hh_ref[...]
        g_deter = g_deter_ref[...]; bt_deter = bt_deter_ref[...]
        w_pq1 = w_pq1_ref[...]; w_q1e = w_q1e_ref[...]
        b_p1 = b_p1_ref[...]; b_q1 = b_q1_ref[...]
        g_p = g_p_ref[...]; bt_p = bt_p_ref[...]
        g_q = g_q_ref[...]; bt_q = bt_q_ref[...]
        w_p2 = w_p2_ref[...]; b_p2 = b_p2_ref[...]
        w_q2 = w_q2_ref[...]; b_q2 = b_q2_ref[...]
        g_st = g_st_ref[...]; bt_st = bt_st_ref[...]
        g_sr = g_sr_ref[...]; bt_sr = bt_sr_ref[...]

        # Lane mask selecting the "mean" half of a fused [mean|std] (B, 2S) tile.
        is_mean = jax.lax.broadcasted_iota(jnp.int32, (B, 2 * S), 1) < S

        s = stoch0_ref[...]   # (B, S)   carried posterior stoch
        h = deter0_ref[...]   # (B, D)   carried deterministic state

        for t in range(T):    # static unroll (T small): no grid-step overhead
            a = act_ref[t]        # (B, A)
            e = obs_ref[t]        # (B, E)
            eps_p = eps_p_ref[t]  # (B, S)
            eps_q = eps_q_ref[t]  # (B, S)

            # --- transition: rnn input model (split-K, no per-step concat) ---
            ri = _elu(dot(a, w_ri_a) + dot(s, w_ri_s) + b_ri)        # (B, H)

            # --- GRU cell: 2 fused matmuls, PyTorch gate order (r, z, n) ---
            gi = dot(ri, w_ih) + b_ih                                # (B, 3D)
            gh = dot(h, w_hh) + b_hh                                 # (B, 3D)
            r = _sigmoid(gi[:, :D] + gh[:, :D])
            z = _sigmoid(gi[:, D:2 * D] + gh[:, D:2 * D])
            n = jnp.tanh(gi[:, 2 * D:] + r * gh[:, 2 * D:])
            deter = (1.0 - z) * n + z * h
            deter = _layer_norm(deter, g_deter, bt_deter)            # (B, D)

            # --- first head linear: deter multiplied once by [w_p1 | w_q1d] ---
            pq = dot(deter, w_pq1)                                   # (B, 2H)
            p = _layer_norm(_elu(pq[:, :H] + b_p1), g_p, bt_p)
            q = _layer_norm(_elu(pq[:, H:] + dot(e, w_q1e) + b_q1), g_q, bt_q)

            # --- prior: fused [mean | std] head ---
            pm = dot(p, w_p2) + b_p2                                 # (B, 2S)
            pm_sp = _softplus(pm) + MIN_STD
            p_ms = jnp.where(is_mean, pm, pm_sp)                     # [mean|std]
            p_stoch = _layer_norm(pm[:, :S] + pm_sp[:, S:] * eps_p, g_st, bt_st)

            # --- posterior: fused [mean | std] head ---
            qm = dot(q, w_q2) + b_q2                                 # (B, 2S)
            qm_sp = _softplus(qm) + MIN_STD
            q_ms = jnp.where(is_mean, qm, qm_sp)
            q_stoch = _layer_norm(qm[:, :S] + qm_sp[:, S:] * eps_q, g_sr, bt_sr)

            # single lane-dense packed store (5 contiguous pieces)
            pieces = [p_ms, p_stoch, q_ms, q_stoch, deter]
            if P > P_raw:
                pieces.append(jnp.zeros((B, P - P_raw), jnp.float32))
            out_ref[t] = jnp.concatenate(pieces, axis=-1)

            # carry: prev_state = posterior_state
            s, h = q_stoch, deter

    return kernel


# ---------------------------------- wrapper -----------------------------------
def rssm_rollout(steps, obs_embed, action, prev_stoch, prev_deter,
                 eps_prior, eps_post, params):
    """Fused T-step RSSM rollout. Returns (prior, post) dicts of (T,B,*) arrays."""
    T, B, E = obs_embed.shape
    assert steps == T
    A = action.shape[-1]
    S = prev_stoch.shape[-1]
    D = prev_deter.shape[-1]
    H = params["w_ri_a"].shape[-1]
    P_raw = 6 * S + D
    P = ((P_raw + 127) // 128) * 128     # lane-dense packed output width

    f32 = jnp.float32

    def bc(x):
        # Pre-broadcast (1, dim) params to (B, dim) so no broadcast_in_dim is
        # re-emitted per unrolled step inside the kernel.
        return jnp.broadcast_to(x.astype(f32), (B, x.shape[-1]))

    zeros_like_b = lambda x: jnp.zeros_like(x)

    fused = dict(
        w_ri_a=params["w_ri_a"], w_ri_s=params["w_ri_s"], b_ri=bc(params["b_ri"]),
        # GRU: N-fused gate weights [r|z|n]; input/hidden biases kept separate
        # (r/z biases are already combined -> put them on the ih side).
        w_ih=jnp.concatenate([params["w_ih_r"], params["w_ih_z"], params["w_ih_n"]],
                             axis=1),
        w_hh=jnp.concatenate([params["w_hh_r"], params["w_hh_z"], params["w_hh_n"]],
                             axis=1),
        b_ih=bc(jnp.concatenate([params["b_r"], params["b_z"], params["b_in"]],
                                axis=-1)),
        b_hh=bc(jnp.concatenate([zeros_like_b(params["b_r"]),
                                 zeros_like_b(params["b_z"]),
                                 params["b_hn"]], axis=-1)),
        g_deter=bc(params["g_deter"]), bt_deter=bc(params["bt_deter"]),
        # deter's two consumers fused: [prior trunk | posterior trunk]
        w_pq1=jnp.concatenate([params["w_p1"], params["w_q1d"]], axis=1),
        w_q1e=params["w_q1e"],
        b_p1=bc(params["b_p1"]), b_q1=bc(params["b_q1"]),
        g_p=bc(params["g_p"]), bt_p=bc(params["bt_p"]),
        g_q=bc(params["g_q"]), bt_q=bc(params["bt_q"]),
        # mean/std heads fused along N
        w_p2=jnp.concatenate([params["w_p2m"], params["w_p2s"]], axis=1),
        b_p2=bc(jnp.concatenate([params["b_p2m"], params["b_p2s"]], axis=-1)),
        w_q2=jnp.concatenate([params["w_q2m"], params["w_q2s"]], axis=1),
        b_q2=bc(jnp.concatenate([params["b_q2m"], params["b_q2s"]], axis=-1)),
        g_st=bc(params["g_st"]), bt_st=bc(params["bt_st"]),
        g_sr=bc(params["g_sr"]), bt_sr=bc(params["bt_sr"]),
    )
    param_order = ("w_ri_a", "w_ri_s", "b_ri", "w_ih", "w_hh", "b_ih", "b_hh",
                   "g_deter", "bt_deter", "w_pq1", "w_q1e", "b_p1", "b_q1",
                   "g_p", "bt_p", "g_q", "bt_q",
                   "w_p2", "b_p2", "w_q2", "b_q2",
                   "g_st", "bt_st", "g_sr", "bt_sr")
    param_list = [fused[k].astype(f32) for k in param_order]

    operands = [action.astype(f32), obs_embed.astype(f32),
                eps_prior.astype(f32), eps_post.astype(f32),
                prev_stoch.astype(f32), prev_deter.astype(f32)] + param_list

    def full_spec(x):
        nd = x.ndim
        def idx(i):
            return (0,) * nd
        return pl.BlockSpec(x.shape, idx)

    in_specs = [full_spec(x) for x in operands]

    kernel = _make_kernel(T, B, A, E, S, D, H, P)

    packed = pl.pallas_call(
        kernel,
        out_shape=jax.ShapeDtypeStruct((T, B, P), jnp.float32),
        grid=(1,),                      # single invocation; time loop is in-kernel
        in_specs=in_specs,
        out_specs=pl.BlockSpec((T, B, P), lambda i: (0, 0, 0)),
        compiler_params=pltpu.CompilerParams(
            dimension_semantics=("arbitrary",)),
    )(*operands)

    # packed layout: [p_mean, p_std | p_stoch | q_mean, q_std | q_stoch | deter]
    deter = packed[..., 6 * S:6 * S + D]
    prior = dict(mean=packed[..., 0:S], std=packed[..., S:2 * S],
                 stoch=packed[..., 2 * S:3 * S], deter=deter)
    post = dict(mean=packed[..., 3 * S:4 * S], std=packed[..., 4 * S:5 * S],
                stoch=packed[..., 5 * S:6 * S], deter=deter)
    return prior, post


# --------------------------------- parameters ---------------------------------
def init_params(key, A, E, S, D, H):
    keys = iter(jax.random.split(key, 40))

    def w(shape):
        return jax.random.normal(next(keys), shape, jnp.float32) * (shape[0] ** -0.5)

    def b(dim):
        return jax.random.normal(next(keys), (1, dim), jnp.float32) * 0.01

    def gamma(dim):
        return 1.0 + 0.1 * jax.random.normal(next(keys), (1, dim), jnp.float32)

    def beta(dim):
        return 0.05 * jax.random.normal(next(keys), (1, dim), jnp.float32)

    p = {}
    p["w_ri_a"], p["w_ri_s"], p["b_ri"] = w((A, H)), w((S, H)), b(H)
    p["w_ih_r"], p["w_ih_z"], p["w_ih_n"] = w((H, D)), w((H, D)), w((H, D))
    p["w_hh_r"], p["w_hh_z"], p["w_hh_n"] = w((D, D)), w((D, D)), w((D, D))
    p["b_r"], p["b_z"], p["b_in"], p["b_hn"] = b(D), b(D), b(D), b(D)
    p["g_deter"], p["bt_deter"] = gamma(D), beta(D)
    p["w_p1"], p["b_p1"] = w((D, H)), b(H)
    p["g_p"], p["bt_p"] = gamma(H), beta(H)
    p["w_p2m"], p["w_p2s"] = w((H, S)), w((H, S))
    p["b_p2m"], p["b_p2s"] = b(S), b(S)
    p["g_st"], p["bt_st"] = gamma(S), beta(S)
    p["w_q1d"], p["w_q1e"], p["b_q1"] = w((D, H)), w((E, H)), b(H)
    p["g_q"], p["bt_q"] = gamma(H), beta(H)
    p["w_q2m"], p["w_q2s"] = w((H, S)), w((H, S))
    p["b_q2m"], p["b_q2s"] = b(S), b(S)
    p["g_sr"], p["bt_sr"] = gamma(S), beta(S)
    return p


# ------------------------------- pure-JAX reference ----------------------------
def rollout_reference(obs_embed, action, stoch0, deter0, eps_prior, eps_post, p):
    T = obs_embed.shape[0]
    s, h = stoch0, deter0
    priors, posts = [], []
    for t in range(T):
        a, e = action[t], obs_embed[t]
        ri = _elu(a @ p["w_ri_a"] + s @ p["w_ri_s"] + p["b_ri"])
        r = _sigmoid(ri @ p["w_ih_r"] + h @ p["w_hh_r"] + p["b_r"])
        z = _sigmoid(ri @ p["w_ih_z"] + h @ p["w_hh_z"] + p["b_z"])
        n = jnp.tanh(ri @ p["w_ih_n"] + p["b_in"] + r * (h @ p["w_hh_n"] + p["b_hn"]))
        deter = (1.0 - z) * n + z * h
        deter = _layer_norm(deter, p["g_deter"], p["bt_deter"])

        pp = _layer_norm(_elu(deter @ p["w_p1"] + p["b_p1"]), p["g_p"], p["bt_p"])
        p_mean = pp @ p["w_p2m"] + p["b_p2m"]
        p_std = _softplus(pp @ p["w_p2s"] + p["b_p2s"]) + MIN_STD
        p_stoch = _layer_norm(p_mean + p_std * eps_prior[t], p["g_st"], p["bt_st"])

        q = _layer_norm(_elu(deter @ p["w_q1d"] + e @ p["w_q1e"] + p["b_q1"]),
                        p["g_q"], p["bt_q"])
        q_mean = q @ p["w_q2m"] + p["b_q2m"]
        q_std = _softplus(q @ p["w_q2s"] + p["b_q2s"]) + MIN_STD
        q_stoch = _layer_norm(q_mean + q_std * eps_post[t], p["g_sr"], p["bt_sr"])

        priors.append((p_mean, p_std, p_stoch, deter))
        posts.append((q_mean, q_std, q_stoch, deter))
        s, h = q_stoch, deter

    def stack(idx, xs):
        return jnp.stack([x[idx] for x in xs], axis=0)

    prior = dict(mean=stack(0, priors), std=stack(1, priors),
                 stoch=stack(2, priors), deter=stack(3, priors))
    post = dict(mean=stack(0, posts), std=stack(1, posts),
                stoch=stack(2, posts), deter=stack(3, posts))
    return prior, post


# ------------------------------------ main -------------------------------------
if __name__ == "__main__":
    T = 8    # rollout steps
    B = 8    # batch (multiple of 8 sublanes)
    A = 8    # action dim
    E = 32   # obs embedding dim
    S = 16   # stochastic state dim
    D = 32   # deterministic (GRU) state dim
    H = 32   # hidden dim

    key = jax.random.PRNGKey(0)
    k_obs, k_act, k_s0, k_d0, k_ep, k_eq, k_par = jax.random.split(key, 7)

    obs_embed = jax.random.normal(k_obs, (T, B, E), jnp.float32)
    action = jax.random.normal(k_act, (T, B, A), jnp.float32)
    stoch0 = 0.5 * jax.random.normal(k_s0, (B, S), jnp.float32)
    deter0 = 0.5 * jax.random.normal(k_d0, (B, D), jnp.float32)
    eps_prior = jax.random.normal(k_ep, (T, B, S), jnp.float32)
    eps_post = jax.random.normal(k_eq, (T, B, S), jnp.float32)

    params = init_params(k_par, A, E, S, D, H)

    prior, post = rssm_rollout(T, obs_embed, action, stoch0, deter0,
                               eps_prior, eps_post, params)
    jax.block_until_ready((prior, post))

    prior_ref, post_ref = rollout_reference(obs_embed, action, stoch0, deter0,
                                            eps_prior, eps_post, params)

    for name in ("mean", "std", "stoch", "deter"):
        assert jnp.allclose(prior[name], prior_ref[name], atol=1e-3, rtol=1e-3), (
            "prior", name)
        assert jnp.allclose(post[name], post_ref[name], atol=1e-3, rtol=1e-3), (
            "post", name)

    print("KERNEL_OK")
</pallas_src>

<mosaic_0001>
module attributes {stable_mosaic.version = 11 : i64} {
  func.func @kernel(%arg0: i32, %arg1: memref<8x8x8xf32, #tpu.memory_space<vmem>>, %arg2: memref<8x8x32xf32, #tpu.memory_space<vmem>>, %arg3: memref<8x8x16xf32, #tpu.memory_space<vmem>>, %arg4: memref<8x8x16xf32, #tpu.memory_space<vmem>>, %arg5: memref<8x16xf32, #tpu.memory_space<vmem>>, %arg6: memref<8x32xf32, #tpu.memory_space<vmem>>, %arg7: memref<8x32xf32, #tpu.memory_space<vmem>>, %arg8: memref<16x32xf32, #tpu.memory_space<vmem>>, %arg9: memref<8x32xf32, #tpu.memory_space<vmem>>, %arg10: memref<32x96xf32, #tpu.memory_space<vmem>>, %arg11: memref<32x96xf32, #tpu.memory_space<vmem>>, %arg12: memref<8x96xf32, #tpu.memory_space<vmem>>, %arg13: memref<8x96xf32, #tpu.memory_space<vmem>>, %arg14: memref<8x32xf32, #tpu.memory_space<vmem>>, %arg15: memref<8x32xf32, #tpu.memory_space<vmem>>, %arg16: memref<32x64xf32, #tpu.memory_space<vmem>>, %arg17: memref<32x32xf32, #tpu.memory_space<vmem>>, %arg18: memref<8x32xf32, #tpu.memory_space<vmem>>, %arg19: memref<8x32xf32, #tpu.memory_space<vmem>>, %arg20: memref<8x32xf32, #tpu.memory_space<vmem>>, %arg21: memref<8x32xf32, #tpu.memory_space<vmem>>, %arg22: memref<8x32xf32, #tpu.memory_space<vmem>>, %arg23: memref<8x32xf32, #tpu.memory_space<vmem>>, %arg24: memref<32x32xf32, #tpu.memory_space<vmem>>, %arg25: memref<8x32xf32, #tpu.memory_space<vmem>>, %arg26: memref<32x32xf32, #tpu.memory_space<vmem>>, %arg27: memref<8x32xf32, #tpu.memory_space<vmem>>, %arg28: memref<8x16xf32, #tpu.memory_space<vmem>>, %arg29: memref<8x16xf32, #tpu.memory_space<vmem>>, %arg30: memref<8x16xf32, #tpu.memory_space<vmem>>, %arg31: memref<8x16xf32, #tpu.memory_space<vmem>>, %arg32: memref<8x8x128xf32, #tpu.memory_space<vmem>>) attributes {dimension_semantics = [#tpu.dimension_semantics<arbitrary>], iteration_bounds = array<i64: 1>, scalar_prefetch = 0 : i64, scratch_operands = 0 : i64, tpu.core_type = #tpu.core_type<tc>, window_params = [{pipeline_mode = #tpu.pipeline_mode<synchronous>, transform_indices = @transform_0, window_bounds = array<i64: 8, 8, 8>}, {pipeline_mode = #tpu.pipeline_mode<synchronous>, transform_indices = @transform_1, window_bounds = array<i64: 8, 8, 32>}, {pipeline_mode = #tpu.pipeline_mode<synchronous>, transform_indices = @transform_2, window_bounds = array<i64: 8, 8, 16>}, {pipeline_mode = #tpu.pipeline_mode<synchronous>, transform_indices = @transform_3, window_bounds = array<i64: 8, 8, 16>}, {pipeline_mode = #tpu.pipeline_mode<synchronous>, transform_indices = @transform_4, window_bounds = array<i64: 8, 16>}, {pipeline_mode = #tpu.pipeline_mode<synchronous>, transform_indices = @transform_5, window_bounds = array<i64: 8, 32>}, {pipeline_mode = #tpu.pipeline_mode<synchronous>, transform_indices = @transform_6, window_bounds = array<i64: 8, 32>}, {pipeline_mode = #tpu.pipeline_mode<synchronous>, transform_indices = @transform_7, window_bounds = array<i64: 16, 32>}, {pipeline_mode = #tpu.pipeline_mode<synchronous>, transform_indices = @transform_8, window_bounds = array<i64: 8, 32>}, {pipeline_mode = #tpu.pipeline_mode<synchronous>, transform_indices = @transform_9, window_bounds = array<i64: 32, 96>}, {pipeline_mode = #tpu.pipeline_mode<synchronous>, transform_indices = @transform_10, window_bounds = array<i64: 32, 96>}, {pipeline_mode = #tpu.pipeline_mode<synchronous>, transform_indices = @transform_11, window_bounds = array<i64: 8, 96>}, {pipeline_mode = #tpu.pipeline_mode<synchronous>, transform_indices = @transform_12, window_bounds = array<i64: 8, 96>}, {pipeline_mode = #tpu.pipeline_mode<synchronous>, transform_indices = @transform_13, window_bounds = array<i64: 8, 32>}, {pipeline_mode = #tpu.pipeline_mode<synchronous>, transform_indices = @transform_14, window_bounds = array<i64: 8, 32>}, {pipeline_mode = #tpu.pipeline_mode<synchronous>, transform_indices = @transform_15, window_bounds = array<i64: 32, 64>}, {pipeline_mode = #tpu.pipeline_mode<synchronous>, transform_indices = @transform_16, window_bounds = array<i64: 32, 32>}, {pipeline_mode = #tpu.pipeline_mode<synchronous>, transform_indices = @transform_17, window_bounds = array<i64: 8, 32>}, {pipeline_mode = #tpu.pipeline_mode<synchronous>, transform_indices = @transform_18, window_bounds = array<i64: 8, 32>}, {pipeline_mode = #tpu.pipeline_mode<synchronous>, transform_indices = @transform_19, window_bounds = array<i64: 8, 32>}, {pipeline_mode = #tpu.pipeline_mode<synchronous>, transform_indices = @transform_20, window_bounds = array<i64: 8, 32>}, {pipeline_mode = #tpu.pipeline_mode<synchronous>, transform_indices = @transform_21, window_bounds = array<i64: 8, 32>}, {pipeline_mode = #tpu.pipeline_mode<synchronous>, transform_indices = @transform_22, window_bounds = array<i64: 8, 32>}, {pipeline_mode = #tpu.pipeline_mode<synchronous>, transform_indices = @transform_23, window_bounds = array<i64: 32, 32>}, {pipeline_mode = #tpu.pipeline_mode<synchronous>, transform_indices = @transform_24, window_bounds = array<i64: 8, 32>}, {pipeline_mode = #tpu.pipeline_mode<synchronous>, transform_indices = @transform_25, window_bounds = array<i64: 32, 32>}, {pipeline_mode = #tpu.pipeline_mode<synchronous>, transform_indices = @transform_26, window_bounds = array<i64: 8, 32>}, {pipeline_mode = #tpu.pipeline_mode<synchronous>, transform_indices = @transform_27, window_bounds = array<i64: 8, 16>}, {pipeline_mode = #tpu.pipeline_mode<synchronous>, transform_indices = @transform_28, window_bounds = array<i64: 8, 16>}, {pipeline_mode = #tpu.pipeline_mode<synchronous>, transform_indices = @transform_29, window_bounds = array<i64: 8, 16>}, {pipeline_mode = #tpu.pipeline_mode<synchronous>, transform_indices = @transform_30, window_bounds = array<i64: 8, 16>}, {pipeline_mode = #tpu.pipeline_mode<synchronous>, transform_indices = @transform_31, window_bounds = array<i64: 8, 8, 128>}]} {
    %c0 = arith.constant 0 : index
    %c0_0 = arith.constant 0 : index
    %0 = vector.load %arg7[%c0, %c0_0] : memref<8x32xf32, #tpu.memory_space<vmem>>, vector<8x32xf32>
    %c0_1 = arith.constant 0 : index
    %c0_2 = arith.constant 0 : index
    %1 = vector.load %arg8[%c0_1, %c0_2] : memref<16x32xf32, #tpu.memory_space<vmem>>, vector<16x32xf32>
    %c0_3 = arith.constant 0 : index
    %c0_4 = arith.constant 0 : index
    %2 = vector.load %arg9[%c0_3, %c0_4] : memref<8x32xf32, #tpu.memory_space<vmem>>, vector<8x32xf32>
    %c0_5 = arith.constant 0 : index
    %c0_6 = arith.constant 0 : index
    %3 = vector.load %arg10[%c0_5, %c0_6] : memref<32x96xf32, #tpu.memory_space<vmem>>, vector<32x96xf32>
    %c0_7 = arith.constant 0 : index
    %c0_8 = arith.constant 0 : index
    %4 = vector.load %arg11[%c0_7, %c0_8] : memref<32x96xf32, #tpu.memory_space<vmem>>, vector<32x96xf32>
    %c0_9 = arith.constant 0 : index
    %c0_10 = arith.constant 0 : index
    %5 = vector.load %arg12[%c0_9, %c0_10] : memref<8x96xf32, #tpu.memory_space<vmem>>, vector<8x96xf32>
    %c0_11 = arith.constant 0 : index
    %c0_12 = arith.constant 0 : index
    %6 = vector.load %arg13[%c0_11, %c0_12] : memref<8x96xf32, #tpu.memory_space<vmem>>, vector<8x96xf32>
    %c0_13 = arith.constant 0 : index
    %c0_14 = arith.constant 0 : index
    %7 = vector.load %arg14[%c0_13, %c0_14] : memref<8x32xf32, #tpu.memory_space<vmem>>, vector<8x32xf32>
    %c0_15 = arith.constant 0 : index
    %c0_16 = arith.constant 0 : index
    %8 = vector.load %arg15[%c0_15, %c0_16] : memref<8x32xf32, #tpu.memory_space<vmem>>, vector<8x32xf32>
    %c0_17 = arith.constant 0 : index
    %c0_18 = arith.constant 0 : index
    %9 = vector.load %arg16[%c0_17, %c0_18] : memref<32x64xf32, #tpu.memory_space<vmem>>, vector<32x64xf32>
    %c0_19 = arith.constant 0 : index
    %c0_20 = arith.constant 0 : index
    %10 = vector.load %arg17[%c0_19, %c0_20] : memref<32x32xf32, #tpu.memory_space<vmem>>, vector<32x32xf32>
    %c0_21 = arith.constant 0 : index
    %c0_22 = arith.constant 0 : index
    %11 = vector.load %arg18[%c0_21, %c0_22] : memref<8x32xf32, #tpu.memory_space<vmem>>, vector<8x32xf32>
    %c0_23 = arith.constant 0 : index
    %c0_24 = arith.constant 0 : index
    %12 = vector.load %arg19[%c0_23, %c0_24] : memref<8x32xf32, #tpu.memory_space<vmem>>, vector<8x32xf32>
    %c0_25 = arith.constant 0 : index
    %c0_26 = arith.constant 0 : index
    %13 = vector.load %arg20[%c0_25, %c0_26] : memref<8x32xf32, #tpu.memory_space<vmem>>, vector<8x32xf32>
    %c0_27 = arith.constant 0 : index
    %c0_28 = arith.constant 0 : index
    %14 = vector.load %arg21[%c0_27, %c0_28] : memref<8x32xf32, #tpu.memory_space<vmem>>, vector<8x32xf32>
    %c0_29 = arith.constant 0 : index
    %c0_30 = arith.constant 0 : index
    %15 = vector.load %arg22[%c0_29, %c0_30] : memref<8x32xf32, #tpu.memory_space<vmem>>, vector<8x32xf32>
    %c0_31 = arith.constant 0 : index
    %c0_32 = arith.constant 0 : index
    %16 = vector.load %arg23[%c0_31, %c0_32] : memref<8x32xf32, #tpu.memory_space<vmem>>, vector<8x32xf32>
    %c0_33 = arith.constant 0 : index
    %c0_34 = arith.constant 0 : index
    %17 = vector.load %arg24[%c0_33, %c0_34] : memref<32x32xf32, #tpu.memory_space<vmem>>, vector<32x32xf32>
    %c0_35 = arith.constant 0 : index
    %c0_36 = arith.constant 0 : index
    %18 = vector.load %arg25[%c0_35, %c0_36] : memref<8x32xf32, #tpu.memory_space<vmem>>, vector<8x32xf32>
    %c0_37 = arith.constant 0 : index
    %c0_38 = arith.constant 0 : index
    %19 = vector.load %arg26[%c0_37, %c0_38] : memref<32x32xf32, #tpu.memory_space<vmem>>, vector<32x32xf32>
    %c0_39 = arith.constant 0 : index
    %c0_40 = arith.constant 0 : index
    %20 = vector.load %arg27[%c0_39, %c0_40] : memref<8x32xf32, #tpu.memory_space<vmem>>, vector<8x32xf32>
    %c0_41 = arith.constant 0 : index
    %c0_42 = arith.constant 0 : index
    %21 = vector.load %arg28[%c0_41, %c0_42] : memref<8x16xf32, #tpu.memory_space<vmem>>, vector<8x16xf32>
    %c0_43 = arith.constant 0 : index
    %c0_44 = arith.constant 0 : index
    %22 = vector.load %arg29[%c0_43, %c0_44] : memref<8x16xf32, #tpu.memory_space<vmem>>, vector<8x16xf32>
    %c0_45 = arith.constant 0 : index
    %c0_46 = arith.constant 0 : index
    %23 = vector.load %arg30[%c0_45, %c0_46] : memref<8x16xf32, #tpu.memory_space<vmem>>, vector<8x16xf32>
    %c0_47 = arith.constant 0 : index
    %c0_48 = arith.constant 0 : index
    %24 = vector.load %arg31[%c0_47, %c0_48] : memref<8x16xf32, #tpu.memory_space<vmem>>, vector<8x16xf32>
    %25 = tpu.iota {dimensions = array<i32: 1>} : vector<8x32xi32>
    %c16_i32 = arith.constant 16 : i32
    %26 = vector.broadcast %c16_i32 : i32 to vector<8x32xi32>
    %27 = arith.cmpi slt, %25, %26 : vector<8x32xi32>
    %c0_49 = arith.constant 0 : index
    %c0_50 = arith.constant 0 : index
    %28 = vector.load %arg5[%c0_49, %c0_50] : memref<8x16xf32, #tpu.memory_space<vmem>>, vector<8x16xf32>
    %c0_51 = arith.constant 0 : index
    %c0_52 = arith.constant 0 : index
    %29 = vector.load %arg6[%c0_51, %c0_52] : memref<8x32xf32, #tpu.memory_space<vmem>>, vector<8x32xf32>
    %c0_53 = arith.constant 0 : index
    %c0_54 = arith.constant 0 : index
    %c0_55 = arith.constant 0 : index
    %30 = vector.load %arg1[%c0_53, %c0_54, %c0_55] : memref<8x8x8xf32, #tpu.memory_space<vmem>>, vector<1x8x8xf32>
    %31 = vector.shape_cast %30 : vector<1x8x8xf32> to vector<8x8xf32>
    %c0_56 = arith.constant 0 : index
    %c0_57 = arith.constant 0 : index
    %c0_58 = arith.constant 0 : index
    %32 = vector.load %arg2[%c0_56, %c0_57, %c0_58] : memref<8x8x32xf32, #tpu.memory_space<vmem>>, vector<1x8x32xf32>
    %33 = vector.shape_cast %32 : vector<1x8x32xf32> to vector<8x32xf32>
    %c0_59 = arith.constant 0 : index
    %c0_60 = arith.constant 0 : index
    %c0_61 = arith.constant 0 : index
    %34 = vector.load %arg3[%c0_59, %c0_60, %c0_61] : memref<8x8x16xf32, #tpu.memory_space<vmem>>, vector<1x8x16xf32>
    %35 = vector.shape_cast %34 : vector<1x8x16xf32> to vector<8x16xf32>
    %c0_62 = arith.constant 0 : index
    %c0_63 = arith.constant 0 : index
    %c0_64 = arith.constant 0 : index
    %36 = vector.load %arg4[%c0_62, %c0_63, %c0_64] : memref<8x8x16xf32, #tpu.memory_space<vmem>>, vector<1x8x16xf32>
    %37 = vector.shape_cast %36 : vector<1x8x16xf32> to vector<8x16xf32>
    %cst = arith.constant dense<0.000000e+00> : vector<8x32xf32>
    %38 = tpu.matmul %31, %0, %cst {dimension_numbers = #tpu.dot_dimension_numbers<[1], [0], [0], [1], [0, 0, 1, 1], [], []>} : vector<8x8xf32>, vector<8x32xf32>, vector<8x32xf32> -> vector<8x32xf32>
    %cst_65 = arith.constant dense<0.000000e+00> : vector<8x32xf32>
    %39 = tpu.matmul %28, %1, %cst_65 {dimension_numbers = #tpu.dot_dimension_numbers<[1], [0], [0], [1], [0, 0, 1, 1], [], []>} : vector<8x16xf32>, vector<16x32xf32>, vector<8x32xf32> -> vector<8x32xf32>
    %40 = arith.addf %38, %39 : vector<8x32xf32>
    %41 = arith.addf %40, %2 : vector<8x32xf32>
    %cst_66 = arith.constant 0.000000e+00 : f32
    %42 = vector.broadcast %cst_66 : f32 to vector<8x32xf32>
    %43 = arith.cmpf ogt, %41, %42 : vector<8x32xf32>
    %cst_67 = arith.constant 0.000000e+00 : f32
    %44 = vector.broadcast %cst_67 : f32 to vector<8x32xf32>
    %45 = arith.minimumf %41, %44 : vector<8x32xf32>
    %46 = math.exp %45 : vector<8x32xf32>
    %cst_68 = arith.constant 1.000000e+00 : f32
    %47 = vector.broadcast %cst_68 : f32 to vector<8x32xf32>
    %48 = arith.subf %46, %47 : vector<8x32xf32>
    %49 = arith.select %43, %41, %48 : vector<8x32xi1>, vector<8x32xf32>
    %cst_69 = arith.constant dense<0.000000e+00> : vector<8x96xf32>
    %50 = tpu.matmul %49, %3, %cst_69 {dimension_numbers = #tpu.dot_dimension_numbers<[1], [0], [0], [1], [0, 0, 1, 1], [], []>} : vector<8x32xf32>, vector<32x96xf32>, vector<8x96xf32> -> vector<8x96xf32>
    %51 = arith.addf %50, %5 : vector<8x96xf32>
    %cst_70 = arith.constant dense<0.000000e+00> : vector<8x96xf32>
    %52 = tpu.matmul %29, %4, %cst_70 {dimension_numbers = #tpu.dot_dimension_numbers<[1], [0], [0], [1], [0, 0, 1, 1], [], []>} : vector<8x32xf32>, vector<32x96xf32>, vector<8x96xf32> -> vector<8x96xf32>
    %53 = arith.addf %52, %6 : vector<8x96xf32>
    %54 = vector.extract_strided_slice %51 {offsets = [0, 0], sizes = [8, 32], strides = [1, 1]} : vector<8x96xf32> to vector<8x32xf32>
    %55 = vector.extract_strided_slice %53 {offsets = [0, 0], sizes = [8, 32], strides = [1, 1]} : vector<8x96xf32> to vector<8x32xf32>
    %56 = arith.addf %54, %55 : vector<8x32xf32>
    %cst_71 = arith.constant 0.000000e+00 : f32
    %57 = vector.broadcast %cst_71 : f32 to vector<8x32xf32>
    %58 = arith.subf %57, %56 : vector<8x32xf32>
    %59 = math.exp %58 : vector<8x32xf32>
    %cst_72 = arith.constant 1.000000e+00 : f32
    %60 = vector.broadcast %cst_72 : f32 to vector<8x32xf32>
    %61 = arith.addf %60, %59 : vector<8x32xf32>
    %cst_73 = arith.constant 1.000000e+00 : f32
    %62 = vector.broadcast %cst_73 : f32 to vector<8x32xf32>
    %63 = arith.divf %62, %61 : vector<8x32xf32>
    %64 = vector.extract_strided_slice %51 {offsets = [0, 32], sizes = [8, 32], strides = [1, 1]} : vector<8x96xf32> to vector<8x32xf32>
    %65 = vector.extract_strided_slice %53 {offsets = [0, 32], sizes = [8, 32], strides = [1, 1]} : vector<8x96xf32> to vector<8x32xf32>
    %66 = arith.addf %64, %65 : vector<8x32xf32>
    %cst_74 = arith.constant 0.000000e+00 : f32
    %67 = vector.broadcast %cst_74 : f32 to vector<8x32xf32>
    %68 = arith.subf %67, %66 : vector<8x32xf32>
    %69 = math.exp %68 : vector<8x32xf32>
    %cst_75 = arith.constant 1.000000e+00 : f32
    %70 = vector.broadcast %cst_75 : f32 to vector<8x32xf32>
    %71 = arith.addf %70, %69 : vector<8x32xf32>
    %cst_76 = arith.constant 1.000000e+00 : f32
    %72 = vector.broadcast %cst_76 : f32 to vector<8x32xf32>
    %73 = arith.divf %72, %71 : vector<8x32xf32>
    %74 = vector.extract_strided_slice %51 {offsets = [0, 64], sizes = [8, 32], strides = [1, 1]} : vector<8x96xf32> to vector<8x32xf32>
    %75 = vector.extract_strided_slice %53 {offsets = [0, 64], sizes = [8, 32], strides = [1, 1]} : vector<8x96xf32> to vector<8x32xf32>
    %76 = arith.mulf %63, %75 : vector<8x32xf32>
    %77 = arith.addf %74, %76 : vector<8x32xf32>
    %78 = math.tanh %77 : vector<8x32xf32>
    %cst_77 = arith.constant 1.000000e+00 : f32
    %79 = vector.broadcast %cst_77 : f32 to vector<8x32xf32>
    %80 = arith.subf %79, %73 : vector<8x32xf32>
    %81 = arith.mulf %80, %78 : vector<8x32xf32>
    %82 = arith.mulf %73, %29 : vector<8x32xf32>
    %83 = arith.addf %81, %82 : vector<8x32xf32>
    %cst_78 = arith.constant dense<0.000000e+00> : vector<8xf32>
    %84 = vector.multi_reduction <add>, %83, %cst_78 [1] : vector<8x32xf32> to vector<8xf32>
    %85 = vector.shape_cast %84 : vector<8xf32> to vector<8x1xf32>
    %cst_79 = arith.constant 3.200000e+01 : f32
    %86 = vector.broadcast %cst_79 : f32 to vector<8x1xf32>
    %87 = arith.divf %85, %86 : vector<8x1xf32>
    %88 = vector.broadcast %87 : vector<8x1xf32> to vector<8x32xf32>
    %89 = arith.subf %83, %88 : vector<8x32xf32>
    %90 = arith.mulf %89, %89 : vector<8x32xf32>
    %cst_80 = arith.constant dense<0.000000e+00> : vector<8xf32>
    %91 = vector.multi_reduction <add>, %90, %cst_80 [1] : vector<8x32xf32> to vector<8xf32>
    %92 = vector.shape_cast %91 : vector<8xf32> to vector<8x1xf32>
    %cst_81 = arith.constant 3.200000e+01 : f32
    %93 = vector.broadcast %cst_81 : f32 to vector<8x1xf32>
    %94 = arith.divf %92, %93 : vector<8x1xf32>
    %cst_82 = arith.constant 9.99999974E-6 : f32
    %95 = vector.broadcast %cst_82 : f32 to vector<8x1xf32>
    %96 = arith.addf %94, %95 : vector<8x1xf32>
    %97 = math.rsqrt %96 : vector<8x1xf32>
    %98 = vector.broadcast %97 : vector<8x1xf32> to vector<8x32xf32>
    %99 = arith.mulf %89, %98 : vector<8x32xf32>
    %100 = arith.mulf %99, %7 : vector<8x32xf32>
    %101 = arith.addf %100, %8 : vector<8x32xf32>
    %cst_83 = arith.constant dense<0.000000e+00> : vector<8x64xf32>
    %102 = tpu.matmul %101, %9, %cst_83 {dimension_numbers = #tpu.dot_dimension_numbers<[1], [0], [0], [1], [0, 0, 1, 1], [], []>} : vector<8x32xf32>, vector<32x64xf32>, vector<8x64xf32> -> vector<8x64xf32>
    %103 = vector.extract_strided_slice %102 {offsets = [0, 0], sizes = [8, 32], strides = [1, 1]} : vector<8x64xf32> to vector<8x32xf32>
    %104 = arith.addf %103, %11 : vector<8x32xf32>
    %cst_84 = arith.constant 0.000000e+00 : f32
    %105 = vector.broadcast %cst_84 : f32 to vector<8x32xf32>
    %106 = arith.cmpf ogt, %104, %105 : vector<8x32xf32>
    %cst_85 = arith.constant 0.000000e+00 : f32
    %107 = vector.broadcast %cst_85 : f32 to vector<8x32xf32>
    %108 = arith.minimumf %104, %107 : vector<8x32xf32>
    %109 = math.exp %108 : vector<8x32xf32>
    %cst_86 = arith.constant 1.000000e+00 : f32
    %110 = vector.broadcast %cst_86 : f32 to vector<8x32xf32>
    %111 = arith.subf %109, %110 : vector<8x32xf32>
    %112 = arith.select %106, %104, %111 : vector<8x32xi1>, vector<8x32xf32>
    %cst_87 = arith.constant dense<0.000000e+00> : vector<8xf32>
    %113 = vector.multi_reduction <add>, %112, %cst_87 [1] : vector<8x32xf32> to vector<8xf32>
    %114 = vector.shape_cast %113 : vector<8xf32> to vector<8x1xf32>
    %cst_88 = arith.constant 3.200000e+01 : f32
    %115 = vector.broadcast %cst_88 : f32 to vector<8x1xf32>
    %116 = arith.divf %114, %115 : vector<8x1xf32>
    %117 = vector.broadcast %116 : vector<8x1xf32> to vector<8x32xf32>
    %118 = arith.subf %112, %117 : vector<8x32xf32>
    %119 = arith.mulf %118, %118 : vector<8x32xf32>
    %cst_89 = arith.constant dense<0.000000e+00> : vector<8xf32>
    %120 = vector.multi_reduction <add>, %119, %cst_89 [1] : vector<8x32xf32> to vector<8xf32>
    %121 = vector.shape_cast %120 : vector<8xf32> to vector<8x1xf32>
    %cst_90 = arith.constant 3.200000e+01 : f32
    %122 = vector.broadcast %cst_90 : f32 to vector<8x1xf32>
    %123 = arith.divf %121, %122 : vector<8x1xf32>
    %cst_91 = arith.constant 9.99999974E-6 : f32
    %124 = vector.broadcast %cst_91 : f32 to vector<8x1xf32>
    %125 = arith.addf %123, %124 : vector<8x1xf32>
    %126 = math.rsqrt %125 : vector<8x1xf32>
    %127 = vector.broadcast %126 : vector<8x1xf32> to vector<8x32xf32>
    %128 = arith.mulf %118, %127 : vector<8x32xf32>
    %129 = arith.mulf %128, %13 : vector<8x32xf32>
    %130 = arith.addf %129, %14 : vector<8x32xf32>
    %131 = vector.extract_strided_slice %102 {offsets = [0, 32], sizes = [8, 32], strides = [1, 1]} : vector<8x64xf32> to vector<8x32xf32>
    %cst_92 = arith.constant dense<0.000000e+00> : vector<8x32xf32>
    %132 = tpu.matmul %33, %10, %cst_92 {dimension_numbers = #tpu.dot_dimension_numbers<[1], [0], [0], [1], [0, 0, 1, 1], [], []>} : vector<8x32xf32>, vector<32x32xf32>, vector<8x32xf32> -> vector<8x32xf32>
    %133 = arith.addf %131, %132 : vector<8x32xf32>
    %134 = arith.addf %133, %12 : vector<8x32xf32>
    %cst_93 = arith.constant 0.000000e+00 : f32
    %135 = vector.broadcast %cst_93 : f32 to vector<8x32xf32>
    %136 = arith.cmpf ogt, %134, %135 : vector<8x32xf32>
    %cst_94 = arith.constant 0.000000e+00 : f32
    %137 = vector.broadcast %cst_94 : f32 to vector<8x32xf32>
    %138 = arith.minimumf %134, %137 : vector<8x32xf32>
    %139 = math.exp %138 : vector<8x32xf32>
    %cst_95 = arith.constant 1.000000e+00 : f32
    %140 = vector.broadcast %cst_95 : f32 to vector<8x32xf32>
    %141 = arith.subf %139, %140 : vector<8x32xf32>
    %142 = arith.select %136, %134, %141 : vector<8x32xi1>, vector<8x32xf32>
    %cst_96 = arith.constant dense<0.000000e+00> : vector<8xf32>
    %143 = vector.multi_reduction <add>, %142, %cst_96 [1] : vector<8x32xf32> to vector<8xf32>
    %144 = vector.shape_cast %143 : vector<8xf32> to vector<8x1xf32>
    %cst_97 = arith.constant 3.200000e+01 : f32
    %145 = vector.broadcast %cst_97 : f32 to vector<8x1xf32>
    %146 = arith.divf %144, %145 : vector<8x1xf32>
    %147 = vector.broadcast %146 : vector<8x1xf32> to vector<8x32xf32>
    %148 = arith.subf %142, %147 : vector<8x32xf32>
    %149 = arith.mulf %148, %148 : vector<8x32xf32>
    %cst_98 = arith.constant dense<0.000000e+00> : vector<8xf32>
    %150 = vector.multi_reduction <add>, %149, %cst_98 [1] : vector<8x32xf32> to vector<8xf32>
    %151 = vector.shape_cast %150 : vector<8xf32> to vector<8x1xf32>
    %cst_99 = arith.constant 3.200000e+01 : f32
    %152 = vector.broadcast %cst_99 : f32 to vector<8x1xf32>
    %153 = arith.divf %151, %152 : vector<8x1xf32>
    %cst_100 = arith.constant 9.99999974E-6 : f32
    %154 = vector.broadcast %cst_100 : f32 to vector<8x1xf32>
    %155 = arith.addf %153, %154 : vector<8x1xf32>
    %156 = math.rsqrt %155 : vector<8x1xf32>
    %157 = vector.broadcast %156 : vector<8x1xf32> to vector<8x32xf32>
    %158 = arith.mulf %148, %157 : vector<8x32xf32>
    %159 = arith.mulf %158, %15 : vector<8x32xf32>
    %160 = arith.addf %159, %16 : vector<8x32xf32>
    %cst_101 = arith.constant dense<0.000000e+00> : vector<8x32xf32>
    %161 = tpu.matmul %130, %17, %cst_101 {dimension_numbers = #tpu.dot_dimension_numbers<[1], [0], [0], [1], [0, 0, 1, 1], [], []>} : vector<8x32xf32>, vector<32x32xf32>, vector<8x32xf32> -> vector<8x32xf32>
    %162 = arith.addf %161, %18 : vector<8x32xf32>
    %cst_102 = arith.constant 0.000000e+00 : f32
    %163 = vector.broadcast %cst_102 : f32 to vector<8x32xf32>
    %164 = arith.maximumf %162, %163 : vector<8x32xf32>
    %165 = math.absf %162 : vector<8x32xf32>
    %cst_103 = arith.constant 0.000000e+00 : f32
    %166 = vector.broadcast %cst_103 : f32 to vector<8x32xf32>
    %167 = arith.subf %166, %165 : vector<8x32xf32>
    %168 = math.exp %167 : vector<8x32xf32>
    %cst_104 = arith.constant 1.000000e+00 : f32
    %169 = vector.broadcast %cst_104 : f32 to vector<8x32xf32>
    %170 = arith.addf %169, %168 : vector<8x32xf32>
    %171 = math.log %170 : vector<8x32xf32>
    %172 = arith.addf %164, %171 : vector<8x32xf32>
    %cst_105 = arith.constant 1.000000e-01 : f32
    %173 = vector.broadcast %cst_105 : f32 to vector<8x32xf32>
    %174 = arith.addf %172, %173 : vector<8x32xf32>
    %175 = arith.select %27, %162, %174 : vector<8x32xi1>, vector<8x32xf32>
    %176 = vector.extract_strided_slice %162 {offsets = [0, 0], sizes = [8, 16], strides = [1, 1]} : vector<8x32xf32> to vector<8x16xf32>
    %177 = vector.extract_strided_slice %174 {offsets = [0, 16], sizes = [8, 16], strides = [1, 1]} : vector<8x32xf32> to vector<8x16xf32>
    %178 = arith.mulf %177, %35 : vector<8x16xf32>
    %179 = arith.addf %176, %178 : vector<8x16xf32>
    %cst_106 = arith.constant dense<0.000000e+00> : vector<8xf32>
    %180 = vector.multi_reduction <add>, %179, %cst_106 [1] : vector<8x16xf32> to vector<8xf32>
    %181 = vector.shape_cast %180 : vector<8xf32> to vector<8x1xf32>
    %cst_107 = arith.constant 1.600000e+01 : f32
    %182 = vector.broadcast %cst_107 : f32 to vector<8x1xf32>
    %183 = arith.divf %181, %182 : vector<8x1xf32>
    %184 = vector.broadcast %183 : vector<8x1xf32> to vector<8x16xf32>
    %185 = arith.subf %179, %184 : vector<8x16xf32>
    %186 = arith.mulf %185, %185 : vector<8x16xf32>
    %cst_108 = arith.constant dense<0.000000e+00> : vector<8xf32>
    %187 = vector.multi_reduction <add>, %186, %cst_108 [1] : vector<8x16xf32> to vector<8xf32>
    %188 = vector.shape_cast %187 : vector<8xf32> to vector<8x1xf32>
    %cst_109 = arith.constant 1.600000e+01 : f32
    %189 = vector.broadcast %cst_109 : f32 to vector<8x1xf32>
    %190 = arith.divf %188, %189 : vector<8x1xf32>
    %cst_110 = arith.constant 9.99999974E-6 : f32
    %191 = vector.broadcast %cst_110 : f32 to vector<8x1xf32>
    %192 = arith.addf %190, %191 : vector<8x1xf32>
    %193 = math.rsqrt %192 : vector<8x1xf32>
    %194 = vector.broadcast %193 : vector<8x1xf32> to vector<8x16xf32>
    %195 = arith.mulf %185, %194 : vector<8x16xf32>
    %196 = arith.mulf %195, %21 : vector<8x16xf32>
    %197 = arith.addf %196, %22 : vector<8x16xf32>
    %cst_111 = arith.constant dense<0.000000e+00> : vector<8x32xf32>
    %198 = tpu.matmul %160, %19, %cst_111 {dimension_numbers = #tpu.dot_dimension_numbers<[1], [0], [0], [1], [0, 0, 1, 1], [], []>} : vector<8x32xf32>, vector<32x32xf32>, vector<8x32xf32> -> vector<8x32xf32>
    %199 = arith.addf %198, %20 : vector<8x32xf32>
    %cst_112 = arith.constant 0.000000e+00 : f32
    %200 = vector.broadcast %cst_112 : f32 to vector<8x32xf32>
    %201 = arith.maximumf %199, %200 : vector<8x32xf32>
    %202 = math.absf %199 : vector<8x32xf32>
    %cst_113 = arith.constant 0.000000e+00 : f32
    %203 = vector.broadcast %cst_113 : f32 to vector<8x32xf32>
    %204 = arith.subf %203, %202 : vector<8x32xf32>
    %205 = math.exp %204 : vector<8x32xf32>
    %cst_114 = arith.constant 1.000000e+00 : f32
    %206 = vector.broadcast %cst_114 : f32 to vector<8x32xf32>
    %207 = arith.addf %206, %205 : vector<8x32xf32>
    %208 = math.log %207 : vector<8x32xf32>
    %209 = arith.addf %201, %208 : vector<8x32xf32>
    %cst_115 = arith.constant 1.000000e-01 : f32
    %210 = vector.broadcast %cst_115 : f32 to vector<8x32xf32>
    %211 = arith.addf %209, %210 : vector<8x32xf32>
    %212 = arith.select %27, %199, %211 : vector<8x32xi1>, vector<8x32xf32>
    %213 = vector.extract_strided_slice %199 {offsets = [0, 0], sizes = [8, 16], strides = [1, 1]} : vector<8x32xf32> to vector<8x16xf32>
    %214 = vector.extract_strided_slice %211 {offsets = [0, 16], sizes = [8, 16], strides = [1, 1]} : vector<8x32xf32> to vector<8x16xf32>
    %215 = arith.mulf %214, %37 : vector<8x16xf32>
    %216 = arith.addf %213, %215 : vector<8x16xf32>
    %cst_116 = arith.constant dense<0.000000e+00> : vector<8xf32>
    %217 = vector.multi_reduction <add>, %216, %cst_116 [1] : vector<8x16xf32> to vector<8xf32>
    %218 = vector.shape_cast %217 : vector<8xf32> to vector<8x1xf32>
    %cst_117 = arith.constant 1.600000e+01 : f32
    %219 = vector.broadcast %cst_117 : f32 to vector<8x1xf32>
    %220 = arith.divf %218, %219 : vector<8x1xf32>
    %221 = vector.broadcast %220 : vector<8x1xf32> to vector<8x16xf32>
    %222 = arith.subf %216, %221 : vector<8x16xf32>
    %223 = arith.mulf %222, %222 : vector<8x16xf32>
    %cst_118 = arith.constant dense<0.000000e+00> : vector<8xf32>
    %224 = vector.multi_reduction <add>, %223, %cst_118 [1] : vector<8x16xf32> to vector<8xf32>
    %225 = vector.shape_cast %224 : vector<8xf32> to vector<8x1xf32>
    %cst_119 = arith.constant 1.600000e+01 : f32
    %226 = vector.broadcast %cst_119 : f32 to vector<8x1xf32>
    %227 = arith.divf %225, %226 : vector<8x1xf32>
    %cst_120 = arith.constant 9.99999974E-6 : f32
    %228 = vector.broadcast %cst_120 : f32 to vector<8x1xf32>
    %229 = arith.addf %227, %228 : vector<8x1xf32>
    %230 = math.rsqrt %229 : vector<8x1xf32>
    %231 = vector.broadcast %230 : vector<8x1xf32> to vector<8x16xf32>
    %232 = arith.mulf %222, %231 : vector<8x16xf32>
    %233 = arith.mulf %232, %23 : vector<8x16xf32>
    %234 = arith.addf %233, %24 : vector<8x16xf32>
    %235 = tpu.concatenate %175, %197, %212, %234, %101 in 1 : vector<8x32xf32>, vector<8x16xf32>, vector<8x32xf32>, vector<8x16xf32>, vector<8x32xf32> -> vector<8x128xf32>
    %c0_121 = arith.constant 0 : index
    %c0_122 = arith.constant 0 : index
    %c0_123 = arith.constant 0 : index
    %236 = vector.load %arg32[%c0_121, %c0_122, %c0_123] : memref<8x8x128xf32, #tpu.memory_space<vmem>>, vector<1x8x128xf32>
    %237 = vector.shape_cast %236 : vector<1x8x128xf32> to vector<8x128xf32>
    %238 = vector.shape_cast %235 : vector<8x128xf32> to vector<1x8x128xf32>
    tpu.vector_store %arg32[%c0_121, %c0_122, %c0_123], %238 {strides = array<i32>} : memref<8x8x128xf32, #tpu.memory_space<vmem>>, vector<1x8x128xf32>,
    %c1 = arith.constant 1 : index
    %c0_124 = arith.constant 0 : index
    %c0_125 = arith.constant 0 : index
    %239 = vector.load %arg1[%c1, %c0_124, %c0_125] : memref<8x8x8xf32, #tpu.memory_space<vmem>>, vector<1x8x8xf32>
    %240 = vector.shape_cast %239 : vector<1x8x8xf32> to vector<8x8xf32>
    %c1_126 = arith.constant 1 : index
    %c0_127 = arith.constant 0 : index
    %c0_128 = arith.constant 0 : index
    %241 = vector.load %arg2[%c1_126, %c0_127, %c0_128] : memref<8x8x32xf32, #tpu.memory_space<vmem>>, vector<1x8x32xf32>
    %242 = vector.shape_cast %241 : vector<1x8x32xf32> to vector<8x32xf32>
    %c1_129 = arith.constant 1 : index
    %c0_130 = arith.constant 0 : index
    %c0_131 = arith.constant 0 : index
    %243 = vector.load %arg3[%c1_129, %c0_130, %c0_131] : memref<8x8x16xf32, #tpu.memory_space<vmem>>, vector<1x8x16xf32>
    %244 = vector.shape_cast %243 : vector<1x8x16xf32> to vector<8x16xf32>
    %c1_132 = arith.constant 1 : index
    %c0_133 = arith.constant 0 : index
    %c0_134 = arith.constant 0 : index
    %245 = vector.load %arg4[%c1_132, %c0_133, %c0_134] : memref<8x8x16xf32, #tpu.memory_space<vmem>>, vector<1x8x16xf32>
    %246 = vector.shape_cast %245 : vector<1x8x16xf32> to vector<8x16xf32>
    %cst_135 = arith.constant dense<0.000000e+00> : vector<8x32xf32>
    %247 = tpu.matmul %240, %0, %cst_135 {dimension_numbers = #tpu.dot_dimension_numbers<[1], [0], [0], [1], [0, 0, 1, 1], [], []>} : vector<8x8xf32>, vector<8x32xf32>, vector<8x32xf32> -> vector<8x32xf32>
    %cst_136 = arith.constant dense<0.000000e+00> : vector<8x32xf32>
    %248 = tpu.matmul %234, %1, %cst_136 {dimension_numbers = #tpu.dot_dimension_numbers<[1], [0], [0], [1], [0, 0, 1, 1], [], []>} : vector<8x16xf32>, vector<16x32xf32>, vector<8x32xf32> -> vector<8x32xf32>
    %249 = arith.addf %247, %248 : vector<8x32xf32>
    %250 = arith.addf %249, %2 : vector<8x32xf32>
    %cst_137 = arith.constant 0.000000e+00 : f32
    %251 = vector.broadcast %cst_137 : f32 to vector<8x32xf32>
    %252 = arith.cmpf ogt, %250, %251 : vector<8x32xf32>
    %cst_138 = arith.constant 0.000000e+00 : f32
    %253 = vector.broadcast %cst_138 : f32 to vector<8x32xf32>
    %254 = arith.minimumf %250, %253 : vector<8x32xf32>
    %255 = math.exp %254 : vector<8x32xf32>
    %cst_139 = arith.constant 1.000000e+00 : f32
    %256 = vector.broadcast %cst_139 : f32 to vector<8x32xf32>
    %257 = arith.subf %255, %256 : vector<8x32xf32>
    %258 = arith.select %252, %250, %257 : vector<8x32xi1>, vector<8x32xf32>
    %cst_140 = arith.constant dense<0.000000e+00> : vector<8x96xf32>
    %259 = tpu.matmul %258, %3, %cst_140 {dimension_numbers = #tpu.dot_dimension_numbers<[1], [0], [0], [1], [0, 0, 1, 1], [], []>} : vector<8x32xf32>, vector<32x96xf32>, vector<8x96xf32> -> vector<8x96xf32>
    %260 = arith.addf %259, %5 : vector<8x96xf32>
    %cst_141 = arith.constant dense<0.000000e+00> : vector<8x96xf32>
    %261 = tpu.matmul %101, %4, %cst_141 {dimension_numbers = #tpu.dot_dimension_numbers<[1], [0], [0], [1], [0, 0, 1, 1], [], []>} : vector<8x32xf32>, vector<32x96xf32>, vector<8x96xf32> -> vector<8x96xf32>
    %262 = arith.addf %261, %6 : vector<8x96xf32>
    %263 = vector.extract_strided_slice %260 {offsets = [0, 0], sizes = [8, 32], strides = [1, 1]} : vector<8x96xf32> to vector<8x32xf32>
    %264 = vector.extract_strided_slice %262 {offsets = [0, 0], sizes = [8, 32], strides = [1, 1]} : vector<8x96xf32> to vector<8x32xf32>
    %265 = arith.addf %263, %264 : vector<8x32xf32>
    %cst_142 = arith.constant 0.000000e+00 : f32
    %266 = vector.broadcast %cst_142 : f32 to vector<8x32xf32>
    %267 = arith.subf %266, %265 : vector<8x32xf32>
    %268 = math.exp %267 : vector<8x32xf32>
    %cst_143 = arith.constant 1.000000e+00 : f32
    %269 = vector.broadcast %cst_143 : f32 to vector<8x32xf32>
    %270 = arith.addf %269, %268 : vector<8x32xf32>
    %cst_144 = arith.constant 1.000000e+00 : f32
    %271 = vector.broadcast %cst_144 : f32 to vector<8x32xf32>
    %272 = arith.divf %271, %270 : vector<8x32xf32>
    %273 = vector.extract_strided_slice %260 {offsets = [0, 32], sizes = [8, 32], strides = [1, 1]} : vector<8x96xf32> to vector<8x32xf32>
    %274 = vector.extract_strided_slice %262 {offsets = [0, 32], sizes = [8, 32], strides = [1, 1]} : vector<8x96xf32> to vector<8x32xf32>
    %275 = arith.addf %273, %274 : vector<8x32xf32>
    %cst_145 = arith.constant 0.000000e+00 : f32
    %276 = vector.broadcast %cst_145 : f32 to vector<8x32xf32>
    %277 = arith.subf %276, %275 : vector<8x32xf32>
    %278 = math.exp %277 : vector<8x32xf32>
    %cst_146 = arith.constant 1.000000e+00 : f32
    %279 = vector.broadcast %cst_146 : f32 to vector<8x32xf32>
    %280 = arith.addf %279, %278 : vector<8x32xf32>
    %cst_147 = arith.constant 1.000000e+00 : f32
    %281 = vector.broadcast %cst_147 : f32 to vector<8x32xf32>
    %282 = arith.divf %281, %280 : vector<8x32xf32>
    %283 = vector.extract_strided_slice %260 {offsets = [0, 64], sizes = [8, 32], strides = [1, 1]} : vector<8x96xf32> to vector<8x32xf32>
    %284 = vector.extract_strided_slice %262 {offsets = [0, 64], sizes = [8, 32], strides = [1, 1]} : vector<8x96xf32> to vector<8x32xf32>
    %285 = arith.mulf %272, %284 : vector<8x32xf32>
    %286 = arith.addf %283, %285 : vector<8x32xf32>
    %287 = math.tanh %286 : vector<8x32xf32>
    %cst_148 = arith.constant 1.000000e+00 : f32
    %288 = vector.broadcast %cst_148 : f32 to vector<8x32xf32>
    %289 = arith.subf %288, %282 : vector<8x32xf32>
    %290 = arith.mulf %289, %287 : vector<8x32xf32>
    %291 = arith.mulf %282, %101 : vector<8x32xf32>
    %292 = arith.addf %290, %291 : vector<8x32xf32>
    %cst_149 = arith.constant dense<0.000000e+00> : vector<8xf32>
    %293 = vector.multi_reduction <add>, %292, %cst_149 [1] : vector<8x32xf32> to vector<8xf32>
    %294 = vector.shape_cast %293 : vector<8xf32> to vector<8x1xf32>
    %cst_150 = arith.constant 3.200000e+01 : f32
    %295 = vector.broadcast %cst_150 : f32 to vector<8x1xf32>
    %296 = arith.divf %294, %295 : vector<8x1xf32>
    %297 = vector.broadcast %296 : vector<8x1xf32> to vector<8x32xf32>
    %298 = arith.subf %292, %297 : vector<8x32xf32>
    %299 = arith.mulf %298, %298 : vector<8x32xf32>
    %cst_151 = arith.constant dense<0.000000e+00> : vector<8xf32>
    %300 = vector.multi_reduction <add>, %299, %cst_151 [1] : vector<8x32xf32> to vector<8xf32>
    %301 = vector.shape_cast %300 : vector<8xf32> to vector<8x1xf32>
    %cst_152 = arith.constant 3.200000e+01 : f32
    %302 = vector.broadcast %cst_152 : f32 to vector<8x1xf32>
    %303 = arith.divf %301, %302 : vector<8x1xf32>
    %cst_153 = arith.constant 9.99999974E-6 : f32
    %304 = vector.broadcast %cst_153 : f32 to vector<8x1xf32>
    %305 = arith.addf %303, %304 : vector<8x1xf32>
    %306 = math.rsqrt %305 : vector<8x1xf32>
    %307 = vector.broadcast %306 : vector<8x1xf32> to vector<8x32xf32>
    %308 = arith.mulf %298, %307 : vector<8x32xf32>
    %309 = arith.mulf %308, %7 : vector<8x32xf32>
    %310 = arith.addf %309, %8 : vector<8x32xf32>
    %cst_154 = arith.constant dense<0.000000e+00> : vector<8x64xf32>
    %311 = tpu.matmul %310, %9, %cst_154 {dimension_numbers = #tpu.dot_dimension_numbers<[1], [0], [0], [1], [0, 0, 1, 1], [], []>} : vector<8x32xf32>, vector<32x64xf32>, vector<8x64xf32> -> vector<8x64xf32>
    %312 = vector.extract_strided_slice %311 {offsets = [0, 0], sizes = [8, 32], strides = [1, 1]} : vector<8x64xf32> to vector<8x32xf32>
    %313 = arith.addf %312, %11 : vector<8x32xf32>
    %cst_155 = arith.constant 0.000000e+00 : f32
    %314 = vector.broadcast %cst_155 : f32 to vector<8x32xf32>
    %315 = arith.cmpf ogt, %313, %314 : vector<8x32xf32>
    %cst_156 = arith.constant 0.000000e+00 : f32
    %316 = vector.broadcast %cst_156 : f32 to vector<8x32xf32>
    %317 = arith.minimumf %313, %316 : vector<8x32xf32>
    %318 = math.exp %317 : vector<8x32xf32>
    %cst_157 = arith.constant 1.000000e+00 : f32
    %319 = vector.broadcast %cst_157 : f32 to vector<8x32xf32>
    %320 = arith.subf %318, %319 : vector<8x32xf32>
    %321 = arith.select %315, %313, %320 : vector<8x32xi1>, vector<8x32xf32>
    %cst_158 = arith.constant dense<0.000000e+00> : vector<8xf32>
    %322 = vector.multi_reduction <add>, %321, %cst_158 [1] : vector<8x32xf32> to vector<8xf32>
    %323 = vector.shape_cast %322 : vector<8xf32> to vector<8x1xf32>
    %cst_159 = arith.constant 3.200000e+01 : f32
    %324 = vector.broadcast %cst_159 : f32 to vector<8x1xf32>
    %325 = arith.divf %323, %324 : vector<8x1xf32>
    %326 = vector.broadcast %325 : vector<8x1xf32> to vector<8x32xf32>
    %327 = arith.subf %321, %326 : vector<8x32xf32>
    %328 = arith.mulf %327, %327 : vector<8x32xf32>
    %cst_160 = arith.constant dense<0.000000e+00> : vector<8xf32>
    %329 = vector.multi_reduction <add>, %328, %cst_160 [1] : vector<8x32xf32> to vector<8xf32>
    %330 = vector.shape_cast %329 : vector<8xf32> to vector<8x1xf32>
    %cst_161 = arith.constant 3.200000e+01 : f32
    %331 = vector.broadcast %cst_161 : f32 to vector<8x1xf32>
    %332 = arith.divf %330, %331 : vector<8x1xf32>
    %cst_162 = arith.constant 9.99999974E-6 : f32
    %333 = vector.broadcast %cst_162 : f32 to vector<8x1xf32>
    %334 = arith.addf %332, %333 : vector<8x1xf32>
    %335 = math.rsqrt %334 : vector<8x1xf32>
    %336 = vector.broadcast %335 : vector<8x1xf32> to vector<8x32xf32>
    %337 = arith.mulf %327, %336 : vector<8x32xf32>
    %338 = arith.mulf %337, %13 : vector<8x32xf32>
    %339 = arith.addf %338, %14 : vector<8x32xf32>
    %340 = vector.extract_strided_slice %311 {offsets = [0, 32], sizes = [8, 32], strides = [1, 1]} : vector<8x64xf32> to vector<8x32xf32>
    %cst_163 = arith.constant dense<0.000000e+00> : vector<8x32xf32>
    %341 = tpu.matmul %242, %10, %cst_163 {dimension_numbers = #tpu.dot_dimension_numbers<[1], [0], [0], [1], [0, 0, 1, 1], [], []>} : vector<8x32xf32>, vector<32x32xf32>, vector<8x32xf32> -> vector<8x32xf32>
    %342 = arith.addf %340, %341 : vector<8x32xf32>
    %343 = arith.addf %342, %12 : vector<8x32xf32>
    %cst_164 = arith.constant 0.000000e+00 : f32
    %344 = vector.broadcast %cst_164 : f32 to vector<8x32xf32>
    %345 = arith.cmpf ogt, %343, %344 : vector<8x32xf32>
    %cst_165 = arith.constant 0.000000e+00 : f32
    %346 = vector.broadcast %cst_165 : f32 to vector<8x32xf32>
    %347 = arith.minimumf %343, %346 : vector<8x32xf32>
    %348 = math.exp %347 : vector<8x32xf32>
    %cst_166 = arith.constant 1.000000e+00 : f32
    %349 = vector.broadcast %cst_166 : f32 to vector<8x32xf32>
    %350 = arith.subf %348, %349 : vector<8x32xf32>
    %351 = arith.select %345, %343, %350 : vector<8x32xi1>, vector<8x32xf32>
    %cst_167 = arith.constant dense<0.000000e+00> : vector<8xf32>
    %352 = vector.multi_reduction <add>, %351, %cst_167 [1] : vector<8x32xf32> to vector<8xf32>
    %353 = vector.shape_cast %352 : vector<8xf32> to vector<8x1xf32>
    %cst_168 = arith.constant 3.200000e+01 : f32
    %354 = vector.broadcast %cst_168 : f32 to vector<8x1xf32>
    %355 = arith.divf %353, %354 : vector<8x1xf32>
    %356 = vector.broadcast %355 : vector<8x1xf32> to vector<8x32xf32>
    %357 = arith.subf %351, %356 : vector<8x32xf32>
    %358 = arith.mulf %357, %357 : vector<8x32xf32>
    %cst_169 = arith.constant dense<0.000000e+00> : vector<8xf32>
    %359 = vector.multi_reduction <add>, %358, %cst_169 [1] : vector<8x32xf32> to vector<8xf32>
    %360 = vector.shape_cast %359 : vector<8xf32> to vector<8x1xf32>
    %cst_170 = arith.constant 3.200000e+01 : f32
    %361 = vector.broadcast %cst_170 : f32 to vector<8x1xf32>
    %362 = arith.divf %360, %361 : vector<8x1xf32>
    %cst_171 = arith.constant 9.99999974E-6 : f32
    %363 = vector.broadcast %cst_171 : f32 to vector<8x1xf32>
    %364 = arith.addf %362, %363 : vector<8x1xf32>
    %365 = math.rsqrt %364 : vector<8x1xf32>
    %366 = vector.broadcast %365 : vector<8x1xf32> to vector<8x32xf32>
    %367 = arith.mulf %357, %366 : vector<8x32xf32>
    %368 = arith.mulf %367, %15 : vector<8x32xf32>
    %369 = arith.addf %368, %16 : vector<8x32xf32>
    %cst_172 = arith.constant dense<0.000000e+00> : vector<8x32xf32>
    %370 = tpu.matmul %339, %17, %cst_172 {dimension_numbers = #tpu.dot_dimension_numbers<[1], [0], [0], [1], [0, 0, 1, 1], [], []>} : vector<8x32xf32>, vector<32x32xf32>, vector<8x32xf32> -> vector<8x32xf32>
    %371 = arith.addf %370, %18 : vector<8x32xf32>
    %cst_173 = arith.constant 0.000000e+00 : f32
    %372 = vector.broadcast %cst_173 : f32 to vector<8x32xf32>
    %373 = arith.maximumf %371, %372 : vector<8x32xf32>
    %374 = math.absf %371 : vector<8x32xf32>
    %cst_174 = arith.constant 0.000000e+00 : f32
    %375 = vector.broadcast %cst_174 : f32 to vector<8x32xf32>
    %376 = arith.subf %375, %374 : vector<8x32xf32>
    %377 = math.exp %376 : vector<8x32xf32>
    %cst_175 = arith.constant 1.000000e+00 : f32
    %378 = vector.broadcast %cst_175 : f32 to vector<8x32xf32>
    %379 = arith.addf %378, %377 : vector<8x32xf32>
    %380 = math.log %379 : vector<8x32xf32>
    %381 = arith.addf %373, %380 : vector<8x32xf32>
    %cst_176 = arith.constant 1.000000e-01 : f32
    %382 = vector.broadcast %cst_176 : f32 to vector<8x32xf32>
    %383 = arith.addf %381, %382 : vector<8x32xf32>
    %384 = arith.select %27, %371, %383 : vector<8x32xi1>, vector<8x32xf32>
    %385 = vector.extract_strided_slice %371 {offsets = [0, 0], sizes = [8, 16], strides = [1, 1]} : vector<8x32xf32> to vector<8x16xf32>
    %386 = vector.extract_strided_slice %383 {offsets = [0, 16], sizes = [8, 16], strides = [1, 1]} : vector<8x32xf32> to vector<8x16xf32>
    %387 = arith.mulf %386, %244 : vector<8x16xf32>
    %388 = arith.addf %385, %387 : vector<8x16xf32>
    %cst_177 = arith.constant dense<0.000000e+00> : vector<8xf32>
    %389 = vector.multi_reduction <add>, %388, %cst_177 [1] : vector<8x16xf32> to vector<8xf32>
    %390 = vector.shape_cast %389 : vector<8xf32> to vector<8x1xf32>
    %cst_178 = arith.constant 1.600000e+01 : f32
    %391 = vector.broadcast %cst_178 : f32 to vector<8x1xf32>
    %392 = arith.divf %390, %391 : vector<8x1xf32>
    %393 = vector.broadcast %392 : vector<8x1xf32> to vector<8x16xf32>
    %394 = arith.subf %388, %393 : vector<8x16xf32>
    %395 = arith.mulf %394, %394 : vector<8x16xf32>
    %cst_179 = arith.constant dense<0.000000e+00> : vector<8xf32>
    %396 = vector.multi_reduction <add>, %395, %cst_179 [1] : vector<8x16xf32> to vector<8xf32>
    %397 = vector.shape_cast %396 : vector<8xf32> to vector<8x1xf32>
    %cst_180 = arith.constant 1.600000e+01 : f32
    %398 = vector.broadcast %cst_180 : f32 to vector<8x1xf32>
    %399 = arith.divf %397, %398 : vector<8x1xf32>
    %cst_181 = arith.constant 9.99999974E-6 : f32
    %400 = vector.broadcast %cst_181 : f32 to vector<8x1xf32>
    %401 = arith.addf %399, %400 : vector<8x1xf32>
    %402 = math.rsqrt %401 : vector<8x1xf32>
    %403 = vector.broadcast %402 : vector<8x1xf32> to vector<8x16xf32>
    %404 = arith.mulf %394, %403 : vector<8x16xf32>
    %405 = arith.mulf %404, %21 : vector<8x16xf32>
    %406 = arith.addf %405, %22 : vector<8x16xf32>
    %cst_182 = arith.constant dense<0.000000e+00> : vector<8x32xf32>
    %407 = tpu.matmul %369, %19, %cst_182 {dimension_numbers = #tpu.dot_dimension_numbers<[1], [0], [0], [1], [0, 0, 1, 1], [], []>} : vector<8x32xf32>, vector<32x32xf32>, vector<8x32xf32> -> vector<8x32xf32>
    %408 = arith.addf %407, %20 : vector<8x32xf32>
    %cst_183 = arith.constant 0.000000e+00 : f32
    %409 = vector.broadcast %cst_183 : f32 to vector<8x32xf32>
    %410 = arith.maximumf %408, %409 : vector<8x32xf32>
    %411 = math.absf %408 : vector<8x32xf32>
    %cst_184 = arith.constant 0.000000e+00 : f32
    %412 = vector.broadcast %cst_184 : f32 to vector<8x32xf32>
    %413 = arith.subf %412, %411 : vector<8x32xf32>
    %414 = math.exp %413 : vector<8x32xf32>
    %cst_185 = arith.constant 1.000000e+00 : f32
    %415 = vector.broadcast %cst_185 : f32 to vector<8x32xf32>
    %416 = arith.addf %415, %414 : vector<8x32xf32>
    %417 = math.log %416 : vector<8x32xf32>
    %418 = arith.addf %410, %417 : vector<8x32xf32>
    %cst_186 = arith.constant 1.000000e-01 : f32
    %419 = vector.broadcast %cst_186 : f32 to vector<8x32xf32>
    %420 = arith.addf %418, %419 : vector<8x32xf32>
    %421 = arith.select %27, %408, %420 : vector<8x32xi1>, vector<8x32xf32>
    %422 = vector.extract_strided_slice %408 {offsets = [0, 0], sizes = [8, 16], strides = [1, 1]} : vector<8x32xf32> to vector<8x16xf32>
    %423 = vector.extract_strided_slice %420 {offsets = [0, 16], sizes = [8, 16], strides = [1, 1]} : vector<8x32xf32> to vector<8x16xf32>
    %424 = arith.mulf %423, %246 : vector<8x16xf32>
    %425 = arith.addf %422, %424 : vector<8x16xf32>
    %cst_187 = arith.constant dense<0.000000e+00> : vector<8xf32>
    %426 = vector.multi_reduction <add>, %425, %cst_187 [1] : vector<8x16xf32> to vector<8xf32>
    %427 = vector.shape_cast %426 : vector<8xf32> to vector<8x1xf32>
    %cst_188 = arith.constant 1.600000e+01 : f32
    %428 = vector.broadcast %cst_188 : f32 to vector<8x1xf32>
    %429 = arith.divf %427, %428 : vector<8x1xf32>
    %430 = vector.broadcast %429 : vector<8x1xf32> to vector<8x16xf32>
    %431 = arith.subf %425, %430 : vector<8x16xf32>
    %432 = arith.mulf %431, %431 : vector<8x16xf32>
    %cst_189 = arith.constant dense<0.000000e+00> : vector<8xf32>
    %433 = vector.multi_reduction <add>, %432, %cst_189 [1] : vector<8x16xf32> to vector<8xf32>
    %434 = vector.shape_cast %433 : vector<8xf32> to vector<8x1xf32>
    %cst_190 = arith.constant 1.600000e+01 : f32
    %435 = vector.broadcast %cst_190 : f32 to vector<8x1xf32>
    %436 = arith.divf %434, %435 : vector<8x1xf32>
    %cst_191 = arith.constant 9.99999974E-6 : f32
    %437 = vector.broadcast %cst_191 : f32 to vector<8x1xf32>
    %438 = arith.addf %436, %437 : vector<8x1xf32>
    %439 = math.rsqrt %438 : vector<8x1xf32>
    %440 = vector.broadcast %439 : vector<8x1xf32> to vector<8x16xf32>
    %441 = arith.mulf %431, %440 : vector<8x16xf32>
    %442 = arith.mulf %441, %23 : vector<8x16xf32>
    %443 = arith.addf %442, %24 : vector<8x16xf32>
    %444 = tpu.concatenate %384, %406, %421, %443, %310 in 1 : vector<8x32xf32>, vector<8x16xf32>, vector<8x32xf32>, vector<8x16xf32>, vector<8x32xf32> -> vector<8x128xf32>
    %c1_192 = arith.constant 1 : index
    %c0_193 = arith.constant 0 : index
    %c0_194 = arith.constant 0 : index
    %445 = vector.load %arg32[%c1_192, %c0_193, %c0_194] : memref<8x8x128xf32, #tpu.memory_space<vmem>>, vector<1x8x128xf32>
    %446 = vector.shape_cast %445 : vector<1x8x128xf32> to vector<8x128xf32>
    %447 = vector.shape_cast %444 : vector<8x128xf32> to vector<1x8x128xf32>
    tpu.vector_store %arg32[%c1_192, %c0_193, %c0_194], %447 {strides = array<i32>} : memref<8x8x128xf32, #tpu.memory_space<vmem>>, vector<1x8x128xf32>,
    %c2 = arith.constant 2 : index
    %c0_195 = arith.constant 0 : index
    %c0_196 = arith.constant 0 : index
    %448 = vector.load %arg1[%c2, %c0_195, %c0_196] : memref<8x8x8xf32, #tpu.memory_space<vmem>>, vector<1x8x8xf32>
    %449 = vector.shape_cast %448 : vector<1x8x8xf32> to vector<8x8xf32>
    %c2_197 = arith.constant 2 : index
    %c0_198 = arith.constant 0 : index
    %c0_199 = arith.constant 0 : index
    %450 = vector.load %arg2[%c2_197, %c0_198, %c0_199] : memref<8x8x32xf32, #tpu.memory_space<vmem>>, vector<1x8x32xf32>
    %451 = vector.shape_cast %450 : vector<1x8x32xf32> to vector<8x32xf32>
    %c2_200 = arith.constant 2 : index
    %c0_201 = arith.constant 0 : index
    %c0_202 = arith.constant 0 : index
    %452 = vector.load %arg3[%c2_200, %c0_201, %c0_202] : memref<8x8x16xf32, #tpu.memory_space<vmem>>, vector<1x8x16xf32>
    %453 = vector.shape_cast %452 : vector<1x8x16xf32> to vector<8x16xf32>
    %c2_203 = arith.constant 2 : index
    %c0_204 = arith.constant 0 : index
    %c0_205 = arith.constant 0 : index
    %454 = vector.load %arg4[%c2_203, %c0_204, %c0_205] : memref<8x8x16xf32, #tpu.memory_space<vmem>>, vector<1x8x16xf32>
    %455 = vector.shape_cast %454 : vector<1x8x16xf32> to vector<8x16xf32>
    %cst_206 = arith.constant dense<0.000000e+00> : vector<8x32xf32>
    %456 = tpu.matmul %449, %0, %cst_206 {dimension_numbers = #tpu.dot_dimension_numbers<[1], [0], [0], [1], [0, 0, 1, 1], [], []>} : vector<8x8xf32>, vector<8x32xf32>, vector<8x32xf32> -> vector<8x32xf32>
    %cst_207 = arith.constant dense<0.000000e+00> : vector<8x32xf32>
    %457 = tpu.matmul %443, %1, %cst_207 {dimension_numbers = #tpu.dot_dimension_numbers<[1], [0], [0], [1], [0, 0, 1, 1], [], []>} : vector<8x16xf32>, vector<16x32xf32>, vector<8x32xf32> -> vector<8x32xf32>
    %458 = arith.addf %456, %457 : vector<8x32xf32>
    %459 = arith.addf %458, %2 : vector<8x32xf32>
    %cst_208 = arith.constant 0.000000e+00 : f32
    %460 = vector.broadcast %cst_208 : f32 to vector<8x32xf32>
    %461 = arith.cmpf ogt, %459, %460 : vector<8x32xf32>
    %cst_209 = arith.constant 0.000000e+00 : f32
    %462 = vector.broadcast %cst_209 : f32 to vector<8x32xf32>
    %463 = arith.minimumf %459, %462 : vector<8x32xf32>
    %464 = math.exp %463 : vector<8x32xf32>
    %cst_210 = arith.constant 1.000000e+00 : f32
    %465 = vector.broadcast %cst_210 : f32 to vector<8x32xf32>
    %466 = arith.subf %464, %465 : vector<8x32xf32>
    %467 = arith.select %461, %459, %466 : vector<8x32xi1>, vector<8x32xf32>
    %cst_211 = arith.constant dense<0.000000e+00> : vector<8x96xf32>
    %468 = tpu.matmul %467, %3, %cst_211 {dimension_numbers = #tpu.dot_dimension_numbers<[1], [0], [0], [1], [0, 0, 1, 1], [], []>} : vector<8x32xf32>, vector<32x96xf32>, vector<8x96xf32> -> vector<8x96xf32>
    %469 = arith.addf %468, %5 : vector<8x96xf32>
    %cst_212 = arith.constant dense<0.000000e+00> : vector<8x96xf32>
    %470 = tpu.matmul %310, %4, %cst_212 {dimension_numbers = #tpu.dot_dimension_numbers<[1], [0], [0], [1], [0, 0, 1, 1], [], []>} : vector<8x32xf32>, vector<32x96xf32>, vector<8x96xf32> -> vector<8x96xf32>
    %471 = arith.addf %470, %6 : vector<8x96xf32>
    %472 = vector.extract_strided_slice %469 {offsets = [0, 0], sizes = [8, 32], strides = [1, 1]} : vector<8x96xf32> to vector<8x32xf32>
    %473 = vector.extract_strided_slice %471 {offsets = [0, 0], sizes = [8, 32], strides = [1, 1]} : vector<8x96xf32> to vector<8x32xf32>
    %474 = arith.addf %472, %473 : vector<8x32xf32>
    %cst_213 = arith.constant 0.000000e+00 : f32
    %475 = vector.broadcast %cst_213 : f32 to vector<8x32xf32>
    %476 = arith.subf %475, %474 : vector<8x32xf32>
    %477 = math.exp %476 : vector<8x32xf32>
    %cst_214 = arith.constant 1.000000e+00 : f32
    %478 = vector.broadcast %cst_214 : f32 to vector<8x32xf32>
    %479 = arith.addf %478, %477 : vector<8x32xf32>
    %cst_215 = arith.constant 1.000000e+00 : f32
    %480 = vector.broadcast %cst_215 : f32 to vector<8x32xf32>
    %481 = arith.divf %480, %479 : vector<8x32xf32>
    %482 = vector.extract_strided_slice %469 {offsets = [0, 32], sizes = [8, 32], strides = [1, 1]} : vector<8x96xf32> to vector<8x32xf32>
    %483 = vector.extract_strided_slice %471 {offsets = [0, 32], sizes = [8, 32], strides = [1, 1]} : vector<8x96xf32> to vector<8x32xf32>
    %484 = arith.addf %482, %483 : vector<8x32xf32>
    %cst_216 = arith.constant 0.000000e+00 : f32
    %485 = vector.broadcast %cst_216 : f32 to vector<8x32xf32>
    %486 = arith.subf %485, %484 : vector<8x32xf32>
    %487 = math.exp %486 : vector<8x32xf32>
    %cst_217 = arith.constant 1.000000e+00 : f32
    %488 = vector.broadcast %cst_217 : f32 to vector<8x32xf32>
    %489 = arith.addf %488, %487 : vector<8x32xf32>
    %cst_218 = arith.constant 1.000000e+00 : f32
    %490 = vector.broadcast %cst_218 : f32 to vector<8x32xf32>
    %491 = arith.divf %490, %489 : vector<8x32xf32>
    %492 = vector.extract_strided_slice %469 {offsets = [0, 64], sizes = [8, 32], strides = [1, 1]} : vector<8x96xf32> to vector<8x32xf32>
    %493 = vector.extract_strided_slice %471 {offsets = [0, 64], sizes = [8, 32], strides = [1, 1]} : vector<8x96xf32> to vector<8x32xf32>
    %494 = arith.mulf %481, %493 : vector<8x32xf32>
    %495 = arith.addf %492, %494 : vector<8x32xf32>
    %496 = math.tanh %495 : vector<8x32xf32>
    %cst_219 = arith.constant 1.000000e+00 : f32
    %497 = vector.broadcast %cst_219 : f32 to vector<8x32xf32>
    %498 = arith.subf %497, %491 : vector<8x32xf32>
    %499 = arith.mulf %498, %496 : vector<8x32xf32>
    %500 = arith.mulf %491, %310 : vector<8x32xf32>
    %501 = arith.addf %499, %500 : vector<8x32xf32>
    %cst_220 = arith.constant dense<0.000000e+00> : vector<8xf32>
    %502 = vector.multi_reduction <add>, %501, %cst_220 [1] : vector<8x32xf32> to vector<8xf32>
    %503 = vector.shape_cast %502 : vector<8xf32> to vector<8x1xf32>
    %cst_221 = arith.constant 3.200000e+01 : f32
    %504 = vector.broadcast %cst_221 : f32 to vector<8x1xf32>
    %505 = arith.divf %503, %504 : vector<8x1xf32>
    %506 = vector.broadcast %505 : vector<8x1xf32> to vector<8x32xf32>
    %507 = arith.subf %501, %506 : vector<8x32xf32>
    %508 = arith.mulf %507, %507 : vector<8x32xf32>
    %cst_222 = arith.constant dense<0.000000e+00> : vector<8xf32>
    %509 = vector.multi_reduction <add>, %508, %cst_222 [1] : vector<8x32xf32> to vector<8xf32>
    %510 = vector.shape_cast %509 : vector<8xf32> to vector<8x1xf32>
    %cst_223 = arith.constant 3.200000e+01 : f32
    %511 = vector.broadcast %cst_223 : f32 to vector<8x1xf32>
    %512 = arith.divf %510, %511 : vector<8x1xf32>
    %cst_224 = arith.constant 9.99999974E-6 : f32
    %513 = vector.broadcast %cst_224 : f32 to vector<8x1xf32>
    %514 = arith.addf %512, %513 : vector<8x1xf32>
    %515 = math.rsqrt %514 : vector<8x1xf32>
    %516 = vector.broadcast %515 : vector<8x1xf32> to vector<8x32xf32>
    %517 = arith.mulf %507, %516 : vector<8x32xf32>
    %518 = arith.mulf %517, %7 : vector<8x32xf32>
    %519 = arith.addf %518, %8 : vector<8x32xf32>
    %cst_225 = arith.constant dense<0.000000e+00> : vector<8x64xf32>
    %520 = tpu.matmul %519, %9, %cst_225 {dimension_numbers = #tpu.dot_dimension_numbers<[1], [0], [0], [1], [0, 0, 1, 1], [], []>} : vector<8x32xf32>, vector<32x64xf32>, vector<8x64xf32> -> vector<8x64xf32>
    %521 = vector.extract_strided_slice %520 {offsets = [0, 0], sizes = [8, 32], strides = [1, 1]} : vector<8x64xf32> to vector<8x32xf32>
    %522 = arith.addf %521, %11 : vector<8x32xf32>
    %cst_226 = arith.constant 0.000000e+00 : f32
    %523 = vector.broadcast %cst_226 : f32 to vector<8x32xf32>
    %524 = arith.cmpf ogt, %522, %523 : vector<8x32xf32>
    %cst_227 = arith.constant 0.000000e+00 : f32
    %525 = vector.broadcast %cst_227 : f32 to vector<8x32xf32>
    %526 = arith.minimumf %522, %525 : vector<8x32xf32>
    %527 = math.exp %526 : vector<8x32xf32>
    %cst_228 = arith.constant 1.000000e+00 : f32
    %528 = vector.broadcast %cst_228 : f32 to vector<8x32xf32>
    %529 = arith.subf %527, %528 : vector<8x32xf32>
    %530 = arith.select %524, %522, %529 : vector<8x32xi1>, vector<8x32xf32>
    %cst_229 = arith.constant dense<0.000000e+00> : vector<8xf32>
    %531 = vector.multi_reduction <add>, %530, %cst_229 [1] : vector<8x32xf32> to vector<8xf32>
    %532 = vector.shape_cast %531 : vector<8xf32> to vector<8x1xf32>
    %cst_230 = arith.constant 3.200000e+01 : f32
    %533 = vector.broadcast %cst_230 : f32 to vector<8x1xf32>
    %534 = arith.divf %532, %533 : vector<8x1xf32>
    %535 = vector.broadcast %534 : vector<8x1xf32> to vector<8x32xf32>
    %536 = arith.subf %530, %535 : vector<8x32xf32>
    %537 = arith.mulf %536, %536 : vector<8x32xf32>
    %cst_231 = arith.constant dense<0.000000e+00> : vector<8xf32>
    %538 = vector.multi_reduction <add>, %537, %cst_231 [1] : vector<8x32xf32> to vector<8xf32>
    %539 = vector.shape_cast %538 : vector<8xf32> to vector<8x1xf32>
    %cst_232 = arith.constant 3.200000e+01 : f32
    %540 = vector.broadcast %cst_232 : f32 to vector<8x1xf32>
    %541 = arith.divf %539, %540 : vector<8x1xf32>
    %cst_233 = arith.constant 9.99999974E-6 : f32
    %542 = vector.broadcast %cst_233 : f32 to vector<8x1xf32>
    %543 = arith.addf %541, %542 : vector<8x1xf32>
    %544 = math.rsqrt %543 : vector<8x1xf32>
    %545 = vector.broadcast %544 : vector<8x1xf32> to vector<8x32xf32>
    %546 = arith.mulf %536, %545 : vector<8x32xf32>
    %547 = arith.mulf %546, %13 : vector<8x32xf32>
    %548 = arith.addf %547, %14 : vector<8x32xf32>
    %549 = vector.extract_strided_slice %520 {offsets = [0, 32], sizes = [8, 32], strides = [1, 1]} : vector<8x64xf32> to vector<8x32xf32>
    %cst_234 = arith.constant dense<0.000000e+00> : vector<8x32xf32>
    %550 = tpu.matmul %451, %10, %cst_234 {dimension_numbers = #tpu.dot_dimension_numbers<[1], [0], [0], [1], [0, 0, 1, 1], [], []>} : vector<8x32xf32>, vector<32x32xf32>, vector<8x32xf32> -> vector<8x32xf32>
    %551 = arith.addf %549, %550 : vector<8x32xf32>
    %552 = arith.addf %551, %12 : vector<8x32xf32>
    %cst_235 = arith.constant 0.000000e+00 : f32
    %553 = vector.broadcast %cst_235 : f32 to vector<8x32xf32>
    %554 = arith.cmpf ogt, %552, %553 : vector<8x32xf32>
    %cst_236 = arith.constant 0.000000e+00 : f32
    %555 = vector.broadcast %cst_236 : f32 to vector<8x32xf32>
    %556 = arith.minimumf %552, %555 : vector<8x32xf32>
    %557 = math.exp %556 : vector<8x32xf32>
    %cst_237 = arith.constant 1.000000e+00 : f32
    %558 = vector.broadcast %cst_237 : f32 to vector<8x32xf32>
    %559 = arith.subf %557, %558 : vector<8x32xf32>
    %560 = arith.select %554, %552, %559 : vector<8x32xi1>, vector<8x32xf32>
    %cst_238 = arith.constant dense<0.000000e+00> : vector<8xf32>
    %561 = vector.multi_reduction <add>, %560, %cst_238 [1] : vector<8x32xf32> to vector<8xf32>
    %562 = vector.shape_cast %561 : vector<8xf32> to vector<8x1xf32>
    %cst_239 = arith.constant 3.200000e+01 : f32
    %563 = vector.broadcast %cst_239 : f32 to vector<8x1xf32>
    %564 = arith.divf %562, %563 : vector<8x1xf32>
    %565 = vector.broadcast %564 : vector<8x1xf32> to vector<8x32xf32>
    %566 = arith.subf %560, %565 : vector<8x32xf32>
    %567 = arith.mulf %566, %566 : vector<8x32xf32>
    %cst_240 = arith.constant dense<0.000000e+00> : vector<8xf32>
    %568 = vector.multi_reduction <add>, %567, %cst_240 [1] : vector<8x32xf32> to vector<8xf32>
    %569 = vector.shape_cast %568 : vector<8xf32> to vector<8x1xf32>
    %cst_241 = arith.constant 3.200000e+01 : f32
    %570 = vector.broadcast %cst_241 : f32 to vector<8x1xf32>
    %571 = arith.divf %569, %570 : vector<8x1xf32>
    %cst_242 = arith.constant 9.99999974E-6 : f32
    %572 = vector.broadcast %cst_242 : f32 to vector<8x1xf32>
    %573 = arith.addf %571, %572 : vector<8x1xf32>
    %574 = math.rsqrt %573 : vector<8x1xf32>
    %575 = vector.broadcast %574 : vector<8x1xf32> to vector<8x32xf32>
    %576 = arith.mulf %566, %575 : vector<8x32xf32>
    %577 = arith.mulf %576, %15 : vector<8x32xf32>
    %578 = arith.addf %577, %16 : vector<8x32xf32>
    %cst_243 = arith.constant dense<0.000000e+00> : vector<8x32xf32>
    %579 = tpu.matmul %548, %17, %cst_243 {dimension_numbers = #tpu.dot_dimension_numbers<[1], [0], [0], [1], [0, 0, 1, 1], [], []>} : vector<8x32xf32>, vector<32x32xf32>, vector<8x32xf32> -> vector<8x32xf32>
    %580 = arith.addf %579, %18 : vector<8x32xf32>
    %cst_244 = arith.constant 0.000000e+00 : f32
    %581 = vector.broadcast %cst_244 : f32 to vector<8x32xf32>
    %582 = arith.maximumf %580, %581 : vector<8x32xf32>
    %583 = math.absf %580 : vector<8x32xf32>
    %cst_245 = arith.constant 0.000000e+00 : f32
    %584 = vector.broadcast %cst_245 : f32 to vector<8x32xf32>
    %585 = arith.subf %584, %583 : vector<8x32xf32>
    %586 = math.exp %585 : vector<8x32xf32>
    %cst_246 = arith.constant 1.000000e+00 : f32
    %587 = vector.broadcast %cst_246 : f32 to vector<8x32xf32>
    %588 = arith.addf %587, %586 : vector<8x32xf32>
    %589 = math.log %588 : vector<8x32xf32>
    %590 = arith.addf %582, %589 : vector<8x32xf32>
    %cst_247 = arith.constant 1.000000e-01 : f32
    %591 = vector.broadcast %cst_247 : f32 to vector<8x32xf32>
    %592 = arith.addf %590, %591 : vector<8x32xf32>
    %593 = arith.select %27, %580, %592 : vector<8x32xi1>, vector<8x32xf32>
    %594 = vector.extract_strided_slice %580 {offsets = [0, 0], sizes = [8, 16], strides = [1, 1]} : vector<8x32xf32> to vector<8x16xf32>
    %595 = vector.extract_strided_slice %592 {offsets = [0, 16], sizes = [8, 16], strides = [1, 1]} : vector<8x32xf32> to vector<8x16xf32>
    %596 = arith.mulf %595, %453 : vector<8x16xf32>
    %597 = arith.addf %594, %596 : vector<8x16xf32>
    %cst_248 = arith.constant dense<0.000000e+00> : vector<8xf32>
    %598 = vector.multi_reduction <add>, %597, %cst_248 [1] : vector<8x16xf32> to vector<8xf32>
    %599 = vector.shape_cast %598 : vector<8xf32> to vector<8x1xf32>
    %cst_249 = arith.constant 1.600000e+01 : f32
    %600 = vector.broadcast %cst_249 : f32 to vector<8x1xf32>
    %601 = arith.divf %599, %600 : vector<8x1xf32>
    %602 = vector.broadcast %601 : vector<8x1xf32> to vector<8x16xf32>
    %603 = arith.subf %597, %602 : vector<8x16xf32>
    %604 = arith.mulf %603, %603 : vector<8x16xf32>
    %cst_250 = arith.constant dense<0.000000e+00> : vector<8xf32>
    %605 = vector.multi_reduction <add>, %604, %cst_250 [1] : vector<8x16xf32> to vector<8xf32>
    %606 = vector.shape_cast %605 : vector<8xf32> to vector<8x1xf32>
    %cst_251 = arith.constant 1.600000e+01 : f32
    %607 = vector.broadcast %cst_251 : f32 to vector<8x1xf32>
    %608 = arith.divf %606, %607 : vector<8x1xf32>
    %cst_252 = arith.constant 9.99999974E-6 : f32
    %609 = vector.broadcast %cst_252 : f32 to vector<8x1xf32>
    %610 = arith.addf %608, %609 : vector<8x1xf32>
    %611 = math.rsqrt %610 : vector<8x1xf32>
    %612 = vector.broadcast %611 : vector<8x1xf32> to vector<8x16xf32>
    %613 = arith.mulf %603, %612 : vector<8x16xf32>
    %614 = arith.mulf %613, %21 : vector<8x16xf32>
    %615 = arith.addf %614, %22 : vector<8x16xf32>
    %cst_253 = arith.constant dense<0.000000e+00> : vector<8x32xf32>
    %616 = tpu.matmul %578, %19, %cst_253 {dimension_numbers = #tpu.dot_dimension_numbers<[1], [0], [0], [1], [0, 0, 1, 1], [], []>} : vector<8x32xf32>, vector<32x32xf32>, vector<8x32xf32> -> vector<8x32xf32>
    %617 = arith.addf %616, %20 : vector<8x32xf32>
    %cst_254 = arith.constant 0.000000e+00 : f32
    %618 = vector.broadcast %cst_254 : f32 to vector<8x32xf32>
    %619 = arith.maximumf %617, %618 : vector<8x32xf32>
    %620 = math.absf %617 : vector<8x32xf32>
    %cst_255 = arith.constant 0.000000e+00 : f32
    %621 = vector.broadcast %cst_255 : f32 to vector<8x32xf32>
    %622 = arith.subf %621, %620 : vector<8x32xf32>
    %623 = math.exp %622 : vector<8x32xf32>
    %cst_256 = arith.constant 1.000000e+00 : f32
    %624 = vector.broadcast %cst_256 : f32 to vector<8x32xf32>
    %625 = arith.addf %624, %623 : vector<8x32xf32>
    %626 = math.log %625 : vector<8x32xf32>
    %627 = arith.addf %619, %626 : vector<8x32xf32>
    %cst_257 = arith.constant 1.000000e-01 : f32
    %628 = vector.broadcast %cst_257 : f32 to vector<8x32xf32>
    %629 = arith.addf %627, %628 : vector<8x32xf32>
    %630 = arith.select %27, %617, %629 : vector<8x32xi1>, vector<8x32xf32>
    %631 = vector.extract_strided_slice %617 {offsets = [0, 0], sizes = [8, 16], strides = [1, 1]} : vector<8x32xf32> to vector<8x16xf32>
    %632 = vector.extract_strided_slice %629 {offsets = [0, 16], sizes = [8, 16], strides = [1, 1]} : vector<8x32xf32> to vector<8x16xf32>
    %633 = arith.mulf %632, %455 : vector<8x16xf32>
    %634 = arith.addf %631, %633 : vector<8x16xf32>
    %cst_258 = arith.constant dense<0.000000e+00> : vector<8xf32>
    %635 = vector.multi_reduction <add>, %634, %cst_258 [1] : vector<8x16xf32> to vector<8xf32>
    %636 = vector.shape_cast %635 : vector<8xf32> to vector<8x1xf32>
    %cst_259 = arith.constant 1.600000e+01 : f32
    %637 = vector.broadcast %cst_259 : f32 to vector<8x1xf32>
    %638 = arith.divf %636, %637 : vector<8x1xf32>
    %639 = vector.broadcast %638 : vector<8x1xf32> to vector<8x16xf32>
    %640 = arith.subf %634, %639 : vector<8x16xf32>
    %641 = arith.mulf %640, %640 : vector<8x16xf32>
    %cst_260 = arith.constant dense<0.000000e+00> : vector<8xf32>
    %642 = vector.multi_reduction <add>, %641, %cst_260 [1] : vector<8x16xf32> to vector<8xf32>
    %643 = vector.shape_cast %642 : vector<8xf32> to vector<8x1xf32>
    %cst_261 = arith.constant 1.600000e+01 : f32
    %644 = vector.broadcast %cst_261 : f32 to vector<8x1xf32>
    %645 = arith.divf %643, %644 : vector<8x1xf32>
    %cst_262 = arith.constant 9.99999974E-6 : f32
    %646 = vector.broadcast %cst_262 : f32 to vector<8x1xf32>
    %647 = arith.addf %645, %646 : vector<8x1xf32>
    %648 = math.rsqrt %647 : vector<8x1xf32>
    %649 = vector.broadcast %648 : vector<8x1xf32> to vector<8x16xf32>
    %650 = arith.mulf %640, %649 : vector<8x16xf32>
    %651 = arith.mulf %650, %23 : vector<8x16xf32>
    %652 = arith.addf %651, %24 : vector<8x16xf32>
    %653 = tpu.concatenate %593, %615, %630, %652, %519 in 1 : vector<8x32xf32>, vector<8x16xf32>, vector<8x32xf32>, vector<8x16xf32>, vector<8x32xf32> -> vector<8x128xf32>
    %c2_263 = arith.constant 2 : index
    %c0_264 = arith.constant 0 : index
    %c0_265 = arith.constant 0 : index
    %654 = vector.load %arg32[%c2_263, %c0_264, %c0_265] : memref<8x8x128xf32, #tpu.memory_space<vmem>>, vector<1x8x128xf32>
    %655 = vector.shape_cast %654 : vector<1x8x128xf32> to vector<8x128xf32>
    %656 = vector.shape_cast %653 : vector<8x128xf32> to vector<1x8x128xf32>
    tpu.vector_store %arg32[%c2_263, %c0_264, %c0_265], %656 {strides = array<i32>} : memref<8x8x128xf32, #tpu.memory_space<vmem>>, vector<1x8x128xf32>,
    %c3 = arith.constant 3 : index
    %c0_266 = arith.constant 0 : index
    %c0_267 = arith.constant 0 : index
    %657 = vector.load %arg1[%c3, %c0_266, %c0_267] : memref<8x8x8xf32, #tpu.memory_space<vmem>>, vector<1x8x8xf32>
    %658 = vector.shape_cast %657 : vector<1x8x8xf32> to vector<8x8xf32>
    %c3_268 = arith.constant 3 : index
    %c0_269 = arith.constant 0 : index
    %c0_270 = arith.constant 0 : index
    %659 = vector.load %arg2[%c3_268, %c0_269, %c0_270] : memref<8x8x32xf32, #tpu.memory_space<vmem>>, vector<1x8x32xf32>
    %660 = vector.shape_cast %659 : vector<1x8x32xf32> to vector<8x32xf32>
    %c3_271 = arith.constant 3 : index
    %c0_272 = arith.constant 0 : index
    %c0_273 = arith.constant 0 : index
    %661 = vector.load %arg3[%c3_271, %c0_272, %c0_273] : memref<8x8x16xf32, #tpu.memory_space<vmem>>, vector<1x8x16xf32>
    %662 = vector.shape_cast %661 : vector<1x8x16xf32> to vector<8x16xf32>
    %c3_274 = arith.constant 3 : index
    %c0_275 = arith.constant 0 : index
    %c0_276 = arith.constant 0 : index
    %663 = vector.load %arg4[%c3_274, %c0_275, %c0_276] : memref<8x8x16xf32, #tpu.memory_space<vmem>>, vector<1x8x16xf32>
    %664 = vector.shape_cast %663 : vector<1x8x16xf32> to vector<8x16xf32>
    %cst_277 = arith.constant dense<0.000000e+00> : vector<8x32xf32>
    %665 = tpu.matmul %658, %0, %cst_277 {dimension_numbers = #tpu.dot_dimension_numbers<[1], [0], [0], [1], [0, 0, 1, 1], [], []>} : vector<8x8xf32>, vector<8x32xf32>, vector<8x32xf32> -> vector<8x32xf32>
    %cst_278 = arith.constant dense<0.000000e+00> : vector<8x32xf32>
    %666 = tpu.matmul %652, %1, %cst_278 {dimension_numbers = #tpu.dot_dimension_numbers<[1], [0], [0], [1], [0, 0, 1, 1], [], []>} : vector<8x16xf32>, vector<16x32xf32>, vector<8x32xf32> -> vector<8x32xf32>
    %667 = arith.addf %665, %666 : vector<8x32xf32>
    %668 = arith.addf %667, %2 : vector<8x32xf32>
    %cst_279 = arith.constant 0.000000e+00 : f32
    %669 = vector.broadcast %cst_279 : f32 to vector<8x32xf32>
    %670 = arith.cmpf ogt, %668, %669 : vector<8x32xf32>
    %cst_280 = arith.constant 0.000000e+00 : f32
    %671 = vector.broadcast %cst_280 : f32 to vector<8x32xf32>
    %672 = arith.minimumf %668, %671 : vector<8x32xf32>
    %673 = math.exp %672 : vector<8x32xf32>
    %cst_281 = arith.constant 1.000000e+00 : f32
    %674 = vector.broadcast %cst_281 : f32 to vector<8x32xf32>
    %675 = arith.subf %673, %674 : vector<8x32xf32>
    %676 = arith.select %670, %668, %675 : vector<8x32xi1>, vector<8x32xf32>
    %cst_282 = arith.constant dense<0.000000e+00> : vector<8x96xf32>
    %677 = tpu.matmul %676, %3, %cst_282 {dimension_numbers = #tpu.dot_dimension_numbers<[1], [0], [0], [1], [0, 0, 1, 1], [], []>} : vector<8x32xf32>, vector<32x96xf32>, vector<8x96xf32> -> vector<8x96xf32>
    %678 = arith.addf %677, %5 : vector<8x96xf32>
    %cst_283 = arith.constant dense<0.000000e+00> : vector<8x96xf32>
    %679 = tpu.matmul %519, %4, %cst_283 {dimension_numbers = #tpu.dot_dimension_numbers<[1], [0], [0], [1], [0, 0, 1, 1], [], []>} : vector<8x32xf32>, vector<32x96xf32>, vector<8x96xf32> -> vector<8x96xf32>
    %680 = arith.addf %679, %6 : vector<8x96xf32>
    %681 = vector.extract_strided_slice %678 {offsets = [0, 0], sizes = [8, 32], strides = [1, 1]} : vector<8x96xf32> to vector<8x32xf32>
    %682 = vector.extract_strided_slice %680 {offsets = [0, 0], sizes = [8, 32], strides = [1, 1]} : vector<8x96xf32> to vector<8x32xf32>
    %683 = arith.addf %681, %682 : vector<8x32xf32>
    %cst_284 = arith.constant 0.000000e+00 : f32
    %684 = vector.broadcast %cst_284 : f32 to vector<8x32xf32>
    %685 = arith.subf %684, %683 : vector<8x32xf32>
    %686 = math.exp %685 : vector<8x32xf32>
    %cst_285 = arith.constant 1.000000e+00 : f32
    %687 = vector.broadcast %cst_285 : f32 to vector<8x32xf32>
    %688 = arith.addf %687, %686 : vector<8x32xf32>
    %cst_286 = arith.constant 1.000000e+00 : f32
    %689 = vector.broadcast %cst_286 : f32 to vector<8x32xf32>
    %690 = arith.divf %689, %688 : vector<8x32xf32>
    %691 = vector.extract_strided_slice %678 {offsets = [0, 32], sizes = [8, 32], strides = [1, 1]} : vector<8x96xf32> to vector<8x32xf32>
    %692 = vector.extract_strided_slice %680 {offsets = [0, 32], sizes = [8, 32], strides = [1, 1]} : vector<8x96xf32> to vector<8x32xf32>
    %693 = arith.addf %691, %692 : vector<8x32xf32>
    %cst_287 = arith.constant 0.000000e+00 : f32
    %694 = vector.broadcast %cst_287 : f32 to vector<8x32xf32>
    %695 = arith.subf %694, %693 : vector<8x32xf32>
    %696 = math.exp %695 : vector<8x32xf32>
    %cst_288 = arith.constant 1.000000e+00 : f32
    %697 = vector.broadcast %cst_288 : f32 to vector<8x32xf32>
    %698 = arith.addf %697, %696 : vector<8x32xf32>
    %cst_289 = arith.constant 1.000000e+00 : f32
    %699 = vector.broadcast %cst_289 : f32 to vector<8x32xf32>
    %700 = arith.divf %699, %698 : vector<8x32xf32>
    %701 = vector.extract_strided_slice %678 {offsets = [0, 64], sizes = [8, 32], strides = [1, 1]} : vector<8x96xf32> to vector<8x32xf32>
    %702 = vector.extract_strided_slice %680 {offsets = [0, 64], sizes = [8, 32], strides = [1, 1]} : vector<8x96xf32> to vector<8x32xf32>
    %703 = arith.mulf %690, %702 : vector<8x32xf32>
    %704 = arith.addf %701, %703 : vector<8x32xf32>
    %705 = math.tanh %704 : vector<8x32xf32>
    %cst_290 = arith.constant 1.000000e+00 : f32
    %706 = vector.broadcast %cst_290 : f32 to vector<8x32xf32>
    %707 = arith.subf %706, %700 : vector<8x32xf32>
    %708 = arith.mulf %707, %705 : vector<8x32xf32>
    %709 = arith.mulf %700, %519 : vector<8x32xf32>
    %710 = arith.addf %708, %709 : vector<8x32xf32>
    %cst_291 = arith.constant dense<0.000000e+00> : vector<8xf32>
    %711 = vector.multi_reduction <add>, %710, %cst_291 [1] : vector<8x32xf32> to vector<8xf32>
    %712 = vector.shape_cast %711 : vector<8xf32> to vector<8x1xf32>
    %cst_292 = arith.constant 3.200000e+01 : f32
    %713 = vector.broadcast %cst_292 : f32 to vector<8x1xf32>
    %714 = arith.divf %712, %713 : vector<8x1xf32>
    %715 = vector.broadcast %714 : vector<8x1xf32> to vector<8x32xf32>
    %716 = arith.subf %710, %715 : vector<8x32xf32>
    %717 = arith.mulf %716, %716 : vector<8x32xf32>
    %cst_293 = arith.constant dense<0.000000e+00> : vector<8xf32>
    %718 = vector.multi_reduction <add>, %717, %cst_293 [1] : vector<8x32xf32> to vector<8xf32>
    %719 = vector.shape_cast %718 : vector<8xf32> to vector<8x1xf32>
    %cst_294 = arith.constant 3.200000e+01 : f32
    %720 = vector.broadcast %cst_294 : f32 to vector<8x1xf32>
    %721 = arith.divf %719, %720 : vector<8x1xf32>
    %cst_295 = arith.constant 9.99999974E-6 : f32
    %722 = vector.broadcast %cst_295 : f32 to vector<8x1xf32>
    %723 = arith.addf %721, %722 : vector<8x1xf32>
    %724 = math.rsqrt %723 : vector<8x1xf32>
    %725 = vector.broadcast %724 : vector<8x1xf32> to vector<8x32xf32>
    %726 = arith.mulf %716, %725 : vector<8x32xf32>
    %727 = arith.mulf %726, %7 : vector<8x32xf32>
    %728 = arith.addf %727, %8 : vector<8x32xf32>
    %cst_296 = arith.constant dense<0.000000e+00> : vector<8x64xf32>
    %729 = tpu.matmul %728, %9, %cst_296 {dimension_numbers = #tpu.dot_dimension_numbers<[1], [0], [0], [1], [0, 0, 1, 1], [], []>} : vector<8x32xf32>, vector<32x64xf32>, vector<8x64xf32> -> vector<8x64xf32>
    %730 = vector.extract_strided_slice %729 {offsets = [0, 0], sizes = [8, 32], strides = [1, 1]} : vector<8x64xf32> to vector<8x32xf32>
    %731 = arith.addf %730, %11 : vector<8x32xf32>
    %cst_297 = arith.constant 0.000000e+00 : f32
    %732 = vector.broadcast %cst_297 : f32 to vector<8x32xf32>
    %733 = arith.cmpf ogt, %731, %732 : vector<8x32xf32>
    %cst_298 = arith.constant 0.000000e+00 : f32
    %734 = vector.broadcast %cst_298 : f32 to vector<8x32xf32>
    %735 = arith.minimumf %731, %734 : vector<8x32xf32>
    %736 = math.exp %735 : vector<8x32xf32>
    %cst_299 = arith.constant 1.000000e+00 : f32
    %737 = vector.broadcast %cst_299 : f32 to vector<8x32xf32>
    %738 = arith.subf %736, %737 : vector<8x32xf32>
    %739 = arith.select %733, %731, %738 : vector<8x32xi1>, vector<8x32xf32>
    %cst_300 = arith.constant dense<0.000000e+00> : vector<8xf32>
    %740 = vector.multi_reduction <add>, %739, %cst_300 [1] : vector<8x32xf32> to vector<8xf32>
    %741 = vector.shape_cast %740 : vector<8xf32> to vector<8x1xf32>
    %cst_301 = arith.constant 3.200000e+01 : f32
    %742 = vector.broadcast %cst_301 : f32 to vector<8x1xf32>
    %743 = arith.divf %741, %742 : vector<8x1xf32>
    %744 = vector.broadcast %743 : vector<8x1xf32> to vector<8x32xf32>
    %745 = arith.subf %739, %744 : vector<8x32xf32>
    %746 = arith.mulf %745, %745 : vector<8x32xf32>
    %cst_302 = arith.constant dense<0.000000e+00> : vector<8xf32>
    %747 = vector.multi_reduction <add>, %746, %cst_302 [1] : vector<8x32xf32> to vector<8xf32>
    %748 = vector.shape_cast %747 : vector<8xf32> to vector<8x1xf32>
    %cst_303 = arith.constant 3.200000e+01 : f32
    %749 = vector.broadcast %cst_303 : f32 to vector<8x1xf32>
    %750 = arith.divf %748, %749 : vector<8x1xf32>
    %cst_304 = arith.constant 9.99999974E-6 : f32
    %751 = vector.broadcast %cst_304 : f32 to vector<8x1xf32>
    %752 = arith.addf %750, %751 : vector<8x1xf32>
    %753 = math.rsqrt %752 : vector<8x1xf32>
    %754 = vector.broadcast %753 : vector<8x1xf32> to vector<8x32xf32>
    %755 = arith.mulf %745, %754 : vector<8x32xf32>
    %756 = arith.mulf %755, %13 : vector<8x32xf32>
    %757 = arith.addf %756, %14 : vector<8x32xf32>
    %758 = vector.extract_strided_slice %729 {offsets = [0, 32], sizes = [8, 32], strides = [1, 1]} : vector<8x64xf32> to vector<8x32xf32>
    %cst_305 = arith.constant dense<0.000000e+00> : vector<8x32xf32>
    %759 = tpu.matmul %660, %10, %cst_305 {dimension_numbers = #tpu.dot_dimension_numbers<[1], [0], [0], [1], [0, 0, 1, 1], [], []>} : vector<8x32xf32>, vector<32x32xf32>, vector<8x32xf32> -> vector<8x32xf32>
    %760 = arith.addf %758, %759 : vector<8x32xf32>
    %761 = arith.addf %760, %12 : vector<8x32xf32>
    %cst_306 = arith.constant 0.000000e+00 : f32
    %762 = vector.broadcast %cst_306 : f32 to vector<8x32xf32>
    %763 = arith.cmpf ogt, %761, %762 : vector<8x32xf32>
    %cst_307 = arith.constant 0.000000e+00 : f32
    %764 = vector.broadcast %cst_307 : f32 to vector<8x32xf32>
    %765 = arith.minimumf %761, %764 : vector<8x32xf32>
    %766 = math.exp %765 : vector<8x32xf32>
    %cst_308 = arith.constant 1.000000e+00 : f32
    %767 = vector.broadcast %cst_308 : f32 to vector<8x32xf32>
    %768 = arith.subf %766, %767 : vector<8x32xf32>
    %769 = arith.select %763, %761, %768 : vector<8x32xi1>, vector<8x32xf32>
    %cst_309 = arith.constant dense<0.000000e+00> : vector<8xf32>
    %770 = vector.multi_reduction <add>, %769, %cst_309 [1] : vector<8x32xf32> to vector<8xf32>
    %771 = vector.shape_cast %770 : vector<8xf32> to vector<8x1xf32>
    %cst_310 = arith.constant 3.200000e+01 : f32
    %772 = vector.broadcast %cst_310 : f32 to vector<8x1xf32>
    %773 = arith.divf %771, %772 : vector<8x1xf32>
    %774 = vector.broadcast %773 : vector<8x1xf32> to vector<8x32xf32>
    %775 = arith.subf %769, %774 : vector<8x32xf32>
    %776 = arith.mulf %775, %775 : vector<8x32xf32>
    %cst_311 = arith.constant dense<0.000000e+00> : vector<8xf32>
    %777 = vector.multi_reduction <add>, %776, %cst_311 [1] : vector<8x32xf32> to vector<8xf32>
    %778 = vector.shape_cast %777 : vector<8xf32> to vector<8x1xf32>
    %cst_312 = arith.constant 3.200000e+01 : f32
    %779 = vector.broadcast %cst_312 : f32 to vector<8x1xf32>
    %780 = arith.divf %778, %779 : vector<8x1xf32>
    %cst_313 = arith.constant 9.99999974E-6 : f32
    %781 = vector.broadcast %cst_313 : f32 to vector<8x1xf32>
    %782 = arith.addf %780, %781 : vector<8x1xf32>
    %783 = math.rsqrt %782 : vector<8x1xf32>
    %784 = vector.broadcast %783 : vector<8x1xf32> to vector<8x32xf32>
    %785 = arith.mulf %775, %784 : vector<8x32xf32>
    %786 = arith.mulf %785, %15 : vector<8x32xf32>
    %787 = arith.addf %786, %16 : vector<8x32xf32>
    %cst_314 = arith.constant dense<0.000000e+00> : vector<8x32xf32>
    %788 = tpu.matmul %757, %17, %cst_314 {dimension_numbers = #tpu.dot_dimension_numbers<[1], [0], [0], [1], [0, 0, 1, 1], [], []>} : vector<8x32xf32>, vector<32x32xf32>, vector<8x32xf32> -> vector<8x32xf32>
    %789 = arith.addf %788, %18 : vector<8x32xf32>
    %cst_315 = arith.constant 0.000000e+00 : f32
    %790 = vector.broadcast %cst_315 : f32 to vector<8x32xf32>
    %791 = arith.maximumf %789, %790 : vector<8x32xf32>
    %792 = math.absf %789 : vector<8x32xf32>
    %cst_316 = arith.constant 0.000000e+00 : f32
    %793 = vector.broadcast %cst_316 : f32 to vector<8x32xf32>
    %794 = arith.subf %793, %792 : vector<8x32xf32>
    %795 = math.exp %794 : vector<8x32xf32>
    %cst_317 = arith.constant 1.000000e+00 : f32
    %796 = vector.broadcast %cst_317 : f32 to vector<8x32xf32>
    %797 = arith.addf %796, %795 : vector<8x32xf32>
    %798 = math.log %797 : vector<8x32xf32>
    %799 = arith.addf %791, %798 : vector<8x32xf32>
    %cst_318 = arith.constant 1.000000e-01 : f32
    %800 = vector.broadcast %cst_318 : f32 to vector<8x32xf32>
    %801 = arith.addf %799, %800 : vector<8x32xf32>
    %802 = arith.select %27, %789, %801 : vector<8x32xi1>, vector<8x32xf32>
    %803 = vector.extract_strided_slice %789 {offsets = [0, 0], sizes = [8, 16], strides = [1, 1]} : vector<8x32xf32> to vector<8x16xf32>
    %804 = vector.extract_strided_slice %801 {offsets = [0, 16], sizes = [8, 16], strides = [1, 1]} : vector<8x32xf32> to vector<8x16xf32>
    %805 = arith.mulf %804, %662 : vector<8x16xf32>
    %806 = arith.addf %803, %805 : vector<8x16xf32>
    %cst_319 = arith.constant dense<0.000000e+00> : vector<8xf32>
    %807 = vector.multi_reduction <add>, %806, %cst_319 [1] : vector<8x16xf32> to vector<8xf32>
    %808 = vector.shape_cast %807 : vector<8xf32> to vector<8x1xf32>
    %cst_320 = arith.constant 1.600000e+01 : f32
    %809 = vector.broadcast %cst_320 : f32 to vector<8x1xf32>
    %810 = arith.divf %808, %809 : vector<8x1xf32>
    %811 = vector.broadcast %810 : vector<8x1xf32> to vector<8x16xf32>
    %812 = arith.subf %806, %811 : vector<8x16xf32>
    %813 = arith.mulf %812, %812 : vector<8x16xf32>
    %cst_321 = arith.constant dense<0.000000e+00> : vector<8xf32>
    %814 = vector.multi_reduction <add>, %813, %cst_321 [1] : vector<8x16xf32> to vector<8xf32>
    %815 = vector.shape_cast %814 : vector<8xf32> to vector<8x1xf32>
    %cst_322 = arith.constant 1.600000e+01 : f32
    %816 = vector.broadcast %cst_322 : f32 to vector<8x1xf32>
    %817 = arith.divf %815, %816 : vector<8x1xf32>
    %cst_323 = arith.constant 9.99999974E-6 : f32
    %818 = vector.broadcast %cst_323 : f32 to vector<8x1xf32>
    %819 = arith.addf %817, %818 : vector<8x1xf32>
    %820 = math.rsqrt %819 : vector<8x1xf32>
    %821 = vector.broadcast %820 : vector<8x1xf32> to vector<8x16xf32>
    %822 = arith.mulf %812, %821 : vector<8x16xf32>
    %823 = arith.mulf %822, %21 : vector<8x16xf32>
    %824 = arith.addf %823, %22 : vector<8x16xf32>
    %cst_324 = arith.constant dense<0.000000e+00> : vector<8x32xf32>
    %825 = tpu.matmul %787, %19, %cst_324 {dimension_numbers = #tpu.dot_dimension_numbers<[1], [0], [0], [1], [0, 0, 1, 1], [], []>} : vector<8x32xf32>, vector<32x32xf32>, vector<8x32xf32> -> vector<8x32xf32>
    %826 = arith.addf %825, %20 : vector<8x32xf32>
    %cst_325 = arith.constant 0.000000e+00 : f32
    %827 = vector.broadcast %cst_325 : f32 to vector<8x32xf32>
    %828 = arith.maximumf %826, %827 : vector<8x32xf32>
    %829 = math.absf %826 : vector<8x32xf32>
    %cst_326 = arith.constant 0.000000e+00 : f32
    %830 = vector.broadcast %cst_326 : f32 to vector<8x32xf32>
    %831 = arith.subf %830, %829 : vector<8x32xf32>
    %832 = math.exp %831 : vector<8x32xf32>
    %cst_327 = arith.constant 1.000000e+00 : f32
    %833 = vector.broadcast %cst_327 : f32 to vector<8x32xf32>
    %834 = arith.addf %833, %832 : vector<8x32xf32>
    %835 = math.log %834 : vector<8x32xf32>
    %836 = arith.addf %828, %835 : vector<8x32xf32>
    %cst_328 = arith.constant 1.000000e-01 : f32
    %837 = vector.broadcast %cst_328 : f32 to vector<8x32xf32>
    %838 = arith.addf %836, %837 : vector<8x32xf32>
    %839 = arith.select %27, %826, %838 : vector<8x32xi1>, vector<8x32xf32>
    %840 = vector.extract_strided_slice %826 {offsets = [0, 0], sizes = [8, 16], strides = [1, 1]} : vector<8x32xf32> to vector<8x16xf32>
    %841 = vector.extract_strided_slice %838 {offsets = [0, 16], sizes = [8, 16], strides = [1, 1]} : vector<8x32xf32> to vector<8x16xf32>
    %842 = arith.mulf %841, %664 : vector<8x16xf32>
    %843 = arith.addf %840, %842 : vector<8x16xf32>
    %cst_329 = arith.constant dense<0.000000e+00> : vector<8xf32>
    %844 = vector.multi_reduction <add>, %843, %cst_329 [1] : vector<8x16xf32> to vector<8xf32>
    %845 = vector.shape_cast %844 : vector<8xf32> to vector<8x1xf32>
    %cst_330 = arith.constant 1.600000e+01 : f32
    %846 = vector.broadcast %cst_330 : f32 to vector<8x1xf32>
    %847 = arith.divf %845, %846 : vector<8x1xf32>
    %848 = vector.broadcast %847 : vector<8x1xf32> to vector<8x16xf32>
    %849 = arith.subf %843, %848 : vector<8x16xf32>
    %850 = arith.mulf %849, %849 : vector<8x16xf32>
    %cst_331 = arith.constant dense<0.000000e+00> : vector<8xf32>
    %851 = vector.multi_reduction <add>, %850, %cst_331 [1] : vector<8x16xf32> to vector<8xf32>
    %852 = vector.shape_cast %851 : vector<8xf32> to vector<8x1xf32>
    %cst_332 = arith.constant 1.600000e+01 : f32
    %853 = vector.broadcast %cst_332 : f32 to vector<8x1xf32>
    %854 = arith.divf %852, %853 : vector<8x1xf32>
    %cst_333 = arith.constant 9.99999974E-6 : f32
    %855 = vector.broadcast %cst_333 : f32 to vector<8x1xf32>
    %856 = arith.addf %854, %855 : vector<8x1xf32>
    %857 = math.rsqrt %856 : vector<8x1xf32>
    %858 = vector.broadcast %857 : vector<8x1xf32> to vector<8x16xf32>
    %859 = arith.mulf %849, %858 : vector<8x16xf32>
    %860 = arith.mulf %859, %23 : vector<8x16xf32>
    %861 = arith.addf %860, %24 : vector<8x16xf32>
    %862 = tpu.concatenate %802, %824, %839, %861, %728 in 1 : vector<8x32xf32>, vector<8x16xf32>, vector<8x32xf32>, vector<8x16xf32>, vector<8x32xf32> -> vector<8x128xf32>
    %c3_334 = arith.constant 3 : index
    %c0_335 = arith.constant 0 : index
    %c0_336 = arith.constant 0 : index
    %863 = vector.load %arg32[%c3_334, %c0_335, %c0_336] : memref<8x8x128xf32, #tpu.memory_space<vmem>>, vector<1x8x128xf32>
    %864 = vector.shape_cast %863 : vector<1x8x128xf32> to vector<8x128xf32>
    %865 = vector.shape_cast %862 : vector<8x128xf32> to vector<1x8x128xf32>
    tpu.vector_store %arg32[%c3_334, %c0_335, %c0_336], %865 {strides = array<i32>} : memref<8x8x128xf32, #tpu.memory_space<vmem>>, vector<1x8x128xf32>,
    %c4 = arith.constant 4 : index
    %c0_337 = arith.constant 0 : index
    %c0_338 = arith.constant 0 : index
    %866 = vector.load %arg1[%c4, %c0_337, %c0_338] : memref<8x8x8xf32, #tpu.memory_space<vmem>>, vector<1x8x8xf32>
    %867 = vector.shape_cast %866 : vector<1x8x8xf32> to vector<8x8xf32>
    %c4_339 = arith.constant 4 : index
    %c0_340 = arith.constant 0 : index
    %c0_341 = arith.constant 0 : index
    %868 = vector.load %arg2[%c4_339, %c0_340, %c0_341] : memref<8x8x32xf32, #tpu.memory_space<vmem>>, vector<1x8x32xf32>
    %869 = vector.shape_cast %868 : vector<1x8x32xf32> to vector<8x32xf32>
    %c4_342 = arith.constant 4 : index
    %c0_343 = arith.constant 0 : index
    %c0_344 = arith.constant 0 : index
    %870 = vector.load %arg3[%c4_342, %c0_343, %c0_344] : memref<8x8x16xf32, #tpu.memory_space<vmem>>, vector<1x8x16xf32>
    %871 = vector.shape_cast %870 : vector<1x8x16xf32> to vector<8x16xf32>
    %c4_345 = arith.constant 4 : index
    %c0_346 = arith.constant 0 : index
    %c0_347 = arith.constant 0 : index
    %872 = vector.load %arg4[%c4_345, %c0_346, %c0_347] : memref<8x8x16xf32, #tpu.memory_space<vmem>>, vector<1x8x16xf32>
    %873 = vector.shape_cast %872 : vector<1x8x16xf32> to vector<8x16xf32>
    %cst_348 = arith.constant dense<0.000000e+00> : vector<8x32xf32>
    %874 = tpu.matmul %867, %0, %cst_348 {dimension_numbers = #tpu.dot_dimension_numbers<[1], [0], [0], [1], [0, 0, 1, 1], [], []>} : vector<8x8xf32>, vector<8x32xf32>, vector<8x32xf32> -> vector<8x32xf32>
    %cst_349 = arith.constant dense<0.000000e+00> : vector<8x32xf32>
    %875 = tpu.matmul %861, %1, %cst_349 {dimension_numbers = #tpu.dot_dimension_numbers<[1], [0], [0], [1], [0, 0, 1, 1], [], []>} : vector<8x16xf32>, vector<16x32xf32>, vector<8x32xf32> -> vector<8x32xf32>
    %876 = arith.addf %874, %875 : vector<8x32xf32>
    %877 = arith.addf %876, %2 : vector<8x32xf32>
    %cst_350 = arith.constant 0.000000e+00 : f32
    %878 = vector.broadcast %cst_350 : f32 to vector<8x32xf32>
    %879 = arith.cmpf ogt, %877, %878 : vector<8x32xf32>
    %cst_351 = arith.constant 0.000000e+00 : f32
    %880 = vector.broadcast %cst_351 : f32 to vector<8x32xf32>
    %881 = arith.minimumf %877, %880 : vector<8x32xf32>
    %882 = math.exp %881 : vector<8x32xf32>
    %cst_352 = arith.constant 1.000000e+00 : f32
    %883 = vector.broadcast %cst_352 : f32 to vector<8x32xf32>
    %884 = arith.subf %882, %883 : vector<8x32xf32>
    %885 = arith.select %879, %877, %884 : vector<8x32xi1>, vector<8x32xf32>
    %cst_353 = arith.constant dense<0.000000e+00> : vector<8x96xf32>
    %886 = tpu.matmul %885, %3, %cst_353 {dimension_numbers = #tpu.dot_dimension_numbers<[1], [0], [0], [1], [0, 0, 1, 1], [], []>} : vector<8x32xf32>, vector<32x96xf32>, vector<8x96xf32> -> vector<8x96xf32>
    %887 = arith.addf %886, %5 : vector<8x96xf32>
    %cst_354 = arith.constant dense<0.000000e+00> : vector<8x96xf32>
    %888 = tpu.matmul %728, %4, %cst_354 {dimension_numbers = #tpu.dot_dimension_numbers<[1], [0], [0], [1], [0, 0, 1, 1], [], []>} : vector<8x32xf32>, vector<32x96xf32>, vector<8x96xf32> -> vector<8x96xf32>
    %889 = arith.addf %888, %6 : vector<8x96xf32>
    %890 = vector.extract_strided_slice %887 {offsets = [0, 0], sizes = [8, 32], strides = [1, 1]} : vector<8x96xf32> to vector<8x32xf32>
    %891 = vector.extract_strided_slice %889 {offsets = [0, 0], sizes = [8, 32], strides = [1, 1]} : vector<8x96xf32> to vector<8x32xf32>
    %892 = arith.addf %890, %891 : vector<8x32xf32>
    %cst_355 = arith.constant 0.000000e+00 : f32
    %893 = vector.broadcast %cst_355 : f32 to vector<8x32xf32>
    %894 = arith.subf %893, %892 : vector<8x32xf32>
    %895 = math.exp %894 : vector<8x32xf32>
    %cst_356 = arith.constant 1.000000e+00 : f32
    %896 = vector.broadcast %cst_356 : f32 to vector<8x32xf32>
    %897 = arith.addf %896, %895 : vector<8x32xf32>
    %cst_357 = arith.constant 1.000000e+00 : f32
    %898 = vector.broadcast %cst_357 : f32 to vector<8x32xf32>
    %899 = arith.divf %898, %897 : vector<8x32xf32>
    %900 = vector.extract_strided_slice %887 {offsets = [0, 32], sizes = [8, 32], strides = [1, 1]} : vector<8x96xf32> to vector<8x32xf32>
    %901 = vector.extract_strided_slice %889 {offsets = [0, 32], sizes = [8, 32], strides = [1, 1]} : vector<8x96xf32> to vector<8x32xf32>
    %902 = arith.addf %900, %901 : vector<8x32xf32>
    %cst_358 = arith.constant 0.000000e+00 : f32
    %903 = vector.broadcast %cst_358 : f32 to vector<8x32xf32>
    %904 = arith.subf %903, %902 : vector<8x32xf32>
    %905 = math.exp %904 : vector<8x32xf32>
    %cst_359 = arith.constant 1.000000e+00 : f32
    %906 = vector.broadcast %cst_359 : f32 to vector<8x32xf32>
    %907 = arith.addf %906, %905 : vector<8x32xf32>
    %cst_360 = arith.constant 1.000000e+00 : f32
    %908 = vector.broadcast %cst_360 : f32 to vector<8x32xf32>
    %909 = arith.divf %908, %907 : vector<8x32xf32>
    %910 = vector.extract_strided_slice %887 {offsets = [0, 64], sizes = [8, 32], strides = [1, 1]} : vector<8x96xf32> to vector<8x32xf32>
    %911 = vector.extract_strided_slice %889 {offsets = [0, 64], sizes = [8, 32], strides = [1, 1]} : vector<8x96xf32> to vector<8x32xf32>
    %912 = arith.mulf %899, %911 : vector<8x32xf32>
    %913 = arith.addf %910, %912 : vector<8x32xf32>
    %914 = math.tanh %913 : vector<8x32xf32>
    %cst_361 = arith.constant 1.000000e+00 : f32
    %915 = vector.broadcast %cst_361 : f32 to vector<8x32xf32>
    %916 = arith.subf %915, %909 : vector<8x32xf32>
    %917 = arith.mulf %916, %914 : vector<8x32xf32>
    %918 = arith.mulf %909, %728 : vector<8x32xf32>
    %919 = arith.addf %917, %918 : vector<8x32xf32>
    %cst_362 = arith.constant dense<0.000000e+00> : vector<8xf32>
    %920 = vector.multi_reduction <add>, %919, %cst_362 [1] : vector<8x32xf32> to vector<8xf32>
    %921 = vector.shape_cast %920 : vector<8xf32> to vector<8x1xf32>
    %cst_363 = arith.constant 3.200000e+01 : f32
    %922 = vector.broadcast %cst_363 : f32 to vector<8x1xf32>
    %923 = arith.divf %921, %922 : vector<8x1xf32>
    %924 = vector.broadcast %923 : vector<8x1xf32> to vector<8x32xf32>
    %925 = arith.subf %919, %924 : vector<8x32xf32>
    %926 = arith.mulf %925, %925 : vector<8x32xf32>
    %cst_364 = arith.constant dense<0.000000e+00> : vector<8xf32>
    %927 = vector.multi_reduction <add>, %926, %cst_364 [1] : vector<8x32xf32> to vector<8xf32>
    %928 = vector.shape_cast %927 : vector<8xf32> to vector<8x1xf32>
    %cst_365 = arith.constant 3.200000e+01 : f32
    %929 = vector.broadcast %cst_365 : f32 to vector<8x1xf32>
    %930 = arith.divf %928, %929 : vector<8x1xf32>
    %cst_366 = arith.constant 9.99999974E-6 : f32
    %931 = vector.broadcast %cst_366 : f32 to vector<8x1xf32>
    %932 = arith.addf %930, %931 : vector<8x1xf32>
    %933 = math.rsqrt %932 : vector<8x1xf32>
    %934 = vector.broadcast %933 : vector<8x1xf32> to vector<8x32xf32>
    %935 = arith.mulf %925, %934 : vector<8x32xf32>
    %936 = arith.mulf %935, %7 : vector<8x32xf32>
    %937 = arith.addf %936, %8 : vector<8x32xf32>
    %cst_367 = arith.constant dense<0.000000e+00> : vector<8x64xf32>
    %938 = tpu.matmul %937, %9, %cst_367 {dimension_numbers = #tpu.dot_dimension_numbers<[1], [0], [0], [1], [0, 0, 1, 1], [], []>} : vector<8x32xf32>, vector<32x64xf32>, vector<8x64xf32> -> vector<8x64xf32>
    %939 = vector.extract_strided_slice %938 {offsets = [0, 0], sizes = [8, 32], strides = [1, 1]} : vector<8x64xf32> to vector<8x32xf32>
    %940 = arith.addf %939, %11 : vector<8x32xf32>
    %cst_368 = arith.constant 0.000000e+00 : f32
    %941 = vector.broadcast %cst_368 : f32 to vector<8x32xf32>
    %942 = arith.cmpf ogt, %940, %941 : vector<8x32xf32>
    %cst_369 = arith.constant 0.000000e+00 : f32
    %943 = vector.broadcast %cst_369 : f32 to vector<8x32xf32>
    %944 = arith.minimumf %940, %943 : vector<8x32xf32>
    %945 = math.exp %944 : vector<8x32xf32>
    %cst_370 = arith.constant 1.000000e+00 : f32
    %946 = vector.broadcast %cst_370 : f32 to vector<8x32xf32>
    %947 = arith.subf %945, %946 : vector<8x32xf32>
    %948 = arith.select %942, %940, %947 : vector<8x32xi1>, vector<8x32xf32>
    %cst_371 = arith.constant dense<0.000000e+00> : vector<8xf32>
    %949 = vector.multi_reduction <add>, %948, %cst_371 [1] : vector<8x32xf32> to vector<8xf32>
    %950 = vector.shape_cast %949 : vector<8xf32> to vector<8x1xf32>
    %cst_372 = arith.constant 3.200000e+01 : f32
    %951 = vector.broadcast %cst_372 : f32 to vector<8x1xf32>
    %952 = arith.divf %950, %951 : vector<8x1xf32>
    %953 = vector.broadcast %952 : vector<8x1xf32> to vector<8x32xf32>
    %954 = arith.subf %948, %953 : vector<8x32xf32>
    %955 = arith.mulf %954, %954 : vector<8x32xf32>
    %cst_373 = arith.constant dense<0.000000e+00> : vector<8xf32>
    %956 = vector.multi_reduction <add>, %955, %cst_373 [1] : vector<8x32xf32> to vector<8xf32>
    %957 = vector.shape_cast %956 : vector<8xf32> to vector<8x1xf32>
    %cst_374 = arith.constant 3.200000e+01 : f32
    %958 = vector.broadcast %cst_374 : f32 to vector<8x1xf32>
    %959 = arith.divf %957, %958 : vector<8x1xf32>
    %cst_375 = arith.constant 9.99999974E-6 : f32
    %960 = vector.broadcast %cst_375 : f32 to vector<8x1xf32>
    %961 = arith.addf %959, %960 : vector<8x1xf32>
    %962 = math.rsqrt %961 : vector<8x1xf32>
    %963 = vector.broadcast %962 : vector<8x1xf32> to vector<8x32xf32>
    %964 = arith.mulf %954, %963 : vector<8x32xf32>
    %965 = arith.mulf %964, %13 : vector<8x32xf32>
    %966 = arith.addf %965, %14 : vector<8x32xf32>
    %967 = vector.extract_strided_slice %938 {offsets = [0, 32], sizes = [8, 32], strides = [1, 1]} : vector<8x64xf32> to vector<8x32xf32>
    %cst_376 = arith.constant dense<0.000000e+00> : vector<8x32xf32>
    %968 = tpu.matmul %869, %10, %cst_376 {dimension_numbers = #tpu.dot_dimension_numbers<[1], [0], [0], [1], [0, 0, 1, 1], [], []>} : vector<8x32xf32>, vector<32x32xf32>, vector<8x32xf32> -> vector<8x32xf32>
    %969 = arith.addf %967, %968 : vector<8x32xf32>
    %970 = arith.addf %969, %12 : vector<8x32xf32>
    %cst_377 = arith.constant 0.000000e+00 : f32
    %971 = vector.broadcast %cst_377 : f32 to vector<8x32xf32>
    %972 = arith.cmpf ogt, %970, %971 : vector<8x32xf32>
    %cst_378 = arith.constant 0.000000e+00 : f32
    %973 = vector.broadcast %cst_378 : f32 to vector<8x32xf32>
    %974 = arith.minimumf %970, %973 : vector<8x32xf32>
    %975 = math.exp %974 : vector<8x32xf32>
    %cst_379 = arith.constant 1.000000e+00 : f32
    %976 = vector.broadcast %cst_379 : f32 to vector<8x32xf32>
    %977 = arith.subf %975, %976 : vector<8x32xf32>
    %978 = arith.select %972, %970, %977 : vector<8x32xi1>, vector<8x32xf32>
    %cst_380 = arith.constant dense<0.000000e+00> : vector<8xf32>
    %979 = vector.multi_reduction <add>, %978, %cst_380 [1] : vector<8x32xf32> to vector<8xf32>
    %980 = vector.shape_cast %979 : vector<8xf32> to vector<8x1xf32>
    %cst_381 = arith.constant 3.200000e+01 : f32
    %981 = vector.broadcast %cst_381 : f32 to vector<8x1xf32>
    %982 = arith.divf %980, %981 : vector<8x1xf32>
    %983 = vector.broadcast %982 : vector<8x1xf32> to vector<8x32xf32>
    %984 = arith.subf %978, %983 : vector<8x32xf32>
    %985 = arith.mulf %984, %984 : vector<8x32xf32>
    %cst_382 = arith.constant dense<0.000000e+00> : vector<8xf32>
    %986 = vector.multi_reduction <add>, %985, %cst_382 [1] : vector<8x32xf32> to vector<8xf32>
    %987 = vector.shape_cast %986 : vector<8xf32> to vector<8x1xf32>
    %cst_383 = arith.constant 3.200000e+01 : f32
    %988 = vector.broadcast %cst_383 : f32 to vector<8x1xf32>
    %989 = arith.divf %987, %988 : vector<8x1xf32>
    %cst_384 = arith.constant 9.99999974E-6 : f32
    %990 = vector.broadcast %cst_384 : f32 to vector<8x1xf32>
    %991 = arith.addf %989, %990 : vector<8x1xf32>
    %992 = math.rsqrt %991 : vector<8x1xf32>
    %993 = vector.broadcast %992 : vector<8x1xf32> to vector<8x32xf32>
    %994 = arith.mulf %984, %993 : vector<8x32xf32>
    %995 = arith.mulf %994, %15 : vector<8x32xf32>
    %996 = arith.addf %995, %16 : vector<8x32xf32>
    %cst_385 = arith.constant dense<0.000000e+00> : vector<8x32xf32>
    %997 = tpu.matmul %966, %17, %cst_385 {dimension_numbers = #tpu.dot_dimension_numbers<[1], [0], [0], [1], [0, 0, 1, 1], [], []>} : vector<8x32xf32>, vector<32x32xf32>, vector<8x32xf32> -> vector<8x32xf32>
    %998 = arith.addf %997, %18 : vector<8x32xf32>
    %cst_386 = arith.constant 0.000000e+00 : f32
    %999 = vector.broadcast %cst_386 : f32 to vector<8x32xf32>
    %1000 = arith.maximumf %998, %999 : vector<8x32xf32>
    %1001 = math.absf %998 : vector<8x32xf32>
    %cst_387 = arith.constant 0.000000e+00 : f32
    %1002 = vector.broadcast %cst_387 : f32 to vector<8x32xf32>
    %1003 = arith.subf %1002, %1001 : vector<8x32xf32>
    %1004 = math.exp %1003 : vector<8x32xf32>
    %cst_388 = arith.constant 1.000000e+00 : f32
    %1005 = vector.broadcast %cst_388 : f32 to vector<8x32xf32>
    %1006 = arith.addf %1005, %1004 : vector<8x32xf32>
    %1007 = math.log %1006 : vector<8x32xf32>
    %1008 = arith.addf %1000, %1007 : vector<8x32xf32>
    %cst_389 = arith.constant 1.000000e-01 : f32
    %1009 = vector.broadcast %cst_389 : f32 to vector<8x32xf32>
    %1010 = arith.addf %1008, %1009 : vector<8x32xf32>
    %1011 = arith.select %27, %998, %1010 : vector<8x32xi1>, vector<8x32xf32>
    %1012 = vector.extract_strided_slice %998 {offsets = [0, 0], sizes = [8, 16], strides = [1, 1]} : vector<8x32xf32> to vector<8x16xf32>
    %1013 = vector.extract_strided_slice %1010 {offsets = [0, 16], sizes = [8, 16], strides = [1, 1]} : vector<8x32xf32> to vector<8x16xf32>
    %1014 = arith.mulf %1013, %871 : vector<8x16xf32>
    %1015 = arith.addf %1012, %1014 : vector<8x16xf32>
    %cst_390 = arith.constant dense<0.000000e+00> : vector<8xf32>
    %1016 = vector.multi_reduction <add>, %1015, %cst_390 [1] : vector<8x16xf32> to vector<8xf32>
    %1017 = vector.shape_cast %1016 : vector<8xf32> to vector<8x1xf32>
    %cst_391 = arith.constant 1.600000e+01 : f32
    %1018 = vector.broadcast %cst_391 : f32 to vector<8x1xf32>
    %1019 = arith.divf %1017, %1018 : vector<8x1xf32>
    %1020 = vector.broadcast %1019 : vector<8x1xf32> to vector<8x16xf32>
    %1021 = arith.subf %1015, %1020 : vector<8x16xf32>
    %1022 = arith.mulf %1021, %1021 : vector<8x16xf32>
    %cst_392 = arith.constant dense<0.000000e+00> : vector<8xf32>
    %1023 = vector.multi_reduction <add>, %1022, %cst_392 [1] : vector<8x16xf32> to vector<8xf32>
    %1024 = vector.shape_cast %1023 : vector<8xf32> to vector<8x1xf32>
    %cst_393 = arith.constant 1.600000e+01 : f32
    %1025 = vector.broadcast %cst_393 : f32 to vector<8x1xf32>
    %1026 = arith.divf %1024, %1025 : vector<8x1xf32>
    %cst_394 = arith.constant 9.99999974E-6 : f32
    %1027 = vector.broadcast %cst_394 : f32 to vector<8x1xf32>
    %1028 = arith.addf %1026, %1027 : vector<8x1xf32>
    %1029 = math.rsqrt %1028 : vector<8x1xf32>
    %1030 = vector.broadcast %1029 : vector<8x1xf32> to vector<8x16xf32>
    %1031 = arith.mulf %1021, %1030 : vector<8x16xf32>
    %1032 = arith.mulf %1031, %21 : vector<8x16xf32>
    %1033 = arith.addf %1032, %22 : vector<8x16xf32>
    %cst_395 = arith.constant dense<0.000000e+00> : vector<8x32xf32>
    %1034 = tpu.matmul %996, %19, %cst_395 {dimension_numbers = #tpu.dot_dimension_numbers<[1], [0], [0], [1], [0, 0, 1, 1], [], []>} : vector<8x32xf32>, vector<32x32xf32>, vector<8x32xf32> -> vector<8x32xf32>
    %1035 = arith.addf %1034, %20 : vector<8x32xf32>
    %cst_396 = arith.constant 0.000000e+00 : f32
    %1036 = vector.broadcast %cst_396 : f32 to vector<8x32xf32>
    %1037 = arith.maximumf %1035, %1036 : vector<8x32xf32>
    %1038 = math.absf %1035 : vector<8x32xf32>
    %cst_397 = arith.constant 0.000000e+00 : f32
    %1039 = vector.broadcast %cst_397 : f32 to vector<8x32xf32>
    %1040 = arith.subf %1039, %1038 : vector<8x32xf32>
    %1041 = math.exp %1040 : vector<8x32xf32>
    %cst_398 = arith.constant 1.000000e+00 : f32
    %1042 = vector.broadcast %cst_398 : f32 to vector<8x32xf32>
    %1043 = arith.addf %1042, %1041 : vector<8x32xf32>
    %1044 = math.log %1043 : vector<8x32xf32>
    %1045 = arith.addf %1037, %1044 : vector<8x32xf32>
    %cst_399 = arith.constant 1.000000e-01 : f32
    %1046 = vector.broadcast %cst_399 : f32 to vector<8x32xf32>
    %1047 = arith.addf %1045, %1046 : vector<8x32xf32>
    %1048 = arith.select %27, %1035, %1047 : vector<8x32xi1>, vector<8x32xf32>
    %1049 = vector.extract_strided_slice %1035 {offsets = [0, 0], sizes = [8, 16], strides = [1, 1]} : vector<8x32xf32> to vector<8x16xf32>
    %1050 = vector.extract_strided_slice %1047 {offsets = [0, 16], sizes = [8, 16], strides = [1, 1]} : vector<8x32xf32> to vector<8x16xf32>
    %1051 = arith.mulf %1050, %873 : vector<8x16xf32>
    %1052 = arith.addf %1049, %1051 : vector<8x16xf32>
    %cst_400 = arith.constant dense<0.000000e+00> : vector<8xf32>
    %1053 = vector.multi_reduction <add>, %1052, %cst_400 [1] : vector<8x16xf32> to vector<8xf32>
    %1054 = vector.shape_cast %1053 : vector<8xf32> to vector<8x1xf32>
    %cst_401 = arith.constant 1.600000e+01 : f32
    %1055 = vector.broadcast %cst_401 : f32 to vector<8x1xf32>
    %1056 = arith.divf %1054, %1055 : vector<8x1xf32>
    %1057 = vector.broadcast %1056 : vector<8x1xf32> to vector<8x16xf32>
    %1058 = arith.subf %1052, %1057 : vector<8x16xf32>
    %1059 = arith.mulf %1058, %1058 : vector<8x16xf32>
    %cst_402 = arith.constant dense<0.000000e+00> : vector<8xf32>
    %1060 = vector.multi_reduction <add>, %1059, %cst_402 [1] : vector<8x16xf32> to vector<8xf32>
    %1061 = vector.shape_cast %1060 : vector<8xf32> to vector<8x1xf32>
    %cst_403 = arith.constant 1.600000e+01 : f32
    %1062 = vector.broadcast %cst_403 : f32 to vector<8x1xf32>
    %1063 = arith.divf %1061, %1062 : vector<8x1xf32>
    %cst_404 = arith.constant 9.99999974E-6 : f32
    %1064 = vector.broadcast %cst_404 : f32 to vector<8x1xf32>
    %1065 = arith.addf %1063, %1064 : vector<8x1xf32>
    %1066 = math.rsqrt %1065 : vector<8x1xf32>
    %1067 = vector.broadcast %1066 : vector<8x1xf32> to vector<8x16xf32>
    %1068 = arith.mulf %1058, %1067 : vector<8x16xf32>
    %1069 = arith.mulf %1068, %23 : vector<8x16xf32>
    %1070 = arith.addf %1069, %24 : vector<8x16xf32>
    %1071 = tpu.concatenate %1011, %1033, %1048, %1070, %937 in 1 : vector<8x32xf32>, vector<8x16xf32>, vector<8x32xf32>, vector<8x16xf32>, vector<8x32xf32> -> vector<8x128xf32>
    %c4_405 = arith.constant 4 : index
    %c0_406 = arith.constant 0 : index
    %c0_407 = arith.constant 0 : index
    %1072 = vector.load %arg32[%c4_405, %c0_406, %c0_407] : memref<8x8x128xf32, #tpu.memory_space<vmem>>, vector<1x8x128xf32>
    %1073 = vector.shape_cast %1072 : vector<1x8x128xf32> to vector<8x128xf32>
    %1074 = vector.shape_cast %1071 : vector<8x128xf32> to vector<1x8x128xf32>
    tpu.vector_store %arg32[%c4_405, %c0_406, %c0_407], %1074 {strides = array<i32>} : memref<8x8x128xf32, #tpu.memory_space<vmem>>, vector<1x8x128xf32>,
    %c5 = arith.constant 5 : index
    %c0_408 = arith.constant 0 : index
    %c0_409 = arith.constant 0 : index
    %1075 = vector.load %arg1[%c5, %c0_408, %c0_409] : memref<8x8x8xf32, #tpu.memory_space<vmem>>, vector<1x8x8xf32>
    %1076 = vector.shape_cast %1075 : vector<1x8x8xf32> to vector<8x8xf32>
    %c5_410 = arith.constant 5 : index
    %c0_411 = arith.constant 0 : index
    %c0_412 = arith.constant 0 : index
    %1077 = vector.load %arg2[%c5_410, %c0_411, %c0_412] : memref<8x8x32xf32, #tpu.memory_space<vmem>>, vector<1x8x32xf32>
    %1078 = vector.shape_cast %1077 : vector<1x8x32xf32> to vector<8x32xf32>
    %c5_413 = arith.constant 5 : index
    %c0_414 = arith.constant 0 : index
    %c0_415 = arith.constant 0 : index
    %1079 = vector.load %arg3[%c5_413, %c0_414, %c0_415] : memref<8x8x16xf32, #tpu.memory_space<vmem>>, vector<1x8x16xf32>
    %1080 = vector.shape_cast %1079 : vector<1x8x16xf32> to vector<8x16xf32>
    %c5_416 = arith.constant 5 : index
    %c0_417 = arith.constant 0 : index
    %c0_418 = arith.constant 0 : index
    %1081 = vector.load %arg4[%c5_416, %c0_417, %c0_418] : memref<8x8x16xf32, #tpu.memory_space<vmem>>, vector<1x8x16xf32>
    %1082 = vector.shape_cast %1081 : vector<1x8x16xf32> to vector<8x16xf32>
    %cst_419 = arith.constant dense<0.000000e+00> : vector<8x32xf32>
    %1083 = tpu.matmul %1076, %0, %cst_419 {dimension_numbers = #tpu.dot_dimension_numbers<[1], [0], [0], [1], [0, 0, 1, 1], [], []>} : vector<8x8xf32>, vector<8x32xf32>, vector<8x32xf32> -> vector<8x32xf32>
    %cst_420 = arith.constant dense<0.000000e+00> : vector<8x32xf32>
    %1084 = tpu.matmul %1070, %1, %cst_420 {dimension_numbers = #tpu.dot_dimension_numbers<[1], [0], [0], [1], [0, 0, 1, 1], [], []>} : vector<8x16xf32>, vector<16x32xf32>, vector<8x32xf32> -> vector<8x32xf32>
    %1085 = arith.addf %1083, %1084 : vector<8x32xf32>
    %1086 = arith.addf %1085, %2 : vector<8x32xf32>
    %cst_421 = arith.constant 0.000000e+00 : f32
    %1087 = vector.broadcast %cst_421 : f32 to vector<8x32xf32>
    %1088 = arith.cmpf ogt, %1086, %1087 : vector<8x32xf32>
    %cst_422 = arith.constant 0.000000e+00 : f32
    %1089 = vector.broadcast %cst_422 : f32 to vector<8x32xf32>
    %1090 = arith.minimumf %1086, %1089 : vector<8x32xf32>
    %1091 = math.exp %1090 : vector<8x32xf32>
    %cst_423 = arith.constant 1.000000e+00 : f32
    %1092 = vector.broadcast %cst_423 : f32 to vector<8x32xf32>
    %1093 = arith.subf %1091, %1092 : vector<8x32xf32>
    %1094 = arith.select %1088, %1086, %1093 : vector<8x32xi1>, vector<8x32xf32>
    %cst_424 = arith.constant dense<0.000000e+00> : vector<8x96xf32>
    %1095 = tpu.matmul %1094, %3, %cst_424 {dimension_numbers = #tpu.dot_dimension_numbers<[1], [0], [0], [1], [0, 0, 1, 1], [], []>} : vector<8x32xf32>, vector<32x96xf32>, vector<8x96xf32> -> vector<8x96xf32>
    %1096 = arith.addf %1095, %5 : vector<8x96xf32>
    %cst_425 = arith.constant dense<0.000000e+00> : vector<8x96xf32>
    %1097 = tpu.matmul %937, %4, %cst_425 {dimension_numbers = #tpu.dot_dimension_numbers<[1], [0], [0], [1], [0, 0, 1, 1], [], []>} : vector<8x32xf32>, vector<32x96xf32>, vector<8x96xf32> -> vector<8x96xf32>
    %1098 = arith.addf %1097, %6 : vector<8x96xf32>
    %1099 = vector.extract_strided_slice %1096 {offsets = [0, 0], sizes = [8, 32], strides = [1, 1]} : vector<8x96xf32> to vector<8x32xf32>
    %1100 = vector.extract_strided_slice %1098 {offsets = [0, 0], sizes = [8, 32], strides = [1, 1]} : vector<8x96xf32> to vector<8x32xf32>
    %1101 = arith.addf %1099, %1100 : vector<8x32xf32>
    %cst_426 = arith.constant 0.000000e+00 : f32
    %1102 = vector.broadcast %cst_426 : f32 to vector<8x32xf32>
    %1103 = arith.subf %1102, %1101 : vector<8x32xf32>
    %1104 = math.exp %1103 : vector<8x32xf32>
    %cst_427 = arith.constant 1.000000e+00 : f32
    %1105 = vector.broadcast %cst_427 : f32 to vector<8x32xf32>
    %1106 = arith.addf %1105, %1104 : vector<8x32xf32>
    %cst_428 = arith.constant 1.000000e+00 : f32
    %1107 = vector.broadcast %cst_428 : f32 to vector<8x32xf32>
    %1108 = arith.divf %1107, %1106 : vector<8x32xf32>
    %1109 = vector.extract_strided_slice %1096 {offsets = [0, 32], sizes = [8, 32], strides = [1, 1]} : vector<8x96xf32> to vector<8x32xf32>
    %1110 = vector.extract_strided_slice %1098 {offsets = [0, 32], sizes = [8, 32], strides = [1, 1]} : vector<8x96xf32> to vector<8x32xf32>
    %1111 = arith.addf %1109, %1110 : vector<8x32xf32>
    %cst_429 = arith.constant 0.000000e+00 : f32
    %1112 = vector.broadcast %cst_429 : f32 to vector<8x32xf32>
    %1113 = arith.subf %1112, %1111 : vector<8x32xf32>
    %1114 = math.exp %1113 : vector<8x32xf32>
    %cst_430 = arith.constant 1.000000e+00 : f32
    %1115 = vector.broadcast %cst_430 : f32 to vector<8x32xf32>
    %1116 = arith.addf %1115, %1114 : vector<8x32xf32>
    %cst_431 = arith.constant 1.000000e+00 : f32
    %1117 = vector.broadcast %cst_431 : f32 to vector<8x32xf32>
    %1118 = arith.divf %1117, %1116 : vector<8x32xf32>
    %1119 = vector.extract_strided_slice %1096 {offsets = [0, 64], sizes = [8, 32], strides = [1, 1]} : vector<8x96xf32> to vector<8x32xf32>
    %1120 = vector.extract_strided_slice %1098 {offsets = [0, 64], sizes = [8, 32], strides = [1, 1]} : vector<8x96xf32> to vector<8x32xf32>
    %1121 = arith.mulf %1108, %1120 : vector<8x32xf32>
    %1122 = arith.addf %1119, %1121 : vector<8x32xf32>
    %1123 = math.tanh %1122 : vector<8x32xf32>
    %cst_432 = arith.constant 1.000000e+00 : f32
    %1124 = vector.broadcast %cst_432 : f32 to vector<8x32xf32>
    %1125 = arith.subf %1124, %1118 : vector<8x32xf32>
    %1126 = arith.mulf %1125, %1123 : vector<8x32xf32>
    %1127 = arith.mulf %1118, %937 : vector<8x32xf32>
    %1128 = arith.addf %1126, %1127 : vector<8x32xf32>
    %cst_433 = arith.constant dense<0.000000e+00> : vector<8xf32>
    %1129 = vector.multi_reduction <add>, %1128, %cst_433 [1] : vector<8x32xf32> to vector<8xf32>
    %1130 = vector.shape_cast %1129 : vector<8xf32> to vector<8x1xf32>
    %cst_434 = arith.constant 3.200000e+01 : f32
    %1131 = vector.broadcast %cst_434 : f32 to vector<8x1xf32>
    %1132 = arith.divf %1130, %1131 : vector<8x1xf32>
    %1133 = vector.broadcast %1132 : vector<8x1xf32> to vector<8x32xf32>
    %1134 = arith.subf %1128, %1133 : vector<8x32xf32>
    %1135 = arith.mulf %1134, %1134 : vector<8x32xf32>
    %cst_435 = arith.constant dense<0.000000e+00> : vector<8xf32>
    %1136 = vector.multi_reduction <add>, %1135, %cst_435 [1] : vector<8x32xf32> to vector<8xf32>
    %1137 = vector.shape_cast %1136 : vector<8xf32> to vector<8x1xf32>
    %cst_436 = arith.constant 3.200000e+01 : f32
    %1138 = vector.broadcast %cst_436 : f32 to vector<8x1xf32>
    %1139 = arith.divf %1137, %1138 : vector<8x1xf32>
    %cst_437 = arith.constant 9.99999974E-6 : f32
    %1140 = vector.broadcast %cst_437 : f32 to vector<8x1xf32>
    %1141 = arith.addf %1139, %1140 : vector<8x1xf32>
    %1142 = math.rsqrt %1141 : vector<8x1xf32>
    %1143 = vector.broadcast %1142 : vector<8x1xf32> to vector<8x32xf32>
    %1144 = arith.mulf %1134, %1143 : vector<8x32xf32>
    %1145 = arith.mulf %1144, %7 : vector<8x32xf32>
    %1146 = arith.addf %1145, %8 : vector<8x32xf32>
    %cst_438 = arith.constant dense<0.000000e+00> : vector<8x64xf32>
    %1147 = tpu.matmul %1146, %9, %cst_438 {dimension_numbers = #tpu.dot_dimension_numbers<[1], [0], [0], [1], [0, 0, 1, 1], [], []>} : vector<8x32xf32>, vector<32x64xf32>, vector<8x64xf32> -> vector<8x64xf32>
    %1148 = vector.extract_strided_slice %1147 {offsets = [0, 0], sizes = [8, 32], strides = [1, 1]} : vector<8x64xf32> to vector<8x32xf32>
    %1149 = arith.addf %1148, %11 : vector<8x32xf32>
    %cst_439 = arith.constant 0.000000e+00 : f32
    %1150 = vector.broadcast %cst_439 : f32 to vector<8x32xf32>
    %1151 = arith.cmpf ogt, %1149, %1150 : vector<8x32xf32>
    %cst_440 = arith.constant 0.000000e+00 : f32
    %1152 = vector.broadcast %cst_440 : f32 to vector<8x32xf32>
    %1153 = arith.minimumf %1149, %1152 : vector<8x32xf32>
    %1154 = math.exp %1153 : vector<8x32xf32>
    %cst_441 = arith.constant 1.000000e+00 : f32
    %1155 = vector.broadcast %cst_441 : f32 to vector<8x32xf32>
    %1156 = arith.subf %1154, %1155 : vector<8x32xf32>
    %1157 = arith.select %1151, %1149, %1156 : vector<8x32xi1>, vector<8x32xf32>
    %cst_442 = arith.constant dense<0.000000e+00> : vector<8xf32>
    %1158 = vector.multi_reduction <add>, %1157, %cst_442 [1] : vector<8x32xf32> to vector<8xf32>
    %1159 = vector.shape_cast %1158 : vector<8xf32> to vector<8x1xf32>
    %cst_443 = arith.constant 3.200000e+01 : f32
    %1160 = vector.broadcast %cst_443 : f32 to vector<8x1xf32>
    %1161 = arith.divf %1159, %1160 : vector<8x1xf32>
    %1162 = vector.broadcast %1161 : vector<8x1xf32> to vector<8x32xf32>
    %1163 = arith.subf %1157, %1162 : vector<8x32xf32>
    %1164 = arith.mulf %1163, %1163 : vector<8x32xf32>
    %cst_444 = arith.constant dense<0.000000e+00> : vector<8xf32>
    %1165 = vector.multi_reduction <add>, %1164, %cst_444 [1] : vector<8x32xf32> to vector<8xf32>
    %1166 = vector.shape_cast %1165 : vector<8xf32> to vector<8x1xf32>
    %cst_445 = arith.constant 3.200000e+01 : f32
    %1167 = vector.broadcast %cst_445 : f32 to vector<8x1xf32>
    %1168 = arith.divf %1166, %1167 : vector<8x1xf32>
    %cst_446 = arith.constant 9.99999974E-6 : f32
    %1169 = vector.broadcast %cst_446 : f32 to vector<8x1xf32>
    %1170 = arith.addf %1168, %1169 : vector<8x1xf32>
    %1171 = math.rsqrt %1170 : vector<8x1xf32>
    %1172 = vector.broadcast %1171 : vector<8x1xf32> to vector<8x32xf32>
    %1173 = arith.mulf %1163, %1172 : vector<8x32xf32>
    %1174 = arith.mulf %1173, %13 : vector<8x32xf32>
    %1175 = arith.addf %1174, %14 : vector<8x32xf32>
    %1176 = vector.extract_strided_slice %1147 {offsets = [0, 32], sizes = [8, 32], strides = [1, 1]} : vector<8x64xf32> to vector<8x32xf32>
    %cst_447 = arith.constant dense<0.000000e+00> : vector<8x32xf32>
    %1177 = tpu.matmul %1078, %10, %cst_447 {dimension_numbers = #tpu.dot_dimension_numbers<[1], [0], [0], [1], [0, 0, 1, 1], [], []>} : vector<8x32xf32>, vector<32x32xf32>, vector<8x32xf32> -> vector<8x32xf32>
    %1178 = arith.addf %1176, %1177 : vector<8x32xf32>
    %1179 = arith.addf %1178, %12 : vector<8x32xf32>
    %cst_448 = arith.constant 0.000000e+00 : f32
    %1180 = vector.broadcast %cst_448 : f32 to vector<8x32xf32>
    %1181 = arith.cmpf ogt, %1179, %1180 : vector<8x32xf32>
    %cst_449 = arith.constant 0.000000e+00 : f32
    %1182 = vector.broadcast %cst_449 : f32 to vector<8x32xf32>
    %1183 = arith.minimumf %1179, %1182 : vector<8x32xf32>
    %1184 = math.exp %1183 : vector<8x32xf32>
    %cst_450 = arith.constant 1.000000e+00 : f32
    %1185 = vector.broadcast %cst_450 : f32 to vector<8x32xf32>
    %1186 = arith.subf %1184, %1185 : vector<8x32xf32>
    %1187 = arith.select %1181, %1179, %1186 : vector<8x32xi1>, vector<8x32xf32>
    %cst_451 = arith.constant dense<0.000000e+00> : vector<8xf32>
    %1188 = vector.multi_reduction <add>, %1187, %cst_451 [1] : vector<8x32xf32> to vector<8xf32>
    %1189 = vector.shape_cast %1188 : vector<8xf32> to vector<8x1xf32>
    %cst_452 = arith.constant 3.200000e+01 : f32
    %1190 = vector.broadcast %cst_452 : f32 to vector<8x1xf32>
    %1191 = arith.divf %1189, %1190 : vector<8x1xf32>
    %1192 = vector.broadcast %1191 : vector<8x1xf32> to vector<8x32xf32>
    %1193 = arith.subf %1187, %1192 : vector<8x32xf32>
    %1194 = arith.mulf %1193, %1193 : vector<8x32xf32>
    %cst_453 = arith.constant dense<0.000000e+00> : vector<8xf32>
    %1195 = vector.multi_reduction <add>, %1194, %cst_453 [1] : vector<8x32xf32> to vector<8xf32>
    %1196 = vector.shape_cast %1195 : vector<8xf32> to vector<8x1xf32>
    %cst_454 = arith.constant 3.200000e+01 : f32
    %1197 = vector.broadcast %cst_454 : f32 to vector<8x1xf32>
    %1198 = arith.divf %1196, %1197 : vector<8x1xf32>
    %cst_455 = arith.constant 9.99999974E-6 : f32
    %1199 = vector.broadcast %cst_455 : f32 to vector<8x1xf32>
    %1200 = arith.addf %1198, %1199 : vector<8x1xf32>
    %1201 = math.rsqrt %1200 : vector<8x1xf32>
    %1202 = vector.broadcast %1201 : vector<8x1xf32> to vector<8x32xf32>
    %1203 = arith.mulf %1193, %1202 : vector<8x32xf32>
    %1204 = arith.mulf %1203, %15 : vector<8x32xf32>
    %1205 = arith.addf %1204, %16 : vector<8x32xf32>
    %cst_456 = arith.constant dense<0.000000e+00> : vector<8x32xf32>
    %1206 = tpu.matmul %1175, %17, %cst_456 {dimension_numbers = #tpu.dot_dimension_numbers<[1], [0], [0], [1], [0, 0, 1, 1], [], []>} : vector<8x32xf32>, vector<32x32xf32>, vector<8x32xf32> -> vector<8x32xf32>
    %1207 = arith.addf %1206, %18 : vector<8x32xf32>
    %cst_457 = arith.constant 0.000000e+00 : f32
    %1208 = vector.broadcast %cst_457 : f32 to vector<8x32xf32>
    %1209 = arith.maximumf %1207, %1208 : vector<8x32xf32>
    %1210 = math.absf %1207 : vector<8x32xf32>
    %cst_458 = arith.constant 0.000000e+00 : f32
    %1211 = vector.broadcast %cst_458 : f32 to vector<8x32xf32>
    %1212 = arith.subf %1211, %1210 : vector<8x32xf32>
    %1213 = math.exp %1212 : vector<8x32xf32>
    %cst_459 = arith.constant 1.000000e+00 : f32
    %1214 = vector.broadcast %cst_459 : f32 to vector<8x32xf32>
    %1215 = arith.addf %1214, %1213 : vector<8x32xf32>
    %1216 = math.log %1215 : vector<8x32xf32>
    %1217 = arith.addf %1209, %1216 : vector<8x32xf32>
    %cst_460 = arith.constant 1.000000e-01 : f32
    %1218 = vector.broadcast %cst_460 : f32 to vector<8x32xf32>
    %1219 = arith.addf %1217, %1218 : vector<8x32xf32>
    %1220 = arith.select %27, %1207, %1219 : vector<8x32xi1>, vector<8x32xf32>
    %1221 = vector.extract_strided_slice %1207 {offsets = [0, 0], sizes = [8, 16], strides = [1, 1]} : vector<8x32xf32> to vector<8x16xf32>
    %1222 = vector.extract_strided_slice %1219 {offsets = [0, 16], sizes = [8, 16], strides = [1, 1]} : vector<8x32xf32> to vector<8x16xf32>
    %1223 = arith.mulf %1222, %1080 : vector<8x16xf32>
    %1224 = arith.addf %1221, %1223 : vector<8x16xf32>
    %cst_461 = arith.constant dense<0.000000e+00> : vector<8xf32>
    %1225 = vector.multi_reduction <add>, %1224, %cst_461 [1] : vector<8x16xf32> to vector<8xf32>
    %1226 = vector.shape_cast %1225 : vector<8xf32> to vector<8x1xf32>
    %cst_462 = arith.constant 1.600000e+01 : f32
    %1227 = vector.broadcast %cst_462 : f32 to vector<8x1xf32>
    %1228 = arith.divf %1226, %1227 : vector<8x1xf32>
    %1229 = vector.broadcast %1228 : vector<8x1xf32> to vector<8x16xf32>
    %1230 = arith.subf %1224, %1229 : vector<8x16xf32>
    %1231 = arith.mulf %1230, %1230 : vector<8x16xf32>
    %cst_463 = arith.constant dense<0.000000e+00> : vector<8xf32>
    %1232 = vector.multi_reduction <add>, %1231, %cst_463 [1] : vector<8x16xf32> to vector<8xf32>
    %1233 = vector.shape_cast %1232 : vector<8xf32> to vector<8x1xf32>
    %cst_464 = arith.constant 1.600000e+01 : f32
    %1234 = vector.broadcast %cst_464 : f32 to vector<8x1xf32>
    %1235 = arith.divf %1233, %1234 : vector<8x1xf32>
    %cst_465 = arith.constant 9.99999974E-6 : f32
    %1236 = vector.broadcast %cst_465 : f32 to vector<8x1xf32>
    %1237 = arith.addf %1235, %1236 : vector<8x1xf32>
    %1238 = math.rsqrt %1237 : vector<8x1xf32>
    %1239 = vector.broadcast %1238 : vector<8x1xf32> to vector<8x16xf32>
    %1240 = arith.mulf %1230, %1239 : vector<8x16xf32>
    %1241 = arith.mulf %1240, %21 : vector<8x16xf32>
    %1242 = arith.addf %1241, %22 : vector<8x16xf32>
    %cst_466 = arith.constant dense<0.000000e+00> : vector<8x32xf32>
    %1243 = tpu.matmul %1205, %19, %cst_466 {dimension_numbers = #tpu.dot_dimension_numbers<[1], [0], [0], [1], [0, 0, 1, 1], [], []>} : vector<8x32xf32>, vector<32x32xf32>, vector<8x32xf32> -> vector<8x32xf32>
    %1244 = arith.addf %1243, %20 : vector<8x32xf32>
    %cst_467 = arith.constant 0.000000e+00 : f32
    %1245 = vector.broadcast %cst_467 : f32 to vector<8x32xf32>
    %1246 = arith.maximumf %1244, %1245 : vector<8x32xf32>
    %1247 = math.absf %1244 : vector<8x32xf32>
    %cst_468 = arith.constant 0.000000e+00 : f32
    %1248 = vector.broadcast %cst_468 : f32 to vector<8x32xf32>
    %1249 = arith.subf %1248, %1247 : vector<8x32xf32>
    %1250 = math.exp %1249 : vector<8x32xf32>
    %cst_469 = arith.constant 1.000000e+00 : f32
    %1251 = vector.broadcast %cst_469 : f32 to vector<8x32xf32>
    %1252 = arith.addf %1251, %1250 : vector<8x32xf32>
    %1253 = math.log %1252 : vector<8x32xf32>
    %1254 = arith.addf %1246, %1253 : vector<8x32xf32>
    %cst_470 = arith.constant 1.000000e-01 : f32
    %1255 = vector.broadcast %cst_470 : f32 to vector<8x32xf32>
    %1256 = arith.addf %1254, %1255 : vector<8x32xf32>
    %1257 = arith.select %27, %1244, %1256 : vector<8x32xi1>, vector<8x32xf32>
    %1258 = vector.extract_strided_slice %1244 {offsets = [0, 0], sizes = [8, 16], strides = [1, 1]} : vector<8x32xf32> to vector<8x16xf32>
    %1259 = vector.extract_strided_slice %1256 {offsets = [0, 16], sizes = [8, 16], strides = [1, 1]} : vector<8x32xf32> to vector<8x16xf32>
    %1260 = arith.mulf %1259, %1082 : vector<8x16xf32>
    %1261 = arith.addf %1258, %1260 : vector<8x16xf32>
    %cst_471 = arith.constant dense<0.000000e+00> : vector<8xf32>
    %1262 = vector.multi_reduction <add>, %1261, %cst_471 [1] : vector<8x16xf32> to vector<8xf32>
    %1263 = vector.shape_cast %1262 : vector<8xf32> to vector<8x1xf32>
    %cst_472 = arith.constant 1.600000e+01 : f32
    %1264 = vector.broadcast %cst_472 : f32 to vector<8x1xf32>
    %1265 = arith.divf %1263, %1264 : vector<8x1xf32>
    %1266 = vector.broadcast %1265 : vector<8x1xf32> to vector<8x16xf32>
    %1267 = arith.subf %1261, %1266 : vector<8x16xf32>
    %1268 = arith.mulf %1267, %1267 : vector<8x16xf32>
    %cst_473 = arith.constant dense<0.000000e+00> : vector<8xf32>
    %1269 = vector.multi_reduction <add>, %1268, %cst_473 [1] : vector<8x16xf32> to vector<8xf32>
    %1270 = vector.shape_cast %1269 : vector<8xf32> to vector<8x1xf32>
    %cst_474 = arith.constant 1.600000e+01 : f32
    %1271 = vector.broadcast %cst_474 : f32 to vector<8x1xf32>
    %1272 = arith.divf %1270, %1271 : vector<8x1xf32>
    %cst_475 = arith.constant 9.99999974E-6 : f32
    %1273 = vector.broadcast %cst_475 : f32 to vector<8x1xf32>
    %1274 = arith.addf %1272, %1273 : vector<8x1xf32>
    %1275 = math.rsqrt %1274 : vector<8x1xf32>
    %1276 = vector.broadcast %1275 : vector<8x1xf32> to vector<8x16xf32>
    %1277 = arith.mulf %1267, %1276 : vector<8x16xf32>
    %1278 = arith.mulf %1277, %23 : vector<8x16xf32>
    %1279 = arith.addf %1278, %24 : vector<8x16xf32>
    %1280 = tpu.concatenate %1220, %1242, %1257, %1279, %1146 in 1 : vector<8x32xf32>, vector<8x16xf32>, vector<8x32xf32>, vector<8x16xf32>, vector<8x32xf32> -> vector<8x128xf32>
    %c5_476 = arith.constant 5 : index
    %c0_477 = arith.constant 0 : index
    %c0_478 = arith.constant 0 : index
    %1281 = vector.load %arg32[%c5_476, %c0_477, %c0_478] : memref<8x8x128xf32, #tpu.memory_space<vmem>>, vector<1x8x128xf32>
    %1282 = vector.shape_cast %1281 : vector<1x8x128xf32> to vector<8x128xf32>
    %1283 = vector.shape_cast %1280 : vector<8x128xf32> to vector<1x8x128xf32>
    tpu.vector_store %arg32[%c5_476, %c0_477, %c0_478], %1283 {strides = array<i32>} : memref<8x8x128xf32, #tpu.memory_space<vmem>>, vector<1x8x128xf32>,
    %c6 = arith.constant 6 : index
    %c0_479 = arith.constant 0 : index
    %c0_480 = arith.constant 0 : index
    %1284 = vector.load %arg1[%c6, %c0_479, %c0_480] : memref<8x8x8xf32, #tpu.memory_space<vmem>>, vector<1x8x8xf32>
    %1285 = vector.shape_cast %1284 : vector<1x8x8xf32> to vector<8x8xf32>
    %c6_481 = arith.constant 6 : index
    %c0_482 = arith.constant 0 : index
    %c0_483 = arith.constant 0 : index
    %1286 = vector.load %arg2[%c6_481, %c0_482, %c0_483] : memref<8x8x32xf32, #tpu.memory_space<vmem>>, vector<1x8x32xf32>
    %1287 = vector.shape_cast %1286 : vector<1x8x32xf32> to vector<8x32xf32>
    %c6_484 = arith.constant 6 : index
    %c0_485 = arith.constant 0 : index
    %c0_486 = arith.constant 0 : index
    %1288 = vector.load %arg3[%c6_484, %c0_485, %c0_486] : memref<8x8x16xf32, #tpu.memory_space<vmem>>, vector<1x8x16xf32>
    %1289 = vector.shape_cast %1288 : vector<1x8x16xf32> to vector<8x16xf32>
    %c6_487 = arith.constant 6 : index
    %c0_488 = arith.constant 0 : index
    %c0_489 = arith.constant 0 : index
    %1290 = vector.load %arg4[%c6_487, %c0_488, %c0_489] : memref<8x8x16xf32, #tpu.memory_space<vmem>>, vector<1x8x16xf32>
    %1291 = vector.shape_cast %1290 : vector<1x8x16xf32> to vector<8x16xf32>
    %cst_490 = arith.constant dense<0.000000e+00> : vector<8x32xf32>
    %1292 = tpu.matmul %1285, %0, %cst_490 {dimension_numbers = #tpu.dot_dimension_numbers<[1], [0], [0], [1], [0, 0, 1, 1], [], []>} : vector<8x8xf32>, vector<8x32xf32>, vector<8x32xf32> -> vector<8x32xf32>
    %cst_491 = arith.constant dense<0.000000e+00> : vector<8x32xf32>
    %1293 = tpu.matmul %1279, %1, %cst_491 {dimension_numbers = #tpu.dot_dimension_numbers<[1], [0], [0], [1], [0, 0, 1, 1], [], []>} : vector<8x16xf32>, vector<16x32xf32>, vector<8x32xf32> -> vector<8x32xf32>
    %1294 = arith.addf %1292, %1293 : vector<8x32xf32>
    %1295 = arith.addf %1294, %2 : vector<8x32xf32>
    %cst_492 = arith.constant 0.000000e+00 : f32
    %1296 = vector.broadcast %cst_492 : f32 to vector<8x32xf32>
    %1297 = arith.cmpf ogt, %1295, %1296 : vector<8x32xf32>
    %cst_493 = arith.constant 0.000000e+00 : f32
    %1298 = vector.broadcast %cst_493 : f32 to vector<8x32xf32>
    %1299 = arith.minimumf %1295, %1298 : vector<8x32xf32>
    %1300 = math.exp %1299 : vector<8x32xf32>
    %cst_494 = arith.constant 1.000000e+00 : f32
    %1301 = vector.broadcast %cst_494 : f32 to vector<8x32xf32>
    %1302 = arith.subf %1300, %1301 : vector<8x32xf32>
    %1303 = arith.select %1297, %1295, %1302 : vector<8x32xi1>, vector<8x32xf32>
    %cst_495 = arith.constant dense<0.000000e+00> : vector<8x96xf32>
    %1304 = tpu.matmul %1303, %3, %cst_495 {dimension_numbers = #tpu.dot_dimension_numbers<[1], [0], [0], [1], [0, 0, 1, 1], [], []>} : vector<8x32xf32>, vector<32x96xf32>, vector<8x96xf32> -> vector<8x96xf32>
    %1305 = arith.addf %1304, %5 : vector<8x96xf32>
    %cst_496 = arith.constant dense<0.000000e+00> : vector<8x96xf32>
    %1306 = tpu.matmul %1146, %4, %cst_496 {dimension_numbers = #tpu.dot_dimension_numbers<[1], [0], [0], [1], [0, 0, 1, 1], [], []>} : vector<8x32xf32>, vector<32x96xf32>, vector<8x96xf32> -> vector<8x96xf32>
    %1307 = arith.addf %1306, %6 : vector<8x96xf32>
    %1308 = vector.extract_strided_slice %1305 {offsets = [0, 0], sizes = [8, 32], strides = [1, 1]} : vector<8x96xf32> to vector<8x32xf32>
    %1309 = vector.extract_strided_slice %1307 {offsets = [0, 0], sizes = [8, 32], strides = [1, 1]} : vector<8x96xf32> to vector<8x32xf32>
    %1310 = arith.addf %1308, %1309 : vector<8x32xf32>
    %cst_497 = arith.constant 0.000000e+00 : f32
    %1311 = vector.broadcast %cst_497 : f32 to vector<8x32xf32>
    %1312 = arith.subf %1311, %1310 : vector<8x32xf32>
    %1313 = math.exp %1312 : vector<8x32xf32>
    %cst_498 = arith.constant 1.000000e+00 : f32
    %1314 = vector.broadcast %cst_498 : f32 to vector<8x32xf32>
    %1315 = arith.addf %1314, %1313 : vector<8x32xf32>
    %cst_499 = arith.constant 1.000000e+00 : f32
    %1316 = vector.broadcast %cst_499 : f32 to vector<8x32xf32>
    %1317 = arith.divf %1316, %1315 : vector<8x32xf32>
    %1318 = vector.extract_strided_slice %1305 {offsets = [0, 32], sizes = [8, 32], strides = [1, 1]} : vector<8x96xf32> to vector<8x32xf32>
    %1319 = vector.extract_strided_slice %1307 {offsets = [0, 32], sizes = [8, 32], strides = [1, 1]} : vector<8x96xf32> to vector<8x32xf32>
    %1320 = arith.addf %1318, %1319 : vector<8x32xf32>
    %cst_500 = arith.constant 0.000000e+00 : f32
    %1321 = vector.broadcast %cst_500 : f32 to vector<8x32xf32>
    %1322 = arith.subf %1321, %1320 : vector<8x32xf32>
    %1323 = math.exp %1322 : vector<8x32xf32>
    %cst_501 = arith.constant 1.000000e+00 : f32
    %1324 = vector.broadcast %cst_501 : f32 to vector<8x32xf32>
    %1325 = arith.addf %1324, %1323 : vector<8x32xf32>
    %cst_502 = arith.constant 1.000000e+00 : f32
    %1326 = vector.broadcast %cst_502 : f32 to vector<8x32xf32>
    %1327 = arith.divf %1326, %1325 : vector<8x32xf32>
    %1328 = vector.extract_strided_slice %1305 {offsets = [0, 64], sizes = [8, 32], strides = [1, 1]} : vector<8x96xf32> to vector<8x32xf32>
    %1329 = vector.extract_strided_slice %1307 {offsets = [0, 64], sizes = [8, 32], strides = [1, 1]} : vector<8x96xf32> to vector<8x32xf32>
    %1330 = arith.mulf %1317, %1329 : vector<8x32xf32>
    %1331 = arith.addf %1328, %1330 : vector<8x32xf32>
    %1332 = math.tanh %1331 : vector<8x32xf32>
    %cst_503 = arith.constant 1.000000e+00 : f32
    %1333 = vector.broadcast %cst_503 : f32 to vector<8x32xf32>
    %1334 = arith.subf %1333, %1327 : vector<8x32xf32>
    %1335 = arith.mulf %1334, %1332 : vector<8x32xf32>
    %1336 = arith.mulf %1327, %1146 : vector<8x32xf32>
    %1337 = arith.addf %1335, %1336 : vector<8x32xf32>
    %cst_504 = arith.constant dense<0.000000e+00> : vector<8xf32>
    %1338 = vector.multi_reduction <add>, %1337, %cst_504 [1] : vector<8x32xf32> to vector<8xf32>
    %1339 = vector.shape_cast %1338 : vector<8xf32> to vector<8x1xf32>
    %cst_505 = arith.constant 3.200000e+01 : f32
    %1340 = vector.broadcast %cst_505 : f32 to vector<8x1xf32>
    %1341 = arith.divf %1339, %1340 : vector<8x1xf32>
    %1342 = vector.broadcast %1341 : vector<8x1xf32> to vector<8x32xf32>
    %1343 = arith.subf %1337, %1342 : vector<8x32xf32>
    %1344 = arith.mulf %1343, %1343 : vector<8x32xf32>
    %cst_506 = arith.constant dense<0.000000e+00> : vector<8xf32>
    %1345 = vector.multi_reduction <add>, %1344, %cst_506 [1] : vector<8x32xf32> to vector<8xf32>
    %1346 = vector.shape_cast %1345 : vector<8xf32> to vector<8x1xf32>
    %cst_507 = arith.constant 3.200000e+01 : f32
    %1347 = vector.broadcast %cst_507 : f32 to vector<8x1xf32>
    %1348 = arith.divf %1346, %1347 : vector<8x1xf32>
    %cst_508 = arith.constant 9.99999974E-6 : f32
    %1349 = vector.broadcast %cst_508 : f32 to vector<8x1xf32>
    %1350 = arith.addf %1348, %1349 : vector<8x1xf32>
    %1351 = math.rsqrt %1350 : vector<8x1xf32>
    %1352 = vector.broadcast %1351 : vector<8x1xf32> to vector<8x32xf32>
    %1353 = arith.mulf %1343, %1352 : vector<8x32xf32>
    %1354 = arith.mulf %1353, %7 : vector<8x32xf32>
    %1355 = arith.addf %1354, %8 : vector<8x32xf32>
    %cst_509 = arith.constant dense<0.000000e+00> : vector<8x64xf32>
    %1356 = tpu.matmul %1355, %9, %cst_509 {dimension_numbers = #tpu.dot_dimension_numbers<[1], [0], [0], [1], [0, 0, 1, 1], [], []>} : vector<8x32xf32>, vector<32x64xf32>, vector<8x64xf32> -> vector<8x64xf32>
    %1357 = vector.extract_strided_slice %1356 {offsets = [0, 0], sizes = [8, 32], strides = [1, 1]} : vector<8x64xf32> to vector<8x32xf32>
    %1358 = arith.addf %1357, %11 : vector<8x32xf32>
    %cst_510 = arith.constant 0.000000e+00 : f32
    %1359 = vector.broadcast %cst_510 : f32 to vector<8x32xf32>
    %1360 = arith.cmpf ogt, %1358, %1359 : vector<8x32xf32>
    %cst_511 = arith.constant 0.000000e+00 : f32
    %1361 = vector.broadcast %cst_511 : f32 to vector<8x32xf32>
    %1362 = arith.minimumf %1358, %1361 : vector<8x32xf32>
    %1363 = math.exp %1362 : vector<8x32xf32>
    %cst_512 = arith.constant 1.000000e+00 : f32
    %1364 = vector.broadcast %cst_512 : f32 to vector<8x32xf32>
    %1365 = arith.subf %1363, %1364 : vector<8x32xf32>
    %1366 = arith.select %1360, %1358, %1365 : vector<8x32xi1>, vector<8x32xf32>
    %cst_513 = arith.constant dense<0.000000e+00> : vector<8xf32>
    %1367 = vector.multi_reduction <add>, %1366, %cst_513 [1] : vector<8x32xf32> to vector<8xf32>
    %1368 = vector.shape_cast %1367 : vector<8xf32> to vector<8x1xf32>
    %cst_514 = arith.constant 3.200000e+01 : f32
    %1369 = vector.broadcast %cst_514 : f32 to vector<8x1xf32>
    %1370 = arith.divf %1368, %1369 : vector<8x1xf32>
    %1371 = vector.broadcast %1370 : vector<8x1xf32> to vector<8x32xf32>
    %1372 = arith.subf %1366, %1371 : vector<8x32xf32>
    %1373 = arith.mulf %1372, %1372 : vector<8x32xf32>
    %cst_515 = arith.constant dense<0.000000e+00> : vector<8xf32>
    %1374 = vector.multi_reduction <add>, %1373, %cst_515 [1] : vector<8x32xf32> to vector<8xf32>
    %1375 = vector.shape_cast %1374 : vector<8xf32> to vector<8x1xf32>
    %cst_516 = arith.constant 3.200000e+01 : f32
    %1376 = vector.broadcast %cst_516 : f32 to vector<8x1xf32>
    %1377 = arith.divf %1375, %1376 : vector<8x1xf32>
    %cst_517 = arith.constant 9.99999974E-6 : f32
    %1378 = vector.broadcast %cst_517 : f32 to vector<8x1xf32>
    %1379 = arith.addf %1377, %1378 : vector<8x1xf32>
    %1380 = math.rsqrt %1379 : vector<8x1xf32>
    %1381 = vector.broadcast %1380 : vector<8x1xf32> to vector<8x32xf32>
    %1382 = arith.mulf %1372, %1381 : vector<8x32xf32>
    %1383 = arith.mulf %1382, %13 : vector<8x32xf32>
    %1384 = arith.addf %1383, %14 : vector<8x32xf32>
    %1385 = vector.extract_strided_slice %1356 {offsets = [0, 32], sizes = [8, 32], strides = [1, 1]} : vector<8x64xf32> to vector<8x32xf32>
    %cst_518 = arith.constant dense<0.000000e+00> : vector<8x32xf32>
    %1386 = tpu.matmul %1287, %10, %cst_518 {dimension_numbers = #tpu.dot_dimension_numbers<[1], [0], [0], [1], [0, 0, 1, 1], [], []>} : vector<8x32xf32>, vector<32x32xf32>, vector<8x32xf32> -> vector<8x32xf32>
    %1387 = arith.addf %1385, %1386 : vector<8x32xf32>
    %1388 = arith.addf %1387, %12 : vector<8x32xf32>
    %cst_519 = arith.constant 0.000000e+00 : f32
    %1389 = vector.broadcast %cst_519 : f32 to vector<8x32xf32>
    %1390 = arith.cmpf ogt, %1388, %1389 : vector<8x32xf32>
    %cst_520 = arith.constant 0.000000e+00 : f32
    %1391 = vector.broadcast %cst_520 : f32 to vector<8x32xf32>
    %1392 = arith.minimumf %1388, %1391 : vector<8x32xf32>
    %1393 = math.exp %1392 : vector<8x32xf32>
    %cst_521 = arith.constant 1.000000e+00 : f32
    %1394 = vector.broadcast %cst_521 : f32 to vector<8x32xf32>
    %1395 = arith.subf %1393, %1394 : vector<8x32xf32>
    %1396 = arith.select %1390, %1388, %1395 : vector<8x32xi1>, vector<8x32xf32>
    %cst_522 = arith.constant dense<0.000000e+00> : vector<8xf32>
    %1397 = vector.multi_reduction <add>, %1396, %cst_522 [1] : vector<8x32xf32> to vector<8xf32>
    %1398 = vector.shape_cast %1397 : vector<8xf32> to vector<8x1xf32>
    %cst_523 = arith.constant 3.200000e+01 : f32
    %1399 = vector.broadcast %cst_523 : f32 to vector<8x1xf32>
    %1400 = arith.divf %1398, %1399 : vector<8x1xf32>
    %1401 = vector.broadcast %1400 : vector<8x1xf32> to vector<8x32xf32>
    %1402 = arith.subf %1396, %1401 : vector<8x32xf32>
    %1403 = arith.mulf %1402, %1402 : vector<8x32xf32>
    %cst_524 = arith.constant dense<0.000000e+00> : vector<8xf32>
    %1404 = vector.multi_reduction <add>, %1403, %cst_524 [1] : vector<8x32xf32> to vector<8xf32>
    %1405 = vector.shape_cast %1404 : vector<8xf32> to vector<8x1xf32>
    %cst_525 = arith.constant 3.200000e+01 : f32
    %1406 = vector.broadcast %cst_525 : f32 to vector<8x1xf32>
    %1407 = arith.divf %1405, %1406 : vector<8x1xf32>
    %cst_526 = arith.constant 9.99999974E-6 : f32
    %1408 = vector.broadcast %cst_526 : f32 to vector<8x1xf32>
    %1409 = arith.addf %1407, %1408 : vector<8x1xf32>
    %1410 = math.rsqrt %1409 : vector<8x1xf32>
    %1411 = vector.broadcast %1410 : vector<8x1xf32> to vector<8x32xf32>
    %1412 = arith.mulf %1402, %1411 : vector<8x32xf32>
    %1413 = arith.mulf %1412, %15 : vector<8x32xf32>
    %1414 = arith.addf %1413, %16 : vector<8x32xf32>
    %cst_527 = arith.constant dense<0.000000e+00> : vector<8x32xf32>
    %1415 = tpu.matmul %1384, %17, %cst_527 {dimension_numbers = #tpu.dot_dimension_numbers<[1], [0], [0], [1], [0, 0, 1, 1], [], []>} : vector<8x32xf32>, vector<32x32xf32>, vector<8x32xf32> -> vector<8x32xf32>
    %1416 = arith.addf %1415, %18 : vector<8x32xf32>
    %cst_528 = arith.constant 0.000000e+00 : f32
    %1417 = vector.broadcast %cst_528 : f32 to vector<8x32xf32>
    %1418 = arith.maximumf %1416, %1417 : vector<8x32xf32>
    %1419 = math.absf %1416 : vector<8x32xf32>
    %cst_529 = arith.constant 0.000000e+00 : f32
    %1420 = vector.broadcast %cst_529 : f32 to vector<8x32xf32>
    %1421 = arith.subf %1420, %1419 : vector<8x32xf32>
    %1422 = math.exp %1421 : vector<8x32xf32>
    %cst_530 = arith.constant 1.000000e+00 : f32
    %1423 = vector.broadcast %cst_530 : f32 to vector<8x32xf32>
    %1424 = arith.addf %1423, %1422 : vector<8x32xf32>
    %1425 = math.log %1424 : vector<8x32xf32>
    %1426 = arith.addf %1418, %1425 : vector<8x32xf32>
    %cst_531 = arith.constant 1.000000e-01 : f32
    %1427 = vector.broadcast %cst_531 : f32 to vector<8x32xf32>
    %1428 = arith.addf %1426, %1427 : vector<8x32xf32>
    %1429 = arith.select %27, %1416, %1428 : vector<8x32xi1>, vector<8x32xf32>
    %1430 = vector.extract_strided_slice %1416 {offsets = [0, 0], sizes = [8, 16], strides = [1, 1]} : vector<8x32xf32> to vector<8x16xf32>
    %1431 = vector.extract_strided_slice %1428 {offsets = [0, 16], sizes = [8, 16], strides = [1, 1]} : vector<8x32xf32> to vector<8x16xf32>
    %1432 = arith.mulf %1431, %1289 : vector<8x16xf32>
    %1433 = arith.addf %1430, %1432 : vector<8x16xf32>
    %cst_532 = arith.constant dense<0.000000e+00> : vector<8xf32>
    %1434 = vector.multi_reduction <add>, %1433, %cst_532 [1] : vector<8x16xf32> to vector<8xf32>
    %1435 = vector.shape_cast %1434 : vector<8xf32> to vector<8x1xf32>
    %cst_533 = arith.constant 1.600000e+01 : f32
    %1436 = vector.broadcast %cst_533 : f32 to vector<8x1xf32>
    %1437 = arith.divf %1435, %1436 : vector<8x1xf32>
    %1438 = vector.broadcast %1437 : vector<8x1xf32> to vector<8x16xf32>
    %1439 = arith.subf %1433, %1438 : vector<8x16xf32>
    %1440 = arith.mulf %1439, %1439 : vector<8x16xf32>
    %cst_534 = arith.constant dense<0.000000e+00> : vector<8xf32>
    %1441 = vector.multi_reduction <add>, %1440, %cst_534 [1] : vector<8x16xf32> to vector<8xf32>
    %1442 = vector.shape_cast %1441 : vector<8xf32> to vector<8x1xf32>
    %cst_535 = arith.constant 1.600000e+01 : f32
    %1443 = vector.broadcast %cst_535 : f32 to vector<8x1xf32>
    %1444 = arith.divf %1442, %1443 : vector<8x1xf32>
    %cst_536 = arith.constant 9.99999974E-6 : f32
    %1445 = vector.broadcast %cst_536 : f32 to vector<8x1xf32>
    %1446 = arith.addf %1444, %1445 : vector<8x1xf32>
    %1447 = math.rsqrt %1446 : vector<8x1xf32>
    %1448 = vector.broadcast %1447 : vector<8x1xf32> to vector<8x16xf32>
    %1449 = arith.mulf %1439, %1448 : vector<8x16xf32>
    %1450 = arith.mulf %1449, %21 : vector<8x16xf32>
    %1451 = arith.addf %1450, %22 : vector<8x16xf32>
    %cst_537 = arith.constant dense<0.000000e+00> : vector<8x32xf32>
    %1452 = tpu.matmul %1414, %19, %cst_537 {dimension_numbers = #tpu.dot_dimension_numbers<[1], [0], [0], [1], [0, 0, 1, 1], [], []>} : vector<8x32xf32>, vector<32x32xf32>, vector<8x32xf32> -> vector<8x32xf32>
    %1453 = arith.addf %1452, %20 : vector<8x32xf32>
    %cst_538 = arith.constant 0.000000e+00 : f32
    %1454 = vector.broadcast %cst_538 : f32 to vector<8x32xf32>
    %1455 = arith.maximumf %1453, %1454 : vector<8x32xf32>
    %1456 = math.absf %1453 : vector<8x32xf32>
    %cst_539 = arith.constant 0.000000e+00 : f32
    %1457 = vector.broadcast %cst_539 : f32 to vector<8x32xf32>
    %1458 = arith.subf %1457, %1456 : vector<8x32xf32>
    %1459 = math.exp %1458 : vector<8x32xf32>
    %cst_540 = arith.constant 1.000000e+00 : f32
    %1460 = vector.broadcast %cst_540 : f32 to vector<8x32xf32>
    %1461 = arith.addf %1460, %1459 : vector<8x32xf32>
    %1462 = math.log %1461 : vector<8x32xf32>
    %1463 = arith.addf %1455, %1462 : vector<8x32xf32>
    %cst_541 = arith.constant 1.000000e-01 : f32
    %1464 = vector.broadcast %cst_541 : f32 to vector<8x32xf32>
    %1465 = arith.addf %1463, %1464 : vector<8x32xf32>
    %1466 = arith.select %27, %1453, %1465 : vector<8x32xi1>, vector<8x32xf32>
    %1467 = vector.extract_strided_slice %1453 {offsets = [0, 0], sizes = [8, 16], strides = [1, 1]} : vector<8x32xf32> to vector<8x16xf32>
    %1468 = vector.extract_strided_slice %1465 {offsets = [0, 16], sizes = [8, 16], strides = [1, 1]} : vector<8x32xf32> to vector<8x16xf32>
    %1469 = arith.mulf %1468, %1291 : vector<8x16xf32>
    %1470 = arith.addf %1467, %1469 : vector<8x16xf32>
    %cst_542 = arith.constant dense<0.000000e+00> : vector<8xf32>
    %1471 = vector.multi_reduction <add>, %1470, %cst_542 [1] : vector<8x16xf32> to vector<8xf32>
    %1472 = vector.shape_cast %1471 : vector<8xf32> to vector<8x1xf32>
    %cst_543 = arith.constant 1.600000e+01 : f32
    %1473 = vector.broadcast %cst_543 : f32 to vector<8x1xf32>
    %1474 = arith.divf %1472, %1473 : vector<8x1xf32>
    %1475 = vector.broadcast %1474 : vector<8x1xf32> to vector<8x16xf32>
    %1476 = arith.subf %1470, %1475 : vector<8x16xf32>
    %1477 = arith.mulf %1476, %1476 : vector<8x16xf32>
    %cst_544 = arith.constant dense<0.000000e+00> : vector<8xf32>
    %1478 = vector.multi_reduction <add>, %1477, %cst_544 [1] : vector<8x16xf32> to vector<8xf32>
    %1479 = vector.shape_cast %1478 : vector<8xf32> to vector<8x1xf32>
    %cst_545 = arith.constant 1.600000e+01 : f32
    %1480 = vector.broadcast %cst_545 : f32 to vector<8x1xf32>
    %1481 = arith.divf %1479, %1480 : vector<8x1xf32>
    %cst_546 = arith.constant 9.99999974E-6 : f32
    %1482 = vector.broadcast %cst_546 : f32 to vector<8x1xf32>
    %1483 = arith.addf %1481, %1482 : vector<8x1xf32>
    %1484 = math.rsqrt %1483 : vector<8x1xf32>
    %1485 = vector.broadcast %1484 : vector<8x1xf32> to vector<8x16xf32>
    %1486 = arith.mulf %1476, %1485 : vector<8x16xf32>
    %1487 = arith.mulf %1486, %23 : vector<8x16xf32>
    %1488 = arith.addf %1487, %24 : vector<8x16xf32>
    %1489 = tpu.concatenate %1429, %1451, %1466, %1488, %1355 in 1 : vector<8x32xf32>, vector<8x16xf32>, vector<8x32xf32>, vector<8x16xf32>, vector<8x32xf32> -> vector<8x128xf32>
    %c6_547 = arith.constant 6 : index
    %c0_548 = arith.constant 0 : index
    %c0_549 = arith.constant 0 : index
    %1490 = vector.load %arg32[%c6_547, %c0_548, %c0_549] : memref<8x8x128xf32, #tpu.memory_space<vmem>>, vector<1x8x128xf32>
    %1491 = vector.shape_cast %1490 : vector<1x8x128xf32> to vector<8x128xf32>
    %1492 = vector.shape_cast %1489 : vector<8x128xf32> to vector<1x8x128xf32>
    tpu.vector_store %arg32[%c6_547, %c0_548, %c0_549], %1492 {strides = array<i32>} : memref<8x8x128xf32, #tpu.memory_space<vmem>>, vector<1x8x128xf32>,
    %c7 = arith.constant 7 : index
    %c0_550 = arith.constant 0 : index
    %c0_551 = arith.constant 0 : index
    %1493 = vector.load %arg1[%c7, %c0_550, %c0_551] : memref<8x8x8xf32, #tpu.memory_space<vmem>>, vector<1x8x8xf32>
    %1494 = vector.shape_cast %1493 : vector<1x8x8xf32> to vector<8x8xf32>
    %c7_552 = arith.constant 7 : index
    %c0_553 = arith.constant 0 : index
    %c0_554 = arith.constant 0 : index
    %1495 = vector.load %arg2[%c7_552, %c0_553, %c0_554] : memref<8x8x32xf32, #tpu.memory_space<vmem>>, vector<1x8x32xf32>
    %1496 = vector.shape_cast %1495 : vector<1x8x32xf32> to vector<8x32xf32>
    %c7_555 = arith.constant 7 : index
    %c0_556 = arith.constant 0 : index
    %c0_557 = arith.constant 0 : index
    %1497 = vector.load %arg3[%c7_555, %c0_556, %c0_557] : memref<8x8x16xf32, #tpu.memory_space<vmem>>, vector<1x8x16xf32>
    %1498 = vector.shape_cast %1497 : vector<1x8x16xf32> to vector<8x16xf32>
    %c7_558 = arith.constant 7 : index
    %c0_559 = arith.constant 0 : index
    %c0_560 = arith.constant 0 : index
    %1499 = vector.load %arg4[%c7_558, %c0_559, %c0_560] : memref<8x8x16xf32, #tpu.memory_space<vmem>>, vector<1x8x16xf32>
    %1500 = vector.shape_cast %1499 : vector<1x8x16xf32> to vector<8x16xf32>
    %cst_561 = arith.constant dense<0.000000e+00> : vector<8x32xf32>
    %1501 = tpu.matmul %1494, %0, %cst_561 {dimension_numbers = #tpu.dot_dimension_numbers<[1], [0], [0], [1], [0, 0, 1, 1], [], []>} : vector<8x8xf32>, vector<8x32xf32>, vector<8x32xf32> -> vector<8x32xf32>
    %cst_562 = arith.constant dense<0.000000e+00> : vector<8x32xf32>
    %1502 = tpu.matmul %1488, %1, %cst_562 {dimension_numbers = #tpu.dot_dimension_numbers<[1], [0], [0], [1], [0, 0, 1, 1], [], []>} : vector<8x16xf32>, vector<16x32xf32>, vector<8x32xf32> -> vector<8x32xf32>
    %1503 = arith.addf %1501, %1502 : vector<8x32xf32>
    %1504 = arith.addf %1503, %2 : vector<8x32xf32>
    %cst_563 = arith.constant 0.000000e+00 : f32
    %1505 = vector.broadcast %cst_563 : f32 to vector<8x32xf32>
    %1506 = arith.cmpf ogt, %1504, %1505 : vector<8x32xf32>
    %cst_564 = arith.constant 0.000000e+00 : f32
    %1507 = vector.broadcast %cst_564 : f32 to vector<8x32xf32>
    %1508 = arith.minimumf %1504, %1507 : vector<8x32xf32>
    %1509 = math.exp %1508 : vector<8x32xf32>
    %cst_565 = arith.constant 1.000000e+00 : f32
    %1510 = vector.broadcast %cst_565 : f32 to vector<8x32xf32>
    %1511 = arith.subf %1509, %1510 : vector<8x32xf32>
    %1512 = arith.select %1506, %1504, %1511 : vector<8x32xi1>, vector<8x32xf32>
    %cst_566 = arith.constant dense<0.000000e+00> : vector<8x96xf32>
    %1513 = tpu.matmul %1512, %3, %cst_566 {dimension_numbers = #tpu.dot_dimension_numbers<[1], [0], [0], [1], [0, 0, 1, 1], [], []>} : vector<8x32xf32>, vector<32x96xf32>, vector<8x96xf32> -> vector<8x96xf32>
    %1514 = arith.addf %1513, %5 : vector<8x96xf32>
    %cst_567 = arith.constant dense<0.000000e+00> : vector<8x96xf32>
    %1515 = tpu.matmul %1355, %4, %cst_567 {dimension_numbers = #tpu.dot_dimension_numbers<[1], [0], [0], [1], [0, 0, 1, 1], [], []>} : vector<8x32xf32>, vector<32x96xf32>, vector<8x96xf32> -> vector<8x96xf32>
    %1516 = arith.addf %1515, %6 : vector<8x96xf32>
    %1517 = vector.extract_strided_slice %1514 {offsets = [0, 0], sizes = [8, 32], strides = [1, 1]} : vector<8x96xf32> to vector<8x32xf32>
    %1518 = vector.extract_strided_slice %1516 {offsets = [0, 0], sizes = [8, 32], strides = [1, 1]} : vector<8x96xf32> to vector<8x32xf32>
    %1519 = arith.addf %1517, %1518 : vector<8x32xf32>
    %cst_568 = arith.constant 0.000000e+00 : f32
    %1520 = vector.broadcast %cst_568 : f32 to vector<8x32xf32>
    %1521 = arith.subf %1520, %1519 : vector<8x32xf32>
    %1522 = math.exp %1521 : vector<8x32xf32>
    %cst_569 = arith.constant 1.000000e+00 : f32
    %1523 = vector.broadcast %cst_569 : f32 to vector<8x32xf32>
    %1524 = arith.addf %1523, %1522 : vector<8x32xf32>
    %cst_570 = arith.constant 1.000000e+00 : f32
    %1525 = vector.broadcast %cst_570 : f32 to vector<8x32xf32>
    %1526 = arith.divf %1525, %1524 : vector<8x32xf32>
    %1527 = vector.extract_strided_slice %1514 {offsets = [0, 32], sizes = [8, 32], strides = [1, 1]} : vector<8x96xf32> to vector<8x32xf32>
    %1528 = vector.extract_strided_slice %1516 {offsets = [0, 32], sizes = [8, 32], strides = [1, 1]} : vector<8x96xf32> to vector<8x32xf32>
    %1529 = arith.addf %1527, %1528 : vector<8x32xf32>
    %cst_571 = arith.constant 0.000000e+00 : f32
    %1530 = vector.broadcast %cst_571 : f32 to vector<8x32xf32>
    %1531 = arith.subf %1530, %1529 : vector<8x32xf32>
    %1532 = math.exp %1531 : vector<8x32xf32>
    %cst_572 = arith.constant 1.000000e+00 : f32
    %1533 = vector.broadcast %cst_572 : f32 to vector<8x32xf32>
    %1534 = arith.addf %1533, %1532 : vector<8x32xf32>
    %cst_573 = arith.constant 1.000000e+00 : f32
    %1535 = vector.broadcast %cst_573 : f32 to vector<8x32xf32>
    %1536 = arith.divf %1535, %1534 : vector<8x32xf32>
    %1537 = vector.extract_strided_slice %1514 {offsets = [0, 64], sizes = [8, 32], strides = [1, 1]} : vector<8x96xf32> to vector<8x32xf32>
    %1538 = vector.extract_strided_slice %1516 {offsets = [0, 64], sizes = [8, 32], strides = [1, 1]} : vector<8x96xf32> to vector<8x32xf32>
    %1539 = arith.mulf %1526, %1538 : vector<8x32xf32>
    %1540 = arith.addf %1537, %1539 : vector<8x32xf32>
    %1541 = math.tanh %1540 : vector<8x32xf32>
    %cst_574 = arith.constant 1.000000e+00 : f32
    %1542 = vector.broadcast %cst_574 : f32 to vector<8x32xf32>
    %1543 = arith.subf %1542, %1536 : vector<8x32xf32>
    %1544 = arith.mulf %1543, %1541 : vector<8x32xf32>
    %1545 = arith.mulf %1536, %1355 : vector<8x32xf32>
    %1546 = arith.addf %1544, %1545 : vector<8x32xf32>
    %cst_575 = arith.constant dense<0.000000e+00> : vector<8xf32>
    %1547 = vector.multi_reduction <add>, %1546, %cst_575 [1] : vector<8x32xf32> to vector<8xf32>
    %1548 = vector.shape_cast %1547 : vector<8xf32> to vector<8x1xf32>
    %cst_576 = arith.constant 3.200000e+01 : f32
    %1549 = vector.broadcast %cst_576 : f32 to vector<8x1xf32>
    %1550 = arith.divf %1548, %1549 : vector<8x1xf32>
    %1551 = vector.broadcast %1550 : vector<8x1xf32> to vector<8x32xf32>
    %1552 = arith.subf %1546, %1551 : vector<8x32xf32>
    %1553 = arith.mulf %1552, %1552 : vector<8x32xf32>
    %cst_577 = arith.constant dense<0.000000e+00> : vector<8xf32>
    %1554 = vector.multi_reduction <add>, %1553, %cst_577 [1] : vector<8x32xf32> to vector<8xf32>
    %1555 = vector.shape_cast %1554 : vector<8xf32> to vector<8x1xf32>
    %cst_578 = arith.constant 3.200000e+01 : f32
    %1556 = vector.broadcast %cst_578 : f32 to vector<8x1xf32>
    %1557 = arith.divf %1555, %1556 : vector<8x1xf32>
    %cst_579 = arith.constant 9.99999974E-6 : f32
    %1558 = vector.broadcast %cst_579 : f32 to vector<8x1xf32>
    %1559 = arith.addf %1557, %1558 : vector<8x1xf32>
    %1560 = math.rsqrt %1559 : vector<8x1xf32>
    %1561 = vector.broadcast %1560 : vector<8x1xf32> to vector<8x32xf32>
    %1562 = arith.mulf %1552, %1561 : vector<8x32xf32>
    %1563 = arith.mulf %1562, %7 : vector<8x32xf32>
    %1564 = arith.addf %1563, %8 : vector<8x32xf32>
    %cst_580 = arith.constant dense<0.000000e+00> : vector<8x64xf32>
    %1565 = tpu.matmul %1564, %9, %cst_580 {dimension_numbers = #tpu.dot_dimension_numbers<[1], [0], [0], [1], [0, 0, 1, 1], [], []>} : vector<8x32xf32>, vector<32x64xf32>, vector<8x64xf32> -> vector<8x64xf32>
    %1566 = vector.extract_strided_slice %1565 {offsets = [0, 0], sizes = [8, 32], strides = [1, 1]} : vector<8x64xf32> to vector<8x32xf32>
    %1567 = arith.addf %1566, %11 : vector<8x32xf32>
    %cst_581 = arith.constant 0.000000e+00 : f32
    %1568 = vector.broadcast %cst_581 : f32 to vector<8x32xf32>
    %1569 = arith.cmpf ogt, %1567, %1568 : vector<8x32xf32>
    %cst_582 = arith.constant 0.000000e+00 : f32
    %1570 = vector.broadcast %cst_582 : f32 to vector<8x32xf32>
    %1571 = arith.minimumf %1567, %1570 : vector<8x32xf32>
    %1572 = math.exp %1571 : vector<8x32xf32>
    %cst_583 = arith.constant 1.000000e+00 : f32
    %1573 = vector.broadcast %cst_583 : f32 to vector<8x32xf32>
    %1574 = arith.subf %1572, %1573 : vector<8x32xf32>
    %1575 = arith.select %1569, %1567, %1574 : vector<8x32xi1>, vector<8x32xf32>
    %cst_584 = arith.constant dense<0.000000e+00> : vector<8xf32>
    %1576 = vector.multi_reduction <add>, %1575, %cst_584 [1] : vector<8x32xf32> to vector<8xf32>
    %1577 = vector.shape_cast %1576 : vector<8xf32> to vector<8x1xf32>
    %cst_585 = arith.constant 3.200000e+01 : f32
    %1578 = vector.broadcast %cst_585 : f32 to vector<8x1xf32>
    %1579 = arith.divf %1577, %1578 : vector<8x1xf32>
    %1580 = vector.broadcast %1579 : vector<8x1xf32> to vector<8x32xf32>
    %1581 = arith.subf %1575, %1580 : vector<8x32xf32>
    %1582 = arith.mulf %1581, %1581 : vector<8x32xf32>
    %cst_586 = arith.constant dense<0.000000e+00> : vector<8xf32>
    %1583 = vector.multi_reduction <add>, %1582, %cst_586 [1] : vector<8x32xf32> to vector<8xf32>
    %1584 = vector.shape_cast %1583 : vector<8xf32> to vector<8x1xf32>
    %cst_587 = arith.constant 3.200000e+01 : f32
    %1585 = vector.broadcast %cst_587 : f32 to vector<8x1xf32>
    %1586 = arith.divf %1584, %1585 : vector<8x1xf32>
    %cst_588 = arith.constant 9.99999974E-6 : f32
    %1587 = vector.broadcast %cst_588 : f32 to vector<8x1xf32>
    %1588 = arith.addf %1586, %1587 : vector<8x1xf32>
    %1589 = math.rsqrt %1588 : vector<8x1xf32>
    %1590 = vector.broadcast %1589 : vector<8x1xf32> to vector<8x32xf32>
    %1591 = arith.mulf %1581, %1590 : vector<8x32xf32>
    %1592 = arith.mulf %1591, %13 : vector<8x32xf32>
    %1593 = arith.addf %1592, %14 : vector<8x32xf32>
    %1594 = vector.extract_strided_slice %1565 {offsets = [0, 32], sizes = [8, 32], strides = [1, 1]} : vector<8x64xf32> to vector<8x32xf32>
    %cst_589 = arith.constant dense<0.000000e+00> : vector<8x32xf32>
    %1595 = tpu.matmul %1496, %10, %cst_589 {dimension_numbers = #tpu.dot_dimension_numbers<[1], [0], [0], [1], [0, 0, 1, 1], [], []>} : vector<8x32xf32>, vector<32x32xf32>, vector<8x32xf32> -> vector<8x32xf32>
    %1596 = arith.addf %1594, %1595 : vector<8x32xf32>
    %1597 = arith.addf %1596, %12 : vector<8x32xf32>
    %cst_590 = arith.constant 0.000000e+00 : f32
    %1598 = vector.broadcast %cst_590 : f32 to vector<8x32xf32>
    %1599 = arith.cmpf ogt, %1597, %1598 : vector<8x32xf32>
    %cst_591 = arith.constant 0.000000e+00 : f32
    %1600 = vector.broadcast %cst_591 : f32 to vector<8x32xf32>
    %1601 = arith.minimumf %1597, %1600 : vector<8x32xf32>
    %1602 = math.exp %1601 : vector<8x32xf32>
    %cst_592 = arith.constant 1.000000e+00 : f32
    %1603 = vector.broadcast %cst_592 : f32 to vector<8x32xf32>
    %1604 = arith.subf %1602, %1603 : vector<8x32xf32>
    %1605 = arith.select %1599, %1597, %1604 : vector<8x32xi1>, vector<8x32xf32>
    %cst_593 = arith.constant dense<0.000000e+00> : vector<8xf32>
    %1606 = vector.multi_reduction <add>, %1605, %cst_593 [1] : vector<8x32xf32> to vector<8xf32>
    %1607 = vector.shape_cast %1606 : vector<8xf32> to vector<8x1xf32>
    %cst_594 = arith.constant 3.200000e+01 : f32
    %1608 = vector.broadcast %cst_594 : f32 to vector<8x1xf32>
    %1609 = arith.divf %1607, %1608 : vector<8x1xf32>
    %1610 = vector.broadcast %1609 : vector<8x1xf32> to vector<8x32xf32>
    %1611 = arith.subf %1605, %1610 : vector<8x32xf32>
    %1612 = arith.mulf %1611, %1611 : vector<8x32xf32>
    %cst_595 = arith.constant dense<0.000000e+00> : vector<8xf32>
    %1613 = vector.multi_reduction <add>, %1612, %cst_595 [1] : vector<8x32xf32> to vector<8xf32>
    %1614 = vector.shape_cast %1613 : vector<8xf32> to vector<8x1xf32>
    %cst_596 = arith.constant 3.200000e+01 : f32
    %1615 = vector.broadcast %cst_596 : f32 to vector<8x1xf32>
    %1616 = arith.divf %1614, %1615 : vector<8x1xf32>
    %cst_597 = arith.constant 9.99999974E-6 : f32
    %1617 = vector.broadcast %cst_597 : f32 to vector<8x1xf32>
    %1618 = arith.addf %1616, %1617 : vector<8x1xf32>
    %1619 = math.rsqrt %1618 : vector<8x1xf32>
    %1620 = vector.broadcast %1619 : vector<8x1xf32> to vector<8x32xf32>
    %1621 = arith.mulf %1611, %1620 : vector<8x32xf32>
    %1622 = arith.mulf %1621, %15 : vector<8x32xf32>
    %1623 = arith.addf %1622, %16 : vector<8x32xf32>
    %cst_598 = arith.constant dense<0.000000e+00> : vector<8x32xf32>
    %1624 = tpu.matmul %1593, %17, %cst_598 {dimension_numbers = #tpu.dot_dimension_numbers<[1], [0], [0], [1], [0, 0, 1, 1], [], []>} : vector<8x32xf32>, vector<32x32xf32>, vector<8x32xf32> -> vector<8x32xf32>
    %1625 = arith.addf %1624, %18 : vector<8x32xf32>
    %cst_599 = arith.constant 0.000000e+00 : f32
    %1626 = vector.broadcast %cst_599 : f32 to vector<8x32xf32>
    %1627 = arith.maximumf %1625, %1626 : vector<8x32xf32>
    %1628 = math.absf %1625 : vector<8x32xf32>
    %cst_600 = arith.constant 0.000000e+00 : f32
    %1629 = vector.broadcast %cst_600 : f32 to vector<8x32xf32>
    %1630 = arith.subf %1629, %1628 : vector<8x32xf32>
    %1631 = math.exp %1630 : vector<8x32xf32>
    %cst_601 = arith.constant 1.000000e+00 : f32
    %1632 = vector.broadcast %cst_601 : f32 to vector<8x32xf32>
    %1633 = arith.addf %1632, %1631 : vector<8x32xf32>
    %1634 = math.log %1633 : vector<8x32xf32>
    %1635 = arith.addf %1627, %1634 : vector<8x32xf32>
    %cst_602 = arith.constant 1.000000e-01 : f32
    %1636 = vector.broadcast %cst_602 : f32 to vector<8x32xf32>
    %1637 = arith.addf %1635, %1636 : vector<8x32xf32>
    %1638 = arith.select %27, %1625, %1637 : vector<8x32xi1>, vector<8x32xf32>
    %1639 = vector.extract_strided_slice %1625 {offsets = [0, 0], sizes = [8, 16], strides = [1, 1]} : vector<8x32xf32> to vector<8x16xf32>
    %1640 = vector.extract_strided_slice %1637 {offsets = [0, 16], sizes = [8, 16], strides = [1, 1]} : vector<8x32xf32> to vector<8x16xf32>
    %1641 = arith.mulf %1640, %1498 : vector<8x16xf32>
    %1642 = arith.addf %1639, %1641 : vector<8x16xf32>
    %cst_603 = arith.constant dense<0.000000e+00> : vector<8xf32>
    %1643 = vector.multi_reduction <add>, %1642, %cst_603 [1] : vector<8x16xf32> to vector<8xf32>
    %1644 = vector.shape_cast %1643 : vector<8xf32> to vector<8x1xf32>
    %cst_604 = arith.constant 1.600000e+01 : f32
    %1645 = vector.broadcast %cst_604 : f32 to vector<8x1xf32>
    %1646 = arith.divf %1644, %1645 : vector<8x1xf32>
    %1647 = vector.broadcast %1646 : vector<8x1xf32> to vector<8x16xf32>
    %1648 = arith.subf %1642, %1647 : vector<8x16xf32>
    %1649 = arith.mulf %1648, %1648 : vector<8x16xf32>
    %cst_605 = arith.constant dense<0.000000e+00> : vector<8xf32>
    %1650 = vector.multi_reduction <add>, %1649, %cst_605 [1] : vector<8x16xf32> to vector<8xf32>
    %1651 = vector.shape_cast %1650 : vector<8xf32> to vector<8x1xf32>
    %cst_606 = arith.constant 1.600000e+01 : f32
    %1652 = vector.broadcast %cst_606 : f32 to vector<8x1xf32>
    %1653 = arith.divf %1651, %1652 : vector<8x1xf32>
    %cst_607 = arith.constant 9.99999974E-6 : f32
    %1654 = vector.broadcast %cst_607 : f32 to vector<8x1xf32>
    %1655 = arith.addf %1653, %1654 : vector<8x1xf32>
    %1656 = math.rsqrt %1655 : vector<8x1xf32>
    %1657 = vector.broadcast %1656 : vector<8x1xf32> to vector<8x16xf32>
    %1658 = arith.mulf %1648, %1657 : vector<8x16xf32>
    %1659 = arith.mulf %1658, %21 : vector<8x16xf32>
    %1660 = arith.addf %1659, %22 : vector<8x16xf32>
    %cst_608 = arith.constant dense<0.000000e+00> : vector<8x32xf32>
    %1661 = tpu.matmul %1623, %19, %cst_608 {dimension_numbers = #tpu.dot_dimension_numbers<[1], [0], [0], [1], [0, 0, 1, 1], [], []>} : vector<8x32xf32>, vector<32x32xf32>, vector<8x32xf32> -> vector<8x32xf32>
    %1662 = arith.addf %1661, %20 : vector<8x32xf32>
    %cst_609 = arith.constant 0.000000e+00 : f32
    %1663 = vector.broadcast %cst_609 : f32 to vector<8x32xf32>
    %1664 = arith.maximumf %1662, %1663 : vector<8x32xf32>
    %1665 = math.absf %1662 : vector<8x32xf32>
    %cst_610 = arith.constant 0.000000e+00 : f32
    %1666 = vector.broadcast %cst_610 : f32 to vector<8x32xf32>
    %1667 = arith.subf %1666, %1665 : vector<8x32xf32>
    %1668 = math.exp %1667 : vector<8x32xf32>
    %cst_611 = arith.constant 1.000000e+00 : f32
    %1669 = vector.broadcast %cst_611 : f32 to vector<8x32xf32>
    %1670 = arith.addf %1669, %1668 : vector<8x32xf32>
    %1671 = math.log %1670 : vector<8x32xf32>
    %1672 = arith.addf %1664, %1671 : vector<8x32xf32>
    %cst_612 = arith.constant 1.000000e-01 : f32
    %1673 = vector.broadcast %cst_612 : f32 to vector<8x32xf32>
    %1674 = arith.addf %1672, %1673 : vector<8x32xf32>
    %1675 = arith.select %27, %1662, %1674 : vector<8x32xi1>, vector<8x32xf32>
    %1676 = vector.extract_strided_slice %1662 {offsets = [0, 0], sizes = [8, 16], strides = [1, 1]} : vector<8x32xf32> to vector<8x16xf32>
    %1677 = vector.extract_strided_slice %1674 {offsets = [0, 16], sizes = [8, 16], strides = [1, 1]} : vector<8x32xf32> to vector<8x16xf32>
    %1678 = arith.mulf %1677, %1500 : vector<8x16xf32>
    %1679 = arith.addf %1676, %1678 : vector<8x16xf32>
    %cst_613 = arith.constant dense<0.000000e+00> : vector<8xf32>
    %1680 = vector.multi_reduction <add>, %1679, %cst_613 [1] : vector<8x16xf32> to vector<8xf32>
    %1681 = vector.shape_cast %1680 : vector<8xf32> to vector<8x1xf32>
    %cst_614 = arith.constant 1.600000e+01 : f32
    %1682 = vector.broadcast %cst_614 : f32 to vector<8x1xf32>
    %1683 = arith.divf %1681, %1682 : vector<8x1xf32>
    %1684 = vector.broadcast %1683 : vector<8x1xf32> to vector<8x16xf32>
    %1685 = arith.subf %1679, %1684 : vector<8x16xf32>
    %1686 = arith.mulf %1685, %1685 : vector<8x16xf32>
    %cst_615 = arith.constant dense<0.000000e+00> : vector<8xf32>
    %1687 = vector.multi_reduction <add>, %1686, %cst_615 [1] : vector<8x16xf32> to vector<8xf32>
    %1688 = vector.shape_cast %1687 : vector<8xf32> to vector<8x1xf32>
    %cst_616 = arith.constant 1.600000e+01 : f32
    %1689 = vector.broadcast %cst_616 : f32 to vector<8x1xf32>
    %1690 = arith.divf %1688, %1689 : vector<8x1xf32>
    %cst_617 = arith.constant 9.99999974E-6 : f32
    %1691 = vector.broadcast %cst_617 : f32 to vector<8x1xf32>
    %1692 = arith.addf %1690, %1691 : vector<8x1xf32>
    %1693 = math.rsqrt %1692 : vector<8x1xf32>
    %1694 = vector.broadcast %1693 : vector<8x1xf32> to vector<8x16xf32>
    %1695 = arith.mulf %1685, %1694 : vector<8x16xf32>
    %1696 = arith.mulf %1695, %23 : vector<8x16xf32>
    %1697 = arith.addf %1696, %24 : vector<8x16xf32>
    %1698 = tpu.concatenate %1638, %1660, %1675, %1697, %1564 in 1 : vector<8x32xf32>, vector<8x16xf32>, vector<8x32xf32>, vector<8x16xf32>, vector<8x32xf32> -> vector<8x128xf32>
    %c7_618 = arith.constant 7 : index
    %c0_619 = arith.constant 0 : index
    %c0_620 = arith.constant 0 : index
    %1699 = vector.load %arg32[%c7_618, %c0_619, %c0_620] : memref<8x8x128xf32, #tpu.memory_space<vmem>>, vector<1x8x128xf32>
    %1700 = vector.shape_cast %1699 : vector<1x8x128xf32> to vector<8x128xf32>
    %1701 = vector.shape_cast %1698 : vector<8x128xf32> to vector<1x8x128xf32>
    tpu.vector_store %arg32[%c7_618, %c0_619, %c0_620], %1701 {strides = array<i32>} : memref<8x8x128xf32, #tpu.memory_space<vmem>>, vector<1x8x128xf32>,
    return
  }
  func.func @transform_0(%arg0: i32) -> (i32, i32, i32) {
    %c0_i32 = arith.constant 0 : i32
    %c0_i32_0 = arith.constant 0 : i32
    %c0_i32_1 = arith.constant 0 : i32
    %c0_i32_2 = arith.constant 0 : i32
    return %c0_i32, %c0_i32_0, %c0_i32_1 : i32, i32, i32
  }
  func.func @transform_1(%arg0: i32) -> (i32, i32, i32) {
    %c0_i32 = arith.constant 0 : i32
    %c0_i32_0 = arith.constant 0 : i32
    %c0_i32_1 = arith.constant 0 : i32
    %c0_i32_2 = arith.constant 0 : i32
    return %c0_i32, %c0_i32_0, %c0_i32_1 : i32, i32, i32
  }
  func.func @transform_2(%arg0: i32) -> (i32, i32, i32) {
    %c0_i32 = arith.constant 0 : i32
    %c0_i32_0 = arith.constant 0 : i32
    %c0_i32_1 = arith.constant 0 : i32
    %c0_i32_2 = arith.constant 0 : i32
    return %c0_i32, %c0_i32_0, %c0_i32_1 : i32, i32, i32
  }
  func.func @transform_3(%arg0: i32) -> (i32, i32, i32) {
    %c0_i32 = arith.constant 0 : i32
    %c0_i32_0 = arith.constant 0 : i32
    %c0_i32_1 = arith.constant 0 : i32
    %c0_i32_2 = arith.constant 0 : i32
    return %c0_i32, %c0_i32_0, %c0_i32_1 : i32, i32, i32
  }
  func.func @transform_4(%arg0: i32) -> (i32, i32) {
    %c0_i32 = arith.constant 0 : i32
    %c0_i32_0 = arith.constant 0 : i32
    %c0_i32_1 = arith.constant 0 : i32
    return %c0_i32, %c0_i32_0 : i32, i32
  }
  func.func @transform_5(%arg0: i32) -> (i32, i32) {
    %c0_i32 = arith.constant 0 : i32
    %c0_i32_0 = arith.constant 0 : i32
    %c0_i32_1 = arith.constant 0 : i32
    return %c0_i32, %c0_i32_0 : i32, i32
  }
  func.func @transform_6(%arg0: i32) -> (i32, i32) {
    %c0_i32 = arith.constant 0 : i32
    %c0_i32_0 = arith.constant 0 : i32
    %c0_i32_1 = arith.constant 0 : i32
    return %c0_i32, %c0_i32_0 : i32, i32
  }
  func.func @transform_7(%arg0: i32) -> (i32, i32) {
    %c0_i32 = arith.constant 0 : i32
    %c0_i32_0 = arith.constant 0 : i32
    %c0_i32_1 = arith.constant 0 : i32
    return %c0_i32, %c0_i32_0 : i32, i32
  }
  func.func @transform_8(%arg0: i32) -> (i32, i32) {
    %c0_i32 = arith.constant 0 : i32
    %c0_i32_0 = arith.constant 0 : i32
    %c0_i32_1 = arith.constant 0 : i32
    return %c0_i32, %c0_i32_0 : i32, i32
  }
  func.func @transform_9(%arg0: i32) -> (i32, i32) {
    %c0_i32 = arith.constant 0 : i32
    %c0_i32_0 = arith.constant 0 : i32
    %c0_i32_1 = arith.constant 0 : i32
    return %c0_i32, %c0_i32_0 : i32, i32
  }
  func.func @transform_10(%arg0: i32) -> (i32, i32) {
    %c0_i32 = arith.constant 0 : i32
    %c0_i32_0 = arith.constant 0 : i32
    %c0_i32_1 = arith.constant 0 : i32
    return %c0_i32, %c0_i32_0 : i32, i32
  }
  func.func @transform_11(%arg0: i32) -> (i32, i32) {
    %c0_i32 = arith.constant 0 : i32
    %c0_i32_0 = arith.constant 0 : i32
    %c0_i32_1 = arith.constant 0 : i32
    return %c0_i32, %c0_i32_0 : i32, i32
  }
  func.func @transform_12(%arg0: i32) -> (i32, i32) {
    %c0_i32 = arith.constant 0 : i32
    %c0_i32_0 = arith.constant 0 : i32
    %c0_i32_1 = arith.constant 0 : i32
    return %c0_i32, %c0_i32_0 : i32, i32
  }
  func.func @transform_13(%arg0: i32) -> (i32, i32) {
    %c0_i32 = arith.constant 0 : i32
    %c0_i32_0 = arith.constant 0 : i32
    %c0_i32_1 = arith.constant 0 : i32
    return %c0_i32, %c0_i32_0 : i32, i32
  }
  func.func @transform_14(%arg0: i32) -> (i32, i32) {
    %c0_i32 = arith.constant 0 : i32
    %c0_i32_0 = arith.constant 0 : i32
    %c0_i32_1 = arith.constant 0 : i32
    return %c0_i32, %c0_i32_0 : i32, i32
  }
  func.func @transform_15(%arg0: i32) -> (i32, i32) {
    %c0_i32 = arith.constant 0 : i32
    %c0_i32_0 = arith.constant 0 : i32
    %c0_i32_1 = arith.constant 0 : i32
    return %c0_i32, %c0_i32_0 : i32, i32
  }
  func.func @transform_16(%arg0: i32) -> (i32, i32) {
    %c0_i32 = arith.constant 0 : i32
    %c0_i32_0 = arith.constant 0 : i32
    %c0_i32_1 = arith.constant 0 : i32
    return %c0_i32, %c0_i32_0 : i32, i32
  }
  func.func @transform_17(%arg0: i32) -> (i32, i32) {
    %c0_i32 = arith.constant 0 : i32
    %c0_i32_0 = arith.constant 0 : i32
    %c0_i32_1 = arith.constant 0 : i32
    return %c0_i32, %c0_i32_0 : i32, i32
  }
  func.func @transform_18(%arg0: i32) -> (i32, i32) {
    %c0_i32 = arith.constant 0 : i32
    %c0_i32_0 = arith.constant 0 : i32
    %c0_i32_1 = arith.constant 0 : i32
    return %c0_i32, %c0_i32_0 : i32, i32
  }
  func.func @transform_19(%arg0: i32) -> (i32, i32) {
    %c0_i32 = arith.constant 0 : i32
    %c0_i32_0 = arith.constant 0 : i32
    %c0_i32_1 = arith.constant 0 : i32
    return %c0_i32, %c0_i32_0 : i32, i32
  }
  func.func @transform_20(%arg0: i32) -> (i32, i32) {
    %c0_i32 = arith.constant 0 : i32
    %c0_i32_0 = arith.constant 0 : i32
    %c0_i32_1 = arith.constant 0 : i32
    return %c0_i32, %c0_i32_0 : i32, i32
  }
  func.func @transform_21(%arg0: i32) -> (i32, i32) {
    %c0_i32 = arith.constant 0 : i32
    %c0_i32_0 = arith.constant 0 : i32
    %c0_i32_1 = arith.constant 0 : i32
    return %c0_i32, %c0_i32_0 : i32, i32
  }
  func.func @transform_22(%arg0: i32) -> (i32, i32) {
    %c0_i32 = arith.constant 0 : i32
    %c0_i32_0 = arith.constant 0 : i32
    %c0_i32_1 = arith.constant 0 : i32
    return %c0_i32, %c0_i32_0 : i32, i32
  }
  func.func @transform_23(%arg0: i32) -> (i32, i32) {
    %c0_i32 = arith.constant 0 : i32
    %c0_i32_0 = arith.constant 0 : i32
    %c0_i32_1 = arith.constant 0 : i32
    return %c0_i32, %c0_i32_0 : i32, i32
  }
  func.func @transform_24(%arg0: i32) -> (i32, i32) {
    %c0_i32 = arith.constant 0 : i32
    %c0_i32_0 = arith.constant 0 : i32
    %c0_i32_1 = arith.constant 0 : i32
    return %c0_i32, %c0_i32_0 : i32, i32
  }
  func.func @transform_25(%arg0: i32) -> (i32, i32) {
    %c0_i32 = arith.constant 0 : i32
    %c0_i32_0 = arith.constant 0 : i32
    %c0_i32_1 = arith.constant 0 : i32
    return %c0_i32, %c0_i32_0 : i32, i32
  }
  func.func @transform_26(%arg0: i32) -> (i32, i32) {
    %c0_i32 = arith.constant 0 : i32
    %c0_i32_0 = arith.constant 0 : i32
    %c0_i32_1 = arith.constant 0 : i32
    return %c0_i32, %c0_i32_0 : i32, i32
  }
  func.func @transform_27(%arg0: i32) -> (i32, i32) {
    %c0_i32 = arith.constant 0 : i32
    %c0_i32_0 = arith.constant 0 : i32
    %c0_i32_1 = arith.constant 0 : i32
    return %c0_i32, %c0_i32_0 : i32, i32
  }
  func.func @transform_28(%arg0: i32) -> (i32, i32) {
    %c0_i32 = arith.constant 0 : i32
    %c0_i32_0 = arith.constant 0 : i32
    %c0_i32_1 = arith.constant 0 : i32
    return %c0_i32, %c0_i32_0 : i32, i32
  }
  func.func @transform_29(%arg0: i32) -> (i32, i32) {
    %c0_i32 = arith.constant 0 : i32
    %c0_i32_0 = arith.constant 0 : i32
    %c0_i32_1 = arith.constant 0 : i32
    return %c0_i32, %c0_i32_0 : i32, i32
  }
  func.func @transform_30(%arg0: i32) -> (i32, i32) {
    %c0_i32 = arith.constant 0 : i32
    %c0_i32_0 = arith.constant 0 : i32
    %c0_i32_1 = arith.constant 0 : i32
    return %c0_i32, %c0_i32_0 : i32, i32
  }
  func.func @transform_31(%arg0: i32) -> (i32, i32, i32) {
    %c0_i32 = arith.constant 0 : i32
    %c0_i32_0 = arith.constant 0 : i32
    %c0_i32_1 = arith.constant 0 : i32
    %c0_i32_2 = arith.constant 0 : i32
    return %c0_i32, %c0_i32_0, %c0_i32_1 : i32, i32, i32
  }
}

</mosaic_0001>

<llo_original>
// kernel: tpu_custom_call.1
$region0: #{tpu_custom_call.1}
  #allocation0 [shape = 'u32[]', space=smem, size = 0x4, offset = 0x4, fixed_abs, tag = 'smem constant byte address 0x4 - core index']
  #allocation1 [shape = 'u32[144,128]{1,0:T(1,128)}', space=vmem, size = 0x12000, scoped, tag = 'internal scratch']
  %s0 = inlined_call_operand.smem [shape: u32[32], index: -1, kind: input, shape index: {}]
  %s1 = sld [smem:[%s0]]
  %s2 = scalar_lea.smem %s0, 1
  %s3 = sld [smem:[%s2]]
  %s4 = scalar_lea.smem %s0, 2
  %s5 = sld [smem:[%s4]]
  %s6 = scalar_lea.smem %s0, 3
  %s7 = sld [smem:[%s6]]
  %s8 = scalar_lea.smem %s0, 4
  %s9 = sld [smem:[%s8]]
  %s10 = scalar_lea.smem %s0, 5
  %s11 = sld [smem:[%s10]]
  %s12 = scalar_lea.smem %s0, 6
  %s13 = sld [smem:[%s12]]
  %s14 = scalar_lea.smem %s0, 7
  %s15 = sld [smem:[%s14]]
  %s16 = scalar_lea.smem %s0, 8
  %s17 = sld [smem:[%s16]]
  %s18 = scalar_lea.smem %s0, 9
  %s19 = sld [smem:[%s18]]
  %s20 = scalar_lea.smem %s0, 10
  %s21 = sld [smem:[%s20]]
  %s22 = scalar_lea.smem %s0, 11
  %s23 = sld [smem:[%s22]]
  %s24 = scalar_lea.smem %s0, 12
  %s25 = sld [smem:[%s24]]
  %s26 = scalar_lea.smem %s0, 13
  %s27 = sld [smem:[%s26]]
  %s28 = scalar_lea.smem %s0, 14
  %s29 = sld [smem:[%s28]]
  %s30 = scalar_lea.smem %s0, 15
  %s31 = sld [smem:[%s30]]
  %s32 = scalar_lea.smem %s0, 16
  %s33 = sld [smem:[%s32]]
  %s34 = scalar_lea.smem %s0, 17
  %s35 = sld [smem:[%s34]]
  %s36 = scalar_lea.smem %s0, 18
  %s37 = sld [smem:[%s36]]
  %s38 = scalar_lea.smem %s0, 19
  %s39 = sld [smem:[%s38]]
  %s40 = scalar_lea.smem %s0, 20
  %s41 = sld [smem:[%s40]]
  %s42 = scalar_lea.smem %s0, 21
  %s43 = sld [smem:[%s42]]
  %s44 = scalar_lea.smem %s0, 22
  %s45 = sld [smem:[%s44]]
  %s46 = scalar_lea.smem %s0, 23
  %s47 = sld [smem:[%s46]]
  %s48 = scalar_lea.smem %s0, 24
  %s49 = sld [smem:[%s48]]
  %s50 = scalar_lea.smem %s0, 25
  %s51 = sld [smem:[%s50]]
  %s52 = scalar_lea.smem %s0, 26
  %s53 = sld [smem:[%s52]]
  %s54 = scalar_lea.smem %s0, 27
  %s55 = sld [smem:[%s54]]
  %s56 = scalar_lea.smem %s0, 28
  %s57 = sld [smem:[%s56]]
  %s58 = scalar_lea.smem %s0, 29
  %s59 = sld [smem:[%s58]]
  %s60 = scalar_lea.smem %s0, 30
  %s61 = sld [smem:[%s60]]
  %s62 = scalar_lea.smem %s0, 31
  %s63 = sld [smem:[%s62]]
  %s64 = sld [smem:[#allocation0]]
  $region226: #{tpu_custom_call.1} parent=0
    _
  %s66 = ssub.s32 1, %s64
  %s67 = scalar_select 0, %s66, %s64
  $region1: #{tpu_custom_call.1} parent=0
    #allocation2 [shape = 'u8[32768]{0}', space=vmem, size = 0x8000, scoped, tag = 'input window, operand 0, single buffered']
    #allocation3 [shape = 's32[1]{0}', space=sflag, size = 0x4, scoped, tag = 'scoped memory for tpu_custom_call.1']
    #allocation4 [shape = 's32[1]{0}', space=sflag, size = 0x4, scoped, tag = 'scoped memory for tpu_custom_call.1']
    #allocation5 [shape = 'u8[32768]{0}', space=vmem, size = 0x8000, scoped, tag = 'input window, operand 1, single buffered']
    #allocation6 [shape = 's32[1]{0}', space=sflag, size = 0x4, scoped, tag = 'scoped memory for tpu_custom_call.1']
    #allocation7 [shape = 'u8[32768]{0}', space=vmem, size = 0x8000, scoped, tag = 'input window, operand 2, single buffered']
    #allocation8 [shape = 'u8[32768]{0}', space=vmem, size = 0x8000, scoped, tag = 'input window, operand 3, single buffered']
    #allocation9 [shape = 's32[1]{0}', space=sflag, size = 0x4, scoped, tag = 'scoped memory for tpu_custom_call.1']
    #allocation10 [shape = 'u8[4096]{0}', space=vmem, size = 0x1000, scoped, tag = 'input window, operand 4, single buffered']
    #allocation11 [shape = 'u8[4096]{0}', space=vmem, size = 0x1000, scoped, tag = 'input window, operand 5, single buffered']
    #allocation12 [shape = 's32[1]{0}', space=sflag, size = 0x4, scoped, tag = 'scoped memory for tpu_custom_call.1']
    #allocation13 [shape = 'u8[4096]{0}', space=vmem, size = 0x1000, scoped, tag = 'input window, operand 6, single buffered']
    #allocation14 [shape = 'u8[8192]{0}', space=vmem, size = 0x2000, scoped, tag = 'input window, operand 7, single buffered']
    #allocation15 [shape = 's32[1]{0}', space=sflag, size = 0x4, scoped, tag = 'scoped memory for tpu_custom_call.1']
    #allocation16 [shape = 'u8[4096]{0}', space=vmem, size = 0x1000, scoped, tag = 'input window, operand 8, single buffered']
    #allocation17 [shape = 'u8[16384]{0}', space=vmem, size = 0x4000, scoped, tag = 'input window, operand 10, single buffered']
    #allocation18 [shape = 's32[1]{0}', space=sflag, size = 0x4, scoped, tag = 'scoped memory for tpu_custom_call.1']
    #allocation19 [shape = 'u8[4096]{0}', space=vmem, size = 0x1000, scoped, tag = 'input window, operand 11, single buffered']
    #allocation20 [shape = 'u8[4096]{0}', space=vmem, size = 0x1000, scoped, tag = 'input window, operand 12, single buffered']
    #allocation21 [shape = 's32[1]{0}', space=sflag, size = 0x4, scoped, tag = 'scoped memory for tpu_custom_call.1']
    #allocation22 [shape = 'u8[4096]{0}', space=vmem, size = 0x1000, scoped, tag = 'input window, operand 13, single buffered']
    #allocation23 [shape = 'u8[4096]{0}', space=vmem, size = 0x1000, scoped, tag = 'input window, operand 14, single buffered']
    #allocation24 [shape = 's32[1]{0}', space=sflag, size = 0x4, scoped, tag = 'scoped memory for tpu_custom_call.1']
    #allocation25 [shape = 'u8[16384]{0}', space=vmem, size = 0x4000, scoped, tag = 'input window, operand 15, single buffered']
    #allocation26 [shape = 'u8[16384]{0}', space=vmem, size = 0x4000, scoped, tag = 'input window, operand 16, single buffered']
    #allocation27 [shape = 's32[1]{0}', space=sflag, size = 0x4, scoped, tag = 'scoped memory for tpu_custom_call.1']
    #allocation28 [shape = 'u8[4096]{0}', space=vmem, size = 0x1000, scoped, tag = 'input window, operand 17, single buffered']
    #allocation29 [shape = 'u8[4096]{0}', space=vmem, size = 0x1000, scoped, tag = 'input window, operand 18, single buffered']
    #allocation30 [shape = 's32[1]{0}', space=sflag, size = 0x4, scoped, tag = 'scoped memory for tpu_custom_call.1']
    #allocation31 [shape = 'u8[4096]{0}', space=vmem, size = 0x1000, scoped, tag = 'input window, operand 19, single buffered']
    #allocation32 [shape = 'u8[4096]{0}', space=vmem, size = 0x1000, scoped, tag = 'input window, operand 21, single buffered']
    #allocation33 [shape = 's32[1]{0}', space=sflag, size = 0x4, scoped, tag = 'scoped memory for tpu_custom_call.1']
    #allocation34 [shape = 'u8[16384]{0}', space=vmem, size = 0x4000, scoped, tag = 'input window, operand 25, single buffered']
    #allocation35 [shape = 'u8[4096]{0}', space=vmem, size = 0x1000, scoped, tag = 'input window, operand 27, single buffered']
    #allocation36 [shape = 's32[1]{0}', space=sflag, size = 0x4, scoped, tag = 'scoped memory for tpu_custom_call.1']
    #allocation37 [shape = 'u8[4096]{0}', space=vmem, size = 0x1000, scoped, tag = 'input window, operand 29, single buffered']
    #allocation38 [shape = 'u8[32768]{0}', space=vmem, size = 0x8000, scoped, tag = 'output window, operand 0, single buffered']
    %68 = vsyncpa [#allocation3], 0
    %69 = vsyncpa [#allocation6], 0
    %70 = vsyncpa [#allocation9], 0
    %71 = vsyncpa [#allocation12], 0
    %72 = vsyncpa [#allocation15], 0
    %73 = vsyncpa [#allocation18], 0
    %74 = vsyncpa [#allocation21], 0
    %75 = vsyncpa [#allocation24], 0
    %76 = vsyncpa [#allocation27], 0
    %77 = vsyncpa [#allocation30], 0
    %78 = vsyncpa [#allocation33], 0
    %79 = vsyncpa [#allocation36], 0
    %80 = vsyncpa [#allocation4], 0
    // Predicated region
    $region2: #{tpu_custom_call.1} parent=1 // pred_check
      _
    $region3: #{tpu_custom_call.1} parent=1 // pred_check_branch
      %82 = sbr.rel (0) target = $region5
    $region4: #{tpu_custom_call.1} parent=1 // pred_region
      %s84 = ssub.s32 1024, 1024
      %85 = vsyncadd [#allocation3], %s84
      %s86 = sshll.u32 [#allocation2], 4
      %s87 = int_to_ptr.vmem [resolvable:$true] %s86
      %92 = dma.hbm_to_vmem [thread:$0]  %s1, 1024, %s87, [#allocation3], 128, 128, 8
    $region5: #{tpu_custom_call.1} parent=1 // pred_fallthru
      _
    // Predicated region
    $region6: #{tpu_custom_call.1} parent=1 // pred_check
      _
    $region7: #{tpu_custom_call.1} parent=1 // pred_check_branch
      %94 = sbr.rel (0) target = $region9
    $region8: #{tpu_custom_call.1} parent=1 // pred_region
      %s96 = ssub.s32 1024, 1024
      %97 = vsyncadd [#allocation6], %s96
      %s98 = sshll.u32 [#allocation5], 4
      %s99 = int_to_ptr.vmem [resolvable:$true] %s98
      %104 = dma.hbm_to_vmem [thread:$0]  %s3, 1024, %s99, [#allocation6], 128, 128, 8
    $region9: #{tpu_custom_call.1} parent=1 // pred_fallthru
      _
    // Predicated region
    $region10: #{tpu_custom_call.1} parent=1 // pred_check
      _
    $region11: #{tpu_custom_call.1} parent=1 // pred_check_branch
      %106 = sbr.rel (0) target = $region13
    $region12: #{tpu_custom_call.1} parent=1 // pred_region
      %s108 = ssub.s32 1024, 1024
      %109 = vsyncadd [#allocation6], %s108
      %s110 = sshll.u32 [#allocation7], 4
      %s111 = int_to_ptr.vmem [resolvable:$true] %s110
      %116 = dma.hbm_to_vmem [thread:$0]  %s5, 1024, %s111, [#allocation6], 128, 128, 8
    $region13: #{tpu_custom_call.1} parent=1 // pred_fallthru
      _
    // Predicated region
    $region14: #{tpu_custom_call.1} parent=1 // pred_check
      _
    $region15: #{tpu_custom_call.1} parent=1 // pred_check_branch
      %118 = sbr.rel (0) target = $region17
    $region16: #{tpu_custom_call.1} parent=1 // pred_region
      %s120 = ssub.s32 1024, 1024
      %121 = vsyncadd [#allocation9], %s120
      %s122 = sshll.u32 [#allocation8], 4
      %s123 = int_to_ptr.vmem [resolvable:$true] %s122
      %128 = dma.hbm_to_vmem [thread:$0]  %s7, 1024, %s123, [#allocation9], 128, 128, 8
    $region17: #{tpu_custom_call.1} parent=1 // pred_fallthru
      _
    // Predicated region
    $region18: #{tpu_custom_call.1} parent=1 // pred_check
      _
    $region19: #{tpu_custom_call.1} parent=1 // pred_check_branch
      %130 = sbr.rel (0) target = $region21
    $region20: #{tpu_custom_call.1} parent=1 // pred_region
      %s132 = ssub.s32 128, 128
      %133 = vsyncadd [#allocation9], %s132
      %s135 = sshll.u32 [#allocation10], 4
      %s136 = int_to_ptr.vmem [resolvable:$true] %s135
      %138 = dma.hbm_to_vmem [thread:$0]  %s9, 128, %s136, [#allocation9]
    $region21: #{tpu_custom_call.1} parent=1 // pred_fallthru
      _
    // Predicated region
    $region22: #{tpu_custom_call.1} parent=1 // pred_check
      _
    $region23: #{tpu_custom_call.1} parent=1 // pred_check_branch
      %140 = sbr.rel (0) target = $region25
    $region24: #{tpu_custom_call.1} parent=1 // pred_region
      %s142 = ssub.s32 128, 128
      %143 = vsyncadd [#allocation12], %s142
      %s145 = sshll.u32 [#allocation11], 4
      %s146 = int_to_ptr.vmem [resolvable:$true] %s145
      %148 = dma.hbm_to_vmem [thread:$0]  %s11, 128, %s146, [#allocation12]
    $region25: #{tpu_custom_call.1} parent=1 // pred_fallthru
      _
    // Predicated region
    $region26: #{tpu_custom_call.1} parent=1 // pred_check
      _
    $region27: #{tpu_custom_call.1} parent=1 // pred_check_branch
      %150 = sbr.rel (0) target = $region29
    $region28: #{tpu_custom_call.1} parent=1 // pred_region
      %s152 = ssub.s32 128, 128
      %153 = vsyncadd [#allocation12], %s152
      %s155 = sshll.u32 [#allocation13], 4
      %s156 = int_to_ptr.vmem [resolvable:$true] %s155
      %158 = dma.hbm_to_vmem [thread:$0]  %s13, 128, %s156, [#allocation12]
    $region29: #{tpu_custom_call.1} parent=1 // pred_fallthru
      _
    // Predicated region
    $region30: #{tpu_custom_call.1} parent=1 // pred_check
      _
    $region31: #{tpu_custom_call.1} parent=1 // pred_check_branch
      %160 = sbr.rel (0) target = $region33
    $region32: #{tpu_custom_call.1} parent=1 // pred_region
      %s162 = ssub.s32 256, 256
      %163 = vsyncadd [#allocation15], %s162
      %s164 = sshll.u32 [#allocation14], 4
      %s165 = int_to_ptr.vmem [resolvable:$true] %s164
      %170 = dma.hbm_to_vmem [thread:$0]  %s15, 256, %s165, [#allocation15], 128, 128, 8
    $region33: #{tpu_custom_call.1} parent=1 // pred_fallthru
      _
    // Predicated region
    $region34: #{tpu_custom_call.1} parent=1 // pred_check
      _
    $region35: #{tpu_custom_call.1} parent=1 // pred_check_branch
      %172 = sbr.rel (0) target = $region37
    $region36: #{tpu_custom_call.1} parent=1 // pred_region
      %s174 = ssub.s32 128, 128
      %175 = vsyncadd [#allocation15], %s174
      %s177 = sshll.u32 [#allocation16], 4
      %s178 = int_to_ptr.vmem [resolvable:$true] %s177
      %180 = dma.hbm_to_vmem [thread:$0]  %s17, 128, %s178, [#allocation15]
    $region37: #{tpu_custom_call.1} parent=1 // pred_fallthru
      _
    // Predicated region
    $region38: #{tpu_custom_call.1} parent=1 // pred_check
      _
    $region39: #{tpu_custom_call.1} parent=1 // pred_check_branch
      %182 = sbr.rel (0) target = $region41
    $region40: #{tpu_custom_call.1} parent=1 // pred_region
      _
    $region41: #{tpu_custom_call.1} parent=1 // pred_fallthru
      _
    // Predicated region
    $region42: #{tpu_custom_call.1} parent=1 // pred_check
      _
    $region43: #{tpu_custom_call.1} parent=1 // pred_check_branch
      %184 = sbr.rel (0) target = $region45
    $region44: #{tpu_custom_call.1} parent=1 // pred_region
      %s186 = ssub.s32 512, 512
      %187 = vsyncadd [#allocation18], %s186
      %s188 = sshll.u32 [#allocation17], 4
      %s189 = int_to_ptr.vmem [resolvable:$true] %s188
      %194 = dma.hbm_to_vmem [thread:$0]  %s21, 512, %s189, [#allocation18], 128, 128, 8
    $region45: #{tpu_custom_call.1} parent=1 // pred_fallthru
      _
    // Predicated region
    $region46: #{tpu_custom_call.1} parent=1 // pred_check
      _
    $region47: #{tpu_custom_call.1} parent=1 // pred_check_branch
      %196 = sbr.rel (0) target = $region49
    $region48: #{tpu_custom_call.1} parent=1 // pred_region
      %s198 = ssub.s32 128, 128
      %199 = vsyncadd [#allocation18], %s198
      %s201 = sshll.u32 [#allocation19], 4
      %s202 = int_to_ptr.vmem [resolvable:$true] %s201
      %204 = dma.hbm_to_vmem [thread:$0]  %s23, 128, %s202, [#allocation18]
    $region49: #{tpu_custom_call.1} parent=1 // pred_fallthru
      _
    // Predicated region
    $region50: #{tpu_custom_call.1} parent=1 // pred_check
      _
    $region51: #{tpu_custom_call.1} parent=1 // pred_check_branch
      %206 = sbr.rel (0) target = $region53
    $region52: #{tpu_custom_call.1} parent=1 // pred_region
      %s208 = ssub.s32 128, 128
      %209 = vsyncadd [#allocation21], %s208
      %s211 = sshll.u32 [#allocation20], 4
      %s212 = int_to_ptr.vmem [resolvable:$true] %s211
      %214 = dma.hbm_to_vmem [thread:$0]  %s25, 128, %s212, [#allocation21]
    $region53: #{tpu_custom_call.1} parent=1 // pred_fallthru
      _
    // Predicated region
    $region54: #{tpu_custom_call.1} parent=1 // pred_check
      _
    $region55: #{tpu_custom_call.1} parent=1 // pred_check_branch
      %216 = sbr.rel (0) target = $region57
    $region56: #{tpu_custom_call.1} parent=1 // pred_region
      %s218 = ssub.s32 128, 128
      %219 = vsyncadd [#allocation21], %s218
      %s221 = sshll.u32 [#allocation22], 4
      %s222 = int_to_ptr.vmem [resolvable:$true] %s221
      %224 = dma.hbm_to_vmem [thread:$0]  %s27, 128, %s222, [#allocation21]
    $region57: #{tpu_custom_call.1} parent=1 // pred_fallthru
      _
    // Predicated region
    $region58: #{tpu_custom_call.1} parent=1 // pred_check
      _
    $region59: #{tpu_custom_call.1} parent=1 // pred_check_branch
      %226 = sbr.rel (0) target = $region61
    $region60: #{tpu_custom_call.1} parent=1 // pred_region
      %s228 = ssub.s32 128, 128
      %229 = vsyncadd [#allocation24], %s228
      %s231 = sshll.u32 [#allocation23], 4
      %s232 = int_to_ptr.vmem [resolvable:$true] %s231
      %234 = dma.hbm_to_vmem [thread:$0]  %s29, 128, %s232, [#allocation24]
    $region61: #{tpu_custom_call.1} parent=1 // pred_fallthru
      _
    // Predicated region
    $region62: #{tpu_custom_call.1} parent=1 // pred_check
      _
    $region63: #{tpu_custom_call.1} parent=1 // pred_check_branch
      %236 = sbr.rel (0) target = $region65
    $region64: #{tpu_custom_call.1} parent=1 // pred_region
      %s238 = ssub.s32 512, 512
      %239 = vsyncadd [#allocation24], %s238
      %s240 = sshll.u32 [#allocation25], 4
      %s241 = int_to_ptr.vmem [resolvable:$true] %s240
      %246 = dma.hbm_to_vmem [thread:$0]  %s31, 512, %s241, [#allocation24], 128, 128, 8
    $region65: #{tpu_custom_call.1} parent=1 // pred_fallthru
      _
    // Predicated region
    $region66: #{tpu_custom_call.1} parent=1 // pred_check
      _
    $region67: #{tpu_custom_call.1} parent=1 // pred_check_branch
      %248 = sbr.rel (0) target = $region69
    $region68: #{tpu_custom_call.1} parent=1 // pred_region
      %s250 = ssub.s32 512, 512
      %251 = vsyncadd [#allocation27], %s250
      %s252 = sshll.u32 [#allocation26], 4
      %s253 = int_to_ptr.vmem [resolvable:$true] %s252
      %258 = dma.hbm_to_vmem [thread:$0]  %s33, 512, %s253, [#allocation27], 128, 128, 8
    $region69: #{tpu_custom_call.1} parent=1 // pred_fallthru
      _
    // Predicated region
    $region70: #{tpu_custom_call.1} parent=1 // pred_check
      _
    $region71: #{tpu_custom_call.1} parent=1 // pred_check_branch
      %260 = sbr.rel (0) target = $region73
    $region72: #{tpu_custom_call.1} parent=1 // pred_region
      %s262 = ssub.s32 128, 128
      %263 = vsyncadd [#allocation27], %s262
      %s265 = sshll.u32 [#allocation28], 4
      %s266 = int_to_ptr.vmem [resolvable:$true] %s265
      %268 = dma.hbm_to_vmem [thread:$0]  %s35, 128, %s266, [#allocation27]
    $region73: #{tpu_custom_call.1} parent=1 // pred_fallthru
      _
    // Predicated region
    $region74: #{tpu_custom_call.1} parent=1 // pred_check
      _
    $region75: #{tpu_custom_call.1} parent=1 // pred_check_branch
      %270 = sbr.rel (0) target = $region77
    $region76: #{tpu_custom_call.1} parent=1 // pred_region
      %s272 = ssub.s32 128, 128
      %273 = vsyncadd [#allocation30], %s272
      %s275 = sshll.u32 [#allocation29], 4
      %s276 = int_to_ptr.vmem [resolvable:$true] %s275
      %278 = dma.hbm_to_vmem [thread:$0]  %s37, 128, %s276, [#allocation30]
    $region77: #{tpu_custom_call.1} parent=1 // pred_fallthru
      _
    // Predicated region
    $region78: #{tpu_custom_call.1} parent=1 // pred_check
      _
    $region79: #{tpu_custom_call.1} parent=1 // pred_check_branch
      %280 = sbr.rel (0) target = $region81
    $region80: #{tpu_custom_call.1} parent=1 // pred_region
      %s282 = ssub.s32 128, 128
      %283 = vsyncadd [#allocation30], %s282
      %s285 = sshll.u32 [#allocation31], 4
      %s286 = int_to_ptr.vmem [resolvable:$true] %s285
      %288 = dma.hbm_to_vmem [thread:$0]  %s39, 128, %s286, [#allocation30]
    $region81: #{tpu_custom_call.1} parent=1 // pred_fallthru
      _
    // Predicated region
    $region82: #{tpu_custom_call.1} parent=1 // pred_check
      _
    $region83: #{tpu_custom_call.1} parent=1 // pred_check_branch
      %290 = sbr.rel (0) target = $region85
    $region84: #{tpu_custom_call.1} parent=1 // pred_region
      _
    $region85: #{tpu_custom_call.1} parent=1 // pred_fallthru
      _
    // Predicated region
    $region86: #{tpu_custom_call.1} parent=1 // pred_check
      _
    $region87: #{tpu_custom_call.1} parent=1 // pred_check_branch
      %292 = sbr.rel (0) target = $region89
    $region88: #{tpu_custom_call.1} parent=1 // pred_region
      %s294 = ssub.s32 128, 128
      %295 = vsyncadd [#allocation33], %s294
      %s297 = sshll.u32 [#allocation32], 4
      %s298 = int_to_ptr.vmem [resolvable:$true] %s297
      %300 = dma.hbm_to_vmem [thread:$0]  %s43, 128, %s298, [#allocation33]
    $region89: #{tpu_custom_call.1} parent=1 // pred_fallthru
      _
    // Predicated region
    $region90: #{tpu_custom_call.1} parent=1 // pred_check
      _
    $region91: #{tpu_custom_call.1} parent=1 // pred_check_branch
      %302 = sbr.rel (0) target = $region93
    $region92: #{tpu_custom_call.1} parent=1 // pred_region
      _
    $region93: #{tpu_custom_call.1} parent=1 // pred_fallthru
      _
    // Predicated region
    $region94: #{tpu_custom_call.1} parent=1 // pred_check
      _
    $region95: #{tpu_custom_call.1} parent=1 // pred_check_branch
      %304 = sbr.rel (0) target = $region97
    $region96: #{tpu_custom_call.1} parent=1 // pred_region
      _
    $region97: #{tpu_custom_call.1} parent=1 // pred_fallthru
      _
    // Predicated region
    $region98: #{tpu_custom_call.1} parent=1 // pred_check
      _
    $region99: #{tpu_custom_call.1} parent=1 // pred_check_branch
      %306 = sbr.rel (0) target = $region101
    $region100: #{tpu_custom_call.1} parent=1 // pred_region
      _
    $region101: #{tpu_custom_call.1} parent=1 // pred_fallthru
      _
    // Predicated region
    $region102: #{tpu_custom_call.1} parent=1 // pred_check
      _
    $region103: #{tpu_custom_call.1} parent=1 // pred_check_branch
      %308 = sbr.rel (0) target = $region105
    $region104: #{tpu_custom_call.1} parent=1 // pred_region
      %s310 = ssub.s32 512, 512
      %311 = vsyncadd [#allocation33], %s310
      %s312 = sshll.u32 [#allocation34], 4
      %s313 = int_to_ptr.vmem [resolvable:$true] %s312
      %318 = dma.hbm_to_vmem [thread:$0]  %s51, 512, %s313, [#allocation33], 128, 128, 8
    $region105: #{tpu_custom_call.1} parent=1 // pred_fallthru
      _
    // Predicated region
    $region106: #{tpu_custom_call.1} parent=1 // pred_check
      _
    $region107: #{tpu_custom_call.1} parent=1 // pred_check_branch
      %320 = sbr.rel (0) target = $region109
    $region108: #{tpu_custom_call.1} parent=1 // pred_region
      _
    $region109: #{tpu_custom_call.1} parent=1 // pred_fallthru
      _
    // Predicated region
    $region110: #{tpu_custom_call.1} parent=1 // pred_check
      _
    $region111: #{tpu_custom_call.1} parent=1 // pred_check_branch
      %322 = sbr.rel (0) target = $region113
    $region112: #{tpu_custom_call.1} parent=1 // pred_region
      %s324 = ssub.s32 128, 128
      %325 = vsyncadd [#allocation36], %s324
      %s327 = sshll.u32 [#allocation35], 4
      %s328 = int_to_ptr.vmem [resolvable:$true] %s327
      %330 = dma.hbm_to_vmem [thread:$0]  %s55, 128, %s328, [#allocation36]
    $region113: #{tpu_custom_call.1} parent=1 // pred_fallthru
      _
    // Predicated region
    $region114: #{tpu_custom_call.1} parent=1 // pred_check
      _
    $region115: #{tpu_custom_call.1} parent=1 // pred_check_branch
      %332 = sbr.rel (0) target = $region117
    $region116: #{tpu_custom_call.1} parent=1 // pred_region
      _
    $region117: #{tpu_custom_call.1} parent=1 // pred_fallthru
      _
    // Predicated region
    $region118: #{tpu_custom_call.1} parent=1 // pred_check
      _
    $region119: #{tpu_custom_call.1} parent=1 // pred_check_branch
      %334 = sbr.rel (0) target = $region121
    $region120: #{tpu_custom_call.1} parent=1 // pred_region
      %s336 = ssub.s32 128, 128
      %337 = vsyncadd [#allocation36], %s336
      %s339 = sshll.u32 [#allocation37], 4
      %s340 = int_to_ptr.vmem [resolvable:$true] %s339
      %342 = dma.hbm_to_vmem [thread:$0]  %s59, 128, %s340, [#allocation36]
    $region121: #{tpu_custom_call.1} parent=1 // pred_fallthru
      _
    // Predicated region
    $region122: #{tpu_custom_call.1} parent=1 // pred_check
      _
    $region123: #{tpu_custom_call.1} parent=1 // pred_check_branch
      %344 = sbr.rel (0) target = $region125
    $region124: #{tpu_custom_call.1} parent=1 // pred_region
      _
    $region125: #{tpu_custom_call.1} parent=1 // pred_fallthru
      _
    // Predicated region
    $region126: #{tpu_custom_call.1} parent=1 // pred_check
      _
    $region127: #{tpu_custom_call.1} parent=1 // pred_check_branch
      %346 = sbr.rel (0) target = $region129
    $region128: #{tpu_custom_call.1} parent=1 // pred_region
      %347 = dma.done [#allocation3], 1024
    $region129: #{tpu_custom_call.1} parent=1 // pred_fallthru
      _
    // Predicated region
    $region130: #{tpu_custom_call.1} parent=1 // pred_check
      _
    $region131: #{tpu_custom_call.1} parent=1 // pred_check_branch
      %349 = sbr.rel (0) target = $region133
    $region132: #{tpu_custom_call.1} parent=1 // pred_region
      %350 = dma.done [#allocation6], 1024
    $region133: #{tpu_custom_call.1} parent=1 // pred_fallthru
      _
    // Predicated region
    $region134: #{tpu_custom_call.1} parent=1 // pred_check
      _
    $region135: #{tpu_custom_call.1} parent=1 // pred_check_branch
      %352 = sbr.rel (0) target = $region137
    $region136: #{tpu_custom_call.1} parent=1 // pred_region
      %353 = dma.done [#allocation6], 1024
    $region137: #{tpu_custom_call.1} parent=1 // pred_fallthru
      _
    // Predicated region
    $region138: #{tpu_custom_call.1} parent=1 // pred_check
      _
    $region139: #{tpu_custom_call.1} parent=1 // pred_check_branch
      %355 = sbr.rel (0) target = $region141
    $region140: #{tpu_custom_call.1} parent=1 // pred_region
      %356 = dma.done [#allocation9], 1024
    $region141: #{tpu_custom_call.1} parent=1 // pred_fallthru
      _
    // Predicated region
    $region142: #{tpu_custom_call.1} parent=1 // pred_check
      _
    $region143: #{tpu_custom_call.1} parent=1 // pred_check_branch
      %358 = sbr.rel (0) target = $region145
    $region144: #{tpu_custom_call.1} parent=1 // pred_region
      %359 = dma.done [#allocation9], 128
    $region145: #{tpu_custom_call.1} parent=1 // pred_fallthru
      _
    // Predicated region
    $region146: #{tpu_custom_call.1} parent=1 // pred_check
      _
    $region147: #{tpu_custom_call.1} parent=1 // pred_check_branch
      %361 = sbr.rel (0) target = $region149
    $region148: #{tpu_custom_call.1} parent=1 // pred_region
      %362 = dma.done [#allocation12], 128
    $region149: #{tpu_custom_call.1} parent=1 // pred_fallthru
      _
    // Predicated region
    $region150: #{tpu_custom_call.1} parent=1 // pred_check
      _
    $region151: #{tpu_custom_call.1} parent=1 // pred_check_branch
      %364 = sbr.rel (0) target = $region153
    $region152: #{tpu_custom_call.1} parent=1 // pred_region
      %365 = dma.done [#allocation12], 128
    $region153: #{tpu_custom_call.1} parent=1 // pred_fallthru
      _
    // Predicated region
    $region154: #{tpu_custom_call.1} parent=1 // pred_check
      _
    $region155: #{tpu_custom_call.1} parent=1 // pred_check_branch
      %367 = sbr.rel (0) target = $region157
    $region156: #{tpu_custom_call.1} parent=1 // pred_region
      %368 = dma.done [#allocation15], 256
    $region157: #{tpu_custom_call.1} parent=1 // pred_fallthru
      _
    // Predicated region
    $region158: #{tpu_custom_call.1} parent=1 // pred_check
      _
    $region159: #{tpu_custom_call.1} parent=1 // pred_check_branch
      %370 = sbr.rel (0) target = $region161
    $region160: #{tpu_custom_call.1} parent=1 // pred_region
      %371 = dma.done [#allocation15], 128
    $region161: #{tpu_custom_call.1} parent=1 // pred_fallthru
      _
    // Predicated region
    $region162: #{tpu_custom_call.1} parent=1 // pred_check
      _
    $region163: #{tpu_custom_call.1} parent=1 // pred_check_branch
      %373 = sbr.rel (0) target = $region165
    $region164: #{tpu_custom_call.1} parent=1 // pred_region
      %374 = dma.done [#allocation18], 512
    $region165: #{tpu_custom_call.1} parent=1 // pred_fallthru
      _
    // Predicated region
    $region166: #{tpu_custom_call.1} parent=1 // pred_check
      _
    $region167: #{tpu_custom_call.1} parent=1 // pred_check_branch
      %376 = sbr.rel (0) target = $region169
    $region168: #{tpu_custom_call.1} parent=1 // pred_region
      %377 = dma.done [#allocation18], 128
    $region169: #{tpu_custom_call.1} parent=1 // pred_fallthru
      _
    // Predicated region
    $region170: #{tpu_custom_call.1} parent=1 // pred_check
      _
    $region171: #{tpu_custom_call.1} parent=1 // pred_check_branch
      %379 = sbr.rel (0) target = $region173
    $region172: #{tpu_custom_call.1} parent=1 // pred_region
      %380 = dma.done [#allocation21], 128
    $region173: #{tpu_custom_call.1} parent=1 // pred_fallthru
      _
    // Predicated region
    $region174: #{tpu_custom_call.1} parent=1 // pred_check
      _
    $region175: #{tpu_custom_call.1} parent=1 // pred_check_branch
      %382 = sbr.rel (0) target = $region177
    $region176: #{tpu_custom_call.1} parent=1 // pred_region
      %383 = dma.done [#allocation21], 128
    $region177: #{tpu_custom_call.1} parent=1 // pred_fallthru
      _
    // Predicated region
    $region178: #{tpu_custom_call.1} parent=1 // pred_check
      _
    $region179: #{tpu_custom_call.1} parent=1 // pred_check_branch
      %385 = sbr.rel (0) target = $region181
    $region180: #{tpu_custom_call.1} parent=1 // pred_region
      %386 = dma.done [#allocation24], 128
    $region181: #{tpu_custom_call.1} parent=1 // pred_fallthru
      _
    // Predicated region
    $region182: #{tpu_custom_call.1} parent=1 // pred_check
      _
    $region183: #{tpu_custom_call.1} parent=1 // pred_check_branch
      %388 = sbr.rel (0) target = $region185
    $region184: #{tpu_custom_call.1} parent=1 // pred_region
      %389 = dma.done [#allocation24], 512
    $region185: #{tpu_custom_call.1} parent=1 // pred_fallthru
      _
    // Predicated region
    $region186: #{tpu_custom_call.1} parent=1 // pred_check
      _
    $region187: #{tpu_custom_call.1} parent=1 // pred_check_branch
      %391 = sbr.rel (0) target = $region189
    $region188: #{tpu_custom_call.1} parent=1 // pred_region
      %392 = dma.done [#allocation27], 512
    $region189: #{tpu_custom_call.1} parent=1 // pred_fallthru
      _
    // Predicated region
    $region190: #{tpu_custom_call.1} parent=1 // pred_check
      _
    $region191: #{tpu_custom_call.1} parent=1 // pred_check_branch
      %394 = sbr.rel (0) target = $region193
    $region192: #{tpu_custom_call.1} parent=1 // pred_region
      %395 = dma.done [#allocation27], 128
    $region193: #{tpu_custom_call.1} parent=1 // pred_fallthru
      _
    // Predicated region
    $region194: #{tpu_custom_call.1} parent=1 // pred_check
      _
    $region195: #{tpu_custom_call.1} parent=1 // pred_check_branch
      %397 = sbr.rel (0) target = $region197
    $region196: #{tpu_custom_call.1} parent=1 // pred_region
      %398 = dma.done [#allocation30], 128
    $region197: #{tpu_custom_call.1} parent=1 // pred_fallthru
      _
    // Predicated region
    $region198: #{tpu_custom_call.1} parent=1 // pred_check
      _
    $region199: #{tpu_custom_call.1} parent=1 // pred_check_branch
      %400 = sbr.rel (0) target = $region201
    $region200: #{tpu_custom_call.1} parent=1 // pred_region
      %401 = dma.done [#allocation30], 128
    $region201: #{tpu_custom_call.1} parent=1 // pred_fallthru
      _
    // Predicated region
    $region202: #{tpu_custom_call.1} parent=1 // pred_check
      _
    $region203: #{tpu_custom_call.1} parent=1 // pred_check_branch
      %403 = sbr.rel (0) target = $region205
    $region204: #{tpu_custom_call.1} parent=1 // pred_region
      %404 = dma.done [#allocation33], 128
    $region205: #{tpu_custom_call.1} parent=1 // pred_fallthru
      _
    // Predicated region
    $region206: #{tpu_custom_call.1} parent=1 // pred_check
      _
    $region207: #{tpu_custom_call.1} parent=1 // pred_check_branch
      %406 = sbr.rel (0) target = $region209
    $region208: #{tpu_custom_call.1} parent=1 // pred_region
      %407 = dma.done [#allocation33], 512
    $region209: #{tpu_custom_call.1} parent=1 // pred_fallthru
      _
    // Predicated region
    $region210: #{tpu_custom_call.1} parent=1 // pred_check
      _
    $region211: #{tpu_custom_call.1} parent=1 // pred_check_branch
      %409 = sbr.rel (0) target = $region213
    $region212: #{tpu_custom_call.1} parent=1 // pred_region
      %410 = dma.done [#allocation36], 128
    $region213: #{tpu_custom_call.1} parent=1 // pred_fallthru
      _
    // Predicated region
    $region214: #{tpu_custom_call.1} parent=1 // pred_check
      _
    $region215: #{tpu_custom_call.1} parent=1 // pred_check_branch
      %412 = sbr.rel (0) target = $region217
    $region216: #{tpu_custom_call.1} parent=1 // pred_region
      %413 = dma.done [#allocation36], 128
    $region217: #{tpu_custom_call.1} parent=1 // pred_fallthru
      _
    %v414 = vld [vmem:[#allocation13] sm:$0xff]
    %v415 = vld [vmem:[#allocation14] sm:$0xff]
    %v416 = vld [vmem:[#allocation14 + $0x8] sm:$0xff]
    %v417 = vld [vmem:[#allocation16] sm:$0xff]
    %v418 = vld [vmem:[%s19] sm:$0xff]
    %v419 = vld [vmem:[%s19 + $0x8] sm:$0xff]
    %v420 = vld [vmem:[%s19 + $0x10] sm:$0xff]
    %v421 = vld [vmem:[%s19 + $0x18] sm:$0xff]
    %v422 = vld [vmem:[#allocation17] sm:$0xff]
    %v423 = vld [vmem:[#allocation17 + $0x8] sm:$0xff]
    %v424 = vld [vmem:[#allocation17 + $0x10] sm:$0xff]
    %v425 = vld [vmem:[#allocation17 + $0x18] sm:$0xff]
    %v426 = vld [vmem:[#allocation19] sm:$0xff]
    %v427 = vld [vmem:[#allocation20] sm:$0xff]
    %v428 = vld [vmem:[#allocation22] sm:$0xff]
    %v429 = vld [vmem:[#allocation23] sm:$0xff]
    %v430 = vld [vmem:[#allocation25] sm:$0xff]
    %v431 = vld [vmem:[#allocation25 + $0x8] sm:$0xff]
    %v432 = vld [vmem:[#allocation25 + $0x10] sm:$0xff]
    %v433 = vld [vmem:[#allocation25 + $0x18] sm:$0xff]
    %v434 = vld [vmem:[#allocation26] sm:$0xff]
    %v435 = vld [vmem:[#allocation26 + $0x8] sm:$0xff]
    %v436 = vld [vmem:[#allocation26 + $0x10] sm:$0xff]
    %v437 = vld [vmem:[#allocation26 + $0x18] sm:$0xff]
    %v438 = vld [vmem:[#allocation28] sm:$0xff]
    %v439 = vld [vmem:[#allocation29] sm:$0xff]
    %v440 = vld [vmem:[#allocation31] sm:$0xff]
    %v441 = vld [vmem:[%s41] sm:$0xff]
    %v442 = vld [vmem:[#allocation32] sm:$0xff]
    %v443 = vld [vmem:[%s45] sm:$0xff]
    %v444 = vld [vmem:[%s47] sm:$0xff]
    %v445 = vld [vmem:[%s47 + $0x8] sm:$0xff]
    %v446 = vld [vmem:[%s47 + $0x10] sm:$0xff]
    %v447 = vld [vmem:[%s47 + $0x18] sm:$0xff]
    %v448 = vld [vmem:[%s49] sm:$0xff]
    %v449 = vld [vmem:[#allocation34] sm:$0xff]
    %v450 = vld [vmem:[#allocation34 + $0x8] sm:$0xff]
    %v451 = vld [vmem:[#allocation34 + $0x10] sm:$0xff]
    %v452 = vld [vmem:[#allocation34 + $0x18] sm:$0xff]
    %v453 = vld [vmem:[%s53] sm:$0xff]
    %v454 = vld [vmem:[#allocation35] sm:$0xff]
    %v455 = vld [vmem:[%s57] sm:$0xff]
    %v456 = vld [vmem:[#allocation37] sm:$0xff]
    %v457 = vld [vmem:[%s61] sm:$0xff]
    %v458 = vlaneseq
    %v459 = vand.u32 %v458, 127
    %vm460 = vcmp.lt.s32.totalorder %v459, 16
    %v461 = vld [vmem:[#allocation10] sm:$0xff]
    %v462 = vld [vmem:[#allocation11] sm:$0xff]
    %v463 = vld [vmem:[#allocation2] sm:$0xff]
    %v464 = vld [vmem:[#allocation5] sm:$0xff]
    %v465 = vld [vmem:[#allocation7] sm:$0xff]
    %v466 = vld [vmem:[#allocation8] sm:$0xff]
    %vm467 = vcmask 130048
    %v469 = vsel %vm467, %v461, 0
    %471 = vmatprep.subr.mxu0 0.0
    %472 = vmatpush1.msra.mxu0 %v415
    %473 = vmatprep.subr.mxu0 0.0
    %474 = vmatpush1.msra.mxu0 %v416
    %475 = vmatprep.subr.mxu0 0.0
    %476 = vmatpush1.msra.mxu0 0.0
    %477 = vmatprep.subr.mxu0 0.0
    %478 = vmatpush1.msra.mxu0 0.0
    %479 = vmatprep.subr.mxu0 0.0
    %480 = vmatpush1.msra.mxu0 0.0
    %481 = vmatprep.subr.mxu0 0.0
    %482 = vmatpush1.msra.mxu0 0.0
    %483 = vmatprep.subr.mxu0 0.0
    %484 = vmatpush1.msra.mxu0 0.0
    %485 = vmatprep.subr.mxu0 0.0
    %486 = vmatpush1.msra.mxu0 0.0
    %487 = vmatprep.subr.mxu0 0.0
    %488 = vmatpush1.msra.mxu0 0.0
    %489 = vmatprep.subr.mxu0 0.0
    %490 = vmatpush1.msra.mxu0 0.0
    %491 = vmatprep.subr.mxu0 0.0
    %492 = vmatpush1.msra.mxu0 0.0
    %493 = vmatprep.subr.mxu0 0.0
    %494 = vmatpush1.msra.mxu0 0.0
    %495 = vmatprep.subr.mxu0 0.0
    %496 = vmatpush1.msra.mxu0 0.0
    %497 = vmatprep.subr.mxu0 0.0
    %498 = vmatpush1.msra.mxu0 0.0
    %499 = vmatprep.subr.mxu0 0.0
    %500 = vmatpush1.msra.mxu0 0.0
    %501 = vmatprep.subr.mxu0 0.0
    %502 = vmatpush1.msra.mxu0 0.0
    %503 = vmatprep.subr.mxu0 0.0
    %504 = vmatpush1.msra.mxu0 0.0
    %505 = vmatprep.subr.mxu0 0.0
    %506 = vmatpush1.msra.mxu0 0.0
    %507 = vmatprep.subr.mxu0 0.0
    %508 = vmatpush1.msra.mxu0 0.0
    %509 = vmatprep.subr.mxu0 0.0
    %510 = vmatpush1.msra.mxu0 0.0
    %511 = vmatprep.subr.mxu0 0.0
    %512 = vmatpush1.msra.mxu0 0.0
    %513 = vmatprep.subr.mxu0 0.0
    %514 = vmatpush1.msra.mxu0 0.0
    %515 = vmatprep.subr.mxu0 0.0
    %516 = vmatpush1.msra.mxu0 0.0
    %517 = vmatprep.subr.mxu0 0.0
    %518 = vmatpush1.msra.mxu0 0.0
    %519 = vmatprep.subr.mxu0 0.0
    %520 = vmatpush1.msra.mxu0 0.0
    %521 = vmatprep.subr.mxu0 0.0
    %522 = vmatpush1.msra.mxu0 0.0
    %523 = vmatprep.subr.mxu0 0.0
    %524 = vmatpush1.msra.mxu0 0.0
    %525 = vmatprep.subr.mxu0 0.0
    %526 = vmatpush1.msra.mxu0 0.0
    %527 = vmatprep.subr.mxu0 0.0
    %528 = vmatpush1.msra.mxu0 0.0
    %529 = vmatprep.subr.mxu0 0.0
    %530 = vmatpush1.msra.mxu0 0.0
    %531 = vmatprep.subr.mxu0 0.0
    %532 = vmatpush1.msra.mxu0 0.0
    %533 = vmatprep.subr.mxu0 0.0
    %534 = vmatpush1.msra.mxu0 0.0
    %535 = vmatprep.mubr.f32.mxu0 0.0
    %536 = vmatmul.mubr.f32.gmra.mrb[0].mxu0 %v469
    %v537 = vpop.f32.mrb[0].mxu0
    %v538 = vadd.f32 0.0, %v537
    %v539 = vpop.f32.mrb[0].mxu0
    %540 = vdwg.mxu0
    %vm541 = vcmask 64512
    %v543 = vsel %vm541, %v463, 0
    %545 = vmatprep.subr.mxu0 0.0
    %546 = vmatpush1.msra.mxu0 %v414
    %547 = vmatprep.subr.mxu0 0.0
    %548 = vmatpush1.msra.mxu0 0.0
    %549 = vmatprep.subr.mxu0 0.0
    %550 = vmatpush1.msra.mxu0 0.0
    %551 = vmatprep.subr.mxu0 0.0
    %552 = vmatpush1.msra.mxu0 0.0
    %553 = vmatprep.subr.mxu0 0.0
    %554 = vmatpush1.msra.mxu0 0.0
    %555 = vmatprep.subr.mxu0 0.0
    %556 = vmatpush1.msra.mxu0 0.0
    %557 = vmatprep.subr.mxu0 0.0
    %558 = vmatpush1.msra.mxu0 0.0
    %559 = vmatprep.subr.mxu0 0.0
    %560 = vmatpush1.msra.mxu0 0.0
    %561 = vmatprep.subr.mxu0 0.0
    %562 = vmatpush1.msra.mxu0 0.0
    %563 = vmatprep.subr.mxu0 0.0
    %564 = vmatpush1.msra.mxu0 0.0
    %565 = vmatprep.subr.mxu0 0.0
    %566 = vmatpush1.msra.mxu0 0.0
    %567 = vmatprep.subr.mxu0 0.0
    %568 = vmatpush1.msra.mxu0 0.0
    %569 = vmatprep.subr.mxu0 0.0
    %570 = vmatpush1.msra.mxu0 0.0
    %571 = vmatprep.subr.mxu0 0.0
    %572 = vmatpush1.msra.mxu0 0.0
    %573 = vmatprep.subr.mxu0 0.0
    %574 = vmatpush1.msra.mxu0 0.0
    %575 = vmatprep.subr.mxu0 0.0
    %576 = vmatpush1.msra.mxu0 0.0
    %577 = vmatprep.subr.mxu0 0.0
    %578 = vmatpush1.msra.mxu0 0.0
    %579 = vmatprep.subr.mxu0 0.0
    %580 = vmatpush1.msra.mxu0 0.0
    %581 = vmatprep.subr.mxu0 0.0
    %582 = vmatpush1.msra.mxu0 0.0
    %583 = vmatprep.subr.mxu0 0.0
    %584 = vmatpush1.msra.mxu0 0.0
    %585 = vmatprep.subr.mxu0 0.0
    %586 = vmatpush1.msra.mxu0 0.0
    %587 = vmatprep.subr.mxu0 0.0
    %588 = vmatpush1.msra.mxu0 0.0
    %589 = vmatprep.subr.mxu0 0.0
    %590 = vmatpush1.msra.mxu0 0.0
    %591 = vmatprep.subr.mxu0 0.0
    %592 = vmatpush1.msra.mxu0 0.0
    %593 = vmatprep.subr.mxu0 0.0
    %594 = vmatpush1.msra.mxu0 0.0
    %595 = vmatprep.subr.mxu0 0.0
    %596 = vmatpush1.msra.mxu0 0.0
    %597 = vmatprep.subr.mxu0 0.0
    %598 = vmatpush1.msra.mxu0 0.0
    %599 = vmatprep.subr.mxu0 0.0
    %600 = vmatpush1.msra.mxu0 0.0
    %601 = vmatprep.subr.mxu0 0.0
    %602 = vmatpush1.msra.mxu0 0.0
    %603 = vmatprep.subr.mxu0 0.0
    %604 = vmatpush1.msra.mxu0 0.0
    %605 = vmatprep.subr.mxu0 0.0
    %606 = vmatpush1.msra.mxu0 0.0
    %607 = vmatprep.subr.mxu0 0.0
    %608 = vmatpush1.msra.mxu0 0.0
    %609 = vmatprep.mubr.f32.mxu0 0.0
    %610 = vmatmul.mubr.f32.gmra.mrb[0].mxu0 %v543
    %v611 = vpop.f32.mrb[0].mxu0
    %v612 = vadd.f32 %v538, %v611
    %v613 = vpop.f32.mrb[0].mxu0
    %614 = vdwg.mxu0
    %v615 = vadd.f32 %v612, %v417
    %vm616 = vcmp.gt.f32.partialorder %v615, 0.0
    %v617 = vmin.f32 %v615, 0.0
    %v618 = vmul.f32 %v617, 1.442695
    %v619 = vpow.pop %v618
    %v620 = vsub.f32 %v619, 1.0
    %v621 = vsel %vm616, %v615, %v620
    %vm622 = vcmask 261120
    %v624 = vsel %vm622, %v621, 0
    %626 = vmatprep.subr.mxu0 0.0
    %627 = vmatpush1.msra.mxu0 %v418
    %628 = vmatprep.subr.mxu0 0.0
    %629 = vmatpush1.msra.mxu0 %v419
    %630 = vmatprep.subr.mxu0 0.0
    %631 = vmatpush1.msra.mxu0 %v420
    %632 = vmatprep.subr.mxu0 0.0
    %633 = vmatpush1.msra.mxu0 %v421
    %634 = vmatprep.subr.mxu0 0.0
    %635 = vmatpush1.msra.mxu0 0.0
    %636 = vmatprep.subr.mxu0 0.0
    %637 = vmatpush1.msra.mxu0 0.0
    %638 = vmatprep.subr.mxu0 0.0
    %639 = vmatpush1.msra.mxu0 0.0
    %640 = vmatprep.subr.mxu0 0.0
    %641 = vmatpush1.msra.mxu0 0.0
    %642 = vmatprep.subr.mxu0 0.0
    %643 = vmatpush1.msra.mxu0 0.0
    %644 = vmatprep.subr.mxu0 0.0
    %645 = vmatpush1.msra.mxu0 0.0
    %646 = vmatprep.subr.mxu0 0.0
    %647 = vmatpush1.msra.mxu0 0.0
    %648 = vmatprep.subr.mxu0 0.0
    %649 = vmatpush1.msra.mxu0 0.0
    %650 = vmatprep.subr.mxu0 0.0
    %651 = vmatpush1.msra.mxu0 0.0
    %652 = vmatprep.subr.mxu0 0.0
    %653 = vmatpush1.msra.mxu0 0.0
    %654 = vmatprep.subr.mxu0 0.0
    %655 = vmatpush1.msra.mxu0 0.0
    %656 = vmatprep.subr.mxu0 0.0
    %657 = vmatpush1.msra.mxu0 0.0
    %658 = vmatprep.subr.mxu0 0.0
    %659 = vmatpush1.msra.mxu0 0.0
    %660 = vmatprep.subr.mxu0 0.0
    %661 = vmatpush1.msra.mxu0 0.0
    %662 = vmatprep.subr.mxu0 0.0
    %663 = vmatpush1.msra.mxu0 0.0
    %664 = vmatprep.subr.mxu0 0.0
    %665 = vmatpush1.msra.mxu0 0.0
    %666 = vmatprep.subr.mxu0 0.0
    %667 = vmatpush1.msra.mxu0 0.0
    %668 = vmatprep.subr.mxu0 0.0
    %669 = vmatpush1.msra.mxu0 0.0
    %670 = vmatprep.subr.mxu0 0.0
    %671 = vmatpush1.msra.mxu0 0.0
    %672 = vmatprep.subr.mxu0 0.0
    %673 = vmatpush1.msra.mxu0 0.0
    %674 = vmatprep.subr.mxu0 0.0
    %675 = vmatpush1.msra.mxu0 0.0
    %676 = vmatprep.subr.mxu0 0.0
    %677 = vmatpush1.msra.mxu0 0.0
    %678 = vmatprep.subr.mxu0 0.0
    %679 = vmatpush1.msra.mxu0 0.0
    %680 = vmatprep.subr.mxu0 0.0
    %681 = vmatpush1.msra.mxu0 0.0
    %682 = vmatprep.subr.mxu0 0.0
    %683 = vmatpush1.msra.mxu0 0.0
    %684 = vmatprep.subr.mxu0 0.0
    %685 = vmatpush1.msra.mxu0 0.0
    %686 = vmatprep.subr.mxu0 0.0
    %687 = vmatpush1.msra.mxu0 0.0
    %688 = vmatprep.subr.mxu0 0.0
    %689 = vmatpush1.msra.mxu0 0.0
    %690 = vmatprep.mubr.f32.mxu0 0.0
    %691 = vmatmul.mubr.f32.gmra.mrb[0].mxu0 %v624
    %v692 = vpop.f32.mrb[0].mxu0
    %v693 = vadd.f32 %v426, %v692
    %v694 = vpop.f32.mrb[0].mxu0
    %695 = vdwg.mxu0
    %v697 = vsel %vm622, %v462, 0
    %699 = vmatprep.subr.mxu0 0.0
    %700 = vmatpush1.msra.mxu0 %v422
    %701 = vmatprep.subr.mxu0 0.0
    %702 = vmatpush1.msra.mxu0 %v423
    %703 = vmatprep.subr.mxu0 0.0
    %704 = vmatpush1.msra.mxu0 %v424
    %705 = vmatprep.subr.mxu0 0.0
    %706 = vmatpush1.msra.mxu0 %v425
    %707 = vmatprep.subr.mxu0 0.0
    %708 = vmatpush1.msra.mxu0 0.0
    %709 = vmatprep.subr.mxu0 0.0
    %710 = vmatpush1.msra.mxu0 0.0
    %711 = vmatprep.subr.mxu0 0.0
    %712 = vmatpush1.msra.mxu0 0.0
    %713 = vmatprep.subr.mxu0 0.0
    %714 = vmatpush1.msra.mxu0 0.0
    %715 = vmatprep.subr.mxu0 0.0
    %716 = vmatpush1.msra.mxu0 0.0
    %717 = vmatprep.subr.mxu0 0.0
    %718 = vmatpush1.msra.mxu0 0.0
    %719 = vmatprep.subr.mxu0 0.0
    %720 = vmatpush1.msra.mxu0 0.0
    %721 = vmatprep.subr.mxu0 0.0
    %722 = vmatpush1.msra.mxu0 0.0
    %723 = vmatprep.subr.mxu0 0.0
    %724 = vmatpush1.msra.mxu0 0.0
    %725 = vmatprep.subr.mxu0 0.0
    %726 = vmatpush1.msra.mxu0 0.0
    %727 = vmatprep.subr.mxu0 0.0
    %728 = vmatpush1.msra.mxu0 0.0
    %729 = vmatprep.subr.mxu0 0.0
    %730 = vmatpush1.msra.mxu0 0.0
    %731 = vmatprep.subr.mxu0 0.0
    %732 = vmatpush1.msra.mxu0 0.0
    %733 = vmatprep.subr.mxu0 0.0
    %734 = vmatpush1.msra.mxu0 0.0
    %735 = vmatprep.subr.mxu0 0.0
    %736 = vmatpush1.msra.mxu0 0.0
    %737 = vmatprep.subr.mxu0 0.0
    %738 = vmatpush1.msra.mxu0 0.0
    %739 = vmatprep.subr.mxu0 0.0
    %740 = vmatpush1.msra.mxu0 0.0
    %741 = vmatprep.subr.mxu0 0.0
    %742 = vmatpush1.msra.mxu0 0.0
    %743 = vmatprep.subr.mxu0 0.0
    %744 = vmatpush1.msra.mxu0 0.0
    %745 = vmatprep.subr.mxu0 0.0
    %746 = vmatpush1.msra.mxu0 0.0
    %747 = vmatprep.subr.mxu0 0.0
    %748 = vmatpush1.msra.mxu0 0.0
    %749 = vmatprep.subr.mxu0 0.0
    %750 = vmatpush1.msra.mxu0 0.0
    %751 = vmatprep.subr.mxu0 0.0
    %752 = vmatpush1.msra.mxu0 0.0
    %753 = vmatprep.subr.mxu0 0.0
    %754 = vmatpush1.msra.mxu0 0.0
    %755 = vmatprep.subr.mxu0 0.0
    %756 = vmatpush1.msra.mxu0 0.0
    %757 = vmatprep.subr.mxu0 0.0
    %758 = vmatpush1.msra.mxu0 0.0
    %759 = vmatprep.subr.mxu0 0.0
    %760 = vmatpush1.msra.mxu0 0.0
    %761 = vmatprep.subr.mxu0 0.0
    %762 = vmatpush1.msra.mxu0 0.0
    %763 = vmatprep.mubr.f32.mxu0 0.0
    %764 = vmatmul.mubr.f32.gmra.mrb[0].mxu0 %v697
    %v765 = vpop.f32.mrb[0].mxu0
    %v766 = vadd.f32 %v427, %v765
    %v767 = vpop.f32.mrb[0].mxu0
    %768 = vdwg.mxu0
    %v769 = vadd.f32 %v693, %v766
    %v770 = vsub.f32 0.0, %v769
    %v771 = vmul.f32 %v770, 1.442695
    %v772 = vpow.pop %v771
    %v773 = vadd.f32 %v772, 1.0
    %v774 = vrcp.pop %v773
    %v775 = vmul.f32 1.0, %v774
    %777 = vrot.lane.b32.xlu0 %v766, 64
    %v778 = vpop.permute.xlu0 %777
    %v780 = vmul.f32 %v775, %v778
    %782 = vrot.lane.b32.xlu0 %v780, 64
    %v783 = vpop.permute.xlu0 %782
    %v785 = vadd.f32 %v693, %v783
    %v786 = vtanh.pop %v785
    %v787 = vsub.f32 1.0, %v775
    %789 = vrot.lane.b32.xlu0 %v786, 96
    %v790 = vpop.permute.xlu0 %789
    %v792 = vmul.f32 %v787, %v790
    %793 = vrot.lane.b32.xlu0 %v462, 32
    %v794 = vpop.permute.xlu0 %793
    %v796 = vmul.f32 %v775, %v794
    %v797 = vadd.f32 %v792, %v796
    %799 = vrot.lane.b32.xlu0 %v797, 96
    %v800 = vpop.permute.xlu0 %799
    %v802 = vsel %vm622, %v800, 0.0
    %803 = vadd.xlane.f32.xlu0 %v802
    %v804 = vpop.xlane.xlu0 %803
    %v805 = vrcp.pop 32.0
    %v806 = vmul.f32 %v804, %v805
    %v807 = vsub.f32 %v797, %v806
    %v808 = vmul.f32 %v807, %v807
    %810 = vrot.lane.b32.xlu0 %v808, 96
    %v811 = vpop.permute.xlu0 %810
    %v813 = vsel %vm622, %v811, 0.0
    %814 = vadd.xlane.f32.xlu0 %v813
    %v815 = vpop.xlane.xlu0 %814
    %v816 = vmul.f32 %v815, %v805
    %v817 = vadd.f32 %v816, 1e-05
    %v818 = vrsqrt.pop %v817
    %v819 = vmul.f32 %v807, %v818
    %821 = vrot.lane.b32.xlu0 %v428, 32
    %v822 = vpop.permute.xlu0 %821
    %v824 = vmul.f32 %v819, %v822
    %826 = vrot.lane.b32.xlu0 %v429, 32
    %v827 = vpop.permute.xlu0 %826
    %v829 = vadd.f32 %v824, %v827
    %831 = vrot.lane.b32.xlu0 %v829, 96
    %v832 = vpop.permute.xlu0 %831
    %v833 = vsel %vm622, %v832, 0
    %835 = vmatprep.subr.mxu0 0.0
    %836 = vmatpush1.msra.mxu0 %v430
    %837 = vmatprep.subr.mxu0 0.0
    %838 = vmatpush1.msra.mxu0 %v431
    %839 = vmatprep.subr.mxu0 0.0
    %840 = vmatpush1.msra.mxu0 %v432
    %841 = vmatprep.subr.mxu0 0.0
    %842 = vmatpush1.msra.mxu0 %v433
    %843 = vmatprep.subr.mxu0 0.0
    %844 = vmatpush1.msra.mxu0 0.0
    %845 = vmatprep.subr.mxu0 0.0
    %846 = vmatpush1.msra.mxu0 0.0
    %847 = vmatprep.subr.mxu0 0.0
    %848 = vmatpush1.msra.mxu0 0.0
    %849 = vmatprep.subr.mxu0 0.0
    %850 = vmatpush1.msra.mxu0 0.0
    %851 = vmatprep.subr.mxu0 0.0
    %852 = vmatpush1.msra.mxu0 0.0
    %853 = vmatprep.subr.mxu0 0.0
    %854 = vmatpush1.msra.mxu0 0.0
    %855 = vmatprep.subr.mxu0 0.0
    %856 = vmatpush1.msra.mxu0 0.0
    %857 = vmatprep.subr.mxu0 0.0
    %858 = vmatpush1.msra.mxu0 0.0
    %859 = vmatprep.subr.mxu0 0.0
    %860 = vmatpush1.msra.mxu0 0.0
    %861 = vmatprep.subr.mxu0 0.0
    %862 = vmatpush1.msra.mxu0 0.0
    %863 = vmatprep.subr.mxu0 0.0
    %864 = vmatpush1.msra.mxu0 0.0
    %865 = vmatprep.subr.mxu0 0.0
    %866 = vmatpush1.msra.mxu0 0.0
    %867 = vmatprep.subr.mxu0 0.0
    %868 = vmatpush1.msra.mxu0 0.0
    %869 = vmatprep.subr.mxu0 0.0
    %870 = vmatpush1.msra.mxu0 0.0
    %871 = vmatprep.subr.mxu0 0.0
    %872 = vmatpush1.msra.mxu0 0.0
    %873 = vmatprep.subr.mxu0 0.0
    %874 = vmatpush1.msra.mxu0 0.0
    %875 = vmatprep.subr.mxu0 0.0
    %876 = vmatpush1.msra.mxu0 0.0
    %877 = vmatprep.subr.mxu0 0.0
    %878 = vmatpush1.msra.mxu0 0.0
    %879 = vmatprep.subr.mxu0 0.0
    %880 = vmatpush1.msra.mxu0 0.0
    %881 = vmatprep.subr.mxu0 0.0
    %882 = vmatpush1.msra.mxu0 0.0
    %883 = vmatprep.subr.mxu0 0.0
    %884 = vmatpush1.msra.mxu0 0.0
    %885 = vmatprep.subr.mxu0 0.0
    %886 = vmatpush1.msra.mxu0 0.0
    %887 = vmatprep.subr.mxu0 0.0
    %888 = vmatpush1.msra.mxu0 0.0
    %889 = vmatprep.subr.mxu0 0.0
    %890 = vmatpush1.msra.mxu0 0.0
    %891 = vmatprep.subr.mxu0 0.0
    %892 = vmatpush1.msra.mxu0 0.0
    %893 = vmatprep.subr.mxu0 0.0
    %894 = vmatpush1.msra.mxu0 0.0
    %895 = vmatprep.subr.mxu0 0.0
    %896 = vmatpush1.msra.mxu0 0.0
    %897 = vmatprep.subr.mxu0 0.0
    %898 = vmatpush1.msra.mxu0 0.0
    %899 = vmatprep.mubr.f32.mxu0 0.0
    %900 = vmatmul.mubr.f32.gmra.mrb[0].mxu0 %v833
    %v901 = vpop.f32.mrb[0].mxu0
    %v902 = vadd.f32 0.0, %v901
    %v903 = vpop.f32.mrb[0].mxu0
    %904 = vdwg.mxu0
    %v905 = vadd.f32 %v902, %v438
    %vm906 = vcmp.gt.f32.partialorder %v905, 0.0
    %v907 = vmin.f32 %v905, 0.0
    %v908 = vmul.f32 %v907, 1.442695
    %v909 = vpow.pop %v908
    %v910 = vsub.f32 %v909, 1.0
    %v911 = vsel %vm906, %v905, %v910
    %v912 = vsel %vm622, %v911, 0.0
    %913 = vadd.xlane.f32.xlu0 %v912
    %v914 = vpop.xlane.xlu0 %913
    %v915 = vmul.f32 %v914, %v805
    %v916 = vsub.f32 %v911, %v915
    %v917 = vmul.f32 %v916, %v916
    %v918 = vsel %vm622, %v917, 0.0
    %919 = vadd.xlane.f32.xlu0 %v918
    %v920 = vpop.xlane.xlu0 %919
    %v921 = vmul.f32 %v920, %v805
    %v922 = vadd.f32 %v921, 1e-05
    %v923 = vrsqrt.pop %v922
    %v924 = vmul.f32 %v916, %v923
    %v925 = vmul.f32 %v924, %v440
    %v926 = vadd.f32 %v925, %v441
    %v928 = vsel %vm622, %v464, 0
    %930 = vmatprep.subr.mxu0 0.0
    %931 = vmatpush1.msra.mxu0 %v434
    %932 = vmatprep.subr.mxu0 0.0
    %933 = vmatpush1.msra.mxu0 %v435
    %934 = vmatprep.subr.mxu0 0.0
    %935 = vmatpush1.msra.mxu0 %v436
    %936 = vmatprep.subr.mxu0 0.0
    %937 = vmatpush1.msra.mxu0 %v437
    %938 = vmatprep.subr.mxu0 0.0
    %939 = vmatpush1.msra.mxu0 0.0
    %940 = vmatprep.subr.mxu0 0.0
    %941 = vmatpush1.msra.mxu0 0.0
    %942 = vmatprep.subr.mxu0 0.0
    %943 = vmatpush1.msra.mxu0 0.0
    %944 = vmatprep.subr.mxu0 0.0
    %945 = vmatpush1.msra.mxu0 0.0
    %946 = vmatprep.subr.mxu0 0.0
    %947 = vmatpush1.msra.mxu0 0.0
    %948 = vmatprep.subr.mxu0 0.0
    %949 = vmatpush1.msra.mxu0 0.0
    %950 = vmatprep.subr.mxu0 0.0
    %951 = vmatpush1.msra.mxu0 0.0
    %952 = vmatprep.subr.mxu0 0.0
    %953 = vmatpush1.msra.mxu0 0.0
    %954 = vmatprep.subr.mxu0 0.0
    %955 = vmatpush1.msra.mxu0 0.0
    %956 = vmatprep.subr.mxu0 0.0
    %957 = vmatpush1.msra.mxu0 0.0
    %958 = vmatprep.subr.mxu0 0.0
    %959 = vmatpush1.msra.mxu0 0.0
    %960 = vmatprep.subr.mxu0 0.0
    %961 = vmatpush1.msra.mxu0 0.0
    %962 = vmatprep.subr.mxu0 0.0
    %963 = vmatpush1.msra.mxu0 0.0
    %964 = vmatprep.subr.mxu0 0.0
    %965 = vmatpush1.msra.mxu0 0.0
    %966 = vmatprep.subr.mxu0 0.0
    %967 = vmatpush1.msra.mxu0 0.0
    %968 = vmatprep.subr.mxu0 0.0
    %969 = vmatpush1.msra.mxu0 0.0
    %970 = vmatprep.subr.mxu0 0.0
    %971 = vmatpush1.msra.mxu0 0.0
    %972 = vmatprep.subr.mxu0 0.0
    %973 = vmatpush1.msra.mxu0 0.0
    %974 = vmatprep.subr.mxu0 0.0
    %975 = vmatpush1.msra.mxu0 0.0
    %976 = vmatprep.subr.mxu0 0.0
    %977 = vmatpush1.msra.mxu0 0.0
    %978 = vmatprep.subr.mxu0 0.0
    %979 = vmatpush1.msra.mxu0 0.0
    %980 = vmatprep.subr.mxu0 0.0
    %981 = vmatpush1.msra.mxu0 0.0
    %982 = vmatprep.subr.mxu0 0.0
    %983 = vmatpush1.msra.mxu0 0.0
    %984 = vmatprep.subr.mxu0 0.0
    %985 = vmatpush1.msra.mxu0 0.0
    %986 = vmatprep.subr.mxu0 0.0
    %987 = vmatpush1.msra.mxu0 0.0
    %988 = vmatprep.subr.mxu0 0.0
    %989 = vmatpush1.msra.mxu0 0.0
    %990 = vmatprep.subr.mxu0 0.0
    %991 = vmatpush1.msra.mxu0 0.0
    %992 = vmatprep.subr.mxu0 0.0
    %993 = vmatpush1.msra.mxu0 0.0
    %994 = vmatprep.mubr.f32.mxu0 0.0
    %995 = vmatmul.mubr.f32.gmra.mrb[0].mxu0 %v928
    %v996 = vpop.f32.mrb[0].mxu0
    %v997 = vadd.f32 0.0, %v996
    %v998 = vpop.f32.mrb[0].mxu0
    %999 = vdwg.mxu0
    %1001 = vrot.lane.b32.xlu0 %v997, 32
    %v1002 = vpop.permute.xlu0 %1001
    %v1004 = vadd.f32 %v902, %v1002
    %1006 = vrot.lane.b32.xlu0 %v439, 32
    %v1007 = vpop.permute.xlu0 %1006
    %v1009 = vadd.f32 %v1004, %v1007
    %vm1010 = vcmp.gt.f32.partialorder %v1009, 0.0
    %v1011 = vmin.f32 %v1009, 0.0
    %v1012 = vmul.f32 %v1011, 1.442695
    %v1013 = vpow.pop %v1012
    %v1014 = vsub.f32 %v1013, 1.0
    %v1015 = vsel %vm1010, %v1009, %v1014
    %1017 = vrot.lane.b32.xlu0 %v1015, 96
    %v1018 = vpop.permute.xlu0 %1017
    %v1020 = vsel %vm622, %v1018, 0.0
    %1021 = vadd.xlane.f32.xlu0 %v1020
    %v1022 = vpop.xlane.xlu0 %1021
    %v1023 = vmul.f32 %v1022, %v805
    %v1024 = vsub.f32 %v1015, %v1023
    %v1025 = vmul.f32 %v1024, %v1024
    %1027 = vrot.lane.b32.xlu0 %v1025, 96
    %v1028 = vpop.permute.xlu0 %1027
    %v1030 = vsel %vm622, %v1028, 0.0
    %1031 = vadd.xlane.f32.xlu0 %v1030
    %v1032 = vpop.xlane.xlu0 %1031
    %v1033 = vmul.f32 %v1032, %v805
    %v1034 = vadd.f32 %v1033, 1e-05
    %v1035 = vrsqrt.pop %v1034
    %v1036 = vmul.f32 %v1024, %v1035
    %1038 = vrot.lane.b32.xlu0 %v442, 32
    %v1039 = vpop.permute.xlu0 %1038
    %v1041 = vmul.f32 %v1036, %v1039
    %1043 = vrot.lane.b32.xlu0 %v443, 32
    %v1044 = vpop.permute.xlu0 %1043
    %v1046 = vadd.f32 %v1041, %v1044
    %v1048 = vsel %vm622, %v926, 0
    %1050 = vmatprep.subr.mxu0 0.0
    %1051 = vmatpush1.msra.mxu0 %v444
    %1052 = vmatprep.subr.mxu0 0.0
    %1053 = vmatpush1.msra.mxu0 %v445
    %1054 = vmatprep.subr.mxu0 0.0
    %1055 = vmatpush1.msra.mxu0 %v446
    %1056 = vmatprep.subr.mxu0 0.0
    %1057 = vmatpush1.msra.mxu0 %v447
    %1058 = vmatprep.subr.mxu0 0.0
    %1059 = vmatpush1.msra.mxu0 0.0
    %1060 = vmatprep.subr.mxu0 0.0
    %1061 = vmatpush1.msra.mxu0 0.0
    %1062 = vmatprep.subr.mxu0 0.0
    %1063 = vmatpush1.msra.mxu0 0.0
    %1064 = vmatprep.subr.mxu0 0.0
    %1065 = vmatpush1.msra.mxu0 0.0
    %1066 = vmatprep.subr.mxu0 0.0
    %1067 = vmatpush1.msra.mxu0 0.0
    %1068 = vmatprep.subr.mxu0 0.0
    %1069 = vmatpush1.msra.mxu0 0.0
    %1070 = vmatprep.subr.mxu0 0.0
    %1071 = vmatpush1.msra.mxu0 0.0
    %1072 = vmatprep.subr.mxu0 0.0
    %1073 = vmatpush1.msra.mxu0 0.0
    %1074 = vmatprep.subr.mxu0 0.0
    %1075 = vmatpush1.msra.mxu0 0.0
    %1076 = vmatprep.subr.mxu0 0.0
    %1077 = vmatpush1.msra.mxu0 0.0
    %1078 = vmatprep.subr.mxu0 0.0
    %1079 = vmatpush1.msra.mxu0 0.0
    %1080 = vmatprep.subr.mxu0 0.0
    %1081 = vmatpush1.msra.mxu0 0.0
    %1082 = vmatprep.subr.mxu0 0.0
    %1083 = vmatpush1.msra.mxu0 0.0
    %1084 = vmatprep.subr.mxu0 0.0
    %1085 = vmatpush1.msra.mxu0 0.0
    %1086 = vmatprep.subr.mxu0 0.0
    %1087 = vmatpush1.msra.mxu0 0.0
    %1088 = vmatprep.subr.mxu0 0.0
    %1089 = vmatpush1.msra.mxu0 0.0
    %1090 = vmatprep.subr.mxu0 0.0
    %1091 = vmatpush1.msra.mxu0 0.0
    %1092 = vmatprep.subr.mxu0 0.0
    %1093 = vmatpush1.msra.mxu0 0.0
    %1094 = vmatprep.subr.mxu0 0.0
    %1095 = vmatpush1.msra.mxu0 0.0
    %1096 = vmatprep.subr.mxu0 0.0
    %1097 = vmatpush1.msra.mxu0 0.0
    %1098 = vmatprep.subr.mxu0 0.0
    %1099 = vmatpush1.msra.mxu0 0.0
    %1100 = vmatprep.subr.mxu0 0.0
    %1101 = vmatpush1.msra.mxu0 0.0
    %1102 = vmatprep.subr.mxu0 0.0
    %1103 = vmatpush1.msra.mxu0 0.0
    %1104 = vmatprep.subr.mxu0 0.0
    %1105 = vmatpush1.msra.mxu0 0.0
    %1106 = vmatprep.subr.mxu0 0.0
    %1107 = vmatpush1.msra.mxu0 0.0
    %1108 = vmatprep.subr.mxu0 0.0
    %1109 = vmatpush1.msra.mxu0 0.0
    %1110 = vmatprep.subr.mxu0 0.0
    %1111 = vmatpush1.msra.mxu0 0.0
    %1112 = vmatprep.subr.mxu0 0.0
    %1113 = vmatpush1.msra.mxu0 0.0
    %1114 = vmatprep.mubr.f32.mxu0 0.0
    %1115 = vmatmul.mubr.f32.gmra.mrb[0].mxu0 %v1048
    %v1116 = vpop.f32.mrb[0].mxu0
    %v1117 = vadd.f32 %v448, %v1116
    %v1118 = vpop.f32.mrb[0].mxu0
    %1119 = vdwg.mxu0
    %v1120 = vmax.f32 %v1117, 0.0
    %v1121 = vand.u32 2147483647, %v1117
    %v1122 = vsub.f32 0.0, %v1121
    %v1123 = vmul.f32 %v1122, 1.442695
    %v1124 = vpow.pop %v1123
    %v1125 = vadd.f32 %v1124, 1.0
    %v1126 = vlog2.pop %v1125
    %v1127 = vmul.f32 %v1126, 0.6931472
    %v1128 = vadd.f32 %v1120, %v1127
    %v1129 = vadd.f32 %v1128, 0.1
    %v1130 = vsel %vm460, %v1117, %v1129
    %1132 = vrot.lane.b32.xlu0 %v465, 16
    %v1133 = vpop.permute.xlu0 %1132
    %v1135 = vmul.f32 %v1129, %v1133
    %1137 = vrot.lane.b32.xlu0 %v1135, 112
    %v1138 = vpop.permute.xlu0 %1137
    %v1140 = vadd.f32 %v1117, %v1138
    %v1141 = vsel %vm467, %v1140, 0.0
    %1142 = vadd.xlane.f32.xlu0 %v1141
    %v1143 = vpop.xlane.xlu0 %1142
    %v1144 = vrcp.pop 16.0
    %v1145 = vmul.f32 %v1143, %v1144
    %v1146 = vsub.f32 %v1140, %v1145
    %v1147 = vmul.f32 %v1146, %v1146
    %v1148 = vsel %vm467, %v1147, 0.0
    %1149 = vadd.xlane.f32.xlu0 %v1148
    %v1150 = vpop.xlane.xlu0 %1149
    %v1151 = vmul.f32 %v1150, %v1144
    %v1152 = vadd.f32 %v1151, 1e-05
    %v1153 = vrsqrt.pop %v1152
    %v1154 = vmul.f32 %v1146, %v1153
    %v1155 = vmul.f32 %v1154, %v454
    %v1156 = vadd.f32 %v1155, %v455
    %1158 = vrot.lane.b32.xlu0 %v1046, 96
    %v1159 = vpop.permute.xlu0 %1158
    %v1160 = vsel %vm622, %v1159, 0
    %1162 = vmatprep.subr.mxu0 0.0
    %1163 = vmatpush1.msra.mxu0 %v449
    %1164 = vmatprep.subr.mxu0 0.0
    %1165 = vmatpush1.msra.mxu0 %v450
    %1166 = vmatprep.subr.mxu0 0.0
    %1167 = vmatpush1.msra.mxu0 %v451
    %1168 = vmatprep.subr.mxu0 0.0
    %1169 = vmatpush1.msra.mxu0 %v452
    %1170 = vmatprep.subr.mxu0 0.0
    %1171 = vmatpush1.msra.mxu0 0.0
    %1172 = vmatprep.subr.mxu0 0.0
    %1173 = vmatpush1.msra.mxu0 0.0
    %1174 = vmatprep.subr.mxu0 0.0
    %1175 = vmatpush1.msra.mxu0 0.0
    %1176 = vmatprep.subr.mxu0 0.0
    %1177 = vmatpush1.msra.mxu0 0.0
    %1178 = vmatprep.subr.mxu0 0.0
    %1179 = vmatpush1.msra.mxu0 0.0
    %1180 = vmatprep.subr.mxu0 0.0
    %1181 = vmatpush1.msra.mxu0 0.0
    %1182 = vmatprep.subr.mxu0 0.0
    %1183 = vmatpush1.msra.mxu0 0.0
    %1184 = vmatprep.subr.mxu0 0.0
    %1185 = vmatpush1.msra.mxu0 0.0
    %1186 = vmatprep.subr.mxu0 0.0
    %1187 = vmatpush1.msra.mxu0 0.0
    %1188 = vmatprep.subr.mxu0 0.0
    %1189 = vmatpush1.msra.mxu0 0.0
    %1190 = vmatprep.subr.mxu0 0.0
    %1191 = vmatpush1.msra.mxu0 0.0
    %1192 = vmatprep.subr.mxu0 0.0
    %1193 = vmatpush1.msra.mxu0 0.0
    %1194 = vmatprep.subr.mxu0 0.0
    %1195 = vmatpush1.msra.mxu0 0.0
    %1196 = vmatprep.subr.mxu0 0.0
    %1197 = vmatpush1.msra.mxu0 0.0
    %1198 = vmatprep.subr.mxu0 0.0
    %1199 = vmatpush1.msra.mxu0 0.0
    %1200 = vmatprep.subr.mxu0 0.0
    %1201 = vmatpush1.msra.mxu0 0.0
    %1202 = vmatprep.subr.mxu0 0.0
    %1203 = vmatpush1.msra.mxu0 0.0
    %1204 = vmatprep.subr.mxu0 0.0
    %1205 = vmatpush1.msra.mxu0 0.0
    %1206 = vmatprep.subr.mxu0 0.0
    %1207 = vmatpush1.msra.mxu0 0.0
    %1208 = vmatprep.subr.mxu0 0.0
    %1209 = vmatpush1.msra.mxu0 0.0
    %1210 = vmatprep.subr.mxu0 0.0
    %1211 = vmatpush1.msra.mxu0 0.0
    %1212 = vmatprep.subr.mxu0 0.0
    %1213 = vmatpush1.msra.mxu0 0.0
    %1214 = vmatprep.subr.mxu0 0.0
    %1215 = vmatpush1.msra.mxu0 0.0
    %1216 = vmatprep.subr.mxu0 0.0
    %1217 = vmatpush1.msra.mxu0 0.0
    %1218 = vmatprep.subr.mxu0 0.0
    %1219 = vmatpush1.msra.mxu0 0.0
    %1220 = vmatprep.subr.mxu0 0.0
    %1221 = vmatpush1.msra.mxu0 0.0
    %1222 = vmatprep.subr.mxu0 0.0
    %1223 = vmatpush1.msra.mxu0 0.0
    %1224 = vmatprep.subr.mxu0 0.0
    %1225 = vmatpush1.msra.mxu0 0.0
    %1226 = vmatprep.mubr.f32.mxu0 0.0
    %1227 = vmatmul.mubr.f32.gmra.mrb[0].mxu0 %v1160
    %v1228 = vpop.f32.mrb[0].mxu0
    %v1229 = vadd.f32 %v453, %v1228
    %v1230 = vpop.f32.mrb[0].mxu0
    %1231 = vdwg.mxu0
    %v1232 = vmax.f32 %v1229, 0.0
    %v1233 = vand.u32 2147483647, %v1229
    %v1234 = vsub.f32 0.0, %v1233
    %v1235 = vmul.f32 %v1234, 1.442695
    %v1236 = vpow.pop %v1235
    %v1237 = vadd.f32 %v1236, 1.0
    %v1238 = vlog2.pop %v1237
    %v1239 = vmul.f32 %v1238, 0.6931472
    %v1240 = vadd.f32 %v1232, %v1239
    %v1241 = vadd.f32 %v1240, 0.1
    %v1242 = vsel %vm460, %v1229, %v1241
    %1244 = vrot.lane.b32.xlu0 %v466, 16
    %v1245 = vpop.permute.xlu0 %1244
    %v1247 = vmul.f32 %v1241, %v1245
    %1249 = vrot.lane.b32.xlu0 %v1247, 112
    %v1250 = vpop.permute.xlu0 %1249
    %v1252 = vadd.f32 %v1229, %v1250
    %v1253 = vsel %vm467, %v1252, 0.0
    %1254 = vadd.xlane.f32.xlu0 %v1253
    %v1255 = vpop.xlane.xlu0 %1254
    %v1256 = vmul.f32 %v1255, %v1144
    %v1257 = vsub.f32 %v1252, %v1256
    %v1258 = vmul.f32 %v1257, %v1257
    %v1259 = vsel %vm467, %v1258, 0.0
    %1260 = vadd.xlane.f32.xlu0 %v1259
    %v1261 = vpop.xlane.xlu0 %1260
    %v1262 = vmul.f32 %v1261, %v1144
    %v1263 = vadd.f32 %v1262, 1e-05
    %v1264 = vrsqrt.pop %v1263
    %v1265 = vmul.f32 %v1257, %v1264
    %v1266 = vmul.f32 %v1265, %v456
    %v1267 = vadd.f32 %v1266, %v457
    %1269 = vrot.lane.b32.xlu0 %v1156, 32
    %v1270 = vpop.permute.xlu0 %1269
    %1273 = vrot.lane.b32.xlu0 %v1242, 48
    %v1274 = vpop.permute.xlu0 %1273
    %1277 = vrot.lane.b32.xlu0 %v1267, 80
    %v1278 = vpop.permute.xlu0 %1277
    %1280 = vrot.lane.b32.xlu0 %v829, 64
    %v1281 = vpop.permute.xlu0 %1280
    %v1283 = vsel %vm622, %v1130, %v1270
    %vm1284 = vcmask 392192
    %v1285 = vsel %vm1284, %v1283, %v1274
    %vm1286 = vcmask 654336
    %v1287 = vsel %vm1286, %v1285, %v1278
    %vm1288 = vcmask 785408
    %v1289 = vsel %vm1288, %v1287, %v1281
    %1290 = vst [vmem:[#allocation38] sm:$0xff] %v1289
    %s1291 = scalar_lea.vmem [#allocation2], 8
    %v1292 = vld [vmem:[%s1291] sm:$0xff]
    %s1293 = scalar_lea.vmem [#allocation5], 8
    %v1294 = vld [vmem:[%s1293] sm:$0xff]
    %s1295 = scalar_lea.vmem [#allocation7], 8
    %v1296 = vld [vmem:[%s1295] sm:$0xff]
    %s1297 = scalar_lea.vmem [#allocation8], 8
    %v1298 = vld [vmem:[%s1297] sm:$0xff]
    %v1299 = vsel %vm467, %v1267, 0
    %1301 = vmatprep.subr.mxu0 0.0
    %1302 = vmatpush1.msra.mxu0 %v415
    %1303 = vmatprep.subr.mxu0 0.0
    %1304 = vmatpush1.msra.mxu0 %v416
    %1305 = vmatprep.subr.mxu0 0.0
    %1306 = vmatpush1.msra.mxu0 0.0
    %1307 = vmatprep.subr.mxu0 0.0
    %1308 = vmatpush1.msra.mxu0 0.0
    %1309 = vmatprep.subr.mxu0 0.0
    %1310 = vmatpush1.msra.mxu0 0.0
    %1311 = vmatprep.subr.mxu0 0.0
    %1312 = vmatpush1.msra.mxu0 0.0
    %1313 = vmatprep.subr.mxu0 0.0
    %1314 = vmatpush1.msra.mxu0 0.0
    %1315 = vmatprep.subr.mxu0 0.0
    %1316 = vmatpush1.msra.mxu0 0.0
    %1317 = vmatprep.subr.mxu0 0.0
    %1318 = vmatpush1.msra.mxu0 0.0
    %1319 = vmatprep.subr.mxu0 0.0
    %1320 = vmatpush1.msra.mxu0 0.0
    %1321 = vmatprep.subr.mxu0 0.0
    %1322 = vmatpush1.msra.mxu0 0.0
    %1323 = vmatprep.subr.mxu0 0.0
    %1324 = vmatpush1.msra.mxu0 0.0
    %1325 = vmatprep.subr.mxu0 0.0
    %1326 = vmatpush1.msra.mxu0 0.0
    %1327 = vmatprep.subr.mxu0 0.0
    %1328 = vmatpush1.msra.mxu0 0.0
    %1329 = vmatprep.subr.mxu0 0.0
    %1330 = vmatpush1.msra.mxu0 0.0
    %1331 = vmatprep.subr.mxu0 0.0
    %1332 = vmatpush1.msra.mxu0 0.0
    %1333 = vmatprep.subr.mxu0 0.0
    %1334 = vmatpush1.msra.mxu0 0.0
    %1335 = vmatprep.subr.mxu0 0.0
    %1336 = vmatpush1.msra.mxu0 0.0
    %1337 = vmatprep.subr.mxu0 0.0
    %1338 = vmatpush1.msra.mxu0 0.0
    %1339 = vmatprep.subr.mxu0 0.0
    %1340 = vmatpush1.msra.mxu0 0.0
    %1341 = vmatprep.subr.mxu0 0.0
    %1342 = vmatpush1.msra.mxu0 0.0
    %1343 = vmatprep.subr.mxu0 0.0
    %1344 = vmatpush1.msra.mxu0 0.0
    %1345 = vmatprep.subr.mxu0 0.0
    %1346 = vmatpush1.msra.mxu0 0.0
    %1347 = vmatprep.subr.mxu0 0.0
    %1348 = vmatpush1.msra.mxu0 0.0
    %1349 = vmatprep.subr.mxu0 0.0
    %1350 = vmatpush1.msra.mxu0 0.0
    %1351 = vmatprep.subr.mxu0 0.0
    %1352 = vmatpush1.msra.mxu0 0.0
    %1353 = vmatprep.subr.mxu0 0.0
    %1354 = vmatpush1.msra.mxu0 0.0
    %1355 = vmatprep.subr.mxu0 0.0
    %1356 = vmatpush1.msra.mxu0 0.0
    %1357 = vmatprep.subr.mxu0 0.0
    %1358 = vmatpush1.msra.mxu0 0.0
    %1359 = vmatprep.subr.mxu0 0.0
    %1360 = vmatpush1.msra.mxu0 0.0
    %1361 = vmatprep.subr.mxu0 0.0
    %1362 = vmatpush1.msra.mxu0 0.0
    %1363 = vmatprep.subr.mxu0 0.0
    %1364 = vmatpush1.msra.mxu0 0.0
    %1365 = vmatprep.mubr.f32.mxu0 0.0
    %1366 = vmatmul.mubr.f32.gmra.mrb[0].mxu0 %v1299
    %v1367 = vpop.f32.mrb[0].mxu0
    %v1368 = vadd.f32 0.0, %v1367
    %v1369 = vpop.f32.mrb[0].mxu0
    %1370 = vdwg.mxu0
    %v1372 = vsel %vm541, %v1292, 0
    %1374 = vmatprep.subr.mxu0 0.0
    %1375 = vmatpush1.msra.mxu0 %v414
    %1376 = vmatprep.subr.mxu0 0.0
    %1377 = vmatpush1.msra.mxu0 0.0
    %1378 = vmatprep.subr.mxu0 0.0
    %1379 = vmatpush1.msra.mxu0 0.0
    %1380 = vmatprep.subr.mxu0 0.0
    %1381 = vmatpush1.msra.mxu0 0.0
    %1382 = vmatprep.subr.mxu0 0.0
    %1383 = vmatpush1.msra.mxu0 0.0
    %1384 = vmatprep.subr.mxu0 0.0
    %1385 = vmatpush1.msra.mxu0 0.0
    %1386 = vmatprep.subr.mxu0 0.0
    %1387 = vmatpush1.msra.mxu0 0.0
    %1388 = vmatprep.subr.mxu0 0.0
    %1389 = vmatpush1.msra.mxu0 0.0
    %1390 = vmatprep.subr.mxu0 0.0
    %1391 = vmatpush1.msra.mxu0 0.0
    %1392 = vmatprep.subr.mxu0 0.0
    %1393 = vmatpush1.msra.mxu0 0.0
    %1394 = vmatprep.subr.mxu0 0.0
    %1395 = vmatpush1.msra.mxu0 0.0
    %1396 = vmatprep.subr.mxu0 0.0
    %1397 = vmatpush1.msra.mxu0 0.0
    %1398 = vmatprep.subr.mxu0 0.0
    %1399 = vmatpush1.msra.mxu0 0.0
    %1400 = vmatprep.subr.mxu0 0.0
    %1401 = vmatpush1.msra.mxu0 0.0
    %1402 = vmatprep.subr.mxu0 0.0
    %1403 = vmatpush1.msra.mxu0 0.0
    %1404 = vmatprep.subr.mxu0 0.0
    %1405 = vmatpush1.msra.mxu0 0.0
    %1406 = vmatprep.subr.mxu0 0.0
    %1407 = vmatpush1.msra.mxu0 0.0
    %1408 = vmatprep.subr.mxu0 0.0
    %1409 = vmatpush1.msra.mxu0 0.0
    %1410 = vmatprep.subr.mxu0 0.0
    %1411 = vmatpush1.msra.mxu0 0.0
    %1412 = vmatprep.subr.mxu0 0.0
    %1413 = vmatpush1.msra.mxu0 0.0
    %1414 = vmatprep.subr.mxu0 0.0
    %1415 = vmatpush1.msra.mxu0 0.0
    %1416 = vmatprep.subr.mxu0 0.0
    %1417 = vmatpush1.msra.mxu0 0.0
    %1418 = vmatprep.subr.mxu0 0.0
    %1419 = vmatpush1.msra.mxu0 0.0
    %1420 = vmatprep.subr.mxu0 0.0
    %1421 = vmatpush1.msra.mxu0 0.0
    %1422 = vmatprep.subr.mxu0 0.0
    %1423 = vmatpush1.msra.mxu0 0.0
    %1424 = vmatprep.subr.mxu0 0.0
    %1425 = vmatpush1.msra.mxu0 0.0
    %1426 = vmatprep.subr.mxu0 0.0
    %1427 = vmatpush1.msra.mxu0 0.0
    %1428 = vmatprep.subr.mxu0 0.0
    %1429 = vmatpush1.msra.mxu0 0.0
    %1430 = vmatprep.subr.mxu0 0.0
    %1431 = vmatpush1.msra.mxu0 0.0
    %1432 = vmatprep.subr.mxu0 0.0
    %1433 = vmatpush1.msra.mxu0 0.0
    %1434 = vmatprep.subr.mxu0 0.0
    %1435 = vmatpush1.msra.mxu0 0.0
    %1436 = vmatprep.subr.mxu0 0.0
    %1437 = vmatpush1.msra.mxu0 0.0
    %1438 = vmatprep.mubr.f32.mxu0 0.0
    %1439 = vmatmul.mubr.f32.gmra.mrb[0].mxu0 %v1372
    %v1440 = vpop.f32.mrb[0].mxu0
    %v1441 = vadd.f32 %v1368, %v1440
    %v1442 = vpop.f32.mrb[0].mxu0
    %1443 = vdwg.mxu0
    %v1444 = vadd.f32 %v1441, %v417
    %vm1445 = vcmp.gt.f32.partialorder %v1444, 0.0
    %v1446 = vmin.f32 %v1444, 0.0
    %v1447 = vmul.f32 %v1446, 1.442695
    %v1448 = vpow.pop %v1447
    %v1449 = vsub.f32 %v1448, 1.0
    %v1450 = vsel %vm1445, %v1444, %v1449
    %v1452 = vsel %vm622, %v1450, 0
    %1454 = vmatprep.subr.mxu0 0.0
    %1455 = vmatpush1.msra.mxu0 %v418
    %1456 = vmatprep.subr.mxu0 0.0
    %1457 = vmatpush1.msra.mxu0 %v419
    %1458 = vmatprep.subr.mxu0 0.0
    %1459 = vmatpush1.msra.mxu0 %v420
    %1460 = vmatprep.subr.mxu0 0.0
    %1461 = vmatpush1.msra.mxu0 %v421
    %1462 = vmatprep.subr.mxu0 0.0
    %1463 = vmatpush1.msra.mxu0 0.0
    %1464 = vmatprep.subr.mxu0 0.0
    %1465 = vmatpush1.msra.mxu0 0.0
    %1466 = vmatprep.subr.mxu0 0.0
    %1467 = vmatpush1.msra.mxu0 0.0
    %1468 = vmatprep.subr.mxu0 0.0
    %1469 = vmatpush1.msra.mxu0 0.0
    %1470 = vmatprep.subr.mxu0 0.0
    %1471 = vmatpush1.msra.mxu0 0.0
    %1472 = vmatprep.subr.mxu0 0.0
    %1473 = vmatpush1.msra.mxu0 0.0
    %1474 = vmatprep.subr.mxu0 0.0
    %1475 = vmatpush1.msra.mxu0 0.0
    %1476 = vmatprep.subr.mxu0 0.0
    %1477 = vmatpush1.msra.mxu0 0.0
    %1478 = vmatprep.subr.mxu0 0.0
    %1479 = vmatpush1.msra.mxu0 0.0
    %1480 = vmatprep.subr.mxu0 0.0
    %1481 = vmatpush1.msra.mxu0 0.0
    %1482 = vmatprep.subr.mxu0 0.0
    %1483 = vmatpush1.msra.mxu0 0.0
    %1484 = vmatprep.subr.mxu0 0.0
    %1485 = vmatpush1.msra.mxu0 0.0
    %1486 = vmatprep.subr.mxu0 0.0
    %1487 = vmatpush1.msra.mxu0 0.0
    %1488 = vmatprep.subr.mxu0 0.0
    %1489 = vmatpush1.msra.mxu0 0.0
    %1490 = vmatprep.subr.mxu0 0.0
    %1491 = vmatpush1.msra.mxu0 0.0
    %1492 = vmatprep.subr.mxu0 0.0
    %1493 = vmatpush1.msra.mxu0 0.0
    %1494 = vmatprep.subr.mxu0 0.0
    %1495 = vmatpush1.msra.mxu0 0.0
    %1496 = vmatprep.subr.mxu0 0.0
    %1497 = vmatpush1.msra.mxu0 0.0
    %1498 = vmatprep.subr.mxu0 0.0
    %1499 = vmatpush1.msra.mxu0 0.0
    %1500 = vmatprep.subr.mxu0 0.0
    %1501 = vmatpush1.msra.mxu0 0.0
    %1502 = vmatprep.subr.mxu0 0.0
    %1503 = vmatpush1.msra.mxu0 0.0
    %1504 = vmatprep.subr.mxu0 0.0
    %1505 = vmatpush1.msra.mxu0 0.0
    %1506 = vmatprep.subr.mxu0 0.0
    %1507 = vmatpush1.msra.mxu0 0.0
    %1508 = vmatprep.subr.mxu0 0.0
    %1509 = vmatpush1.msra.mxu0 0.0
    %1510 = vmatprep.subr.mxu0 0.0
    %1511 = vmatpush1.msra.mxu0 0.0
    %1512 = vmatprep.subr.mxu0 0.0
    %1513 = vmatpush1.msra.mxu0 0.0
    %1514 = vmatprep.subr.mxu0 0.0
    %1515 = vmatpush1.msra.mxu0 0.0
    %1516 = vmatprep.subr.mxu0 0.0
    %1517 = vmatpush1.msra.mxu0 0.0
    %1518 = vmatprep.mubr.f32.mxu0 0.0
    %1519 = vmatmul.mubr.f32.gmra.mrb[0].mxu0 %v1452
    %v1520 = vpop.f32.mrb[0].mxu0
    %v1521 = vadd.f32 %v426, %v1520
    %v1522 = vpop.f32.mrb[0].mxu0
    %1523 = vdwg.mxu0
    %1524 = vmatprep.subr.mxu0 0.0
    %1525 = vmatpush1.msra.mxu0 %v422
    %1526 = vmatprep.subr.mxu0 0.0
    %1527 = vmatpush1.msra.mxu0 %v423
    %1528 = vmatprep.subr.mxu0 0.0
    %1529 = vmatpush1.msra.mxu0 %v424
    %1530 = vmatprep.subr.mxu0 0.0
    %1531 = vmatpush1.msra.mxu0 %v425
    %1532 = vmatprep.subr.mxu0 0.0
    %1533 = vmatpush1.msra.mxu0 0.0
    %1534 = vmatprep.subr.mxu0 0.0
    %1535 = vmatpush1.msra.mxu0 0.0
    %1536 = vmatprep.subr.mxu0 0.0
    %1537 = vmatpush1.msra.mxu0 0.0
    %1538 = vmatprep.subr.mxu0 0.0
    %1539 = vmatpush1.msra.mxu0 0.0
    %1540 = vmatprep.subr.mxu0 0.0
    %1541 = vmatpush1.msra.mxu0 0.0
    %1542 = vmatprep.subr.mxu0 0.0
    %1543 = vmatpush1.msra.mxu0 0.0
    %1544 = vmatprep.subr.mxu0 0.0
    %1545 = vmatpush1.msra.mxu0 0.0
    %1546 = vmatprep.subr.mxu0 0.0
    %1547 = vmatpush1.msra.mxu0 0.0
    %1548 = vmatprep.subr.mxu0 0.0
    %1549 = vmatpush1.msra.mxu0 0.0
    %1550 = vmatprep.subr.mxu0 0.0
    %1551 = vmatpush1.msra.mxu0 0.0
    %1552 = vmatprep.subr.mxu0 0.0
    %1553 = vmatpush1.msra.mxu0 0.0
    %1554 = vmatprep.subr.mxu0 0.0
    %1555 = vmatpush1.msra.mxu0 0.0
    %1556 = vmatprep.subr.mxu0 0.0
    %1557 = vmatpush1.msra.mxu0 0.0
    %1558 = vmatprep.subr.mxu0 0.0
    %1559 = vmatpush1.msra.mxu0 0.0
    %1560 = vmatprep.subr.mxu0 0.0
    %1561 = vmatpush1.msra.mxu0 0.0
    %1562 = vmatprep.subr.mxu0 0.0
    %1563 = vmatpush1.msra.mxu0 0.0
    %1564 = vmatprep.subr.mxu0 0.0
    %1565 = vmatpush1.msra.mxu0 0.0
    %1566 = vmatprep.subr.mxu0 0.0
    %1567 = vmatpush1.msra.mxu0 0.0
    %1568 = vmatprep.subr.mxu0 0.0
    %1569 = vmatpush1.msra.mxu0 0.0
    %1570 = vmatprep.subr.mxu0 0.0
    %1571 = vmatpush1.msra.mxu0 0.0
    %1572 = vmatprep.subr.mxu0 0.0
    %1573 = vmatpush1.msra.mxu0 0.0
    %1574 = vmatprep.subr.mxu0 0.0
    %1575 = vmatpush1.msra.mxu0 0.0
    %1576 = vmatprep.subr.mxu0 0.0
    %1577 = vmatpush1.msra.mxu0 0.0
    %1578 = vmatprep.subr.mxu0 0.0
    %1579 = vmatpush1.msra.mxu0 0.0
    %1580 = vmatprep.subr.mxu0 0.0
    %1581 = vmatpush1.msra.mxu0 0.0
    %1582 = vmatprep.subr.mxu0 0.0
    %1583 = vmatpush1.msra.mxu0 0.0
    %1584 = vmatprep.subr.mxu0 0.0
    %1585 = vmatpush1.msra.mxu0 0.0
    %1586 = vmatprep.subr.mxu0 0.0
    %1587 = vmatpush1.msra.mxu0 0.0
    %1588 = vmatprep.mubr.f32.mxu0 0.0
    %1589 = vmatmul.mubr.f32.gmra.mrb[0].mxu0 %v833
    %v1590 = vpop.f32.mrb[0].mxu0
    %v1591 = vadd.f32 %v427, %v1590
    %v1592 = vpop.f32.mrb[0].mxu0
    %1593 = vdwg.mxu0
    %v1594 = vadd.f32 %v1521, %v1591
    %v1595 = vsub.f32 0.0, %v1594
    %v1596 = vmul.f32 %v1595, 1.442695
    %v1597 = vpow.pop %v1596
    %v1598 = vadd.f32 %v1597, 1.0
    %v1599 = vrcp.pop %v1598
    %v1600 = vmul.f32 1.0, %v1599
    %1602 = vrot.lane.b32.xlu0 %v1591, 64
    %v1603 = vpop.permute.xlu0 %1602
    %v1605 = vmul.f32 %v1600, %v1603
    %1607 = vrot.lane.b32.xlu0 %v1605, 64
    %v1608 = vpop.permute.xlu0 %1607
    %v1610 = vadd.f32 %v1521, %v1608
    %v1611 = vtanh.pop %v1610
    %v1612 = vsub.f32 1.0, %v1600
    %1614 = vrot.lane.b32.xlu0 %v1611, 96
    %v1615 = vpop.permute.xlu0 %1614
    %v1617 = vmul.f32 %v1612, %v1615
    %v1618 = vmul.f32 %v1600, %v829
    %v1619 = vadd.f32 %v1617, %v1618
    %1621 = vrot.lane.b32.xlu0 %v1619, 96
    %v1622 = vpop.permute.xlu0 %1621
    %v1624 = vsel %vm622, %v1622, 0.0
    %1625 = vadd.xlane.f32.xlu0 %v1624
    %v1626 = vpop.xlane.xlu0 %1625
    %v1627 = vmul.f32 %v1626, %v805
    %v1628 = vsub.f32 %v1619, %v1627
    %v1629 = vmul.f32 %v1628, %v1628
    %1631 = vrot.lane.b32.xlu0 %v1629, 96
    %v1632 = vpop.permute.xlu0 %1631
    %v1634 = vsel %vm622, %v1632, 0.0
    %1635 = vadd.xlane.f32.xlu0 %v1634
    %v1636 = vpop.xlane.xlu0 %1635
    %v1637 = vmul.f32 %v1636, %v805
    %v1638 = vadd.f32 %v1637, 1e-05
    %v1639 = vrsqrt.pop %v1638
    %v1640 = vmul.f32 %v1628, %v1639
    %v1641 = vmul.f32 %v1640, %v822
    %v1642 = vadd.f32 %v1641, %v827
    %1644 = vrot.lane.b32.xlu0 %v1642, 96
    %v1645 = vpop.permute.xlu0 %1644
    %v1646 = vsel %vm622, %v1645, 0
    %1648 = vmatprep.subr.mxu0 0.0
    %1649 = vmatpush1.msra.mxu0 %v430
    %1650 = vmatprep.subr.mxu0 0.0
    %1651 = vmatpush1.msra.mxu0 %v431
    %1652 = vmatprep.subr.mxu0 0.0
    %1653 = vmatpush1.msra.mxu0 %v432
    %1654 = vmatprep.subr.mxu0 0.0
    %1655 = vmatpush1.msra.mxu0 %v433
    %1656 = vmatprep.subr.mxu0 0.0
    %1657 = vmatpush1.msra.mxu0 0.0
    %1658 = vmatprep.subr.mxu0 0.0
    %1659 = vmatpush1.msra.mxu0 0.0
    %1660 = vmatprep.subr.mxu0 0.0
    %1661 = vmatpush1.msra.mxu0 0.0
    %1662 = vmatprep.subr.mxu0 0.0
    %1663 = vmatpush1.msra.mxu0 0.0
    %1664 = vmatprep.subr.mxu0 0.0
    %1665 = vmatpush1.msra.mxu0 0.0
    %1666 = vmatprep.subr.mxu0 0.0
    %1667 = vmatpush1.msra.mxu0 0.0
    %1668 = vmatprep.subr.mxu0 0.0
    %1669 = vmatpush1.msra.mxu0 0.0
    %1670 = vmatprep.subr.mxu0 0.0
    %1671 = vmatpush1.msra.mxu0 0.0
    %1672 = vmatprep.subr.mxu0 0.0
    %1673 = vmatpush1.msra.mxu0 0.0
    %1674 = vmatprep.subr.mxu0 0.0
    %1675 = vmatpush1.msra.mxu0 0.0
    %1676 = vmatprep.subr.mxu0 0.0
    %1677 = vmatpush1.msra.mxu0 0.0
    %1678 = vmatprep.subr.mxu0 0.0
    %1679 = vmatpush1.msra.mxu0 0.0
    %1680 = vmatprep.subr.mxu0 0.0
    %1681 = vmatpush1.msra.mxu0 0.0
    %1682 = vmatprep.subr.mxu0 0.0
    %1683 = vmatpush1.msra.mxu0 0.0
    %1684 = vmatprep.subr.mxu0 0.0
    %1685 = vmatpush1.msra.mxu0 0.0
    %1686 = vmatprep.subr.mxu0 0.0
    %1687 = vmatpush1.msra.mxu0 0.0
    %1688 = vmatprep.subr.mxu0 0.0
    %1689 = vmatpush1.msra.mxu0 0.0
    %1690 = vmatprep.subr.mxu0 0.0
    %1691 = vmatpush1.msra.mxu0 0.0
    %1692 = vmatprep.subr.mxu0 0.0
    %1693 = vmatpush1.msra.mxu0 0.0
    %1694 = vmatprep.subr.mxu0 0.0
    %1695 = vmatpush1.msra.mxu0 0.0
    %1696 = vmatprep.subr.mxu0 0.0
    %1697 = vmatpush1.msra.mxu0 0.0
    %1698 = vmatprep.subr.mxu0 0.0
    %1699 = vmatpush1.msra.mxu0 0.0
    %1700 = vmatprep.subr.mxu0 0.0
    %1701 = vmatpush1.msra.mxu0 0.0
    %1702 = vmatprep.subr.mxu0 0.0
    %1703 = vmatpush1.msra.mxu0 0.0
    %1704 = vmatprep.subr.mxu0 0.0
    %1705 = vmatpush1.msra.mxu0 0.0
    %1706 = vmatprep.subr.mxu0 0.0
    %1707 = vmatpush1.msra.mxu0 0.0
    %1708 = vmatprep.subr.mxu0 0.0
    %1709 = vmatpush1.msra.mxu0 0.0
    %1710 = vmatprep.subr.mxu0 0.0
    %1711 = vmatpush1.msra.mxu0 0.0
    %1712 = vmatprep.mubr.f32.mxu0 0.0
    %1713 = vmatmul.mubr.f32.gmra.mrb[0].mxu0 %v1646
    %v1714 = vpop.f32.mrb[0].mxu0
    %v1715 = vadd.f32 0.0, %v1714
    %v1716 = vpop.f32.mrb[0].mxu0
    %1717 = vdwg.mxu0
    %v1718 = vadd.f32 %v1715, %v438
    %vm1719 = vcmp.gt.f32.partialorder %v1718, 0.0
    %v1720 = vmin.f32 %v1718, 0.0
    %v1721 = vmul.f32 %v1720, 1.442695
    %v1722 = vpow.pop %v1721
    %v1723 = vsub.f32 %v1722, 1.0
    %v1724 = vsel %vm1719, %v1718, %v1723
    %v1725 = vsel %vm622, %v1724, 0.0
    %1726 = vadd.xlane.f32.xlu0 %v1725
    %v1727 = vpop.xlane.xlu0 %1726
    %v1728 = vmul.f32 %v1727, %v805
    %v1729 = vsub.f32 %v1724, %v1728
    %v1730 = vmul.f32 %v1729, %v1729
    %v1731 = vsel %vm622, %v1730, 0.0
    %1732 = vadd.xlane.f32.xlu0 %v1731
    %v1733 = vpop.xlane.xlu0 %1732
    %v1734 = vmul.f32 %v1733, %v805
    %v1735 = vadd.f32 %v1734, 1e-05
    %v1736 = vrsqrt.pop %v1735
    %v1737 = vmul.f32 %v1729, %v1736
    %v1738 = vmul.f32 %v1737, %v440
    %v1739 = vadd.f32 %v1738, %v441
    %v1741 = vsel %vm622, %v1294, 0
    %1743 = vmatprep.subr.mxu0 0.0
    %1744 = vmatpush1.msra.mxu0 %v434
    %1745 = vmatprep.subr.mxu0 0.0
    %1746 = vmatpush1.msra.mxu0 %v435
    %1747 = vmatprep.subr.mxu0 0.0
    %1748 = vmatpush1.msra.mxu0 %v436
    %1749 = vmatprep.subr.mxu0 0.0
    %1750 = vmatpush1.msra.mxu0 %v437
    %1751 = vmatprep.subr.mxu0 0.0
    %1752 = vmatpush1.msra.mxu0 0.0
    %1753 = vmatprep.subr.mxu0 0.0
    %1754 = vmatpush1.msra.mxu0 0.0
    %1755 = vmatprep.subr.mxu0 0.0
    %1756 = vmatpush1.msra.mxu0 0.0
    %1757 = vmatprep.subr.mxu0 0.0
    %1758 = vmatpush1.msra.mxu0 0.0
    %1759 = vmatprep.subr.mxu0 0.0
    %1760 = vmatpush1.msra.mxu0 0.0
    %1761 = vmatprep.subr.mxu0 0.0
    %1762 = vmatpush1.msra.mxu0 0.0
    %1763 = vmatprep.subr.mxu0 0.0
    %1764 = vmatpush1.msra.mxu0 0.0
    %1765 = vmatprep.subr.mxu0 0.0
    %1766 = vmatpush1.msra.mxu0 0.0
    %1767 = vmatprep.subr.mxu0 0.0
    %1768 = vmatpush1.msra.mxu0 0.0
    %1769 = vmatprep.subr.mxu0 0.0
    %1770 = vmatpush1.msra.mxu0 0.0
    %1771 = vmatprep.subr.mxu0 0.0
    %1772 = vmatpush1.msra.mxu0 0.0
    %1773 = vmatprep.subr.mxu0 0.0
    %1774 = vmatpush1.msra.mxu0 0.0
    %1775 = vmatprep.subr.mxu0 0.0
    %1776 = vmatpush1.msra.mxu0 0.0
    %1777 = vmatprep.subr.mxu0 0.0
    %1778 = vmatpush1.msra.mxu0 0.0
    %1779 = vmatprep.subr.mxu0 0.0
    %1780 = vmatpush1.msra.mxu0 0.0
    %1781 = vmatprep.subr.mxu0 0.0
    %1782 = vmatpush1.msra.mxu0 0.0
    %1783 = vmatprep.subr.mxu0 0.0
    %1784 = vmatpush1.msra.mxu0 0.0
    %1785 = vmatprep.subr.mxu0 0.0
    %1786 = vmatpush1.msra.mxu0 0.0
    %1787 = vmatprep.subr.mxu0 0.0
    %1788 = vmatpush1.msra.mxu0 0.0
    %1789 = vmatprep.subr.mxu0 0.0
    %1790 = vmatpush1.msra.mxu0 0.0
    %1791 = vmatprep.subr.mxu0 0.0
    %1792 = vmatpush1.msra.mxu0 0.0
    %1793 = vmatprep.subr.mxu0 0.0
    %1794 = vmatpush1.msra.mxu0 0.0
    %1795 = vmatprep.subr.mxu0 0.0
    %1796 = vmatpush1.msra.mxu0 0.0
    %1797 = vmatprep.subr.mxu0 0.0
    %1798 = vmatpush1.msra.mxu0 0.0
    %1799 = vmatprep.subr.mxu0 0.0
    %1800 = vmatpush1.msra.mxu0 0.0
    %1801 = vmatprep.subr.mxu0 0.0
    %1802 = vmatpush1.msra.mxu0 0.0
    %1803 = vmatprep.subr.mxu0 0.0
    %1804 = vmatpush1.msra.mxu0 0.0
    %1805 = vmatprep.subr.mxu0 0.0
    %1806 = vmatpush1.msra.mxu0 0.0
    %1807 = vmatprep.mubr.f32.mxu0 0.0
    %1808 = vmatmul.mubr.f32.gmra.mrb[0].mxu0 %v1741
    %v1809 = vpop.f32.mrb[0].mxu0
    %v1810 = vadd.f32 0.0, %v1809
    %v1811 = vpop.f32.mrb[0].mxu0
    %1812 = vdwg.mxu0
    %1814 = vrot.lane.b32.xlu0 %v1810, 32
    %v1815 = vpop.permute.xlu0 %1814
    %v1817 = vadd.f32 %v1715, %v1815
    %v1818 = vadd.f32 %v1817, %v1007
    %vm1819 = vcmp.gt.f32.partialorder %v1818, 0.0
    %v1820 = vmin.f32 %v1818, 0.0
    %v1821 = vmul.f32 %v1820, 1.442695
    %v1822 = vpow.pop %v1821
    %v1823 = vsub.f32 %v1822, 1.0
    %v1824 = vsel %vm1819, %v1818, %v1823
    %1826 = vrot.lane.b32.xlu0 %v1824, 96
    %v1827 = vpop.permute.xlu0 %1826
    %v1829 = vsel %vm622, %v1827, 0.0
    %1830 = vadd.xlane.f32.xlu0 %v1829
    %v1831 = vpop.xlane.xlu0 %1830
    %v1832 = vmul.f32 %v1831, %v805
    %v1833 = vsub.f32 %v1824, %v1832
    %v1834 = vmul.f32 %v1833, %v1833
    %1836 = vrot.lane.b32.xlu0 %v1834, 96
    %v1837 = vpop.permute.xlu0 %1836
    %v1839 = vsel %vm622, %v1837, 0.0
    %1840 = vadd.xlane.f32.xlu0 %v1839
    %v1841 = vpop.xlane.xlu0 %1840
    %v1842 = vmul.f32 %v1841, %v805
    %v1843 = vadd.f32 %v1842, 1e-05
    %v1844 = vrsqrt.pop %v1843
    %v1845 = vmul.f32 %v1833, %v1844
    %v1846 = vmul.f32 %v1845, %v1039
    %v1847 = vadd.f32 %v1846, %v1044
    %v1849 = vsel %vm622, %v1739, 0
    %1851 = vmatprep.subr.mxu0 0.0
    %1852 = vmatpush1.msra.mxu0 %v444
    %1853 = vmatprep.subr.mxu0 0.0
    %1854 = vmatpush1.msra.mxu0 %v445
    %1855 = vmatprep.subr.mxu0 0.0
    %1856 = vmatpush1.msra.mxu0 %v446
    %1857 = vmatprep.subr.mxu0 0.0
    %1858 = vmatpush1.msra.mxu0 %v447
    %1859 = vmatprep.subr.mxu0 0.0
    %1860 = vmatpush1.msra.mxu0 0.0
    %1861 = vmatprep.subr.mxu0 0.0
    %1862 = vmatpush1.msra.mxu0 0.0
    %1863 = vmatprep.subr.mxu0 0.0
    %1864 = vmatpush1.msra.mxu0 0.0
    %1865 = vmatprep.subr.mxu0 0.0
    %1866 = vmatpush1.msra.mxu0 0.0
    %1867 = vmatprep.subr.mxu0 0.0
    %1868 = vmatpush1.msra.mxu0 0.0
    %1869 = vmatprep.subr.mxu0 0.0
    %1870 = vmatpush1.msra.mxu0 0.0
    %1871 = vmatprep.subr.mxu0 0.0
    %1872 = vmatpush1.msra.mxu0 0.0
    %1873 = vmatprep.subr.mxu0 0.0
    %1874 = vmatpush1.msra.mxu0 0.0
    %1875 = vmatprep.subr.mxu0 0.0
    %1876 = vmatpush1.msra.mxu0 0.0
    %1877 = vmatprep.subr.mxu0 0.0
    %1878 = vmatpush1.msra.mxu0 0.0
    %1879 = vmatprep.subr.mxu0 0.0
    %1880 = vmatpush1.msra.mxu0 0.0
    %1881 = vmatprep.subr.mxu0 0.0
    %1882 = vmatpush1.msra.mxu0 0.0
    %1883 = vmatprep.subr.mxu0 0.0
    %1884 = vmatpush1.msra.mxu0 0.0
    %1885 = vmatprep.subr.mxu0 0.0
    %1886 = vmatpush1.msra.mxu0 0.0
    %1887 = vmatprep.subr.mxu0 0.0
    %1888 = vmatpush1.msra.mxu0 0.0
    %1889 = vmatprep.subr.mxu0 0.0
    %1890 = vmatpush1.msra.mxu0 0.0
    %1891 = vmatprep.subr.mxu0 0.0
    %1892 = vmatpush1.msra.mxu0 0.0
    %1893 = vmatprep.subr.mxu0 0.0
    %1894 = vmatpush1.msra.mxu0 0.0
    %1895 = vmatprep.subr.mxu0 0.0
    %1896 = vmatpush1.msra.mxu0 0.0
    %1897 = vmatprep.subr.mxu0 0.0
    %1898 = vmatpush1.msra.mxu0 0.0
    %1899 = vmatprep.subr.mxu0 0.0
    %1900 = vmatpush1.msra.mxu0 0.0
    %1901 = vmatprep.subr.mxu0 0.0
    %1902 = vmatpush1.msra.mxu0 0.0
    %1903 = vmatprep.subr.mxu0 0.0
    %1904 = vmatpush1.msra.mxu0 0.0
    %1905 = vmatprep.subr.mxu0 0.0
    %1906 = vmatpush1.msra.mxu0 0.0
    %1907 = vmatprep.subr.mxu0 0.0
    %1908 = vmatpush1.msra.mxu0 0.0
    %1909 = vmatprep.subr.mxu0 0.0
    %1910 = vmatpush1.msra.mxu0 0.0
    %1911 = vmatprep.subr.mxu0 0.0
    %1912 = vmatpush1.msra.mxu0 0.0
    %1913 = vmatprep.subr.mxu0 0.0
    %1914 = vmatpush1.msra.mxu0 0.0
    %1915 = vmatprep.mubr.f32.mxu0 0.0
    %1916 = vmatmul.mubr.f32.gmra.mrb[0].mxu0 %v1849
    %v1917 = vpop.f32.mrb[0].mxu0
    %v1918 = vadd.f32 %v448, %v1917
    %v1919 = vpop.f32.mrb[0].mxu0
    %1920 = vdwg.mxu0
    %v1921 = vmax.f32 %v1918, 0.0
    %v1922 = vand.u32 2147483647, %v1918
    %v1923 = vsub.f32 0.0, %v1922
    %v1924 = vmul.f32 %v1923, 1.442695
    %v1925 = vpow.pop %v1924
    %v1926 = vadd.f32 %v1925, 1.0
    %v1927 = vlog2.pop %v1926
    %v1928 = vmul.f32 %v1927, 0.6931472
    %v1929 = vadd.f32 %v1921, %v1928
    %v1930 = vadd.f32 %v1929, 0.1
    %v1931 = vsel %vm460, %v1918, %v1930
    %1933 = vrot.lane.b32.xlu0 %v1296, 16
    %v1934 = vpop.permute.xlu0 %1933
    %v1936 = vmul.f32 %v1930, %v1934
    %1938 = vrot.lane.b32.xlu0 %v1936, 112
    %v1939 = vpop.permute.xlu0 %1938
    %v1941 = vadd.f32 %v1918, %v1939
    %v1942 = vsel %vm467, %v1941, 0.0
    %1943 = vadd.xlane.f32.xlu0 %v1942
    %v1944 = vpop.xlane.xlu0 %1943
    %v1945 = vmul.f32 %v1944, %v1144
    %v1946 = vsub.f32 %v1941, %v1945
    %v1947 = vmul.f32 %v1946, %v1946
    %v1948 = vsel %vm467, %v1947, 0.0
    %1949 = vadd.xlane.f32.xlu0 %v1948
    %v1950 = vpop.xlane.xlu0 %1949
    %v1951 = vmul.f32 %v1950, %v1144
    %v1952 = vadd.f32 %v1951, 1e-05
    %v1953 = vrsqrt.pop %v1952
    %v1954 = vmul.f32 %v1946, %v1953
    %v1955 = vmul.f32 %v1954, %v454
    %v1956 = vadd.f32 %v1955, %v455
    %1958 = vrot.lane.b32.xlu0 %v1847, 96
    %v1959 = vpop.permute.xlu0 %1958
    %v1960 = vsel %vm622, %v1959, 0
    %1962 = vmatprep.subr.mxu0 0.0
    %1963 = vmatpush1.msra.mxu0 %v449
    %1964 = vmatprep.subr.mxu0 0.0
    %1965 = vmatpush1.msra.mxu0 %v450
    %1966 = vmatprep.subr.mxu0 0.0
    %1967 = vmatpush1.msra.mxu0 %v451
    %1968 = vmatprep.subr.mxu0 0.0
    %1969 = vmatpush1.msra.mxu0 %v452
    %1970 = vmatprep.subr.mxu0 0.0
    %1971 = vmatpush1.msra.mxu0 0.0
    %1972 = vmatprep.subr.mxu0 0.0
    %1973 = vmatpush1.msra.mxu0 0.0
    %1974 = vmatprep.subr.mxu0 0.0
    %1975 = vmatpush1.msra.mxu0 0.0
    %1976 = vmatprep.subr.mxu0 0.0
    %1977 = vmatpush1.msra.mxu0 0.0
    %1978 = vmatprep.subr.mxu0 0.0
    %1979 = vmatpush1.msra.mxu0 0.0
    %1980 = vmatprep.subr.mxu0 0.0
    %1981 = vmatpush1.msra.mxu0 0.0
    %1982 = vmatprep.subr.mxu0 0.0
    %1983 = vmatpush1.msra.mxu0 0.0
    %1984 = vmatprep.subr.mxu0 0.0
    %1985 = vmatpush1.msra.mxu0 0.0
    %1986 = vmatprep.subr.mxu0 0.0
    %1987 = vmatpush1.msra.mxu0 0.0
    %1988 = vmatprep.subr.mxu0 0.0
    %1989 = vmatpush1.msra.mxu0 0.0
    %1990 = vmatprep.subr.mxu0 0.0
    %1991 = vmatpush1.msra.mxu0 0.0
    %1992 = vmatprep.subr.mxu0 0.0
    %1993 = vmatpush1.msra.mxu0 0.0
    %1994 = vmatprep.subr.mxu0 0.0
    %1995 = vmatpush1.msra.mxu0 0.0
    %1996 = vmatprep.subr.mxu0 0.0
    %1997 = vmatpush1.msra.mxu0 0.0
    %1998 = vmatprep.subr.mxu0 0.0
    %1999 = vmatpush1.msra.mxu0 0.0
    %2000 = vmatprep.subr.mxu0 0.0
    %2001 = vmatpush1.msra.mxu0 0.0
    %2002 = vmatprep.subr.mxu0 0.0
    %2003 = vmatpush1.msra.mxu0 0.0
    %2004 = vmatprep.subr.mxu0 0.0
    %2005 = vmatpush1.msra.mxu0 0.0
    %2006 = vmatprep.subr.mxu0 0.0
    %2007 = vmatpush1.msra.mxu0 0.0
    %2008 = vmatprep.subr.mxu0 0.0
    %2009 = vmatpush1.msra.mxu0 0.0
    %2010 = vmatprep.subr.mxu0 0.0
    %2011 = vmatpush1.msra.mxu0 0.0
    %2012 = vmatprep.subr.mxu0 0.0
    %2013 = vmatpush1.msra.mxu0 0.0
    %2014 = vmatprep.subr.mxu0 0.0
    %2015 = vmatpush1.msra.mxu0 0.0
    %2016 = vmatprep.subr.mxu0 0.0
    %2017 = vmatpush1.msra.mxu0 0.0
    %2018 = vmatprep.subr.mxu0 0.0
    %2019 = vmatpush1.msra.mxu0 0.0
    %2020 = vmatprep.subr.mxu0 0.0
    %2021 = vmatpush1.msra.mxu0 0.0
    %2022 = vmatprep.subr.mxu0 0.0
    %2023 = vmatpush1.msra.mxu0 0.0
    %2024 = vmatprep.subr.mxu0 0.0
    %2025 = vmatpush1.msra.mxu0 0.0
    %2026 = vmatprep.mubr.f32.mxu0 0.0
    %2027 = vmatmul.mubr.f32.gmra.mrb[0].mxu0 %v1960
    %v2028 = vpop.f32.mrb[0].mxu0
    %v2029 = vadd.f32 %v453, %v2028
    %v2030 = vpop.f32.mrb[0].mxu0
    %2031 = vdwg.mxu0
    %v2032 = vmax.f32 %v2029, 0.0
    %v2033 = vand.u32 2147483647, %v2029
    %v2034 = vsub.f32 0.0, %v2033
    %v2035 = vmul.f32 %v2034, 1.442695
    %v2036 = vpow.pop %v2035
    %v2037 = vadd.f32 %v2036, 1.0
    %v2038 = vlog2.pop %v2037
    %v2039 = vmul.f32 %v2038, 0.6931472
    %v2040 = vadd.f32 %v2032, %v2039
    %v2041 = vadd.f32 %v2040, 0.1
    %v2042 = vsel %vm460, %v2029, %v2041
    %2044 = vrot.lane.b32.xlu0 %v1298, 16
    %v2045 = vpop.permute.xlu0 %2044
    %v2047 = vmul.f32 %v2041, %v2045
    %2049 = vrot.lane.b32.xlu0 %v2047, 112
    %v2050 = vpop.permute.xlu0 %2049
    %v2052 = vadd.f32 %v2029, %v2050
    %v2053 = vsel %vm467, %v2052, 0.0
    %2054 = vadd.xlane.f32.xlu0 %v2053
    %v2055 = vpop.xlane.xlu0 %2054
    %v2056 = vmul.f32 %v2055, %v1144
    %v2057 = vsub.f32 %v2052, %v2056
    %v2058 = vmul.f32 %v2057, %v2057
    %v2059 = vsel %vm467, %v2058, 0.0
    %2060 = vadd.xlane.f32.xlu0 %v2059
    %v2061 = vpop.xlane.xlu0 %2060
    %v2062 = vmul.f32 %v2061, %v1144
    %v2063 = vadd.f32 %v2062, 1e-05
    %v2064 = vrsqrt.pop %v2063
    %v2065 = vmul.f32 %v2057, %v2064
    %v2066 = vmul.f32 %v2065, %v456
    %v2067 = vadd.f32 %v2066, %v457
    %2069 = vrot.lane.b32.xlu0 %v1956, 32
    %v2070 = vpop.permute.xlu0 %2069
    %2073 = vrot.lane.b32.xlu0 %v2042, 48
    %v2074 = vpop.permute.xlu0 %2073
    %2077 = vrot.lane.b32.xlu0 %v2067, 80
    %v2078 = vpop.permute.xlu0 %2077
    %2080 = vrot.lane.b32.xlu0 %v1642, 64
    %v2081 = vpop.permute.xlu0 %2080
    %v2083 = vsel %vm622, %v1931, %v2070
    %v2084 = vsel %vm1284, %v2083, %v2074
    %v2085 = vsel %vm1286, %v2084, %v2078
    %v2086 = vsel %vm1288, %v2085, %v2081
    %s2087 = scalar_lea.vmem [#allocation38], 8
    %2088 = vst [vmem:[%s2087] sm:$0xff] %v2086
    %s2089 = scalar_lea.vmem [#allocation2], 16
    %v2090 = vld [vmem:[%s2089] sm:$0xff]
    %s2091 = scalar_lea.vmem [#allocation5], 16
    %v2092 = vld [vmem:[%s2091] sm:$0xff]
    %s2093 = scalar_lea.vmem [#allocation7], 16
    %v2094 = vld [vmem:[%s2093] sm:$0xff]
    %s2095 = scalar_lea.vmem [#allocation8], 16
    %v2096 = vld [vmem:[%s2095] sm:$0xff]
    %v2097 = vsel %vm467, %v2067, 0
    %2099 = vmatprep.subr.mxu0 0.0
    %2100 = vmatpush1.msra.mxu0 %v415
    %2101 = vmatprep.subr.mxu0 0.0
    %2102 = vmatpush1.msra.mxu0 %v416
    %2103 = vmatprep.subr.mxu0 0.0
    %2104 = vmatpush1.msra.mxu0 0.0
    %2105 = vmatprep.subr.mxu0 0.0
    %2106 = vmatpush1.msra.mxu0 0.0
    %2107 = vmatprep.subr.mxu0 0.0
    %2108 = vmatpush1.msra.mxu0 0.0
    %2109 = vmatprep.subr.mxu0 0.0
    %2110 = vmatpush1.msra.mxu0 0.0
    %2111 = vmatprep.subr.mxu0 0.0
    %2112 = vmatpush1.msra.mxu0 0.0
    %2113 = vmatprep.subr.mxu0 0.0
    %2114 = vmatpush1.msra.mxu0 0.0
    %2115 = vmatprep.subr.mxu0 0.0
    %2116 = vmatpush1.msra.mxu0 0.0
    %2117 = vmatprep.subr.mxu0 0.0
    %2118 = vmatpush1.msra.mxu0 0.0
    %2119 = vmatprep.subr.mxu0 0.0
    %2120 = vmatpush1.msra.mxu0 0.0
    %2121 = vmatprep.subr.mxu0 0.0
    %2122 = vmatpush1.msra.mxu0 0.0
    %2123 = vmatprep.subr.mxu0 0.0
    %2124 = vmatpush1.msra.mxu0 0.0
    %2125 = vmatprep.subr.mxu0 0.0
    %2126 = vmatpush1.msra.mxu0 0.0
    %2127 = vmatprep.subr.mxu0 0.0
    %2128 = vmatpush1.msra.mxu0 0.0
    %2129 = vmatprep.subr.mxu0 0.0
    %2130 = vmatpush1.msra.mxu0 0.0
    %2131 = vmatprep.subr.mxu0 0.0
    %2132 = vmatpush1.msra.mxu0 0.0
    %2133 = vmatprep.subr.mxu0 0.0
    %2134 = vmatpush1.msra.mxu0 0.0
    %2135 = vmatprep.subr.mxu0 0.0
    %2136 = vmatpush1.msra.mxu0 0.0
    %2137 = vmatprep.subr.mxu0 0.0
    %2138 = vmatpush1.msra.mxu0 0.0
    %2139 = vmatprep.subr.mxu0 0.0
    %2140 = vmatpush1.msra.mxu0 0.0
    %2141 = vmatprep.subr.mxu0 0.0
    %2142 = vmatpush1.msra.mxu0 0.0
    %2143 = vmatprep.subr.mxu0 0.0
    %2144 = vmatpush1.msra.mxu0 0.0
    %2145 = vmatprep.subr.mxu0 0.0
    %2146 = vmatpush1.msra.mxu0 0.0
    %2147 = vmatprep.subr.mxu0 0.0
    %2148 = vmatpush1.msra.mxu0 0.0
    %2149 = vmatprep.subr.mxu0 0.0
    %2150 = vmatpush1.msra.mxu0 0.0
    %2151 = vmatprep.subr.mxu0 0.0
    %2152 = vmatpush1.msra.mxu0 0.0
    %2153 = vmatprep.subr.mxu0 0.0
    %2154 = vmatpush1.msra.mxu0 0.0
    %2155 = vmatprep.subr.mxu0 0.0
    %2156 = vmatpush1.msra.mxu0 0.0
    %2157 = vmatprep.subr.mxu0 0.0
    %2158 = vmatpush1.msra.mxu0 0.0
    %2159 = vmatprep.subr.mxu0 0.0
    %2160 = vmatpush1.msra.mxu0 0.0
    %2161 = vmatprep.subr.mxu0 0.0
    %2162 = vmatpush1.msra.mxu0 0.0
    %2163 = vmatprep.mubr.f32.mxu0 0.0
    %2164 = vmatmul.mubr.f32.gmra.mrb[0].mxu0 %v2097
    %v2165 = vpop.f32.mrb[0].mxu0
    %v2166 = vadd.f32 0.0, %v2165
    %v2167 = vpop.f32.mrb[0].mxu0
    %2168 = vdwg.mxu0
    %v2170 = vsel %vm541, %v2090, 0
    %2172 = vmatprep.subr.mxu0 0.0
    %2173 = vmatpush1.msra.mxu0 %v414
    %2174 = vmatprep.subr.mxu0 0.0
    %2175 = vmatpush1.msra.mxu0 0.0
    %2176 = vmatprep.subr.mxu0 0.0
    %2177 = vmatpush1.msra.mxu0 0.0
    %2178 = vmatprep.subr.mxu0 0.0
    %2179 = vmatpush1.msra.mxu0 0.0
    %2180 = vmatprep.subr.mxu0 0.0
    %2181 = vmatpush1.msra.mxu0 0.0
    %2182 = vmatprep.subr.mxu0 0.0
    %2183 = vmatpush1.msra.mxu0 0.0
    %2184 = vmatprep.subr.mxu0 0.0
    %2185 = vmatpush1.msra.mxu0 0.0
    %2186 = vmatprep.subr.mxu0 0.0
    %2187 = vmatpush1.msra.mxu0 0.0
    %2188 = vmatprep.subr.mxu0 0.0
    %2189 = vmatpush1.msra.mxu0 0.0
    %2190 = vmatprep.subr.mxu0 0.0
    %2191 = vmatpush1.msra.mxu0 0.0
    %2192 = vmatprep.subr.mxu0 0.0
    %2193 = vmatpush1.msra.mxu0 0.0
    %2194 = vmatprep.subr.mxu0 0.0
    %2195 = vmatpush1.msra.mxu0 0.0
    %2196 = vmatprep.subr.mxu0 0.0
    %2197 = vmatpush1.msra.mxu0 0.0
    %2198 = vmatprep.subr.mxu0 0.0
    %2199 = vmatpush1.msra.mxu0 0.0
    %2200 = vmatprep.subr.mxu0 0.0
    %2201 = vmatpush1.msra.mxu0 0.0
    %2202 = vmatprep.subr.mxu0 0.0
    %2203 = vmatpush1.msra.mxu0 0.0
    %2204 = vmatprep.subr.mxu0 0.0
    %2205 = vmatpush1.msra.mxu0 0.0
    %2206 = vmatprep.subr.mxu0 0.0
    %2207 = vmatpush1.msra.mxu0 0.0
    %2208 = vmatprep.subr.mxu0 0.0
    %2209 = vmatpush1.msra.mxu0 0.0
    %2210 = vmatprep.subr.mxu0 0.0
    %2211 = vmatpush1.msra.mxu0 0.0
    %2212 = vmatprep.subr.mxu0 0.0
    %2213 = vmatpush1.msra.mxu0 0.0
    %2214 = vmatprep.subr.mxu0 0.0
    %2215 = vmatpush1.msra.mxu0 0.0
    %2216 = vmatprep.subr.mxu0 0.0
    %2217 = vmatpush1.msra.mxu0 0.0
    %2218 = vmatprep.subr.mxu0 0.0
    %2219 = vmatpush1.msra.mxu0 0.0
    %2220 = vmatprep.subr.mxu0 0.0
    %2221 = vmatpush1.msra.mxu0 0.0
    %2222 = vmatprep.subr.mxu0 0.0
    %2223 = vmatpush1.msra.mxu0 0.0
    %2224 = vmatprep.subr.mxu0 0.0
    %2225 = vmatpush1.msra.mxu0 0.0
    %2226 = vmatprep.subr.mxu0 0.0
    %2227 = vmatpush1.msra.mxu0 0.0
    %2228 = vmatprep.subr.mxu0 0.0
    %2229 = vmatpush1.msra.mxu0 0.0
    %2230 = vmatprep.subr.mxu0 0.0
    %2231 = vmatpush1.msra.mxu0 0.0
    %2232 = vmatprep.subr.mxu0 0.0
    %2233 = vmatpush1.msra.mxu0 0.0
    %2234 = vmatprep.subr.mxu0 0.0
    %2235 = vmatpush1.msra.mxu0 0.0
    %2236 = vmatprep.mubr.f32.mxu0 0.0
    %2237 = vmatmul.mubr.f32.gmra.mrb[0].mxu0 %v2170
    %v2238 = vpop.f32.mrb[0].mxu0
    %v2239 = vadd.f32 %v2166, %v2238
    %v2240 = vpop.f32.mrb[0].mxu0
    %2241 = vdwg.mxu0
    %v2242 = vadd.f32 %v2239, %v417
    %vm2243 = vcmp.gt.f32.partialorder %v2242, 0.0
    %v2244 = vmin.f32 %v2242, 0.0
    %v2245 = vmul.f32 %v2244, 1.442695
    %v2246 = vpow.pop %v2245
    %v2247 = vsub.f32 %v2246, 1.0
    %v2248 = vsel %vm2243, %v2242, %v2247
    %v2250 = vsel %vm622, %v2248, 0
    %2252 = vmatprep.subr.mxu0 0.0
    %2253 = vmatpush1.msra.mxu0 %v418
    %2254 = vmatprep.subr.mxu0 0.0
    %2255 = vmatpush1.msra.mxu0 %v419
    %2256 = vmatprep.subr.mxu0 0.0
    %2257 = vmatpush1.msra.mxu0 %v420
    %2258 = vmatprep.subr.mxu0 0.0
    %2259 = vmatpush1.msra.mxu0 %v421
    %2260 = vmatprep.subr.mxu0 0.0
    %2261 = vmatpush1.msra.mxu0 0.0
    %2262 = vmatprep.subr.mxu0 0.0
    %2263 = vmatpush1.msra.mxu0 0.0
    %2264 = vmatprep.subr.mxu0 0.0
    %2265 = vmatpush1.msra.mxu0 0.0
    %2266 = vmatprep.subr.mxu0 0.0
    %2267 = vmatpush1.msra.mxu0 0.0
    %2268 = vmatprep.subr.mxu0 0.0
    %2269 = vmatpush1.msra.mxu0 0.0
    %2270 = vmatprep.subr.mxu0 0.0
    %2271 = vmatpush1.msra.mxu0 0.0
    %2272 = vmatprep.subr.mxu0 0.0
    %2273 = vmatpush1.msra.mxu0 0.0
    %2274 = vmatprep.subr.mxu0 0.0
    %2275 = vmatpush1.msra.mxu0 0.0
    %2276 = vmatprep.subr.mxu0 0.0
    %2277 = vmatpush1.msra.mxu0 0.0
    %2278 = vmatprep.subr.mxu0 0.0
    %2279 = vmatpush1.msra.mxu0 0.0
    %2280 = vmatprep.subr.mxu0 0.0
    %2281 = vmatpush1.msra.mxu0 0.0
    %2282 = vmatprep.subr.mxu0 0.0
    %2283 = vmatpush1.msra.mxu0 0.0
    %2284 = vmatprep.subr.mxu0 0.0
    %2285 = vmatpush1.msra.mxu0 0.0
    %2286 = vmatprep.subr.mxu0 0.0
    %2287 = vmatpush1.msra.mxu0 0.0
    %2288 = vmatprep.subr.mxu0 0.0
    %2289 = vmatpush1.msra.mxu0 0.0
    %2290 = vmatprep.subr.mxu0 0.0
    %2291 = vmatpush1.msra.mxu0 0.0
    %2292 = vmatprep.subr.mxu0 0.0
    %2293 = vmatpush1.msra.mxu0 0.0
    %2294 = vmatprep.subr.mxu0 0.0
    %2295 = vmatpush1.msra.mxu0 0.0
    %2296 = vmatprep.subr.mxu0 0.0
    %2297 = vmatpush1.msra.mxu0 0.0
    %2298 = vmatprep.subr.mxu0 0.0
    %2299 = vmatpush1.msra.mxu0 0.0
    %2300 = vmatprep.subr.mxu0 0.0
    %2301 = vmatpush1.msra.mxu0 0.0
    %2302 = vmatprep.subr.mxu0 0.0
    %2303 = vmatpush1.msra.mxu0 0.0
    %2304 = vmatprep.subr.mxu0 0.0
    %2305 = vmatpush1.msra.mxu0 0.0
    %2306 = vmatprep.subr.mxu0 0.0
    %2307 = vmatpush1.msra.mxu0 0.0
    %2308 = vmatprep.subr.mxu0 0.0
    %2309 = vmatpush1.msra.mxu0 0.0
    %2310 = vmatprep.subr.mxu0 0.0
    %2311 = vmatpush1.msra.mxu0 0.0
    %2312 = vmatprep.subr.mxu0 0.0
    %2313 = vmatpush1.msra.mxu0 0.0
    %2314 = vmatprep.subr.mxu0 0.0
    %2315 = vmatpush1.msra.mxu0 0.0
    %2316 = vmatprep.mubr.f32.mxu0 0.0
    %2317 = vmatmul.mubr.f32.gmra.mrb[0].mxu0 %v2250
    %v2318 = vpop.f32.mrb[0].mxu0
    %v2319 = vadd.f32 %v426, %v2318
    %v2320 = vpop.f32.mrb[0].mxu0
    %2321 = vdwg.mxu0
    %2322 = vmatprep.subr.mxu0 0.0
    %2323 = vmatpush1.msra.mxu0 %v422
    %2324 = vmatprep.subr.mxu0 0.0
    %2325 = vmatpush1.msra.mxu0 %v423
    %2326 = vmatprep.subr.mxu0 0.0
    %2327 = vmatpush1.msra.mxu0 %v424
    %2328 = vmatprep.subr.mxu0 0.0
    %2329 = vmatpush1.msra.mxu0 %v425
    %2330 = vmatprep.subr.mxu0 0.0
    %2331 = vmatpush1.msra.mxu0 0.0
    %2332 = vmatprep.subr.mxu0 0.0
    %2333 = vmatpush1.msra.mxu0 0.0
    %2334 = vmatprep.subr.mxu0 0.0
    %2335 = vmatpush1.msra.mxu0 0.0
    %2336 = vmatprep.subr.mxu0 0.0
    %2337 = vmatpush1.msra.mxu0 0.0
    %2338 = vmatprep.subr.mxu0 0.0
    %2339 = vmatpush1.msra.mxu0 0.0
    %2340 = vmatprep.subr.mxu0 0.0
    %2341 = vmatpush1.msra.mxu0 0.0
    %2342 = vmatprep.subr.mxu0 0.0
    %2343 = vmatpush1.msra.mxu0 0.0
    %2344 = vmatprep.subr.mxu0 0.0
    %2345 = vmatpush1.msra.mxu0 0.0
    %2346 = vmatprep.subr.mxu0 0.0
    %2347 = vmatpush1.msra.mxu0 0.0
    %2348 = vmatprep.subr.mxu0 0.0
    %2349 = vmatpush1.msra.mxu0 0.0
    %2350 = vmatprep.subr.mxu0 0.0
    %2351 = vmatpush1.msra.mxu0 0.0
    %2352 = vmatprep.subr.mxu0 0.0
    %2353 = vmatpush1.msra.mxu0 0.0
    %2354 = vmatprep.subr.mxu0 0.0
    %2355 = vmatpush1.msra.mxu0 0.0
    %2356 = vmatprep.subr.mxu0 0.0
    %2357 = vmatpush1.msra.mxu0 0.0
    %2358 = vmatprep.subr.mxu0 0.0
    %2359 = vmatpush1.msra.mxu0 0.0
    %2360 = vmatprep.subr.mxu0 0.0
    %2361 = vmatpush1.msra.mxu0 0.0
    %2362 = vmatprep.subr.mxu0 0.0
    %2363 = vmatpush1.msra.mxu0 0.0
    %2364 = vmatprep.subr.mxu0 0.0
    %2365 = vmatpush1.msra.mxu0 0.0
    %2366 = vmatprep.subr.mxu0 0.0
    %2367 = vmatpush1.msra.mxu0 0.0
    %2368 = vmatprep.subr.mxu0 0.0
    %2369 = vmatpush1.msra.mxu0 0.0
    %2370 = vmatprep.subr.mxu0 0.0
    %2371 = vmatpush1.msra.mxu0 0.0
    %2372 = vmatprep.subr.mxu0 0.0
    %2373 = vmatpush1.msra.mxu0 0.0
    %2374 = vmatprep.subr.mxu0 0.0
    %2375 = vmatpush1.msra.mxu0 0.0
    %2376 = vmatprep.subr.mxu0 0.0
    %2377 = vmatpush1.msra.mxu0 0.0
    %2378 = vmatprep.subr.mxu0 0.0
    %2379 = vmatpush1.msra.mxu0 0.0
    %2380 = vmatprep.subr.mxu0 0.0
    %2381 = vmatpush1.msra.mxu0 0.0
    %2382 = vmatprep.subr.mxu0 0.0
    %2383 = vmatpush1.msra.mxu0 0.0
    %2384 = vmatprep.subr.mxu0 0.0
    %2385 = vmatpush1.msra.mxu0 0.0
    %2386 = vmatprep.mubr.f32.mxu0 0.0
    %2387 = vmatmul.mubr.f32.gmra.mrb[0].mxu0 %v1646
    %v2388 = vpop.f32.mrb[0].mxu0
    %v2389 = vadd.f32 %v427, %v2388
    %v2390 = vpop.f32.mrb[0].mxu0
    %2391 = vdwg.mxu0
    %v2392 = vadd.f32 %v2319, %v2389
    %v2393 = vsub.f32 0.0, %v2392
    %v2394 = vmul.f32 %v2393, 1.442695
    %v2395 = vpow.pop %v2394
    %v2396 = vadd.f32 %v2395, 1.0
    %v2397 = vrcp.pop %v2396
    %v2398 = vmul.f32 1.0, %v2397
    %2400 = vrot.lane.b32.xlu0 %v2389, 64
    %v2401 = vpop.permute.xlu0 %2400
    %v2403 = vmul.f32 %v2398, %v2401
    %2405 = vrot.lane.b32.xlu0 %v2403, 64
    %v2406 = vpop.permute.xlu0 %2405
    %v2408 = vadd.f32 %v2319, %v2406
    %v2409 = vtanh.pop %v2408
    %v2410 = vsub.f32 1.0, %v2398
    %2412 = vrot.lane.b32.xlu0 %v2409, 96
    %v2413 = vpop.permute.xlu0 %2412
    %v2415 = vmul.f32 %v2410, %v2413
    %v2416 = vmul.f32 %v2398, %v1642
    %v2417 = vadd.f32 %v2415, %v2416
    %2419 = vrot.lane.b32.xlu0 %v2417, 96
    %v2420 = vpop.permute.xlu0 %2419
    %v2422 = vsel %vm622, %v2420, 0.0
    %2423 = vadd.xlane.f32.xlu0 %v2422
    %v2424 = vpop.xlane.xlu0 %2423
    %v2425 = vmul.f32 %v2424, %v805
    %v2426 = vsub.f32 %v2417, %v2425
    %v2427 = vmul.f32 %v2426, %v2426
    %2429 = vrot.lane.b32.xlu0 %v2427, 96
    %v2430 = vpop.permute.xlu0 %2429
    %v2432 = vsel %vm622, %v2430, 0.0
    %2433 = vadd.xlane.f32.xlu0 %v2432
    %v2434 = vpop.xlane.xlu0 %2433
    %v2435 = vmul.f32 %v2434, %v805
    %v2436 = vadd.f32 %v2435, 1e-05
    %v2437 = vrsqrt.pop %v2436
    %v2438 = vmul.f32 %v2426, %v2437
    %v2439 = vmul.f32 %v2438, %v822
    %v2440 = vadd.f32 %v2439, %v827
    %2442 = vrot.lane.b32.xlu0 %v2440, 96
    %v2443 = vpop.permute.xlu0 %2442
    %v2444 = vsel %vm622, %v2443, 0
    %2446 = vmatprep.subr.mxu0 0.0
    %2447 = vmatpush1.msra.mxu0 %v430
    %2448 = vmatprep.subr.mxu0 0.0
    %2449 = vmatpush1.msra.mxu0 %v431
    %2450 = vmatprep.subr.mxu0 0.0
    %2451 = vmatpush1.msra.mxu0 %v432
    %2452 = vmatprep.subr.mxu0 0.0
    %2453 = vmatpush1.msra.mxu0 %v433
    %2454 = vmatprep.subr.mxu0 0.0
    %2455 = vmatpush1.msra.mxu0 0.0
    %2456 = vmatprep.subr.mxu0 0.0
    %2457 = vmatpush1.msra.mxu0 0.0
    %2458 = vmatprep.subr.mxu0 0.0
    %2459 = vmatpush1.msra.mxu0 0.0
    %2460 = vmatprep.subr.mxu0 0.0
    %2461 = vmatpush1.msra.mxu0 0.0
    %2462 = vmatprep.subr.mxu0 0.0
    %2463 = vmatpush1.msra.mxu0 0.0
    %2464 = vmatprep.subr.mxu0 0.0
    %2465 = vmatpush1.msra.mxu0 0.0
    %2466 = vmatprep.subr.mxu0 0.0
    %2467 = vmatpush1.msra.mxu0 0.0
    %2468 = vmatprep.subr.mxu0 0.0
    %2469 = vmatpush1.msra.mxu0 0.0
    %2470 = vmatprep.subr.mxu0 0.0
    %2471 = vmatpush1.msra.mxu0 0.0
    %2472 = vmatprep.subr.mxu0 0.0
    %2473 = vmatpush1.msra.mxu0 0.0
    %2474 = vmatprep.subr.mxu0 0.0
    %2475 = vmatpush1.msra.mxu0 0.0
    %2476 = vmatprep.subr.mxu0 0.0
    %2477 = vmatpush1.msra.mxu0 0.0
    %2478 = vmatprep.subr.mxu0 0.0
    %2479 = vmatpush1.msra.mxu0 0.0
    %2480 = vmatprep.subr.mxu0 0.0
    %2481 = vmatpush1.msra.mxu0 0.0
    %2482 = vmatprep.subr.mxu0 0.0
    %2483 = vmatpush1.msra.mxu0 0.0
    %2484 = vmatprep.subr.mxu0 0.0
    %2485 = vmatpush1.msra.mxu0 0.0
    %2486 = vmatprep.subr.mxu0 0.0
    %2487 = vmatpush1.msra.mxu0 0.0
    %2488 = vmatprep.subr.mxu0 0.0
    %2489 = vmatpush1.msra.mxu0 0.0
    %2490 = vmatprep.subr.mxu0 0.0
    %2491 = vmatpush1.msra.mxu0 0.0
    %2492 = vmatprep.subr.mxu0 0.0
    %2493 = vmatpush1.msra.mxu0 0.0
    %2494 = vmatprep.subr.mxu0 0.0
    %2495 = vmatpush1.msra.mxu0 0.0
    %2496 = vmatprep.subr.mxu0 0.0
    %2497 = vmatpush1.msra.mxu0 0.0
    %2498 = vmatprep.subr.mxu0 0.0
    %2499 = vmatpush1.msra.mxu0 0.0
    %2500 = vmatprep.subr.mxu0 0.0
    %2501 = vmatpush1.msra.mxu0 0.0
    %2502 = vmatprep.subr.mxu0 0.0
    %2503 = vmatpush1.msra.mxu0 0.0
    %2504 = vmatprep.subr.mxu0 0.0
    %2505 = vmatpush1.msra.mxu0 0.0
    %2506 = vmatprep.subr.mxu0 0.0
    %2507 = vmatpush1.msra.mxu0 0.0
    %2508 = vmatprep.subr.mxu0 0.0
    %2509 = vmatpush1.msra.mxu0 0.0
    %2510 = vmatprep.mubr.f32.mxu0 0.0
    %2511 = vmatmul.mubr.f32.gmra.mrb[0].mxu0 %v2444
    %v2512 = vpop.f32.mrb[0].mxu0
    %v2513 = vadd.f32 0.0, %v2512
    %v2514 = vpop.f32.mrb[0].mxu0
    %2515 = vdwg.mxu0
    %v2516 = vadd.f32 %v2513, %v438
    %vm2517 = vcmp.gt.f32.partialorder %v2516, 0.0
    %v2518 = vmin.f32 %v2516, 0.0
    %v2519 = vmul.f32 %v2518, 1.442695
    %v2520 = vpow.pop %v2519
    %v2521 = vsub.f32 %v2520, 1.0
    %v2522 = vsel %vm2517, %v2516, %v2521
    %v2523 = vsel %vm622, %v2522, 0.0
    %2524 = vadd.xlane.f32.xlu0 %v2523
    %v2525 = vpop.xlane.xlu0 %2524
    %v2526 = vmul.f32 %v2525, %v805
    %v2527 = vsub.f32 %v2522, %v2526
    %v2528 = vmul.f32 %v2527, %v2527
    %v2529 = vsel %vm622, %v2528, 0.0
    %2530 = vadd.xlane.f32.xlu0 %v2529
    %v2531 = vpop.xlane.xlu0 %2530
    %v2532 = vmul.f32 %v2531, %v805
    %v2533 = vadd.f32 %v2532, 1e-05
    %v2534 = vrsqrt.pop %v2533
    %v2535 = vmul.f32 %v2527, %v2534
    %v2536 = vmul.f32 %v2535, %v440
    %v2537 = vadd.f32 %v2536, %v441
    %v2539 = vsel %vm622, %v2092, 0
    %2541 = vmatprep.subr.mxu0 0.0
    %2542 = vmatpush1.msra.mxu0 %v434
    %2543 = vmatprep.subr.mxu0 0.0
    %2544 = vmatpush1.msra.mxu0 %v435
    %2545 = vmatprep.subr.mxu0 0.0
    %2546 = vmatpush1.msra.mxu0 %v436
    %2547 = vmatprep.subr.mxu0 0.0
    %2548 = vmatpush1.msra.mxu0 %v437
    %2549 = vmatprep.subr.mxu0 0.0
    %2550 = vmatpush1.msra.mxu0 0.0
    %2551 = vmatprep.subr.mxu0 0.0
    %2552 = vmatpush1.msra.mxu0 0.0
    %2553 = vmatprep.subr.mxu0 0.0
    %2554 = vmatpush1.msra.mxu0 0.0
    %2555 = vmatprep.subr.mxu0 0.0
    %2556 = vmatpush1.msra.mxu0 0.0
    %2557 = vmatprep.subr.mxu0 0.0
    %2558 = vmatpush1.msra.mxu0 0.0
    %2559 = vmatprep.subr.mxu0 0.0
    %2560 = vmatpush1.msra.mxu0 0.0
    %2561 = vmatprep.subr.mxu0 0.0
    %2562 = vmatpush1.msra.mxu0 0.0
    %2563 = vmatprep.subr.mxu0 0.0
    %2564 = vmatpush1.msra.mxu0 0.0
    %2565 = vmatprep.subr.mxu0 0.0
    %2566 = vmatpush1.msra.mxu0 0.0
    %2567 = vmatprep.subr.mxu0 0.0
    %2568 = vmatpush1.msra.mxu0 0.0
    %2569 = vmatprep.subr.mxu0 0.0
    %2570 = vmatpush1.msra.mxu0 0.0
    %2571 = vmatprep.subr.mxu0 0.0
    %2572 = vmatpush1.msra.mxu0 0.0
    %2573 = vmatprep.subr.mxu0 0.0
    %2574 = vmatpush1.msra.mxu0 0.0
    %2575 = vmatprep.subr.mxu0 0.0
    %2576 = vmatpush1.msra.mxu0 0.0
    %2577 = vmatprep.subr.mxu0 0.0
    %2578 = vmatpush1.msra.mxu0 0.0
    %2579 = vmatprep.subr.mxu0 0.0
    %2580 = vmatpush1.msra.mxu0 0.0
    %2581 = vmatprep.subr.mxu0 0.0
    %2582 = vmatpush1.msra.mxu0 0.0
    %2583 = vmatprep.subr.mxu0 0.0
    %2584 = vmatpush1.msra.mxu0 0.0
    %2585 = vmatprep.subr.mxu0 0.0
    %2586 = vmatpush1.msra.mxu0 0.0
    %2587 = vmatprep.subr.mxu0 0.0
    %2588 = vmatpush1.msra.mxu0 0.0
    %2589 = vmatprep.subr.mxu0 0.0
    %2590 = vmatpush1.msra.mxu0 0.0
    %2591 = vmatprep.subr.mxu0 0.0
    %2592 = vmatpush1.msra.mxu0 0.0
    %2593 = vmatprep.subr.mxu0 0.0
    %2594 = vmatpush1.msra.mxu0 0.0
    %2595 = vmatprep.subr.mxu0 0.0
    %2596 = vmatpush1.msra.mxu0 0.0
    %2597 = vmatprep.subr.mxu0 0.0
    %2598 = vmatpush1.msra.mxu0 0.0
    %2599 = vmatprep.subr.mxu0 0.0
    %2600 = vmatpush1.msra.mxu0 0.0
    %2601 = vmatprep.subr.mxu0 0.0
    %2602 = vmatpush1.msra.mxu0 0.0
    %2603 = vmatprep.subr.mxu0 0.0
    %2604 = vmatpush1.msra.mxu0 0.0
    %2605 = vmatprep.mubr.f32.mxu0 0.0
    %2606 = vmatmul.mubr.f32.gmra.mrb[0].mxu0 %v2539
    %v2607 = vpop.f32.mrb[0].mxu0
    %v2608 = vadd.f32 0.0, %v2607
    %v2609 = vpop.f32.mrb[0].mxu0
    %2610 = vdwg.mxu0
    %2612 = vrot.lane.b32.xlu0 %v2608, 32
    %v2613 = vpop.permute.xlu0 %2612
    %v2615 = vadd.f32 %v2513, %v2613
    %v2616 = vadd.f32 %v2615, %v1007
    %vm2617 = vcmp.gt.f32.partialorder %v2616, 0.0
    %v2618 = vmin.f32 %v2616, 0.0
    %v2619 = vmul.f32 %v2618, 1.442695
    %v2620 = vpow.pop %v2619
    %v2621 = vsub.f32 %v2620, 1.0
    %v2622 = vsel %vm2617, %v2616, %v2621
    %2624 = vrot.lane.b32.xlu0 %v2622, 96
    %v2625 = vpop.permute.xlu0 %2624
    %v2627 = vsel %vm622, %v2625, 0.0
    %2628 = vadd.xlane.f32.xlu0 %v2627
    %v2629 = vpop.xlane.xlu0 %2628
    %v2630 = vmul.f32 %v2629, %v805
    %v2631 = vsub.f32 %v2622, %v2630
    %v2632 = vmul.f32 %v2631, %v2631
    %2634 = vrot.lane.b32.xlu0 %v2632, 96
    %v2635 = vpop.permute.xlu0 %2634
    %v2637 = vsel %vm622, %v2635, 0.0
    %2638 = vadd.xlane.f32.xlu0 %v2637
    %v2639 = vpop.xlane.xlu0 %2638
    %v2640 = vmul.f32 %v2639, %v805
    %v2641 = vadd.f32 %v2640, 1e-05
    %v2642 = vrsqrt.pop %v2641
    %v2643 = vmul.f32 %v2631, %v2642
    %v2644 = vmul.f32 %v2643, %v1039
    %v2645 = vadd.f32 %v2644, %v1044
    %v2647 = vsel %vm622, %v2537, 0
    %2649 = vmatprep.subr.mxu0 0.0
    %2650 = vmatpush1.msra.mxu0 %v444
    %2651 = vmatprep.subr.mxu0 0.0
    %2652 = vmatpush1.msra.mxu0 %v445
    %2653 = vmatprep.subr.mxu0 0.0
    %2654 = vmatpush1.msra.mxu0 %v446
    %2655 = vmatprep.subr.mxu0 0.0
    %2656 = vmatpush1.msra.mxu0 %v447
    %2657 = vmatprep.subr.mxu0 0.0
    %2658 = vmatpush1.msra.mxu0 0.0
    %2659 = vmatprep.subr.mxu0 0.0
    %2660 = vmatpush1.msra.mxu0 0.0
    %2661 = vmatprep.subr.mxu0 0.0
    %2662 = vmatpush1.msra.mxu0 0.0
    %2663 = vmatprep.subr.mxu0 0.0
    %2664 = vmatpush1.msra.mxu0 0.0
    %2665 = vmatprep.subr.mxu0 0.0
    %2666 = vmatpush1.msra.mxu0 0.0
    %2667 = vmatprep.subr.mxu0 0.0
    %2668 = vmatpush1.msra.mxu0 0.0
    %2669 = vmatprep.subr.mxu0 0.0
    %2670 = vmatpush1.msra.mxu0 0.0
    %2671 = vmatprep.subr.mxu0 0.0
    %2672 = vmatpush1.msra.mxu0 0.0
    %2673 = vmatprep.subr.mxu0 0.0
    %2674 = vmatpush1.msra.mxu0 0.0
    %2675 = vmatprep.subr.mxu0 0.0
    %2676 = vmatpush1.msra.mxu0 0.0
    %2677 = vmatprep.subr.mxu0 0.0
    %2678 = vmatpush1.msra.mxu0 0.0
    %2679 = vmatprep.subr.mxu0 0.0
    %2680 = vmatpush1.msra.mxu0 0.0
    %2681 = vmatprep.subr.mxu0 0.0
    %2682 = vmatpush1.msra.mxu0 0.0
    %2683 = vmatprep.subr.mxu0 0.0
    %2684 = vmatpush1.msra.mxu0 0.0
    %2685 = vmatprep.subr.mxu0 0.0
    %2686 = vmatpush1.msra.mxu0 0.0
    %2687 = vmatprep.subr.mxu0 0.0
    %2688 = vmatpush1.msra.mxu0 0.0
    %2689 = vmatprep.subr.mxu0 0.0
    %2690 = vmatpush1.msra.mxu0 0.0
    %2691 = vmatprep.subr.mxu0 0.0
    %2692 = vmatpush1.msra.mxu0 0.0
    %2693 = vmatprep.subr.mxu0 0.0
    %2694 = vmatpush1.msra.mxu0 0.0
    %2695 = vmatprep.subr.mxu0 0.0
    %2696 = vmatpush1.msra.mxu0 0.0
    %2697 = vmatprep.subr.mxu0 0.0
    %2698 = vmatpush1.msra.mxu0 0.0
    %2699 = vmatprep.subr.mxu0 0.0
    %2700 = vmatpush1.msra.mxu0 0.0
    %2701 = vmatprep.subr.mxu0 0.0
    %2702 = vmatpush1.msra.mxu0 0.0
    %2703 = vmatprep.subr.mxu0 0.0
    %2704 = vmatpush1.msra.mxu0 0.0
    %2705 = vmatprep.subr.mxu0 0.0
    %2706 = vmatpush1.msra.mxu0 0.0
    %2707 = vmatprep.subr.mxu0 0.0
    %2708 = vmatpush1.msra.mxu0 0.0
    %2709 = vmatprep.subr.mxu0 0.0
    %2710 = vmatpush1.msra.mxu0 0.0
    %2711 = vmatprep.subr.mxu0 0.0
    %2712 = vmatpush1.msra.mxu0 0.0
    %2713 = vmatprep.mubr.f32.mxu0 0.0
    %2714 = vmatmul.mubr.f32.gmra.mrb[0].mxu0 %v2647
    %v2715 = vpop.f32.mrb[0].mxu0
    %v2716 = vadd.f32 %v448, %v2715
    %v2717 = vpop.f32.mrb[0].mxu0
    %2718 = vdwg.mxu0
    %v2719 = vmax.f32 %v2716, 0.0
    %v2720 = vand.u32 2147483647, %v2716
    %v2721 = vsub.f32 0.0, %v2720
    %v2722 = vmul.f32 %v2721, 1.442695
    %v2723 = vpow.pop %v2722
    %v2724 = vadd.f32 %v2723, 1.0
    %v2725 = vlog2.pop %v2724
    %v2726 = vmul.f32 %v2725, 0.6931472
    %v2727 = vadd.f32 %v2719, %v2726
    %v2728 = vadd.f32 %v2727, 0.1
    %v2729 = vsel %vm460, %v2716, %v2728
    %2731 = vrot.lane.b32.xlu0 %v2094, 16
    %v2732 = vpop.permute.xlu0 %2731
    %v2734 = vmul.f32 %v2728, %v2732
    %2736 = vrot.lane.b32.xlu0 %v2734, 112
    %v2737 = vpop.permute.xlu0 %2736
    %v2739 = vadd.f32 %v2716, %v2737
    %v2740 = vsel %vm467, %v2739, 0.0
    %2741 = vadd.xlane.f32.xlu0 %v2740
    %v2742 = vpop.xlane.xlu0 %2741
    %v2743 = vmul.f32 %v2742, %v1144
    %v2744 = vsub.f32 %v2739, %v2743
    %v2745 = vmul.f32 %v2744, %v2744
    %v2746 = vsel %vm467, %v2745, 0.0
    %2747 = vadd.xlane.f32.xlu0 %v2746
    %v2748 = vpop.xlane.xlu0 %2747
    %v2749 = vmul.f32 %v2748, %v1144
    %v2750 = vadd.f32 %v2749, 1e-05
    %v2751 = vrsqrt.pop %v2750
    %v2752 = vmul.f32 %v2744, %v2751
    %v2753 = vmul.f32 %v2752, %v454
    %v2754 = vadd.f32 %v2753, %v455
    %2756 = vrot.lane.b32.xlu0 %v2645, 96
    %v2757 = vpop.permute.xlu0 %2756
    %v2758 = vsel %vm622, %v2757, 0
    %2760 = vmatprep.subr.mxu0 0.0
    %2761 = vmatpush1.msra.mxu0 %v449
    %2762 = vmatprep.subr.mxu0 0.0
    %2763 = vmatpush1.msra.mxu0 %v450
    %2764 = vmatprep.subr.mxu0 0.0
    %2765 = vmatpush1.msra.mxu0 %v451
    %2766 = vmatprep.subr.mxu0 0.0
    %2767 = vmatpush1.msra.mxu0 %v452
    %2768 = vmatprep.subr.mxu0 0.0
    %2769 = vmatpush1.msra.mxu0 0.0
    %2770 = vmatprep.subr.mxu0 0.0
    %2771 = vmatpush1.msra.mxu0 0.0
    %2772 = vmatprep.subr.mxu0 0.0
    %2773 = vmatpush1.msra.mxu0 0.0
    %2774 = vmatprep.subr.mxu0 0.0
    %2775 = vmatpush1.msra.mxu0 0.0
    %2776 = vmatprep.subr.mxu0 0.0
    %2777 = vmatpush1.msra.mxu0 0.0
    %2778 = vmatprep.subr.mxu0 0.0
    %2779 = vmatpush1.msra.mxu0 0.0
    %2780 = vmatprep.subr.mxu0 0.0
    %2781 = vmatpush1.msra.mxu0 0.0
    %2782 = vmatprep.subr.mxu0 0.0
    %2783 = vmatpush1.msra.mxu0 0.0
    %2784 = vmatprep.subr.mxu0 0.0
    %2785 = vmatpush1.msra.mxu0 0.0
    %2786 = vmatprep.subr.mxu0 0.0
    %2787 = vmatpush1.msra.mxu0 0.0
    %2788 = vmatprep.subr.mxu0 0.0
    %2789 = vmatpush1.msra.mxu0 0.0
    %2790 = vmatprep.subr.mxu0 0.0
    %2791 = vmatpush1.msra.mxu0 0.0
    %2792 = vmatprep.subr.mxu0 0.0
    %2793 = vmatpush1.msra.mxu0 0.0
    %2794 = vmatprep.subr.mxu0 0.0
    %2795 = vmatpush1.msra.mxu0 0.0
    %2796 = vmatprep.subr.mxu0 0.0
    %2797 = vmatpush1.msra.mxu0 0.0
    %2798 = vmatprep.subr.mxu0 0.0
    %2799 = vmatpush1.msra.mxu0 0.0
    %2800 = vmatprep.subr.mxu0 0.0
    %2801 = vmatpush1.msra.mxu0 0.0
    %2802 = vmatprep.subr.mxu0 0.0
    %2803 = vmatpush1.msra.mxu0 0.0
    %2804 = vmatprep.subr.mxu0 0.0
    %2805 = vmatpush1.msra.mxu0 0.0
    %2806 = vmatprep.subr.mxu0 0.0
    %2807 = vmatpush1.msra.mxu0 0.0
    %2808 = vmatprep.subr.mxu0 0.0
    %2809 = vmatpush1.msra.mxu0 0.0
    %2810 = vmatprep.subr.mxu0 0.0
    %2811 = vmatpush1.msra.mxu0 0.0
    %2812 = vmatprep.subr.mxu0 0.0
    %2813 = vmatpush1.msra.mxu0 0.0
    %2814 = vmatprep.subr.mxu0 0.0
    %2815 = vmatpush1.msra.mxu0 0.0
    %2816 = vmatprep.subr.mxu0 0.0
    %2817 = vmatpush1.msra.mxu0 0.0
    %2818 = vmatprep.subr.mxu0 0.0
    %2819 = vmatpush1.msra.mxu0 0.0
    %2820 = vmatprep.subr.mxu0 0.0
    %2821 = vmatpush1.msra.mxu0 0.0
    %2822 = vmatprep.subr.mxu0 0.0
    %2823 = vmatpush1.msra.mxu0 0.0
    %2824 = vmatprep.mubr.f32.mxu0 0.0
    %2825 = vmatmul.mubr.f32.gmra.mrb[0].mxu0 %v2758
    %v2826 = vpop.f32.mrb[0].mxu0
    %v2827 = vadd.f32 %v453, %v2826
    %v2828 = vpop.f32.mrb[0].mxu0
    %2829 = vdwg.mxu0
    %v2830 = vmax.f32 %v2827, 0.0
    %v2831 = vand.u32 2147483647, %v2827
    %v2832 = vsub.f32 0.0, %v2831
    %v2833 = vmul.f32 %v2832, 1.442695
    %v2834 = vpow.pop %v2833
    %v2835 = vadd.f32 %v2834, 1.0
    %v2836 = vlog2.pop %v2835
    %v2837 = vmul.f32 %v2836, 0.6931472
    %v2838 = vadd.f32 %v2830, %v2837
    %v2839 = vadd.f32 %v2838, 0.1
    %v2840 = vsel %vm460, %v2827, %v2839
    %2842 = vrot.lane.b32.xlu0 %v2096, 16
    %v2843 = vpop.permute.xlu0 %2842
    %v2845 = vmul.f32 %v2839, %v2843
    %2847 = vrot.lane.b32.xlu0 %v2845, 112
    %v2848 = vpop.permute.xlu0 %2847
    %v2850 = vadd.f32 %v2827, %v2848
    %v2851 = vsel %vm467, %v2850, 0.0
    %2852 = vadd.xlane.f32.xlu0 %v2851
    %v2853 = vpop.xlane.xlu0 %2852
    %v2854 = vmul.f32 %v2853, %v1144
    %v2855 = vsub.f32 %v2850, %v2854
    %v2856 = vmul.f32 %v2855, %v2855
    %v2857 = vsel %vm467, %v2856, 0.0
    %2858 = vadd.xlane.f32.xlu0 %v2857
    %v2859 = vpop.xlane.xlu0 %2858
    %v2860 = vmul.f32 %v2859, %v1144
    %v2861 = vadd.f32 %v2860, 1e-05
    %v2862 = vrsqrt.pop %v2861
    %v2863 = vmul.f32 %v2855, %v2862
    %v2864 = vmul.f32 %v2863, %v456
    %v2865 = vadd.f32 %v2864, %v457
    %2867 = vrot.lane.b32.xlu0 %v2754, 32
    %v2868 = vpop.permute.xlu0 %2867
    %2871 = vrot.lane.b32.xlu0 %v2840, 48
    %v2872 = vpop.permute.xlu0 %2871
    %2875 = vrot.lane.b32.xlu0 %v2865, 80
    %v2876 = vpop.permute.xlu0 %2875
    %2878 = vrot.lane.b32.xlu0 %v2440, 64
    %v2879 = vpop.permute.xlu0 %2878
    %v2881 = vsel %vm622, %v2729, %v2868
    %v2882 = vsel %vm1284, %v2881, %v2872
    %v2883 = vsel %vm1286, %v2882, %v2876
    %v2884 = vsel %vm1288, %v2883, %v2879
    %s2885 = scalar_lea.vmem [#allocation38], 16
    %2886 = vst [vmem:[%s2885] sm:$0xff] %v2884
    %s2887 = scalar_lea.vmem [#allocation2], 24
    %v2888 = vld [vmem:[%s2887] sm:$0xff]
    %s2889 = scalar_lea.vmem [#allocation5], 24
    %v2890 = vld [vmem:[%s2889] sm:$0xff]
    %s2891 = scalar_lea.vmem [#allocation7], 24
    %v2892 = vld [vmem:[%s2891] sm:$0xff]
    %s2893 = scalar_lea.vmem [#allocation8], 24
    %v2894 = vld [vmem:[%s2893] sm:$0xff]
    %v2895 = vsel %vm467, %v2865, 0
    %2897 = vmatprep.subr.mxu0 0.0
    %2898 = vmatpush1.msra.mxu0 %v415
    %2899 = vmatprep.subr.mxu0 0.0
    %2900 = vmatpush1.msra.mxu0 %v416
    %2901 = vmatprep.subr.mxu0 0.0
    %2902 = vmatpush1.msra.mxu0 0.0
    %2903 = vmatprep.subr.mxu0 0.0
    %2904 = vmatpush1.msra.mxu0 0.0
    %2905 = vmatprep.subr.mxu0 0.0
    %2906 = vmatpush1.msra.mxu0 0.0
    %2907 = vmatprep.subr.mxu0 0.0
    %2908 = vmatpush1.msra.mxu0 0.0
    %2909 = vmatprep.subr.mxu0 0.0
    %2910 = vmatpush1.msra.mxu0 0.0
    %2911 = vmatprep.subr.mxu0 0.0
    %2912 = vmatpush1.msra.mxu0 0.0
    %2913 = vmatprep.subr.mxu0 0.0
    %2914 = vmatpush1.msra.mxu0 0.0
    %2915 = vmatprep.subr.mxu0 0.0
    %2916 = vmatpush1.msra.mxu0 0.0
    %2917 = vmatprep.subr.mxu0 0.0
    %2918 = vmatpush1.msra.mxu0 0.0
    %2919 = vmatprep.subr.mxu0 0.0
    %2920 = vmatpush1.msra.mxu0 0.0
    %2921 = vmatprep.subr.mxu0 0.0
    %2922 = vmatpush1.msra.mxu0 0.0
    %2923 = vmatprep.subr.mxu0 0.0
    %2924 = vmatpush1.msra.mxu0 0.0
    %2925 = vmatprep.subr.mxu0 0.0
    %2926 = vmatpush1.msra.mxu0 0.0
    %2927 = vmatprep.subr.mxu0 0.0
    %2928 = vmatpush1.msra.mxu0 0.0
    %2929 = vmatprep.subr.mxu0 0.0
    %2930 = vmatpush1.msra.mxu0 0.0
    %2931 = vmatprep.subr.mxu0 0.0
    %2932 = vmatpush1.msra.mxu0 0.0
    %2933 = vmatprep.subr.mxu0 0.0
    %2934 = vmatpush1.msra.mxu0 0.0
    %2935 = vmatprep.subr.mxu0 0.0
    %2936 = vmatpush1.msra.mxu0 0.0
    %2937 = vmatprep.subr.mxu0 0.0
    %2938 = vmatpush1.msra.mxu0 0.0
    %2939 = vmatprep.subr.mxu0 0.0
    %2940 = vmatpush1.msra.mxu0 0.0
    %2941 = vmatprep.subr.mxu0 0.0
    %2942 = vmatpush1.msra.mxu0 0.0
    %2943 = vmatprep.subr.mxu0 0.0
    %2944 = vmatpush1.msra.mxu0 0.0
    %2945 = vmatprep.subr.mxu0 0.0
    %2946 = vmatpush1.msra.mxu0 0.0
    %2947 = vmatprep.subr.mxu0 0.0
    %2948 = vmatpush1.msra.mxu0 0.0
    %2949 = vmatprep.subr.mxu0 0.0
    %2950 = vmatpush1.msra.mxu0 0.0
    %2951 = vmatprep.subr.mxu0 0.0
    %2952 = vmatpush1.msra.mxu0 0.0
    %2953 = vmatprep.subr.mxu0 0.0
    %2954 = vmatpush1.msra.mxu0 0.0
    %2955 = vmatprep.subr.mxu0 0.0
    %2956 = vmatpush1.msra.mxu0 0.0
    %2957 = vmatprep.subr.mxu0 0.0
    %2958 = vmatpush1.msra.mxu0 0.0
    %2959 = vmatprep.subr.mxu0 0.0
    %2960 = vmatpush1.msra.mxu0 0.0
    %2961 = vmatprep.mubr.f32.mxu0 0.0
    %2962 = vmatmul.mubr.f32.gmra.mrb[0].mxu0 %v2895
    %v2963 = vpop.f32.mrb[0].mxu0
    %v2964 = vadd.f32 0.0, %v2963
    %v2965 = vpop.f32.mrb[0].mxu0
    %2966 = vdwg.mxu0
    %v2968 = vsel %vm541, %v2888, 0
    %2970 = vmatprep.subr.mxu0 0.0
    %2971 = vmatpush1.msra.mxu0 %v414
    %2972 = vmatprep.subr.mxu0 0.0
    %2973 = vmatpush1.msra.mxu0 0.0
    %2974 = vmatprep.subr.mxu0 0.0
    %2975 = vmatpush1.msra.mxu0 0.0
    %2976 = vmatprep.subr.mxu0 0.0
    %2977 = vmatpush1.msra.mxu0 0.0
    %2978 = vmatprep.subr.mxu0 0.0
    %2979 = vmatpush1.msra.mxu0 0.0
    %2980 = vmatprep.subr.mxu0 0.0
    %2981 = vmatpush1.msra.mxu0 0.0
    %2982 = vmatprep.subr.mxu0 0.0
    %2983 = vmatpush1.msra.mxu0 0.0
    %2984 = vmatprep.subr.mxu0 0.0
    %2985 = vmatpush1.msra.mxu0 0.0
    %2986 = vmatprep.subr.mxu0 0.0
    %2987 = vmatpush1.msra.mxu0 0.0
    %2988 = vmatprep.subr.mxu0 0.0
    %2989 = vmatpush1.msra.mxu0 0.0
    %2990 = vmatprep.subr.mxu0 0.0
    %2991 = vmatpush1.msra.mxu0 0.0
    %2992 = vmatprep.subr.mxu0 0.0
    %2993 = vmatpush1.msra.mxu0 0.0
    %2994 = vmatprep.subr.mxu0 0.0
    %2995 = vmatpush1.msra.mxu0 0.0
    %2996 = vmatprep.subr.mxu0 0.0
    %2997 = vmatpush1.msra.mxu0 0.0
    %2998 = vmatprep.subr.mxu0 0.0
    %2999 = vmatpush1.msra.mxu0 0.0
    %3000 = vmatprep.subr.mxu0 0.0
    %3001 = vmatpush1.msra.mxu0 0.0
    %3002 = vmatprep.subr.mxu0 0.0
    %3003 = vmatpush1.msra.mxu0 0.0
    %3004 = vmatprep.subr.mxu0 0.0
    %3005 = vmatpush1.msra.mxu0 0.0
    %3006 = vmatprep.subr.mxu0 0.0
    %3007 = vmatpush1.msra.mxu0 0.0
    %3008 = vmatprep.subr.mxu0 0.0
    %3009 = vmatpush1.msra.mxu0 0.0
    %3010 = vmatprep.subr.mxu0 0.0
    %3011 = vmatpush1.msra.mxu0 0.0
    %3012 = vmatprep.subr.mxu0 0.0
    %3013 = vmatpush1.msra.mxu0 0.0
    %3014 = vmatprep.subr.mxu0 0.0
    %3015 = vmatpush1.msra.mxu0 0.0
    %3016 = vmatprep.subr.mxu0 0.0
    %3017 = vmatpush1.msra.mxu0 0.0
    %3018 = vmatprep.subr.mxu0 0.0
    %3019 = vmatpush1.msra.mxu0 0.0
    %3020 = vmatprep.subr.mxu0 0.0
    %3021 = vmatpush1.msra.mxu0 0.0
    %3022 = vmatprep.subr.mxu0 0.0
    %3023 = vmatpush1.msra.mxu0 0.0
    %3024 = vmatprep.subr.mxu0 0.0
    %3025 = vmatpush1.msra.mxu0 0.0
    %3026 = vmatprep.subr.mxu0 0.0
    %3027 = vmatpush1.msra.mxu0 0.0
    %3028 = vmatprep.subr.mxu0 0.0
    %3029 = vmatpush1.msra.mxu0 0.0
    %3030 = vmatprep.subr.mxu0 0.0
    %3031 = vmatpush1.msra.mxu0 0.0
    %3032 = vmatprep.subr.mxu0 0.0
    %3033 = vmatpush1.msra.mxu0 0.0
    %3034 = vmatprep.mubr.f32.mxu0 0.0
    %3035 = vmatmul.mubr.f32.gmra.mrb[0].mxu0 %v2968
    %v3036 = vpop.f32.mrb[0].mxu0
    %v3037 = vadd.f32 %v2964, %v3036
    %v3038 = vpop.f32.mrb[0].mxu0
    %3039 = vdwg.mxu0
    %v3040 = vadd.f32 %v3037, %v417
    %vm3041 = vcmp.gt.f32.partialorder %v3040, 0.0
    %v3042 = vmin.f32 %v3040, 0.0
    %v3043 = vmul.f32 %v3042, 1.442695
    %v3044 = vpow.pop %v3043
    %v3045 = vsub.f32 %v3044, 1.0
    %v3046 = vsel %vm3041, %v3040, %v3045
    %v3048 = vsel %vm622, %v3046, 0
    %3050 = vmatprep.subr.mxu0 0.0
    %3051 = vmatpush1.msra.mxu0 %v418
    %3052 = vmatprep.subr.mxu0 0.0
    %3053 = vmatpush1.msra.mxu0 %v419
    %3054 = vmatprep.subr.mxu0 0.0
    %3055 = vmatpush1.msra.mxu0 %v420
    %3056 = vmatprep.subr.mxu0 0.0
    %3057 = vmatpush1.msra.mxu0 %v421
    %3058 = vmatprep.subr.mxu0 0.0
    %3059 = vmatpush1.msra.mxu0 0.0
    %3060 = vmatprep.subr.mxu0 0.0
    %3061 = vmatpush1.msra.mxu0 0.0
    %3062 = vmatprep.subr.mxu0 0.0
    %3063 = vmatpush1.msra.mxu0 0.0
    %3064 = vmatprep.subr.mxu0 0.0
    %3065 = vmatpush1.msra.mxu0 0.0
    %3066 = vmatprep.subr.mxu0 0.0
    %3067 = vmatpush1.msra.mxu0 0.0
    %3068 = vmatprep.subr.mxu0 0.0
    %3069 = vmatpush1.msra.mxu0 0.0
    %3070 = vmatprep.subr.mxu0 0.0
    %3071 = vmatpush1.msra.mxu0 0.0
    %3072 = vmatprep.subr.mxu0 0.0
    %3073 = vmatpush1.msra.mxu0 0.0
    %3074 = vmatprep.subr.mxu0 0.0
    %3075 = vmatpush1.msra.mxu0 0.0
    %3076 = vmatprep.subr.mxu0 0.0
    %3077 = vmatpush1.msra.mxu0 0.0
    %3078 = vmatprep.subr.mxu0 0.0
    %3079 = vmatpush1.msra.mxu0 0.0
    %3080 = vmatprep.subr.mxu0 0.0
    %3081 = vmatpush1.msra.mxu0 0.0
    %3082 = vmatprep.subr.mxu0 0.0
    %3083 = vmatpush1.msra.mxu0 0.0
    %3084 = vmatprep.subr.mxu0 0.0
    %3085 = vmatpush1.msra.mxu0 0.0
    %3086 = vmatprep.subr.mxu0 0.0
    %3087 = vmatpush1.msra.mxu0 0.0
    %3088 = vmatprep.subr.mxu0 0.0
    %3089 = vmatpush1.msra.mxu0 0.0
    %3090 = vmatprep.subr.mxu0 0.0
    %3091 = vmatpush1.msra.mxu0 0.0
    %3092 = vmatprep.subr.mxu0 0.0
    %3093 = vmatpush1.msra.mxu0 0.0
    %3094 = vmatprep.subr.mxu0 0.0
    %3095 = vmatpush1.msra.mxu0 0.0
    %3096 = vmatprep.subr.mxu0 0.0
    %3097 = vmatpush1.msra.mxu0 0.0
    %3098 = vmatprep.subr.mxu0 0.0
    %3099 = vmatpush1.msra.mxu0 0.0
    %3100 = vmatprep.subr.mxu0 0.0
    %3101 = vmatpush1.msra.mxu0 0.0
    %3102 = vmatprep.subr.mxu0 0.0
    %3103 = vmatpush1.msra.mxu0 0.0
    %3104 = vmatprep.subr.mxu0 0.0
    %3105 = vmatpush1.msra.mxu0 0.0
    %3106 = vmatprep.subr.mxu0 0.0
    %3107 = vmatpush1.msra.mxu0 0.0
    %3108 = vmatprep.subr.mxu0 0.0
    %3109 = vmatpush1.msra.mxu0 0.0
    %3110 = vmatprep.subr.mxu0 0.0
    %3111 = vmatpush1.msra.mxu0 0.0
    %3112 = vmatprep.subr.mxu0 0.0
    %3113 = vmatpush1.msra.mxu0 0.0
    %3114 = vmatprep.mubr.f32.mxu0 0.0
    %3115 = vmatmul.mubr.f32.gmra.mrb[0].mxu0 %v3048
    %v3116 = vpop.f32.mrb[0].mxu0
    %v3117 = vadd.f32 %v426, %v3116
    %v3118 = vpop.f32.mrb[0].mxu0
    %3119 = vdwg.mxu0
    %3120 = vmatprep.subr.mxu0 0.0
    %3121 = vmatpush1.msra.mxu0 %v422
    %3122 = vmatprep.subr.mxu0 0.0
    %3123 = vmatpush1.msra.mxu0 %v423
    %3124 = vmatprep.subr.mxu0 0.0
    %3125 = vmatpush1.msra.mxu0 %v424
    %3126 = vmatprep.subr.mxu0 0.0
    %3127 = vmatpush1.msra.mxu0 %v425
    %3128 = vmatprep.subr.mxu0 0.0
    %3129 = vmatpush1.msra.mxu0 0.0
    %3130 = vmatprep.subr.mxu0 0.0
    %3131 = vmatpush1.msra.mxu0 0.0
    %3132 = vmatprep.subr.mxu0 0.0
    %3133 = vmatpush1.msra.mxu0 0.0
    %3134 = vmatprep.subr.mxu0 0.0
    %3135 = vmatpush1.msra.mxu0 0.0
    %3136 = vmatprep.subr.mxu0 0.0
    %3137 = vmatpush1.msra.mxu0 0.0
    %3138 = vmatprep.subr.mxu0 0.0
    %3139 = vmatpush1.msra.mxu0 0.0
    %3140 = vmatprep.subr.mxu0 0.0
    %3141 = vmatpush1.msra.mxu0 0.0
    %3142 = vmatprep.subr.mxu0 0.0
    %3143 = vmatpush1.msra.mxu0 0.0
    %3144 = vmatprep.subr.mxu0 0.0
    %3145 = vmatpush1.msra.mxu0 0.0
    %3146 = vmatprep.subr.mxu0 0.0
    %3147 = vmatpush1.msra.mxu0 0.0
    %3148 = vmatprep.subr.mxu0 0.0
    %3149 = vmatpush1.msra.mxu0 0.0
    %3150 = vmatprep.subr.mxu0 0.0
    %3151 = vmatpush1.msra.mxu0 0.0
    %3152 = vmatprep.subr.mxu0 0.0
    %3153 = vmatpush1.msra.mxu0 0.0
    %3154 = vmatprep.subr.mxu0 0.0
    %3155 = vmatpush1.msra.mxu0 0.0
    %3156 = vmatprep.subr.mxu0 0.0
    %3157 = vmatpush1.msra.mxu0 0.0
    %3158 = vmatprep.subr.mxu0 0.0
    %3159 = vmatpush1.msra.mxu0 0.0
    %3160 = vmatprep.subr.mxu0 0.0
    %3161 = vmatpush1.msra.mxu0 0.0
    %3162 = vmatprep.subr.mxu0 0.0
    %3163 = vmatpush1.msra.mxu0 0.0
    %3164 = vmatprep.subr.mxu0 0.0
    %3165 = vmatpush1.msra.mxu0 0.0
    %3166 = vmatprep.subr.mxu0 0.0
    %3167 = vmatpush1.msra.mxu0 0.0
    %3168 = vmatprep.subr.mxu0 0.0
    %3169 = vmatpush1.msra.mxu0 0.0
    %3170 = vmatprep.subr.mxu0 0.0
    %3171 = vmatpush1.msra.mxu0 0.0
    %3172 = vmatprep.subr.mxu0 0.0
    %3173 = vmatpush1.msra.mxu0 0.0
    %3174 = vmatprep.subr.mxu0 0.0
    %3175 = vmatpush1.msra.mxu0 0.0
    %3176 = vmatprep.subr.mxu0 0.0
    %3177 = vmatpush1.msra.mxu0 0.0
    %3178 = vmatprep.subr.mxu0 0.0
    %3179 = vmatpush1.msra.mxu0 0.0
    %3180 = vmatprep.subr.mxu0 0.0
    %3181 = vmatpush1.msra.mxu0 0.0
    %3182 = vmatprep.subr.mxu0 0.0
    %3183 = vmatpush1.msra.mxu0 0.0
    %3184 = vmatprep.mubr.f32.mxu0 0.0
    %3185 = vmatmul.mubr.f32.gmra.mrb[0].mxu0 %v2444
    %v3186 = vpop.f32.mrb[0].mxu0
    %v3187 = vadd.f32 %v427, %v3186
    %v3188 = vpop.f32.mrb[0].mxu0
    %3189 = vdwg.mxu0
    %v3190 = vadd.f32 %v3117, %v3187
    %v3191 = vsub.f32 0.0, %v3190
    %v3192 = vmul.f32 %v3191, 1.442695
    %v3193 = vpow.pop %v3192
    %v3194 = vadd.f32 %v3193, 1.0
    %v3195 = vrcp.pop %v3194
    %v3196 = vmul.f32 1.0, %v3195
    %3198 = vrot.lane.b32.xlu0 %v3187, 64
    %v3199 = vpop.permute.xlu0 %3198
    %v3201 = vmul.f32 %v3196, %v3199
    %3203 = vrot.lane.b32.xlu0 %v3201, 64
    %v3204 = vpop.permute.xlu0 %3203
    %v3206 = vadd.f32 %v3117, %v3204
    %v3207 = vtanh.pop %v3206
    %v3208 = vsub.f32 1.0, %v3196
    %3210 = vrot.lane.b32.xlu0 %v3207, 96
    %v3211 = vpop.permute.xlu0 %3210
    %v3213 = vmul.f32 %v3208, %v3211
    %v3214 = vmul.f32 %v3196, %v2440
    %v3215 = vadd.f32 %v3213, %v3214
    %3217 = vrot.lane.b32.xlu0 %v3215, 96
    %v3218 = vpop.permute.xlu0 %3217
    %v3220 = vsel %vm622, %v3218, 0.0
    %3221 = vadd.xlane.f32.xlu0 %v3220
    %v3222 = vpop.xlane.xlu0 %3221
    %v3223 = vmul.f32 %v3222, %v805
    %v3224 = vsub.f32 %v3215, %v3223
    %v3225 = vmul.f32 %v3224, %v3224
    %3227 = vrot.lane.b32.xlu0 %v3225, 96
    %v3228 = vpop.permute.xlu0 %3227
    %v3230 = vsel %vm622, %v3228, 0.0
    %3231 = vadd.xlane.f32.xlu0 %v3230
    %v3232 = vpop.xlane.xlu0 %3231
    %v3233 = vmul.f32 %v3232, %v805
    %v3234 = vadd.f32 %v3233, 1e-05
    %v3235 = vrsqrt.pop %v3234
    %v3236 = vmul.f32 %v3224, %v3235
    %v3237 = vmul.f32 %v3236, %v822
    %v3238 = vadd.f32 %v3237, %v827
    %3240 = vrot.lane.b32.xlu0 %v3238, 96
    %v3241 = vpop.permute.xlu0 %3240
    %v3242 = vsel %vm622, %v3241, 0
    %3244 = vmatprep.subr.mxu0 0.0
    %3245 = vmatpush1.msra.mxu0 %v430
    %3246 = vmatprep.subr.mxu0 0.0
    %3247 = vmatpush1.msra.mxu0 %v431
    %3248 = vmatprep.subr.mxu0 0.0
    %3249 = vmatpush1.msra.mxu0 %v432
    %3250 = vmatprep.subr.mxu0 0.0
    %3251 = vmatpush1.msra.mxu0 %v433
    %3252 = vmatprep.subr.mxu0 0.0
    %3253 = vmatpush1.msra.mxu0 0.0
    %3254 = vmatprep.subr.mxu0 0.0
    %3255 = vmatpush1.msra.mxu0 0.0
    %3256 = vmatprep.subr.mxu0 0.0
    %3257 = vmatpush1.msra.mxu0 0.0
    %3258 = vmatprep.subr.mxu0 0.0
    %3259 = vmatpush1.msra.mxu0 0.0
    %3260 = vmatprep.subr.mxu0 0.0
    %3261 = vmatpush1.msra.mxu0 0.0
    %3262 = vmatprep.subr.mxu0 0.0
    %3263 = vmatpush1.msra.mxu0 0.0
    %3264 = vmatprep.subr.mxu0 0.0
    %3265 = vmatpush1.msra.mxu0 0.0
    %3266 = vmatprep.subr.mxu0 0.0
    %3267 = vmatpush1.msra.mxu0 0.0
    %3268 = vmatprep.subr.mxu0 0.0
    %3269 = vmatpush1.msra.mxu0 0.0
    %3270 = vmatprep.subr.mxu0 0.0
    %3271 = vmatpush1.msra.mxu0 0.0
    %3272 = vmatprep.subr.mxu0 0.0
    %3273 = vmatpush1.msra.mxu0 0.0
    %3274 = vmatprep.subr.mxu0 0.0
    %3275 = vmatpush1.msra.mxu0 0.0
    %3276 = vmatprep.subr.mxu0 0.0
    %3277 = vmatpush1.msra.mxu0 0.0
    %3278 = vmatprep.subr.mxu0 0.0
    %3279 = vmatpush1.msra.mxu0 0.0
    %3280 = vmatprep.subr.mxu0 0.0
    %3281 = vmatpush1.msra.mxu0 0.0
    %3282 = vmatprep.subr.mxu0 0.0
    %3283 = vmatpush1.msra.mxu0 0.0
    %3284 = vmatprep.subr.mxu0 0.0
    %3285 = vmatpush1.msra.mxu0 0.0
    %3286 = vmatprep.subr.mxu0 0.0
    %3287 = vmatpush1.msra.mxu0 0.0
    %3288 = vmatprep.subr.mxu0 0.0
    %3289 = vmatpush1.msra.mxu0 0.0
    %3290 = vmatprep.subr.mxu0 0.0
    %3291 = vmatpush1.msra.mxu0 0.0
    %3292 = vmatprep.subr.mxu0 0.0
    %3293 = vmatpush1.msra.mxu0 0.0
    %3294 = vmatprep.subr.mxu0 0.0
    %3295 = vmatpush1.msra.mxu0 0.0
    %3296 = vmatprep.subr.mxu0 0.0
    %3297 = vmatpush1.msra.mxu0 0.0
    %3298 = vmatprep.subr.mxu0 0.0
    %3299 = vmatpush1.msra.mxu0 0.0
    %3300 = vmatprep.subr.mxu0 0.0
    %3301 = vmatpush1.msra.mxu0 0.0
    %3302 = vmatprep.subr.mxu0 0.0
    %3303 = vmatpush1.msra.mxu0 0.0
    %3304 = vmatprep.subr.mxu0 0.0
    %3305 = vmatpush1.msra.mxu0 0.0
    %3306 = vmatprep.subr.mxu0 0.0
    %3307 = vmatpush1.msra.mxu0 0.0
    %3308 = vmatprep.mubr.f32.mxu0 0.0
    %3309 = vmatmul.mubr.f32.gmra.mrb[0].mxu0 %v3242
    %v3310 = vpop.f32.mrb[0].mxu0
    %v3311 = vadd.f32 0.0, %v3310
    %v3312 = vpop.f32.mrb[0].mxu0
    %3313 = vdwg.mxu0
    %v3314 = vadd.f32 %v3311, %v438
    %vm3315 = vcmp.gt.f32.partialorder %v3314, 0.0
    %v3316 = vmin.f32 %v3314, 0.0
    %v3317 = vmul.f32 %v3316, 1.442695
    %v3318 = vpow.pop %v3317
    %v3319 = vsub.f32 %v3318, 1.0
    %v3320 = vsel %vm3315, %v3314, %v3319
    %v3321 = vsel %vm622, %v3320, 0.0
    %3322 = vadd.xlane.f32.xlu0 %v3321
    %v3323 = vpop.xlane.xlu0 %3322
    %v3324 = vmul.f32 %v3323, %v805
    %v3325 = vsub.f32 %v3320, %v3324
    %v3326 = vmul.f32 %v3325, %v3325
    %v3327 = vsel %vm622, %v3326, 0.0
    %3328 = vadd.xlane.f32.xlu0 %v3327
    %v3329 = vpop.xlane.xlu0 %3328
    %v3330 = vmul.f32 %v3329, %v805
    %v3331 = vadd.f32 %v3330, 1e-05
    %v3332 = vrsqrt.pop %v3331
    %v3333 = vmul.f32 %v3325, %v3332
    %v3334 = vmul.f32 %v3333, %v440
    %v3335 = vadd.f32 %v3334, %v441
    %v3337 = vsel %vm622, %v2890, 0
    %3339 = vmatprep.subr.mxu0 0.0
    %3340 = vmatpush1.msra.mxu0 %v434
    %3341 = vmatprep.subr.mxu0 0.0
    %3342 = vmatpush1.msra.mxu0 %v435
    %3343 = vmatprep.subr.mxu0 0.0
    %3344 = vmatpush1.msra.mxu0 %v436
    %3345 = vmatprep.subr.mxu0 0.0
    %3346 = vmatpush1.msra.mxu0 %v437
    %3347 = vmatprep.subr.mxu0 0.0
    %3348 = vmatpush1.msra.mxu0 0.0
    %3349 = vmatprep.subr.mxu0 0.0
    %3350 = vmatpush1.msra.mxu0 0.0
    %3351 = vmatprep.subr.mxu0 0.0
    %3352 = vmatpush1.msra.mxu0 0.0
    %3353 = vmatprep.subr.mxu0 0.0
    %3354 = vmatpush1.msra.mxu0 0.0
    %3355 = vmatprep.subr.mxu0 0.0
    %3356 = vmatpush1.msra.mxu0 0.0
    %3357 = vmatprep.subr.mxu0 0.0
    %3358 = vmatpush1.msra.mxu0 0.0
    %3359 = vmatprep.subr.mxu0 0.0
    %3360 = vmatpush1.msra.mxu0 0.0
    %3361 = vmatprep.subr.mxu0 0.0
    %3362 = vmatpush1.msra.mxu0 0.0
    %3363 = vmatprep.subr.mxu0 0.0
    %3364 = vmatpush1.msra.mxu0 0.0
    %3365 = vmatprep.subr.mxu0 0.0
    %3366 = vmatpush1.msra.mxu0 0.0
    %3367 = vmatprep.subr.mxu0 0.0
    %3368 = vmatpush1.msra.mxu0 0.0
    %3369 = vmatprep.subr.mxu0 0.0
    %3370 = vmatpush1.msra.mxu0 0.0
    %3371 = vmatprep.subr.mxu0 0.0
    %3372 = vmatpush1.msra.mxu0 0.0
    %3373 = vmatprep.subr.mxu0 0.0
    %3374 = vmatpush1.msra.mxu0 0.0
    %3375 = vmatprep.subr.mxu0 0.0
    %3376 = vmatpush1.msra.mxu0 0.0
    %3377 = vmatprep.subr.mxu0 0.0
    %3378 = vmatpush1.msra.mxu0 0.0
    %3379 = vmatprep.subr.mxu0 0.0
    %3380 = vmatpush1.msra.mxu0 0.0
    %3381 = vmatprep.subr.mxu0 0.0
    %3382 = vmatpush1.msra.mxu0 0.0
    %3383 = vmatprep.subr.mxu0 0.0
    %3384 = vmatpush1.msra.mxu0 0.0
    %3385 = vmatprep.subr.mxu0 0.0
    %3386 = vmatpush1.msra.mxu0 0.0
    %3387 = vmatprep.subr.mxu0 0.0
    %3388 = vmatpush1.msra.mxu0 0.0
    %3389 = vmatprep.subr.mxu0 0.0
    %3390 = vmatpush1.msra.mxu0 0.0
    %3391 = vmatprep.subr.mxu0 0.0
    %3392 = vmatpush1.msra.mxu0 0.0
    %3393 = vmatprep.subr.mxu0 0.0
    %3394 = vmatpush1.msra.mxu0 0.0
    %3395 = vmatprep.subr.mxu0 0.0
    %3396 = vmatpush1.msra.mxu0 0.0
    %3397 = vmatprep.subr.mxu0 0.0
    %3398 = vmatpush1.msra.mxu0 0.0
    %3399 = vmatprep.subr.mxu0 0.0
    %3400 = vmatpush1.msra.mxu0 0.0
    %3401 = vmatprep.subr.mxu0 0.0
    %3402 = vmatpush1.msra.mxu0 0.0
    %3403 = vmatprep.mubr.f32.mxu0 0.0
    %3404 = vmatmul.mubr.f32.gmra.mrb[0].mxu0 %v3337
    %v3405 = vpop.f32.mrb[0].mxu0
    %v3406 = vadd.f32 0.0, %v3405
    %v3407 = vpop.f32.mrb[0].mxu0
    %3408 = vdwg.mxu0
    %3410 = vrot.lane.b32.xlu0 %v3406, 32
    %v3411 = vpop.permute.xlu0 %3410
    %v3413 = vadd.f32 %v3311, %v3411
    %v3414 = vadd.f32 %v3413, %v1007
    %vm3415 = vcmp.gt.f32.partialorder %v3414, 0.0
    %v3416 = vmin.f32 %v3414, 0.0
    %v3417 = vmul.f32 %v3416, 1.442695
    %v3418 = vpow.pop %v3417
    %v3419 = vsub.f32 %v3418, 1.0
    %v3420 = vsel %vm3415, %v3414, %v3419
    %3422 = vrot.lane.b32.xlu0 %v3420, 96
    %v3423 = vpop.permute.xlu0 %3422
    %v3425 = vsel %vm622, %v3423, 0.0
    %3426 = vadd.xlane.f32.xlu0 %v3425
    %v3427 = vpop.xlane.xlu0 %3426
    %v3428 = vmul.f32 %v3427, %v805
    %v3429 = vsub.f32 %v3420, %v3428
    %v3430 = vmul.f32 %v3429, %v3429
    %3432 = vrot.lane.b32.xlu0 %v3430, 96
    %v3433 = vpop.permute.xlu0 %3432
    %v3435 = vsel %vm622, %v3433, 0.0
    %3436 = vadd.xlane.f32.xlu0 %v3435
    %v3437 = vpop.xlane.xlu0 %3436
    %v3438 = vmul.f32 %v3437, %v805
    %v3439 = vadd.f32 %v3438, 1e-05
    %v3440 = vrsqrt.pop %v3439
    %v3441 = vmul.f32 %v3429, %v3440
    %v3442 = vmul.f32 %v3441, %v1039
    %v3443 = vadd.f32 %v3442, %v1044
    %v3445 = vsel %vm622, %v3335, 0
    %3447 = vmatprep.subr.mxu0 0.0
    %3448 = vmatpush1.msra.mxu0 %v444
    %3449 = vmatprep.subr.mxu0 0.0
    %3450 = vmatpush1.msra.mxu0 %v445
    %3451 = vmatprep.subr.mxu0 0.0
    %3452 = vmatpush1.msra.mxu0 %v446
    %3453 = vmatprep.subr.mxu0 0.0
    %3454 = vmatpush1.msra.mxu0 %v447
    %3455 = vmatprep.subr.mxu0 0.0
    %3456 = vmatpush1.msra.mxu0 0.0
    %3457 = vmatprep.subr.mxu0 0.0
    %3458 = vmatpush1.msra.mxu0 0.0
    %3459 = vmatprep.subr.mxu0 0.0
    %3460 = vmatpush1.msra.mxu0 0.0
    %3461 = vmatprep.subr.mxu0 0.0
    %3462 = vmatpush1.msra.mxu0 0.0
    %3463 = vmatprep.subr.mxu0 0.0
    %3464 = vmatpush1.msra.mxu0 0.0
    %3465 = vmatprep.subr.mxu0 0.0
    %3466 = vmatpush1.msra.mxu0 0.0
    %3467 = vmatprep.subr.mxu0 0.0
    %3468 = vmatpush1.msra.mxu0 0.0
    %3469 = vmatprep.subr.mxu0 0.0
    %3470 = vmatpush1.msra.mxu0 0.0
    %3471 = vmatprep.subr.mxu0 0.0
    %3472 = vmatpush1.msra.mxu0 0.0
    %3473 = vmatprep.subr.mxu0 0.0
    %3474 = vmatpush1.msra.mxu0 0.0
    %3475 = vmatprep.subr.mxu0 0.0
    %3476 = vmatpush1.msra.mxu0 0.0
    %3477 = vmatprep.subr.mxu0 0.0
    %3478 = vmatpush1.msra.mxu0 0.0
    %3479 = vmatprep.subr.mxu0 0.0
    %3480 = vmatpush1.msra.mxu0 0.0
    %3481 = vmatprep.subr.mxu0 0.0
    %3482 = vmatpush1.msra.mxu0 0.0
    %3483 = vmatprep.subr.mxu0 0.0
    %3484 = vmatpush1.msra.mxu0 0.0
    %3485 = vmatprep.subr.mxu0 0.0
    %3486 = vmatpush1.msra.mxu0 0.0
    %3487 = vmatprep.subr.mxu0 0.0
    %3488 = vmatpush1.msra.mxu0 0.0
    %3489 = vmatprep.subr.mxu0 0.0
    %3490 = vmatpush1.msra.mxu0 0.0
    %3491 = vmatprep.subr.mxu0 0.0
    %3492 = vmatpush1.msra.mxu0 0.0
    %3493 = vmatprep.subr.mxu0 0.0
    %3494 = vmatpush1.msra.mxu0 0.0
    %3495 = vmatprep.subr.mxu0 0.0
    %3496 = vmatpush1.msra.mxu0 0.0
    %3497 = vmatprep.subr.mxu0 0.0
    %3498 = vmatpush1.msra.mxu0 0.0
    %3499 = vmatprep.subr.mxu0 0.0
    %3500 = vmatpush1.msra.mxu0 0.0
    %3501 = vmatprep.subr.mxu0 0.0
    %3502 = vmatpush1.msra.mxu0 0.0
    %3503 = vmatprep.subr.mxu0 0.0
    %3504 = vmatpush1.msra.mxu0 0.0
    %3505 = vmatprep.subr.mxu0 0.0
    %3506 = vmatpush1.msra.mxu0 0.0
    %3507 = vmatprep.subr.mxu0 0.0
    %3508 = vmatpush1.msra.mxu0 0.0
    %3509 = vmatprep.subr.mxu0 0.0
    %3510 = vmatpush1.msra.mxu0 0.0
    %3511 = vmatprep.mubr.f32.mxu0 0.0
    %3512 = vmatmul.mubr.f32.gmra.mrb[0].mxu0 %v3445
    %v3513 = vpop.f32.mrb[0].mxu0
    %v3514 = vadd.f32 %v448, %v3513
    %v3515 = vpop.f32.mrb[0].mxu0
    %3516 = vdwg.mxu0
    %v3517 = vmax.f32 %v3514, 0.0
    %v3518 = vand.u32 2147483647, %v3514
    %v3519 = vsub.f32 0.0, %v3518
    %v3520 = vmul.f32 %v3519, 1.442695
    %v3521 = vpow.pop %v3520
    %v3522 = vadd.f32 %v3521, 1.0
    %v3523 = vlog2.pop %v3522
    %v3524 = vmul.f32 %v3523, 0.6931472
    %v3525 = vadd.f32 %v3517, %v3524
    %v3526 = vadd.f32 %v3525, 0.1
    %v3527 = vsel %vm460, %v3514, %v3526
    %3529 = vrot.lane.b32.xlu0 %v2892, 16
    %v3530 = vpop.permute.xlu0 %3529
    %v3532 = vmul.f32 %v3526, %v3530
    %3534 = vrot.lane.b32.xlu0 %v3532, 112
    %v3535 = vpop.permute.xlu0 %3534
    %v3537 = vadd.f32 %v3514, %v3535
    %v3538 = vsel %vm467, %v3537, 0.0
    %3539 = vadd.xlane.f32.xlu0 %v3538
    %v3540 = vpop.xlane.xlu0 %3539
    %v3541 = vmul.f32 %v3540, %v1144
    %v3542 = vsub.f32 %v3537, %v3541
    %v3543 = vmul.f32 %v3542, %v3542
    %v3544 = vsel %vm467, %v3543, 0.0
    %3545 = vadd.xlane.f32.xlu0 %v3544
    %v3546 = vpop.xlane.xlu0 %3545
    %v3547 = vmul.f32 %v3546, %v1144
    %v3548 = vadd.f32 %v3547, 1e-05
    %v3549 = vrsqrt.pop %v3548
    %v3550 = vmul.f32 %v3542, %v3549
    %v3551 = vmul.f32 %v3550, %v454
    %v3552 = vadd.f32 %v3551, %v455
    %3554 = vrot.lane.b32.xlu0 %v3443, 96
    %v3555 = vpop.permute.xlu0 %3554
    %v3556 = vsel %vm622, %v3555, 0
    %3558 = vmatprep.subr.mxu0 0.0
    %3559 = vmatpush1.msra.mxu0 %v449
    %3560 = vmatprep.subr.mxu0 0.0
    %3561 = vmatpush1.msra.mxu0 %v450
    %3562 = vmatprep.subr.mxu0 0.0
    %3563 = vmatpush1.msra.mxu0 %v451
    %3564 = vmatprep.subr.mxu0 0.0
    %3565 = vmatpush1.msra.mxu0 %v452
    %3566 = vmatprep.subr.mxu0 0.0
    %3567 = vmatpush1.msra.mxu0 0.0
    %3568 = vmatprep.subr.mxu0 0.0
    %3569 = vmatpush1.msra.mxu0 0.0
    %3570 = vmatprep.subr.mxu0 0.0
    %3571 = vmatpush1.msra.mxu0 0.0
    %3572 = vmatprep.subr.mxu0 0.0
    %3573 = vmatpush1.msra.mxu0 0.0
    %3574 = vmatprep.subr.mxu0 0.0
    %3575 = vmatpush1.msra.mxu0 0.0
    %3576 = vmatprep.subr.mxu0 0.0
    %3577 = vmatpush1.msra.mxu0 0.0
    %3578 = vmatprep.subr.mxu0 0.0
    %3579 = vmatpush1.msra.mxu0 0.0
    %3580 = vmatprep.subr.mxu0 0.0
    %3581 = vmatpush1.msra.mxu0 0.0
    %3582 = vmatprep.subr.mxu0 0.0
    %3583 = vmatpush1.msra.mxu0 0.0
    %3584 = vmatprep.subr.mxu0 0.0
    %3585 = vmatpush1.msra.mxu0 0.0
    %3586 = vmatprep.subr.mxu0 0.0
    %3587 = vmatpush1.msra.mxu0 0.0
    %3588 = vmatprep.subr.mxu0 0.0
    %3589 = vmatpush1.msra.mxu0 0.0
    %3590 = vmatprep.subr.mxu0 0.0
    %3591 = vmatpush1.msra.mxu0 0.0
    %3592 = vmatprep.subr.mxu0 0.0
    %3593 = vmatpush1.msra.mxu0 0.0
    %3594 = vmatprep.subr.mxu0 0.0
    %3595 = vmatpush1.msra.mxu0 0.0
    %3596 = vmatprep.subr.mxu0 0.0
    %3597 = vmatpush1.msra.mxu0 0.0
    %3598 = vmatprep.subr.mxu0 0.0
    %3599 = vmatpush1.msra.mxu0 0.0
    %3600 = vmatprep.subr.mxu0 0.0
    %3601 = vmatpush1.msra.mxu0 0.0
    %3602 = vmatprep.subr.mxu0 0.0
    %3603 = vmatpush1.msra.mxu0 0.0
    %3604 = vmatprep.subr.mxu0 0.0
    %3605 = vmatpush1.msra.mxu0 0.0
    %3606 = vmatprep.subr.mxu0 0.0
    %3607 = vmatpush1.msra.mxu0 0.0
    %3608 = vmatprep.subr.mxu0 0.0
    %3609 = vmatpush1.msra.mxu0 0.0
    %3610 = vmatprep.subr.mxu0 0.0
    %3611 = vmatpush1.msra.mxu0 0.0
    %3612 = vmatprep.subr.mxu0 0.0
    %3613 = vmatpush1.msra.mxu0 0.0
    %3614 = vmatprep.subr.mxu0 0.0
    %3615 = vmatpush1.msra.mxu0 0.0
    %3616 = vmatprep.subr.mxu0 0.0
    %3617 = vmatpush1.msra.mxu0 0.0
    %3618 = vmatprep.subr.mxu0 0.0
    %3619 = vmatpush1.msra.mxu0 0.0
    %3620 = vmatprep.subr.mxu0 0.0
    %3621 = vmatpush1.msra.mxu0 0.0
    %3622 = vmatprep.mubr.f32.mxu0 0.0
    %3623 = vmatmul.mubr.f32.gmra.mrb[0].mxu0 %v3556
    %v3624 = vpop.f32.mrb[0].mxu0
    %v3625 = vadd.f32 %v453, %v3624
    %v3626 = vpop.f32.mrb[0].mxu0
    %3627 = vdwg.mxu0
    %v3628 = vmax.f32 %v3625, 0.0
    %v3629 = vand.u32 2147483647, %v3625
    %v3630 = vsub.f32 0.0, %v3629
    %v3631 = vmul.f32 %v3630, 1.442695
    %v3632 = vpow.pop %v3631
    %v3633 = vadd.f32 %v3632, 1.0
    %v3634 = vlog2.pop %v3633
    %v3635 = vmul.f32 %v3634, 0.6931472
    %v3636 = vadd.f32 %v3628, %v3635
    %v3637 = vadd.f32 %v3636, 0.1
    %v3638 = vsel %vm460, %v3625, %v3637
    %3640 = vrot.lane.b32.xlu0 %v2894, 16
    %v3641 = vpop.permute.xlu0 %3640
    %v3643 = vmul.f32 %v3637, %v3641
    %3645 = vrot.lane.b32.xlu0 %v3643, 112
    %v3646 = vpop.permute.xlu0 %3645
    %v3648 = vadd.f32 %v3625, %v3646
    %v3649 = vsel %vm467, %v3648, 0.0
    %3650 = vadd.xlane.f32.xlu0 %v3649
    %v3651 = vpop.xlane.xlu0 %3650
    %v3652 = vmul.f32 %v3651, %v1144
    %v3653 = vsub.f32 %v3648, %v3652
    %v3654 = vmul.f32 %v3653, %v3653
    %v3655 = vsel %vm467, %v3654, 0.0
    %3656 = vadd.xlane.f32.xlu0 %v3655
    %v3657 = vpop.xlane.xlu0 %3656
    %v3658 = vmul.f32 %v3657, %v1144
    %v3659 = vadd.f32 %v3658, 1e-05
    %v3660 = vrsqrt.pop %v3659
    %v3661 = vmul.f32 %v3653, %v3660
    %v3662 = vmul.f32 %v3661, %v456
    %v3663 = vadd.f32 %v3662, %v457
    %3665 = vrot.lane.b32.xlu0 %v3552, 32
    %v3666 = vpop.permute.xlu0 %3665
    %3669 = vrot.lane.b32.xlu0 %v3638, 48
    %v3670 = vpop.permute.xlu0 %3669
    %3673 = vrot.lane.b32.xlu0 %v3663, 80
    %v3674 = vpop.permute.xlu0 %3673
    %3676 = vrot.lane.b32.xlu0 %v3238, 64
    %v3677 = vpop.permute.xlu0 %3676
    %v3679 = vsel %vm622, %v3527, %v3666
    %v3680 = vsel %vm1284, %v3679, %v3670
    %v3681 = vsel %vm1286, %v3680, %v3674
    %v3682 = vsel %vm1288, %v3681, %v3677
    %s3683 = scalar_lea.vmem [#allocation38], 24
    %3684 = vst [vmem:[%s3683] sm:$0xff] %v3682
    %s3685 = scalar_lea.vmem [#allocation2], 32
    %v3686 = vld [vmem:[%s3685] sm:$0xff]
    %s3687 = scalar_lea.vmem [#allocation5], 32
    %v3688 = vld [vmem:[%s3687] sm:$0xff]
    %s3689 = scalar_lea.vmem [#allocation7], 32
    %v3690 = vld [vmem:[%s3689] sm:$0xff]
    %s3691 = scalar_lea.vmem [#allocation8], 32
    %v3692 = vld [vmem:[%s3691] sm:$0xff]
    %v3693 = vsel %vm467, %v3663, 0
    %3695 = vmatprep.subr.mxu0 0.0
    %3696 = vmatpush1.msra.mxu0 %v415
    %3697 = vmatprep.subr.mxu0 0.0
    %3698 = vmatpush1.msra.mxu0 %v416
    %3699 = vmatprep.subr.mxu0 0.0
    %3700 = vmatpush1.msra.mxu0 0.0
    %3701 = vmatprep.subr.mxu0 0.0
    %3702 = vmatpush1.msra.mxu0 0.0
    %3703 = vmatprep.subr.mxu0 0.0
    %3704 = vmatpush1.msra.mxu0 0.0
    %3705 = vmatprep.subr.mxu0 0.0
    %3706 = vmatpush1.msra.mxu0 0.0
    %3707 = vmatprep.subr.mxu0 0.0
    %3708 = vmatpush1.msra.mxu0 0.0
    %3709 = vmatprep.subr.mxu0 0.0
    %3710 = vmatpush1.msra.mxu0 0.0
    %3711 = vmatprep.subr.mxu0 0.0
    %3712 = vmatpush1.msra.mxu0 0.0
    %3713 = vmatprep.subr.mxu0 0.0
    %3714 = vmatpush1.msra.mxu0 0.0
    %3715 = vmatprep.subr.mxu0 0.0
    %3716 = vmatpush1.msra.mxu0 0.0
    %3717 = vmatprep.subr.mxu0 0.0
    %3718 = vmatpush1.msra.mxu0 0.0
    %3719 = vmatprep.subr.mxu0 0.0
    %3720 = vmatpush1.msra.mxu0 0.0
    %3721 = vmatprep.subr.mxu0 0.0
    %3722 = vmatpush1.msra.mxu0 0.0
    %3723 = vmatprep.subr.mxu0 0.0
    %3724 = vmatpush1.msra.mxu0 0.0
    %3725 = vmatprep.subr.mxu0 0.0
    %3726 = vmatpush1.msra.mxu0 0.0
    %3727 = vmatprep.subr.mxu0 0.0
    %3728 = vmatpush1.msra.mxu0 0.0
    %3729 = vmatprep.subr.mxu0 0.0
    %3730 = vmatpush1.msra.mxu0 0.0
    %3731 = vmatprep.subr.mxu0 0.0
    %3732 = vmatpush1.msra.mxu0 0.0
    %3733 = vmatprep.subr.mxu0 0.0
    %3734 = vmatpush1.msra.mxu0 0.0
    %3735 = vmatprep.subr.mxu0 0.0
    %3736 = vmatpush1.msra.mxu0 0.0
    %3737 = vmatprep.subr.mxu0 0.0
    %3738 = vmatpush1.msra.mxu0 0.0
    %3739 = vmatprep.subr.mxu0 0.0
    %3740 = vmatpush1.msra.mxu0 0.0
    %3741 = vmatprep.subr.mxu0 0.0
    %3742 = vmatpush1.msra.mxu0 0.0
    %3743 = vmatprep.subr.mxu0 0.0
    %3744 = vmatpush1.msra.mxu0 0.0
    %3745 = vmatprep.subr.mxu0 0.0
    %3746 = vmatpush1.msra.mxu0 0.0
    %3747 = vmatprep.subr.mxu0 0.0
    %3748 = vmatpush1.msra.mxu0 0.0
    %3749 = vmatprep.subr.mxu0 0.0
    %3750 = vmatpush1.msra.mxu0 0.0
    %3751 = vmatprep.subr.mxu0 0.0
    %3752 = vmatpush1.msra.mxu0 0.0
    %3753 = vmatprep.subr.mxu0 0.0
    %3754 = vmatpush1.msra.mxu0 0.0
    %3755 = vmatprep.subr.mxu0 0.0
    %3756 = vmatpush1.msra.mxu0 0.0
    %3757 = vmatprep.subr.mxu0 0.0
    %3758 = vmatpush1.msra.mxu0 0.0
    %3759 = vmatprep.mubr.f32.mxu0 0.0
    %3760 = vmatmul.mubr.f32.gmra.mrb[0].mxu0 %v3693
    %v3761 = vpop.f32.mrb[0].mxu0
    %v3762 = vadd.f32 0.0, %v3761
    %v3763 = vpop.f32.mrb[0].mxu0
    %3764 = vdwg.mxu0
    %v3766 = vsel %vm541, %v3686, 0
    %3768 = vmatprep.subr.mxu0 0.0
    %3769 = vmatpush1.msra.mxu0 %v414
    %3770 = vmatprep.subr.mxu0 0.0
    %3771 = vmatpush1.msra.mxu0 0.0
    %3772 = vmatprep.subr.mxu0 0.0
    %3773 = vmatpush1.msra.mxu0 0.0
    %3774 = vmatprep.subr.mxu0 0.0
    %3775 = vmatpush1.msra.mxu0 0.0
    %3776 = vmatprep.subr.mxu0 0.0
    %3777 = vmatpush1.msra.mxu0 0.0
    %3778 = vmatprep.subr.mxu0 0.0
    %3779 = vmatpush1.msra.mxu0 0.0
    %3780 = vmatprep.subr.mxu0 0.0
    %3781 = vmatpush1.msra.mxu0 0.0
    %3782 = vmatprep.subr.mxu0 0.0
    %3783 = vmatpush1.msra.mxu0 0.0
    %3784 = vmatprep.subr.mxu0 0.0
    %3785 = vmatpush1.msra.mxu0 0.0
    %3786 = vmatprep.subr.mxu0 0.0
    %3787 = vmatpush1.msra.mxu0 0.0
    %3788 = vmatprep.subr.mxu0 0.0
    %3789 = vmatpush1.msra.mxu0 0.0
    %3790 = vmatprep.subr.mxu0 0.0
    %3791 = vmatpush1.msra.mxu0 0.0
    %3792 = vmatprep.subr.mxu0 0.0
    %3793 = vmatpush1.msra.mxu0 0.0
    %3794 = vmatprep.subr.mxu0 0.0
    %3795 = vmatpush1.msra.mxu0 0.0
    %3796 = vmatprep.subr.mxu0 0.0
    %3797 = vmatpush1.msra.mxu0 0.0
    %3798 = vmatprep.subr.mxu0 0.0
    %3799 = vmatpush1.msra.mxu0 0.0
    %3800 = vmatprep.subr.mxu0 0.0
    %3801 = vmatpush1.msra.mxu0 0.0
    %3802 = vmatprep.subr.mxu0 0.0
    %3803 = vmatpush1.msra.mxu0 0.0
    %3804 = vmatprep.subr.mxu0 0.0
    %3805 = vmatpush1.msra.mxu0 0.0
    %3806 = vmatprep.subr.mxu0 0.0
    %3807 = vmatpush1.msra.mxu0 0.0
    %3808 = vmatprep.subr.mxu0 0.0
    %3809 = vmatpush1.msra.mxu0 0.0
    %3810 = vmatprep.subr.mxu0 0.0
    %3811 = vmatpush1.msra.mxu0 0.0
    %3812 = vmatprep.subr.mxu0 0.0
    %3813 = vmatpush1.msra.mxu0 0.0
    %3814 = vmatprep.subr.mxu0 0.0
    %3815 = vmatpush1.msra.mxu0 0.0
    %3816 = vmatprep.subr.mxu0 0.0
    %3817 = vmatpush1.msra.mxu0 0.0
    %3818 = vmatprep.subr.mxu0 0.0
    %3819 = vmatpush1.msra.mxu0 0.0
    %3820 = vmatprep.subr.mxu0 0.0
    %3821 = vmatpush1.msra.mxu0 0.0
    %3822 = vmatprep.subr.mxu0 0.0
    %3823 = vmatpush1.msra.mxu0 0.0
    %3824 = vmatprep.subr.mxu0 0.0
    %3825 = vmatpush1.msra.mxu0 0.0
    %3826 = vmatprep.subr.mxu0 0.0
    %3827 = vmatpush1.msra.mxu0 0.0
    %3828 = vmatprep.subr.mxu0 0.0
    %3829 = vmatpush1.msra.mxu0 0.0
    %3830 = vmatprep.subr.mxu0 0.0
    %3831 = vmatpush1.msra.mxu0 0.0
    %3832 = vmatprep.mubr.f32.mxu0 0.0
    %3833 = vmatmul.mubr.f32.gmra.mrb[0].mxu0 %v3766
    %v3834 = vpop.f32.mrb[0].mxu0
    %v3835 = vadd.f32 %v3762, %v3834
    %v3836 = vpop.f32.mrb[0].mxu0
    %3837 = vdwg.mxu0
    %v3838 = vadd.f32 %v3835, %v417
    %vm3839 = vcmp.gt.f32.partialorder %v3838, 0.0
    %v3840 = vmin.f32 %v3838, 0.0
    %v3841 = vmul.f32 %v3840, 1.442695
    %v3842 = vpow.pop %v3841
    %v3843 = vsub.f32 %v3842, 1.0
    %v3844 = vsel %vm3839, %v3838, %v3843
    %v3846 = vsel %vm622, %v3844, 0
    %3848 = vmatprep.subr.mxu0 0.0
    %3849 = vmatpush1.msra.mxu0 %v418
    %3850 = vmatprep.subr.mxu0 0.0
    %3851 = vmatpush1.msra.mxu0 %v419
    %3852 = vmatprep.subr.mxu0 0.0
    %3853 = vmatpush1.msra.mxu0 %v420
    %3854 = vmatprep.subr.mxu0 0.0
    %3855 = vmatpush1.msra.mxu0 %v421
    %3856 = vmatprep.subr.mxu0 0.0
    %3857 = vmatpush1.msra.mxu0 0.0
    %3858 = vmatprep.subr.mxu0 0.0
    %3859 = vmatpush1.msra.mxu0 0.0
    %3860 = vmatprep.subr.mxu0 0.0
    %3861 = vmatpush1.msra.mxu0 0.0
    %3862 = vmatprep.subr.mxu0 0.0
    %3863 = vmatpush1.msra.mxu0 0.0
    %3864 = vmatprep.subr.mxu0 0.0
    %3865 = vmatpush1.msra.mxu0 0.0
    %3866 = vmatprep.subr.mxu0 0.0
    %3867 = vmatpush1.msra.mxu0 0.0
    %3868 = vmatprep.subr.mxu0 0.0
    %3869 = vmatpush1.msra.mxu0 0.0
    %3870 = vmatprep.subr.mxu0 0.0
    %3871 = vmatpush1.msra.mxu0 0.0
    %3872 = vmatprep.subr.mxu0 0.0
    %3873 = vmatpush1.msra.mxu0 0.0
    %3874 = vmatprep.subr.mxu0 0.0
    %3875 = vmatpush1.msra.mxu0 0.0
    %3876 = vmatprep.subr.mxu0 0.0
    %3877 = vmatpush1.msra.mxu0 0.0
    %3878 = vmatprep.subr.mxu0 0.0
    %3879 = vmatpush1.msra.mxu0 0.0
    %3880 = vmatprep.subr.mxu0 0.0
    %3881 = vmatpush1.msra.mxu0 0.0
    %3882 = vmatprep.subr.mxu0 0.0
    %3883 = vmatpush1.msra.mxu0 0.0
    %3884 = vmatprep.subr.mxu0 0.0
    %3885 = vmatpush1.msra.mxu0 0.0
    %3886 = vmatprep.subr.mxu0 0.0
    %3887 = vmatpush1.msra.mxu0 0.0
    %3888 = vmatprep.subr.mxu0 0.0
    %3889 = vmatpush1.msra.mxu0 0.0
    %3890 = vmatprep.subr.mxu0 0.0
    %3891 = vmatpush1.msra.mxu0 0.0
    %3892 = vmatprep.subr.mxu0 0.0
    %3893 = vmatpush1.msra.mxu0 0.0
    %3894 = vmatprep.subr.mxu0 0.0
    %3895 = vmatpush1.msra.mxu0 0.0
    %3896 = vmatprep.subr.mxu0 0.0
    %3897 = vmatpush1.msra.mxu0 0.0
    %3898 = vmatprep.subr.mxu0 0.0
    %3899 = vmatpush1.msra.mxu0 0.0
    %3900 = vmatprep.subr.mxu0 0.0
    %3901 = vmatpush1.msra.mxu0 0.0
    %3902 = vmatprep.subr.mxu0 0.0
    %3903 = vmatpush1.msra.mxu0 0.0
    %3904 = vmatprep.subr.mxu0 0.0
    %3905 = vmatpush1.msra.mxu0 0.0
    %3906 = vmatprep.subr.mxu0 0.0
    %3907 = vmatpush1.msra.mxu0 0.0
    %3908 = vmatprep.subr.mxu0 0.0
    %3909 = vmatpush1.msra.mxu0 0.0
    %3910 = vmatprep.subr.mxu0 0.0
    %3911 = vmatpush1.msra.mxu0 0.0
    %3912 = vmatprep.mubr.f32.mxu0 0.0
    %3913 = vmatmul.mubr.f32.gmra.mrb[0].mxu0 %v3846
    %v3914 = vpop.f32.mrb[0].mxu0
    %v3915 = vadd.f32 %v426, %v3914
    %v3916 = vpop.f32.mrb[0].mxu0
    %3917 = vdwg.mxu0
    %3918 = vmatprep.subr.mxu0 0.0
    %3919 = vmatpush1.msra.mxu0 %v422
    %3920 = vmatprep.subr.mxu0 0.0
    %3921 = vmatpush1.msra.mxu0 %v423
    %3922 = vmatprep.subr.mxu0 0.0
    %3923 = vmatpush1.msra.mxu0 %v424
    %3924 = vmatprep.subr.mxu0 0.0
    %3925 = vmatpush1.msra.mxu0 %v425
    %3926 = vmatprep.subr.mxu0 0.0
    %3927 = vmatpush1.msra.mxu0 0.0
    %3928 = vmatprep.subr.mxu0 0.0
    %3929 = vmatpush1.msra.mxu0 0.0
    %3930 = vmatprep.subr.mxu0 0.0
    %3931 = vmatpush1.msra.mxu0 0.0
    %3932 = vmatprep.subr.mxu0 0.0
    %3933 = vmatpush1.msra.mxu0 0.0
    %3934 = vmatprep.subr.mxu0 0.0
    %3935 = vmatpush1.msra.mxu0 0.0
    %3936 = vmatprep.subr.mxu0 0.0
    %3937 = vmatpush1.msra.mxu0 0.0
    %3938 = vmatprep.subr.mxu0 0.0
    %3939 = vmatpush1.msra.mxu0 0.0
    %3940 = vmatprep.subr.mxu0 0.0
    %3941 = vmatpush1.msra.mxu0 0.0
    %3942 = vmatprep.subr.mxu0 0.0
    %3943 = vmatpush1.msra.mxu0 0.0
    %3944 = vmatprep.subr.mxu0 0.0
    %3945 = vmatpush1.msra.mxu0 0.0
    %3946 = vmatprep.subr.mxu0 0.0
    %3947 = vmatpush1.msra.mxu0 0.0
    %3948 = vmatprep.subr.mxu0 0.0
    %3949 = vmatpush1.msra.mxu0 0.0
    %3950 = vmatprep.subr.mxu0 0.0
    %3951 = vmatpush1.msra.mxu0 0.0
    %3952 = vmatprep.subr.mxu0 0.0
    %3953 = vmatpush1.msra.mxu0 0.0
    %3954 = vmatprep.subr.mxu0 0.0
    %3955 = vmatpush1.msra.mxu0 0.0
    %3956 = vmatprep.subr.mxu0 0.0
    %3957 = vmatpush1.msra.mxu0 0.0
    %3958 = vmatprep.subr.mxu0 0.0
    %3959 = vmatpush1.msra.mxu0 0.0
    %3960 = vmatprep.subr.mxu0 0.0
    %3961 = vmatpush1.msra.mxu0 0.0
    %3962 = vmatprep.subr.mxu0 0.0
    %3963 = vmatpush1.msra.mxu0 0.0
    %3964 = vmatprep.subr.mxu0 0.0
    %3965 = vmatpush1.msra.mxu0 0.0
    %3966 = vmatprep.subr.mxu0 0.0
    %3967 = vmatpush1.msra.mxu0 0.0
    %3968 = vmatprep.subr.mxu0 0.0
    %3969 = vmatpush1.msra.mxu0 0.0
    %3970 = vmatprep.subr.mxu0 0.0
    %3971 = vmatpush1.msra.mxu0 0.0
    %3972 = vmatprep.subr.mxu0 0.0
    %3973 = vmatpush1.msra.mxu0 0.0
    %3974 = vmatprep.subr.mxu0 0.0
    %3975 = vmatpush1.msra.mxu0 0.0
    %3976 = vmatprep.subr.mxu0 0.0
    %3977 = vmatpush1.msra.mxu0 0.0
    %3978 = vmatprep.subr.mxu0 0.0
    %3979 = vmatpush1.msra.mxu0 0.0
    %3980 = vmatprep.subr.mxu0 0.0
    %3981 = vmatpush1.msra.mxu0 0.0
    %3982 = vmatprep.mubr.f32.mxu0 0.0
    %3983 = vmatmul.mubr.f32.gmra.mrb[0].mxu0 %v3242
    %v3984 = vpop.f32.mrb[0].mxu0
    %v3985 = vadd.f32 %v427, %v3984
    %v3986 = vpop.f32.mrb[0].mxu0
    %3987 = vdwg.mxu0
    %v3988 = vadd.f32 %v3915, %v3985
    %v3989 = vsub.f32 0.0, %v3988
    %v3990 = vmul.f32 %v3989, 1.442695
    %v3991 = vpow.pop %v3990
    %v3992 = vadd.f32 %v3991, 1.0
    %v3993 = vrcp.pop %v3992
    %v3994 = vmul.f32 1.0, %v3993
    %3996 = vrot.lane.b32.xlu0 %v3985, 64
    %v3997 = vpop.permute.xlu0 %3996
    %v3999 = vmul.f32 %v3994, %v3997
    %4001 = vrot.lane.b32.xlu0 %v3999, 64
    %v4002 = vpop.permute.xlu0 %4001
    %v4004 = vadd.f32 %v3915, %v4002
    %v4005 = vtanh.pop %v4004
    %v4006 = vsub.f32 1.0, %v3994
    %4008 = vrot.lane.b32.xlu0 %v4005, 96
    %v4009 = vpop.permute.xlu0 %4008
    %v4011 = vmul.f32 %v4006, %v4009
    %v4012 = vmul.f32 %v3994, %v3238
    %v4013 = vadd.f32 %v4011, %v4012
    %4015 = vrot.lane.b32.xlu0 %v4013, 96
    %v4016 = vpop.permute.xlu0 %4015
    %v4018 = vsel %vm622, %v4016, 0.0
    %4019 = vadd.xlane.f32.xlu0 %v4018
    %v4020 = vpop.xlane.xlu0 %4019
    %v4021 = vmul.f32 %v4020, %v805
    %v4022 = vsub.f32 %v4013, %v4021
    %v4023 = vmul.f32 %v4022, %v4022
    %4025 = vrot.lane.b32.xlu0 %v4023, 96
    %v4026 = vpop.permute.xlu0 %4025
    %v4028 = vsel %vm622, %v4026, 0.0
    %4029 = vadd.xlane.f32.xlu0 %v4028
    %v4030 = vpop.xlane.xlu0 %4029
    %v4031 = vmul.f32 %v4030, %v805
    %v4032 = vadd.f32 %v4031, 1e-05
    %v4033 = vrsqrt.pop %v4032
    %v4034 = vmul.f32 %v4022, %v4033
    %v4035 = vmul.f32 %v4034, %v822
    %v4036 = vadd.f32 %v4035, %v827
    %4038 = vrot.lane.b32.xlu0 %v4036, 96
    %v4039 = vpop.permute.xlu0 %4038
    %v4040 = vsel %vm622, %v4039, 0
    %4042 = vmatprep.subr.mxu0 0.0
    %4043 = vmatpush1.msra.mxu0 %v430
    %4044 = vmatprep.subr.mxu0 0.0
    %4045 = vmatpush1.msra.mxu0 %v431
    %4046 = vmatprep.subr.mxu0 0.0
    %4047 = vmatpush1.msra.mxu0 %v432
    %4048 = vmatprep.subr.mxu0 0.0
    %4049 = vmatpush1.msra.mxu0 %v433
    %4050 = vmatprep.subr.mxu0 0.0
    %4051 = vmatpush1.msra.mxu0 0.0
    %4052 = vmatprep.subr.mxu0 0.0
    %4053 = vmatpush1.msra.mxu0 0.0
    %4054 = vmatprep.subr.mxu0 0.0
    %4055 = vmatpush1.msra.mxu0 0.0
    %4056 = vmatprep.subr.mxu0 0.0
    %4057 = vmatpush1.msra.mxu0 0.0
    %4058 = vmatprep.subr.mxu0 0.0
    %4059 = vmatpush1.msra.mxu0 0.0
    %4060 = vmatprep.subr.mxu0 0.0
    %4061 = vmatpush1.msra.mxu0 0.0
    %4062 = vmatprep.subr.mxu0 0.0
    %4063 = vmatpush1.msra.mxu0 0.0
    %4064 = vmatprep.subr.mxu0 0.0
    %4065 = vmatpush1.msra.mxu0 0.0
    %4066 = vmatprep.subr.mxu0 0.0
    %4067 = vmatpush1.msra.mxu0 0.0
    %4068 = vmatprep.subr.mxu0 0.0
    %4069 = vmatpush1.msra.mxu0 0.0
    %4070 = vmatprep.subr.mxu0 0.0
    %4071 = vmatpush1.msra.mxu0 0.0
    %4072 = vmatprep.subr.mxu0 0.0
    %4073 = vmatpush1.msra.mxu0 0.0
    %4074 = vmatprep.subr.mxu0 0.0
    %4075 = vmatpush1.msra.mxu0 0.0
    %4076 = vmatprep.subr.mxu0 0.0
    %4077 = vmatpush1.msra.mxu0 0.0
    %4078 = vmatprep.subr.mxu0 0.0
    %4079 = vmatpush1.msra.mxu0 0.0
    %4080 = vmatprep.subr.mxu0 0.0
    %4081 = vmatpush1.msra.mxu0 0.0
    %4082 = vmatprep.subr.mxu0 0.0
    %4083 = vmatpush1.msra.mxu0 0.0
    %4084 = vmatprep.subr.mxu0 0.0
    %4085 = vmatpush1.msra.mxu0 0.0
    %4086 = vmatprep.subr.mxu0 0.0
    %4087 = vmatpush1.msra.mxu0 0.0
    %4088 = vmatprep.subr.mxu0 0.0
    %4089 = vmatpush1.msra.mxu0 0.0
    %4090 = vmatprep.subr.mxu0 0.0
    %4091 = vmatpush1.msra.mxu0 0.0
    %4092 = vmatprep.subr.mxu0 0.0
    %4093 = vmatpush1.msra.mxu0 0.0
    %4094 = vmatprep.subr.mxu0 0.0
    %4095 = vmatpush1.msra.mxu0 0.0
    %4096 = vmatprep.subr.mxu0 0.0
    %4097 = vmatpush1.msra.mxu0 0.0
    %4098 = vmatprep.subr.mxu0 0.0
    %4099 = vmatpush1.msra.mxu0 0.0
    %4100 = vmatprep.subr.mxu0 0.0
    %4101 = vmatpush1.msra.mxu0 0.0
    %4102 = vmatprep.subr.mxu0 0.0
    %4103 = vmatpush1.msra.mxu0 0.0
    %4104 = vmatprep.subr.mxu0 0.0
    %4105 = vmatpush1.msra.mxu0 0.0
    %4106 = vmatprep.mubr.f32.mxu0 0.0
    %4107 = vmatmul.mubr.f32.gmra.mrb[0].mxu0 %v4040
    %v4108 = vpop.f32.mrb[0].mxu0
    %v4109 = vadd.f32 0.0, %v4108
    %v4110 = vpop.f32.mrb[0].mxu0
    %4111 = vdwg.mxu0
    %v4112 = vadd.f32 %v4109, %v438
    %vm4113 = vcmp.gt.f32.partialorder %v4112, 0.0
    %v4114 = vmin.f32 %v4112, 0.0
    %v4115 = vmul.f32 %v4114, 1.442695
    %v4116 = vpow.pop %v4115
    %v4117 = vsub.f32 %v4116, 1.0
    %v4118 = vsel %vm4113, %v4112, %v4117
    %v4119 = vsel %vm622, %v4118, 0.0
    %4120 = vadd.xlane.f32.xlu0 %v4119
    %v4121 = vpop.xlane.xlu0 %4120
    %v4122 = vmul.f32 %v4121, %v805
    %v4123 = vsub.f32 %v4118, %v4122
    %v4124 = vmul.f32 %v4123, %v4123
    %v4125 = vsel %vm622, %v4124, 0.0
    %4126 = vadd.xlane.f32.xlu0 %v4125
    %v4127 = vpop.xlane.xlu0 %4126
    %v4128 = vmul.f32 %v4127, %v805
    %v4129 = vadd.f32 %v4128, 1e-05
    %v4130 = vrsqrt.pop %v4129
    %v4131 = vmul.f32 %v4123, %v4130
    %v4132 = vmul.f32 %v4131, %v440
    %v4133 = vadd.f32 %v4132, %v441
    %v4135 = vsel %vm622, %v3688, 0
    %4137 = vmatprep.subr.mxu0 0.0
    %4138 = vmatpush1.msra.mxu0 %v434
    %4139 = vmatprep.subr.mxu0 0.0
    %4140 = vmatpush1.msra.mxu0 %v435
    %4141 = vmatprep.subr.mxu0 0.0
    %4142 = vmatpush1.msra.mxu0 %v436
    %4143 = vmatprep.subr.mxu0 0.0
    %4144 = vmatpush1.msra.mxu0 %v437
    %4145 = vmatprep.subr.mxu0 0.0
    %4146 = vmatpush1.msra.mxu0 0.0
    %4147 = vmatprep.subr.mxu0 0.0
    %4148 = vmatpush1.msra.mxu0 0.0
    %4149 = vmatprep.subr.mxu0 0.0
    %4150 = vmatpush1.msra.mxu0 0.0
    %4151 = vmatprep.subr.mxu0 0.0
    %4152 = vmatpush1.msra.mxu0 0.0
    %4153 = vmatprep.subr.mxu0 0.0
    %4154 = vmatpush1.msra.mxu0 0.0
    %4155 = vmatprep.subr.mxu0 0.0
    %4156 = vmatpush1.msra.mxu0 0.0
    %4157 = vmatprep.subr.mxu0 0.0
    %4158 = vmatpush1.msra.mxu0 0.0
    %4159 = vmatprep.subr.mxu0 0.0
    %4160 = vmatpush1.msra.mxu0 0.0
    %4161 = vmatprep.subr.mxu0 0.0
    %4162 = vmatpush1.msra.mxu0 0.0
    %4163 = vmatprep.subr.mxu0 0.0
    %4164 = vmatpush1.msra.mxu0 0.0
    %4165 = vmatprep.subr.mxu0 0.0
    %4166 = vmatpush1.msra.mxu0 0.0
    %4167 = vmatprep.subr.mxu0 0.0
    %4168 = vmatpush1.msra.mxu0 0.0
    %4169 = vmatprep.subr.mxu0 0.0
    %4170 = vmatpush1.msra.mxu0 0.0
    %4171 = vmatprep.subr.mxu0 0.0
    %4172 = vmatpush1.msra.mxu0 0.0
    %4173 = vmatprep.subr.mxu0 0.0
    %4174 = vmatpush1.msra.mxu0 0.0
    %4175 = vmatprep.subr.mxu0 0.0
    %4176 = vmatpush1.msra.mxu0 0.0
    %4177 = vmatprep.subr.mxu0 0.0
    %4178 = vmatpush1.msra.mxu0 0.0
    %4179 = vmatprep.subr.mxu0 0.0
    %4180 = vmatpush1.msra.mxu0 0.0
    %4181 = vmatprep.subr.mxu0 0.0
    %4182 = vmatpush1.msra.mxu0 0.0
    %4183 = vmatprep.subr.mxu0 0.0
    %4184 = vmatpush1.msra.mxu0 0.0
    %4185 = vmatprep.subr.mxu0 0.0
    %4186 = vmatpush1.msra.mxu0 0.0
    %4187 = vmatprep.subr.mxu0 0.0
    %4188 = vmatpush1.msra.mxu0 0.0
    %4189 = vmatprep.subr.mxu0 0.0
    %4190 = vmatpush1.msra.mxu0 0.0
    %4191 = vmatprep.subr.mxu0 0.0
    %4192 = vmatpush1.msra.mxu0 0.0
    %4193 = vmatprep.subr.mxu0 0.0
    %4194 = vmatpush1.msra.mxu0 0.0
    %4195 = vmatprep.subr.mxu0 0.0
    %4196 = vmatpush1.msra.mxu0 0.0
    %4197 = vmatprep.subr.mxu0 0.0
    %4198 = vmatpush1.msra.mxu0 0.0
    %4199 = vmatprep.subr.mxu0 0.0
    %4200 = vmatpush1.msra.mxu0 0.0
    %4201 = vmatprep.mubr.f32.mxu0 0.0
    %4202 = vmatmul.mubr.f32.gmra.mrb[0].mxu0 %v4135
    %v4203 = vpop.f32.mrb[0].mxu0
    %v4204 = vadd.f32 0.0, %v4203
    %v4205 = vpop.f32.mrb[0].mxu0
    %4206 = vdwg.mxu0
    %4208 = vrot.lane.b32.xlu0 %v4204, 32
    %v4209 = vpop.permute.xlu0 %4208
    %v4211 = vadd.f32 %v4109, %v4209
    %v4212 = vadd.f32 %v4211, %v1007
    %vm4213 = vcmp.gt.f32.partialorder %v4212, 0.0
    %v4214 = vmin.f32 %v4212, 0.0
    %v4215 = vmul.f32 %v4214, 1.442695
    %v4216 = vpow.pop %v4215
    %v4217 = vsub.f32 %v4216, 1.0
    %v4218 = vsel %vm4213, %v4212, %v4217
    %4220 = vrot.lane.b32.xlu0 %v4218, 96
    %v4221 = vpop.permute.xlu0 %4220
    %v4223 = vsel %vm622, %v4221, 0.0
    %4224 = vadd.xlane.f32.xlu0 %v4223
    %v4225 = vpop.xlane.xlu0 %4224
    %v4226 = vmul.f32 %v4225, %v805
    %v4227 = vsub.f32 %v4218, %v4226
    %v4228 = vmul.f32 %v4227, %v4227
    %4230 = vrot.lane.b32.xlu0 %v4228, 96
    %v4231 = vpop.permute.xlu0 %4230
    %v4233 = vsel %vm622, %v4231, 0.0
    %4234 = vadd.xlane.f32.xlu0 %v4233
    %v4235 = vpop.xlane.xlu0 %4234
    %v4236 = vmul.f32 %v4235, %v805
    %v4237 = vadd.f32 %v4236, 1e-05
    %v4238 = vrsqrt.pop %v4237
    %v4239 = vmul.f32 %v4227, %v4238
    %v4240 = vmul.f32 %v4239, %v1039
    %v4241 = vadd.f32 %v4240, %v1044
    %v4243 = vsel %vm622, %v4133, 0
    %4245 = vmatprep.subr.mxu0 0.0
    %4246 = vmatpush1.msra.mxu0 %v444
    %4247 = vmatprep.subr.mxu0 0.0
    %4248 = vmatpush1.msra.mxu0 %v445
    %4249 = vmatprep.subr.mxu0 0.0
    %4250 = vmatpush1.msra.mxu0 %v446
    %4251 = vmatprep.subr.mxu0 0.0
    %4252 = vmatpush1.msra.mxu0 %v447
    %4253 = vmatprep.subr.mxu0 0.0
    %4254 = vmatpush1.msra.mxu0 0.0
    %4255 = vmatprep.subr.mxu0 0.0
    %4256 = vmatpush1.msra.mxu0 0.0
    %4257 = vmatprep.subr.mxu0 0.0
    %4258 = vmatpush1.msra.mxu0 0.0
    %4259 = vmatprep.subr.mxu0 0.0
    %4260 = vmatpush1.msra.mxu0 0.0
    %4261 = vmatprep.subr.mxu0 0.0
    %4262 = vmatpush1.msra.mxu0 0.0
    %4263 = vmatprep.subr.mxu0 0.0
    %4264 = vmatpush1.msra.mxu0 0.0
    %4265 = vmatprep.subr.mxu0 0.0
    %4266 = vmatpush1.msra.mxu0 0.0
    %4267 = vmatprep.subr.mxu0 0.0
    %4268 = vmatpush1.msra.mxu0 0.0
    %4269 = vmatprep.subr.mxu0 0.0
    %4270 = vmatpush1.msra.mxu0 0.0
    %4271 = vmatprep.subr.mxu0 0.0
    %4272 = vmatpush1.msra.mxu0 0.0
    %4273 = vmatprep.subr.mxu0 0.0
    %4274 = vmatpush1.msra.mxu0 0.0
    %4275 = vmatprep.subr.mxu0 0.0
    %4276 = vmatpush1.msra.mxu0 0.0
    %4277 = vmatprep.subr.mxu0 0.0
    %4278 = vmatpush1.msra.mxu0 0.0
    %4279 = vmatprep.subr.mxu0 0.0
    %4280 = vmatpush1.msra.mxu0 0.0
    %4281 = vmatprep.subr.mxu0 0.0
    %4282 = vmatpush1.msra.mxu0 0.0
    %4283 = vmatprep.subr.mxu0 0.0
    %4284 = vmatpush1.msra.mxu0 0.0
    %4285 = vmatprep.subr.mxu0 0.0
    %4286 = vmatpush1.msra.mxu0 0.0
    %4287 = vmatprep.subr.mxu0 0.0
    %4288 = vmatpush1.msra.mxu0 0.0
    %4289 = vmatprep.subr.mxu0 0.0
    %4290 = vmatpush1.msra.mxu0 0.0
    %4291 = vmatprep.subr.mxu0 0.0
    %4292 = vmatpush1.msra.mxu0 0.0
    %4293 = vmatprep.subr.mxu0 0.0
    %4294 = vmatpush1.msra.mxu0 0.0
    %4295 = vmatprep.subr.mxu0 0.0
    %4296 = vmatpush1.msra.mxu0 0.0
    %4297 = vmatprep.subr.mxu0 0.0
    %4298 = vmatpush1.msra.mxu0 0.0
    %4299 = vmatprep.subr.mxu0 0.0
    %4300 = vmatpush1.msra.mxu0 0.0
    %4301 = vmatprep.subr.mxu0 0.0
    %4302 = vmatpush1.msra.mxu0 0.0
    %4303 = vmatprep.subr.mxu0 0.0
    %4304 = vmatpush1.msra.mxu0 0.0
    %4305 = vmatprep.subr.mxu0 0.0
    %4306 = vmatpush1.msra.mxu0 0.0
    %4307 = vmatprep.subr.mxu0 0.0
    %4308 = vmatpush1.msra.mxu0 0.0
    %4309 = vmatprep.mubr.f32.mxu0 0.0
    %4310 = vmatmul.mubr.f32.gmra.mrb[0].mxu0 %v4243
    %v4311 = vpop.f32.mrb[0].mxu0
    %v4312 = vadd.f32 %v448, %v4311
    %v4313 = vpop.f32.mrb[0].mxu0
    %4314 = vdwg.mxu0
    %v4315 = vmax.f32 %v4312, 0.0
    %v4316 = vand.u32 2147483647, %v4312
    %v4317 = vsub.f32 0.0, %v4316
    %v4318 = vmul.f32 %v4317, 1.442695
    %v4319 = vpow.pop %v4318
    %v4320 = vadd.f32 %v4319, 1.0
    %v4321 = vlog2.pop %v4320
    %v4322 = vmul.f32 %v4321, 0.6931472
    %v4323 = vadd.f32 %v4315, %v4322
    %v4324 = vadd.f32 %v4323, 0.1
    %v4325 = vsel %vm460, %v4312, %v4324
    %4327 = vrot.lane.b32.xlu0 %v3690, 16
    %v4328 = vpop.permute.xlu0 %4327
    %v4330 = vmul.f32 %v4324, %v4328
    %4332 = vrot.lane.b32.xlu0 %v4330, 112
    %v4333 = vpop.permute.xlu0 %4332
    %v4335 = vadd.f32 %v4312, %v4333
    %v4336 = vsel %vm467, %v4335, 0.0
    %4337 = vadd.xlane.f32.xlu0 %v4336
    %v4338 = vpop.xlane.xlu0 %4337
    %v4339 = vmul.f32 %v4338, %v1144
    %v4340 = vsub.f32 %v4335, %v4339
    %v4341 = vmul.f32 %v4340, %v4340
    %v4342 = vsel %vm467, %v4341, 0.0
    %4343 = vadd.xlane.f32.xlu0 %v4342
    %v4344 = vpop.xlane.xlu0 %4343
    %v4345 = vmul.f32 %v4344, %v1144
    %v4346 = vadd.f32 %v4345, 1e-05
    %v4347 = vrsqrt.pop %v4346
    %v4348 = vmul.f32 %v4340, %v4347
    %v4349 = vmul.f32 %v4348, %v454
    %v4350 = vadd.f32 %v4349, %v455
    %4352 = vrot.lane.b32.xlu0 %v4241, 96
    %v4353 = vpop.permute.xlu0 %4352
    %v4354 = vsel %vm622, %v4353, 0
    %4356 = vmatprep.subr.mxu0 0.0
    %4357 = vmatpush1.msra.mxu0 %v449
    %4358 = vmatprep.subr.mxu0 0.0
    %4359 = vmatpush1.msra.mxu0 %v450
    %4360 = vmatprep.subr.mxu0 0.0
    %4361 = vmatpush1.msra.mxu0 %v451
    %4362 = vmatprep.subr.mxu0 0.0
    %4363 = vmatpush1.msra.mxu0 %v452
    %4364 = vmatprep.subr.mxu0 0.0
    %4365 = vmatpush1.msra.mxu0 0.0
    %4366 = vmatprep.subr.mxu0 0.0
    %4367 = vmatpush1.msra.mxu0 0.0
    %4368 = vmatprep.subr.mxu0 0.0
    %4369 = vmatpush1.msra.mxu0 0.0
    %4370 = vmatprep.subr.mxu0 0.0
    %4371 = vmatpush1.msra.mxu0 0.0
    %4372 = vmatprep.subr.mxu0 0.0
    %4373 = vmatpush1.msra.mxu0 0.0
    %4374 = vmatprep.subr.mxu0 0.0
    %4375 = vmatpush1.msra.mxu0 0.0
    %4376 = vmatprep.subr.mxu0 0.0
    %4377 = vmatpush1.msra.mxu0 0.0
    %4378 = vmatprep.subr.mxu0 0.0
    %4379 = vmatpush1.msra.mxu0 0.0
    %4380 = vmatprep.subr.mxu0 0.0
    %4381 = vmatpush1.msra.mxu0 0.0
    %4382 = vmatprep.subr.mxu0 0.0
    %4383 = vmatpush1.msra.mxu0 0.0
    %4384 = vmatprep.subr.mxu0 0.0
    %4385 = vmatpush1.msra.mxu0 0.0
    %4386 = vmatprep.subr.mxu0 0.0
    %4387 = vmatpush1.msra.mxu0 0.0
    %4388 = vmatprep.subr.mxu0 0.0
    %4389 = vmatpush1.msra.mxu0 0.0
    %4390 = vmatprep.subr.mxu0 0.0
    %4391 = vmatpush1.msra.mxu0 0.0
    %4392 = vmatprep.subr.mxu0 0.0
    %4393 = vmatpush1.msra.mxu0 0.0
    %4394 = vmatprep.subr.mxu0 0.0
    %4395 = vmatpush1.msra.mxu0 0.0
    %4396 = vmatprep.subr.mxu0 0.0
    %4397 = vmatpush1.msra.mxu0 0.0
    %4398 = vmatprep.subr.mxu0 0.0
    %4399 = vmatpush1.msra.mxu0 0.0
    %4400 = vmatprep.subr.mxu0 0.0
    %4401 = vmatpush1.msra.mxu0 0.0
    %4402 = vmatprep.subr.mxu0 0.0
    %4403 = vmatpush1.msra.mxu0 0.0
    %4404 = vmatprep.subr.mxu0 0.0
    %4405 = vmatpush1.msra.mxu0 0.0
    %4406 = vmatprep.subr.mxu0 0.0
    %4407 = vmatpush1.msra.mxu0 0.0
    %4408 = vmatprep.subr.mxu0 0.0
    %4409 = vmatpush1.msra.mxu0 0.0
    %4410 = vmatprep.subr.mxu0 0.0
    %4411 = vmatpush1.msra.mxu0 0.0
    %4412 = vmatprep.subr.mxu0 0.0
    %4413 = vmatpush1.msra.mxu0 0.0
    %4414 = vmatprep.subr.mxu0 0.0
    %4415 = vmatpush1.msra.mxu0 0.0
    %4416 = vmatprep.subr.mxu0 0.0
    %4417 = vmatpush1.msra.mxu0 0.0
    %4418 = vmatprep.subr.mxu0 0.0
    %4419 = vmatpush1.msra.mxu0 0.0
    %4420 = vmatprep.mubr.f32.mxu0 0.0
    %4421 = vmatmul.mubr.f32.gmra.mrb[0].mxu0 %v4354
    %v4422 = vpop.f32.mrb[0].mxu0
    %v4423 = vadd.f32 %v453, %v4422
    %v4424 = vpop.f32.mrb[0].mxu0
    %4425 = vdwg.mxu0
    %v4426 = vmax.f32 %v4423, 0.0
    %v4427 = vand.u32 2147483647, %v4423
    %v4428 = vsub.f32 0.0, %v4427
    %v4429 = vmul.f32 %v4428, 1.442695
    %v4430 = vpow.pop %v4429
    %v4431 = vadd.f32 %v4430, 1.0
    %v4432 = vlog2.pop %v4431
    %v4433 = vmul.f32 %v4432, 0.6931472
    %v4434 = vadd.f32 %v4426, %v4433
    %v4435 = vadd.f32 %v4434, 0.1
    %v4436 = vsel %vm460, %v4423, %v4435
    %4438 = vrot.lane.b32.xlu0 %v3692, 16
    %v4439 = vpop.permute.xlu0 %4438
    %v4441 = vmul.f32 %v4435, %v4439
    %4443 = vrot.lane.b32.xlu0 %v4441, 112
    %v4444 = vpop.permute.xlu0 %4443
    %v4446 = vadd.f32 %v4423, %v4444
    %v4447 = vsel %vm467, %v4446, 0.0
    %4448 = vadd.xlane.f32.xlu0 %v4447
    %v4449 = vpop.xlane.xlu0 %4448
    %v4450 = vmul.f32 %v4449, %v1144
    %v4451 = vsub.f32 %v4446, %v4450
    %v4452 = vmul.f32 %v4451, %v4451
    %v4453 = vsel %vm467, %v4452, 0.0
    %4454 = vadd.xlane.f32.xlu0 %v4453
    %v4455 = vpop.xlane.xlu0 %4454
    %v4456 = vmul.f32 %v4455, %v1144
    %v4457 = vadd.f32 %v4456, 1e-05
    %v4458 = vrsqrt.pop %v4457
    %v4459 = vmul.f32 %v4451, %v4458
    %v4460 = vmul.f32 %v4459, %v456
    %v4461 = vadd.f32 %v4460, %v457
    %4463 = vrot.lane.b32.xlu0 %v4350, 32
    %v4464 = vpop.permute.xlu0 %4463
    %4467 = vrot.lane.b32.xlu0 %v4436, 48
    %v4468 = vpop.permute.xlu0 %4467
    %4471 = vrot.lane.b32.xlu0 %v4461, 80
    %v4472 = vpop.permute.xlu0 %4471
    %4474 = vrot.lane.b32.xlu0 %v4036, 64
    %v4475 = vpop.permute.xlu0 %4474
    %v4477 = vsel %vm622, %v4325, %v4464
    %v4478 = vsel %vm1284, %v4477, %v4468
    %v4479 = vsel %vm1286, %v4478, %v4472
    %v4480 = vsel %vm1288, %v4479, %v4475
    %s4481 = scalar_lea.vmem [#allocation38], 32
    %4482 = vst [vmem:[%s4481] sm:$0xff] %v4480
    %s4483 = scalar_lea.vmem [#allocation2], 40
    %v4484 = vld [vmem:[%s4483] sm:$0xff]
    %s4485 = scalar_lea.vmem [#allocation5], 40
    %v4486 = vld [vmem:[%s4485] sm:$0xff]
    %s4487 = scalar_lea.vmem [#allocation7], 40
    %v4488 = vld [vmem:[%s4487] sm:$0xff]
    %s4489 = scalar_lea.vmem [#allocation8], 40
    %v4490 = vld [vmem:[%s4489] sm:$0xff]
    %v4491 = vsel %vm467, %v4461, 0
    %4493 = vmatprep.subr.mxu0 0.0
    %4494 = vmatpush1.msra.mxu0 %v415
    %4495 = vmatprep.subr.mxu0 0.0
    %4496 = vmatpush1.msra.mxu0 %v416
    %4497 = vmatprep.subr.mxu0 0.0
    %4498 = vmatpush1.msra.mxu0 0.0
    %4499 = vmatprep.subr.mxu0 0.0
    %4500 = vmatpush1.msra.mxu0 0.0
    %4501 = vmatprep.subr.mxu0 0.0
    %4502 = vmatpush1.msra.mxu0 0.0
    %4503 = vmatprep.subr.mxu0 0.0
    %4504 = vmatpush1.msra.mxu0 0.0
    %4505 = vmatprep.subr.mxu0 0.0
    %4506 = vmatpush1.msra.mxu0 0.0
    %4507 = vmatprep.subr.mxu0 0.0
    %4508 = vmatpush1.msra.mxu0 0.0
    %4509 = vmatprep.subr.mxu0 0.0
    %4510 = vmatpush1.msra.mxu0 0.0
    %4511 = vmatprep.subr.mxu0 0.0
    %4512 = vmatpush1.msra.mxu0 0.0
    %4513 = vmatprep.subr.mxu0 0.0
    %4514 = vmatpush1.msra.mxu0 0.0
    %4515 = vmatprep.subr.mxu0 0.0
    %4516 = vmatpush1.msra.mxu0 0.0
    %4517 = vmatprep.subr.mxu0 0.0
    %4518 = vmatpush1.msra.mxu0 0.0
    %4519 = vmatprep.subr.mxu0 0.0
    %4520 = vmatpush1.msra.mxu0 0.0
    %4521 = vmatprep.subr.mxu0 0.0
    %4522 = vmatpush1.msra.mxu0 0.0
    %4523 = vmatprep.subr.mxu0 0.0
    %4524 = vmatpush1.msra.mxu0 0.0
    %4525 = vmatprep.subr.mxu0 0.0
    %4526 = vmatpush1.msra.mxu0 0.0
    %4527 = vmatprep.subr.mxu0 0.0
    %4528 = vmatpush1.msra.mxu0 0.0
    %4529 = vmatprep.subr.mxu0 0.0
    %4530 = vmatpush1.msra.mxu0 0.0
    %4531 = vmatprep.subr.mxu0 0.0
    %4532 = vmatpush1.msra.mxu0 0.0
    %4533 = vmatprep.subr.mxu0 0.0
    %4534 = vmatpush1.msra.mxu0 0.0
    %4535 = vmatprep.subr.mxu0 0.0
    %4536 = vmatpush1.msra.mxu0 0.0
    %4537 = vmatprep.subr.mxu0 0.0
    %4538 = vmatpush1.msra.mxu0 0.0
    %4539 = vmatprep.subr.mxu0 0.0
    %4540 = vmatpush1.msra.mxu0 0.0
    %4541 = vmatprep.subr.mxu0 0.0
    %4542 = vmatpush1.msra.mxu0 0.0
    %4543 = vmatprep.subr.mxu0 0.0
    %4544 = vmatpush1.msra.mxu0 0.0
    %4545 = vmatprep.subr.mxu0 0.0
    %4546 = vmatpush1.msra.mxu0 0.0
    %4547 = vmatprep.subr.mxu0 0.0
    %4548 = vmatpush1.msra.mxu0 0.0
    %4549 = vmatprep.subr.mxu0 0.0
    %4550 = vmatpush1.msra.mxu0 0.0
    %4551 = vmatprep.subr.mxu0 0.0
    %4552 = vmatpush1.msra.mxu0 0.0
    %4553 = vmatprep.subr.mxu0 0.0
    %4554 = vmatpush1.msra.mxu0 0.0
    %4555 = vmatprep.subr.mxu0 0.0
    %4556 = vmatpush1.msra.mxu0 0.0
    %4557 = vmatprep.mubr.f32.mxu0 0.0
    %4558 = vmatmul.mubr.f32.gmra.mrb[0].mxu0 %v4491
    %v4559 = vpop.f32.mrb[0].mxu0
    %v4560 = vadd.f32 0.0, %v4559
    %v4561 = vpop.f32.mrb[0].mxu0
    %4562 = vdwg.mxu0
    %v4564 = vsel %vm541, %v4484, 0
    %4566 = vmatprep.subr.mxu0 0.0
    %4567 = vmatpush1.msra.mxu0 %v414
    %4568 = vmatprep.subr.mxu0 0.0
    %4569 = vmatpush1.msra.mxu0 0.0
    %4570 = vmatprep.subr.mxu0 0.0
    %4571 = vmatpush1.msra.mxu0 0.0
    %4572 = vmatprep.subr.mxu0 0.0
    %4573 = vmatpush1.msra.mxu0 0.0
    %4574 = vmatprep.subr.mxu0 0.0
    %4575 = vmatpush1.msra.mxu0 0.0
    %4576 = vmatprep.subr.mxu0 0.0
    %4577 = vmatpush1.msra.mxu0 0.0
    %4578 = vmatprep.subr.mxu0 0.0
    %4579 = vmatpush1.msra.mxu0 0.0
    %4580 = vmatprep.subr.mxu0 0.0
    %4581 = vmatpush1.msra.mxu0 0.0
    %4582 = vmatprep.subr.mxu0 0.0
    %4583 = vmatpush1.msra.mxu0 0.0
    %4584 = vmatprep.subr.mxu0 0.0
    %4585 = vmatpush1.msra.mxu0 0.0
    %4586 = vmatprep.subr.mxu0 0.0
    %4587 = vmatpush1.msra.mxu0 0.0
    %4588 = vmatprep.subr.mxu0 0.0
    %4589 = vmatpush1.msra.mxu0 0.0
    %4590 = vmatprep.subr.mxu0 0.0
    %4591 = vmatpush1.msra.mxu0 0.0
    %4592 = vmatprep.subr.mxu0 0.0
    %4593 = vmatpush1.msra.mxu0 0.0
    %4594 = vmatprep.subr.mxu0 0.0
    %4595 = vmatpush1.msra.mxu0 0.0
    %4596 = vmatprep.subr.mxu0 0.0
    %4597 = vmatpush1.msra.mxu0 0.0
    %4598 = vmatprep.subr.mxu0 0.0
    %4599 = vmatpush1.msra.mxu0 0.0
    %4600 = vmatprep.subr.mxu0 0.0
    %4601 = vmatpush1.msra.mxu0 0.0
    %4602 = vmatprep.subr.mxu0 0.0
    %4603 = vmatpush1.msra.mxu0 0.0
    %4604 = vmatprep.subr.mxu0 0.0
    %4605 = vmatpush1.msra.mxu0 0.0
    %4606 = vmatprep.subr.mxu0 0.0
    %4607 = vmatpush1.msra.mxu0 0.0
    %4608 = vmatprep.subr.mxu0 0.0
    %4609 = vmatpush1.msra.mxu0 0.0
    %4610 = vmatprep.subr.mxu0 0.0
    %4611 = vmatpush1.msra.mxu0 0.0
    %4612 = vmatprep.subr.mxu0 0.0
    %4613 = vmatpush1.msra.mxu0 0.0
    %4614 = vmatprep.subr.mxu0 0.0
    %4615 = vmatpush1.msra.mxu0 0.0
    %4616 = vmatprep.subr.mxu0 0.0
    %4617 = vmatpush1.msra.mxu0 0.0
    %4618 = vmatprep.subr.mxu0 0.0
    %4619 = vmatpush1.msra.mxu0 0.0
    %4620 = vmatprep.subr.mxu0 0.0
    %4621 = vmatpush1.msra.mxu0 0.0
    %4622 = vmatprep.subr.mxu0 0.0
    %4623 = vmatpush1.msra.mxu0 0.0
    %4624 = vmatprep.subr.mxu0 0.0
    %4625 = vmatpush1.msra.mxu0 0.0
    %4626 = vmatprep.subr.mxu0 0.0
    %4627 = vmatpush1.msra.mxu0 0.0
    %4628 = vmatprep.subr.mxu0 0.0
    %4629 = vmatpush1.msra.mxu0 0.0
    %4630 = vmatprep.mubr.f32.mxu0 0.0
    %4631 = vmatmul.mubr.f32.gmra.mrb[0].mxu0 %v4564
    %v4632 = vpop.f32.mrb[0].mxu0
    %v4633 = vadd.f32 %v4560, %v4632
    %v4634 = vpop.f32.mrb[0].mxu0
    %4635 = vdwg.mxu0
    %v4636 = vadd.f32 %v4633, %v417
    %vm4637 = vcmp.gt.f32.partialorder %v4636, 0.0
    %v4638 = vmin.f32 %v4636, 0.0
    %v4639 = vmul.f32 %v4638, 1.442695
    %v4640 = vpow.pop %v4639
    %v4641 = vsub.f32 %v4640, 1.0
    %v4642 = vsel %vm4637, %v4636, %v4641
    %v4644 = vsel %vm622, %v4642, 0
    %4646 = vmatprep.subr.mxu0 0.0
    %4647 = vmatpush1.msra.mxu0 %v418
    %4648 = vmatprep.subr.mxu0 0.0
    %4649 = vmatpush1.msra.mxu0 %v419
    %4650 = vmatprep.subr.mxu0 0.0
    %4651 = vmatpush1.msra.mxu0 %v420
    %4652 = vmatprep.subr.mxu0 0.0
    %4653 = vmatpush1.msra.mxu0 %v421
    %4654 = vmatprep.subr.mxu0 0.0
    %4655 = vmatpush1.msra.mxu0 0.0
    %4656 = vmatprep.subr.mxu0 0.0
    %4657 = vmatpush1.msra.mxu0 0.0
    %4658 = vmatprep.subr.mxu0 0.0
    %4659 = vmatpush1.msra.mxu0 0.0
    %4660 = vmatprep.subr.mxu0 0.0
    %4661 = vmatpush1.msra.mxu0 0.0
    %4662 = vmatprep.subr.mxu0 0.0
    %4663 = vmatpush1.msra.mxu0 0.0
    %4664 = vmatprep.subr.mxu0 0.0
    %4665 = vmatpush1.msra.mxu0 0.0
    %4666 = vmatprep.subr.mxu0 0.0
    %4667 = vmatpush1.msra.mxu0 0.0
    %4668 = vmatprep.subr.mxu0 0.0
    %4669 = vmatpush1.msra.mxu0 0.0
    %4670 = vmatprep.subr.mxu0 0.0
    %4671 = vmatpush1.msra.mxu0 0.0
    %4672 = vmatprep.subr.mxu0 0.0
    %4673 = vmatpush1.msra.mxu0 0.0
    %4674 = vmatprep.subr.mxu0 0.0
    %4675 = vmatpush1.msra.mxu0 0.0
    %4676 = vmatprep.subr.mxu0 0.0
    %4677 = vmatpush1.msra.mxu0 0.0
    %4678 = vmatprep.subr.mxu0 0.0
    %4679 = vmatpush1.msra.mxu0 0.0
    %4680 = vmatprep.subr.mxu0 0.0
    %4681 = vmatpush1.msra.mxu0 0.0
    %4682 = vmatprep.subr.mxu0 0.0
    %4683 = vmatpush1.msra.mxu0 0.0
    %4684 = vmatprep.subr.mxu0 0.0
    %4685 = vmatpush1.msra.mxu0 0.0
    %4686 = vmatprep.subr.mxu0 0.0
    %4687 = vmatpush1.msra.mxu0 0.0
    %4688 = vmatprep.subr.mxu0 0.0
    %4689 = vmatpush1.msra.mxu0 0.0
    %4690 = vmatprep.subr.mxu0 0.0
    %4691 = vmatpush1.msra.mxu0 0.0
    %4692 = vmatprep.subr.mxu0 0.0
    %4693 = vmatpush1.msra.mxu0 0.0
    %4694 = vmatprep.subr.mxu0 0.0
    %4695 = vmatpush1.msra.mxu0 0.0
    %4696 = vmatprep.subr.mxu0 0.0
    %4697 = vmatpush1.msra.mxu0 0.0
    %4698 = vmatprep.subr.mxu0 0.0
    %4699 = vmatpush1.msra.mxu0 0.0
    %4700 = vmatprep.subr.mxu0 0.0
    %4701 = vmatpush1.msra.mxu0 0.0
    %4702 = vmatprep.subr.mxu0 0.0
    %4703 = vmatpush1.msra.mxu0 0.0
    %4704 = vmatprep.subr.mxu0 0.0
    %4705 = vmatpush1.msra.mxu0 0.0
    %4706 = vmatprep.subr.mxu0 0.0
    %4707 = vmatpush1.msra.mxu0 0.0
    %4708 = vmatprep.subr.mxu0 0.0
    %4709 = vmatpush1.msra.mxu0 0.0
    %4710 = vmatprep.mubr.f32.mxu0 0.0
    %4711 = vmatmul.mubr.f32.gmra.mrb[0].mxu0 %v4644
    %v4712 = vpop.f32.mrb[0].mxu0
    %v4713 = vadd.f32 %v426, %v4712
    %v4714 = vpop.f32.mrb[0].mxu0
    %4715 = vdwg.mxu0
    %4716 = vmatprep.subr.mxu0 0.0
    %4717 = vmatpush1.msra.mxu0 %v422
    %4718 = vmatprep.subr.mxu0 0.0
    %4719 = vmatpush1.msra.mxu0 %v423
    %4720 = vmatprep.subr.mxu0 0.0
    %4721 = vmatpush1.msra.mxu0 %v424
    %4722 = vmatprep.subr.mxu0 0.0
    %4723 = vmatpush1.msra.mxu0 %v425
    %4724 = vmatprep.subr.mxu0 0.0
    %4725 = vmatpush1.msra.mxu0 0.0
    %4726 = vmatprep.subr.mxu0 0.0
    %4727 = vmatpush1.msra.mxu0 0.0
    %4728 = vmatprep.subr.mxu0 0.0
    %4729 = vmatpush1.msra.mxu0 0.0
    %4730 = vmatprep.subr.mxu0 0.0
    %4731 = vmatpush1.msra.mxu0 0.0
    %4732 = vmatprep.subr.mxu0 0.0
    %4733 = vmatpush1.msra.mxu0 0.0
    %4734 = vmatprep.subr.mxu0 0.0
    %4735 = vmatpush1.msra.mxu0 0.0
    %4736 = vmatprep.subr.mxu0 0.0
    %4737 = vmatpush1.msra.mxu0 0.0
    %4738 = vmatprep.subr.mxu0 0.0
    %4739 = vmatpush1.msra.mxu0 0.0
    %4740 = vmatprep.subr.mxu0 0.0
    %4741 = vmatpush1.msra.mxu0 0.0
    %4742 = vmatprep.subr.mxu0 0.0
    %4743 = vmatpush1.msra.mxu0 0.0
    %4744 = vmatprep.subr.mxu0 0.0
    %4745 = vmatpush1.msra.mxu0 0.0
    %4746 = vmatprep.subr.mxu0 0.0
    %4747 = vmatpush1.msra.mxu0 0.0
    %4748 = vmatprep.subr.mxu0 0.0
    %4749 = vmatpush1.msra.mxu0 0.0
    %4750 = vmatprep.subr.mxu0 0.0
    %4751 = vmatpush1.msra.mxu0 0.0
    %4752 = vmatprep.subr.mxu0 0.0
    %4753 = vmatpush1.msra.mxu0 0.0
    %4754 = vmatprep.subr.mxu0 0.0
    %4755 = vmatpush1.msra.mxu0 0.0
    %4756 = vmatprep.subr.mxu0 0.0
    %4757 = vmatpush1.msra.mxu0 0.0
    %4758 = vmatprep.subr.mxu0 0.0
    %4759 = vmatpush1.msra.mxu0 0.0
    %4760 = vmatprep.subr.mxu0 0.0
    %4761 = vmatpush1.msra.mxu0 0.0
    %4762 = vmatprep.subr.mxu0 0.0
    %4763 = vmatpush1.msra.mxu0 0.0
    %4764 = vmatprep.subr.mxu0 0.0
    %4765 = vmatpush1.msra.mxu0 0.0
    %4766 = vmatprep.subr.mxu0 0.0
    %4767 = vmatpush1.msra.mxu0 0.0
    %4768 = vmatprep.subr.mxu0 0.0
    %4769 = vmatpush1.msra.mxu0 0.0
    %4770 = vmatprep.subr.mxu0 0.0
    %4771 = vmatpush1.msra.mxu0 0.0
    %4772 = vmatprep.subr.mxu0 0.0
    %4773 = vmatpush1.msra.mxu0 0.0
    %4774 = vmatprep.subr.mxu0 0.0
    %4775 = vmatpush1.msra.mxu0 0.0
    %4776 = vmatprep.subr.mxu0 0.0
    %4777 = vmatpush1.msra.mxu0 0.0
    %4778 = vmatprep.subr.mxu0 0.0
    %4779 = vmatpush1.msra.mxu0 0.0
    %4780 = vmatprep.mubr.f32.mxu0 0.0
    %4781 = vmatmul.mubr.f32.gmra.mrb[0].mxu0 %v4040
    %v4782 = vpop.f32.mrb[0].mxu0
    %v4783 = vadd.f32 %v427, %v4782
    %v4784 = vpop.f32.mrb[0].mxu0
    %4785 = vdwg.mxu0
    %v4786 = vadd.f32 %v4713, %v4783
    %v4787 = vsub.f32 0.0, %v4786
    %v4788 = vmul.f32 %v4787, 1.442695
    %v4789 = vpow.pop %v4788
    %v4790 = vadd.f32 %v4789, 1.0
    %v4791 = vrcp.pop %v4790
    %v4792 = vmul.f32 1.0, %v4791
    %4794 = vrot.lane.b32.xlu0 %v4783, 64
    %v4795 = vpop.permute.xlu0 %4794
    %v4797 = vmul.f32 %v4792, %v4795
    %4799 = vrot.lane.b32.xlu0 %v4797, 64
    %v4800 = vpop.permute.xlu0 %4799
    %v4802 = vadd.f32 %v4713, %v4800
    %v4803 = vtanh.pop %v4802
    %v4804 = vsub.f32 1.0, %v4792
    %4806 = vrot.lane.b32.xlu0 %v4803, 96
    %v4807 = vpop.permute.xlu0 %4806
    %v4809 = vmul.f32 %v4804, %v4807
    %v4810 = vmul.f32 %v4792, %v4036
    %v4811 = vadd.f32 %v4809, %v4810
    %4813 = vrot.lane.b32.xlu0 %v4811, 96
    %v4814 = vpop.permute.xlu0 %4813
    %v4816 = vsel %vm622, %v4814, 0.0
    %4817 = vadd.xlane.f32.xlu0 %v4816
    %v4818 = vpop.xlane.xlu0 %4817
    %v4819 = vmul.f32 %v4818, %v805
    %v4820 = vsub.f32 %v4811, %v4819
    %v4821 = vmul.f32 %v4820, %v4820
    %4823 = vrot.lane.b32.xlu0 %v4821, 96
    %v4824 = vpop.permute.xlu0 %4823
    %v4826 = vsel %vm622, %v4824, 0.0
    %4827 = vadd.xlane.f32.xlu0 %v4826
    %v4828 = vpop.xlane.xlu0 %4827
    %v4829 = vmul.f32 %v4828, %v805
    %v4830 = vadd.f32 %v4829, 1e-05
    %v4831 = vrsqrt.pop %v4830
    %v4832 = vmul.f32 %v4820, %v4831
    %v4833 = vmul.f32 %v4832, %v822
    %v4834 = vadd.f32 %v4833, %v827
    %4836 = vrot.lane.b32.xlu0 %v4834, 96
    %v4837 = vpop.permute.xlu0 %4836
    %v4838 = vsel %vm622, %v4837, 0
    %4840 = vmatprep.subr.mxu0 0.0
    %4841 = vmatpush1.msra.mxu0 %v430
    %4842 = vmatprep.subr.mxu0 0.0
    %4843 = vmatpush1.msra.mxu0 %v431
    %4844 = vmatprep.subr.mxu0 0.0
    %4845 = vmatpush1.msra.mxu0 %v432
    %4846 = vmatprep.subr.mxu0 0.0
    %4847 = vmatpush1.msra.mxu0 %v433
    %4848 = vmatprep.subr.mxu0 0.0
    %4849 = vmatpush1.msra.mxu0 0.0
    %4850 = vmatprep.subr.mxu0 0.0
    %4851 = vmatpush1.msra.mxu0 0.0
    %4852 = vmatprep.subr.mxu0 0.0
    %4853 = vmatpush1.msra.mxu0 0.0
    %4854 = vmatprep.subr.mxu0 0.0
    %4855 = vmatpush1.msra.mxu0 0.0
    %4856 = vmatprep.subr.mxu0 0.0
    %4857 = vmatpush1.msra.mxu0 0.0
    %4858 = vmatprep.subr.mxu0 0.0
    %4859 = vmatpush1.msra.mxu0 0.0
    %4860 = vmatprep.subr.mxu0 0.0
    %4861 = vmatpush1.msra.mxu0 0.0
    %4862 = vmatprep.subr.mxu0 0.0
    %4863 = vmatpush1.msra.mxu0 0.0
    %4864 = vmatprep.subr.mxu0 0.0
    %4865 = vmatpush1.msra.mxu0 0.0
    %4866 = vmatprep.subr.mxu0 0.0
    %4867 = vmatpush1.msra.mxu0 0.0
    %4868 = vmatprep.subr.mxu0 0.0
    %4869 = vmatpush1.msra.mxu0 0.0
    %4870 = vmatprep.subr.mxu0 0.0
    %4871 = vmatpush1.msra.mxu0 0.0
    %4872 = vmatprep.subr.mxu0 0.0
    %4873 = vmatpush1.msra.mxu0 0.0
    %4874 = vmatprep.subr.mxu0 0.0
    %4875 = vmatpush1.msra.mxu0 0.0
    %4876 = vmatprep.subr.mxu0 0.0
    %4877 = vmatpush1.msra.mxu0 0.0
    %4878 = vmatprep.subr.mxu0 0.0
    %4879 = vmatpush1.msra.mxu0 0.0
    %4880 = vmatprep.subr.mxu0 0.0
    %4881 = vmatpush1.msra.mxu0 0.0
    %4882 = vmatprep.subr.mxu0 0.0
    %4883 = vmatpush1.msra.mxu0 0.0
    %4884 = vmatprep.subr.mxu0 0.0
    %4885 = vmatpush1.msra.mxu0 0.0
    %4886 = vmatprep.subr.mxu0 0.0
    %4887 = vmatpush1.msra.mxu0 0.0
    %4888 = vmatprep.subr.mxu0 0.0
    %4889 = vmatpush1.msra.mxu0 0.0
    %4890 = vmatprep.subr.mxu0 0.0
    %4891 = vmatpush1.msra.mxu0 0.0
    %4892 = vmatprep.subr.mxu0 0.0
    %4893 = vmatpush1.msra.mxu0 0.0
    %4894 = vmatprep.subr.mxu0 0.0
    %4895 = vmatpush1.msra.mxu0 0.0
    %4896 = vmatprep.subr.mxu0 0.0
    %4897 = vmatpush1.msra.mxu0 0.0
    %4898 = vmatprep.subr.mxu0 0.0
    %4899 = vmatpush1.msra.mxu0 0.0
    %4900 = vmatprep.subr.mxu0 0.0
    %4901 = vmatpush1.msra.mxu0 0.0
    %4902 = vmatprep.subr.mxu0 0.0
    %4903 = vmatpush1.msra.mxu0 0.0
    %4904 = vmatprep.mubr.f32.mxu0 0.0
    %4905 = vmatmul.mubr.f32.gmra.mrb[0].mxu0 %v4838
    %v4906 = vpop.f32.mrb[0].mxu0
    %v4907 = vadd.f32 0.0, %v4906
    %v4908 = vpop.f32.mrb[0].mxu0
    %4909 = vdwg.mxu0
    %v4910 = vadd.f32 %v4907, %v438
    %vm4911 = vcmp.gt.f32.partialorder %v4910, 0.0
    %v4912 = vmin.f32 %v4910, 0.0
    %v4913 = vmul.f32 %v4912, 1.442695
    %v4914 = vpow.pop %v4913
    %v4915 = vsub.f32 %v4914, 1.0
    %v4916 = vsel %vm4911, %v4910, %v4915
    %v4917 = vsel %vm622, %v4916, 0.0
    %4918 = vadd.xlane.f32.xlu0 %v4917
    %v4919 = vpop.xlane.xlu0 %4918
    %v4920 = vmul.f32 %v4919, %v805
    %v4921 = vsub.f32 %v4916, %v4920
    %v4922 = vmul.f32 %v4921, %v4921
    %v4923 = vsel %vm622, %v4922, 0.0
    %4924 = vadd.xlane.f32.xlu0 %v4923
    %v4925 = vpop.xlane.xlu0 %4924
    %v4926 = vmul.f32 %v4925, %v805
    %v4927 = vadd.f32 %v4926, 1e-05
    %v4928 = vrsqrt.pop %v4927
    %v4929 = vmul.f32 %v4921, %v4928
    %v4930 = vmul.f32 %v4929, %v440
    %v4931 = vadd.f32 %v4930, %v441
    %v4933 = vsel %vm622, %v4486, 0
    %4935 = vmatprep.subr.mxu0 0.0
    %4936 = vmatpush1.msra.mxu0 %v434
    %4937 = vmatprep.subr.mxu0 0.0
    %4938 = vmatpush1.msra.mxu0 %v435
    %4939 = vmatprep.subr.mxu0 0.0
    %4940 = vmatpush1.msra.mxu0 %v436
    %4941 = vmatprep.subr.mxu0 0.0
    %4942 = vmatpush1.msra.mxu0 %v437
    %4943 = vmatprep.subr.mxu0 0.0
    %4944 = vmatpush1.msra.mxu0 0.0
    %4945 = vmatprep.subr.mxu0 0.0
    %4946 = vmatpush1.msra.mxu0 0.0
    %4947 = vmatprep.subr.mxu0 0.0
    %4948 = vmatpush1.msra.mxu0 0.0
    %4949 = vmatprep.subr.mxu0 0.0
    %4950 = vmatpush1.msra.mxu0 0.0
    %4951 = vmatprep.subr.mxu0 0.0
    %4952 = vmatpush1.msra.mxu0 0.0
    %4953 = vmatprep.subr.mxu0 0.0
    %4954 = vmatpush1.msra.mxu0 0.0
    %4955 = vmatprep.subr.mxu0 0.0
    %4956 = vmatpush1.msra.mxu0 0.0
    %4957 = vmatprep.subr.mxu0 0.0
    %4958 = vmatpush1.msra.mxu0 0.0
    %4959 = vmatprep.subr.mxu0 0.0
    %4960 = vmatpush1.msra.mxu0 0.0
    %4961 = vmatprep.subr.mxu0 0.0
    %4962 = vmatpush1.msra.mxu0 0.0
    %4963 = vmatprep.subr.mxu0 0.0
    %4964 = vmatpush1.msra.mxu0 0.0
    %4965 = vmatprep.subr.mxu0 0.0
    %4966 = vmatpush1.msra.mxu0 0.0
    %4967 = vmatprep.subr.mxu0 0.0
    %4968 = vmatpush1.msra.mxu0 0.0
    %4969 = vmatprep.subr.mxu0 0.0
    %4970 = vmatpush1.msra.mxu0 0.0
    %4971 = vmatprep.subr.mxu0 0.0
    %4972 = vmatpush1.msra.mxu0 0.0
    %4973 = vmatprep.subr.mxu0 0.0
    %4974 = vmatpush1.msra.mxu0 0.0
    %4975 = vmatprep.subr.mxu0 0.0
    %4976 = vmatpush1.msra.mxu0 0.0
    %4977 = vmatprep.subr.mxu0 0.0
    %4978 = vmatpush1.msra.mxu0 0.0
    %4979 = vmatprep.subr.mxu0 0.0
    %4980 = vmatpush1.msra.mxu0 0.0
    %4981 = vmatprep.subr.mxu0 0.0
    %4982 = vmatpush1.msra.mxu0 0.0
    %4983 = vmatprep.subr.mxu0 0.0
    %4984 = vmatpush1.msra.mxu0 0.0
    %4985 = vmatprep.subr.mxu0 0.0
    %4986 = vmatpush1.msra.mxu0 0.0
    %4987 = vmatprep.subr.mxu0 0.0
    %4988 = vmatpush1.msra.mxu0 0.0
    %4989 = vmatprep.subr.mxu0 0.0
    %4990 = vmatpush1.msra.mxu0 0.0
    %4991 = vmatprep.subr.mxu0 0.0
    %4992 = vmatpush1.msra.mxu0 0.0
    %4993 = vmatprep.subr.mxu0 0.0
    %4994 = vmatpush1.msra.mxu0 0.0
    %4995 = vmatprep.subr.mxu0 0.0
    %4996 = vmatpush1.msra.mxu0 0.0
    %4997 = vmatprep.subr.mxu0 0.0
    %4998 = vmatpush1.msra.mxu0 0.0
    %4999 = vmatprep.mubr.f32.mxu0 0.0
    %5000 = vmatmul.mubr.f32.gmra.mrb[0].mxu0 %v4933
    %v5001 = vpop.f32.mrb[0].mxu0
    %v5002 = vadd.f32 0.0, %v5001
    %v5003 = vpop.f32.mrb[0].mxu0
    %5004 = vdwg.mxu0
    %5006 = vrot.lane.b32.xlu0 %v5002, 32
    %v5007 = vpop.permute.xlu0 %5006
    %v5009 = vadd.f32 %v4907, %v5007
    %v5010 = vadd.f32 %v5009, %v1007
    %vm5011 = vcmp.gt.f32.partialorder %v5010, 0.0
    %v5012 = vmin.f32 %v5010, 0.0
    %v5013 = vmul.f32 %v5012, 1.442695
    %v5014 = vpow.pop %v5013
    %v5015 = vsub.f32 %v5014, 1.0
    %v5016 = vsel %vm5011, %v5010, %v5015
    %5018 = vrot.lane.b32.xlu0 %v5016, 96
    %v5019 = vpop.permute.xlu0 %5018
    %v5021 = vsel %vm622, %v5019, 0.0
    %5022 = vadd.xlane.f32.xlu0 %v5021
    %v5023 = vpop.xlane.xlu0 %5022
    %v5024 = vmul.f32 %v5023, %v805
    %v5025 = vsub.f32 %v5016, %v5024
    %v5026 = vmul.f32 %v5025, %v5025
    %5028 = vrot.lane.b32.xlu0 %v5026, 96
    %v5029 = vpop.permute.xlu0 %5028
    %v5031 = vsel %vm622, %v5029, 0.0
    %5032 = vadd.xlane.f32.xlu0 %v5031
    %v5033 = vpop.xlane.xlu0 %5032
    %v5034 = vmul.f32 %v5033, %v805
    %v5035 = vadd.f32 %v5034, 1e-05
    %v5036 = vrsqrt.pop %v5035
    %v5037 = vmul.f32 %v5025, %v5036
    %v5038 = vmul.f32 %v5037, %v1039
    %v5039 = vadd.f32 %v5038, %v1044
    %v5041 = vsel %vm622, %v4931, 0
    %5043 = vmatprep.subr.mxu0 0.0
    %5044 = vmatpush1.msra.mxu0 %v444
    %5045 = vmatprep.subr.mxu0 0.0
    %5046 = vmatpush1.msra.mxu0 %v445
    %5047 = vmatprep.subr.mxu0 0.0
    %5048 = vmatpush1.msra.mxu0 %v446
    %5049 = vmatprep.subr.mxu0 0.0
    %5050 = vmatpush1.msra.mxu0 %v447
    %5051 = vmatprep.subr.mxu0 0.0
    %5052 = vmatpush1.msra.mxu0 0.0
    %5053 = vmatprep.subr.mxu0 0.0
    %5054 = vmatpush1.msra.mxu0 0.0
    %5055 = vmatprep.subr.mxu0 0.0
    %5056 = vmatpush1.msra.mxu0 0.0
    %5057 = vmatprep.subr.mxu0 0.0
    %5058 = vmatpush1.msra.mxu0 0.0
    %5059 = vmatprep.subr.mxu0 0.0
    %5060 = vmatpush1.msra.mxu0 0.0
    %5061 = vmatprep.subr.mxu0 0.0
    %5062 = vmatpush1.msra.mxu0 0.0
    %5063 = vmatprep.subr.mxu0 0.0
    %5064 = vmatpush1.msra.mxu0 0.0
    %5065 = vmatprep.subr.mxu0 0.0
    %5066 = vmatpush1.msra.mxu0 0.0
    %5067 = vmatprep.subr.mxu0 0.0
    %5068 = vmatpush1.msra.mxu0 0.0
    %5069 = vmatprep.subr.mxu0 0.0
    %5070 = vmatpush1.msra.mxu0 0.0
    %5071 = vmatprep.subr.mxu0 0.0
    %5072 = vmatpush1.msra.mxu0 0.0
    %5073 = vmatprep.subr.mxu0 0.0
    %5074 = vmatpush1.msra.mxu0 0.0
    %5075 = vmatprep.subr.mxu0 0.0
    %5076 = vmatpush1.msra.mxu0 0.0
    %5077 = vmatprep.subr.mxu0 0.0
    %5078 = vmatpush1.msra.mxu0 0.0
    %5079 = vmatprep.subr.mxu0 0.0
    %5080 = vmatpush1.msra.mxu0 0.0
    %5081 = vmatprep.subr.mxu0 0.0
    %5082 = vmatpush1.msra.mxu0 0.0
    %5083 = vmatprep.subr.mxu0 0.0
    %5084 = vmatpush1.msra.mxu0 0.0
    %5085 = vmatprep.subr.mxu0 0.0
    %5086 = vmatpush1.msra.mxu0 0.0
    %5087 = vmatprep.subr.mxu0 0.0
    %5088 = vmatpush1.msra.mxu0 0.0
    %5089 = vmatprep.subr.mxu0 0.0
    %5090 = vmatpush1.msra.mxu0 0.0
    %5091 = vmatprep.subr.mxu0 0.0
    %5092 = vmatpush1.msra.mxu0 0.0
    %5093 = vmatprep.subr.mxu0 0.0
    %5094 = vmatpush1.msra.mxu0 0.0
    %5095 = vmatprep.subr.mxu0 0.0
    %5096 = vmatpush1.msra.mxu0 0.0
    %5097 = vmatprep.subr.mxu0 0.0
    %5098 = vmatpush1.msra.mxu0 0.0
    %5099 = vmatprep.subr.mxu0 0.0
    %5100 = vmatpush1.msra.mxu0 0.0
    %5101 = vmatprep.subr.mxu0 0.0
    %5102 = vmatpush1.msra.mxu0 0.0
    %5103 = vmatprep.subr.mxu0 0.0
    %5104 = vmatpush1.msra.mxu0 0.0
    %5105 = vmatprep.subr.mxu0 0.0
    %5106 = vmatpush1.msra.mxu0 0.0
    %5107 = vmatprep.mubr.f32.mxu0 0.0
    %5108 = vmatmul.mubr.f32.gmra.mrb[0].mxu0 %v5041
    %v5109 = vpop.f32.mrb[0].mxu0
    %v5110 = vadd.f32 %v448, %v5109
    %v5111 = vpop.f32.mrb[0].mxu0
    %5112 = vdwg.mxu0
    %v5113 = vmax.f32 %v5110, 0.0
    %v5114 = vand.u32 2147483647, %v5110
    %v5115 = vsub.f32 0.0, %v5114
    %v5116 = vmul.f32 %v5115, 1.442695
    %v5117 = vpow.pop %v5116
    %v5118 = vadd.f32 %v5117, 1.0
    %v5119 = vlog2.pop %v5118
    %v5120 = vmul.f32 %v5119, 0.6931472
    %v5121 = vadd.f32 %v5113, %v5120
    %v5122 = vadd.f32 %v5121, 0.1
    %v5123 = vsel %vm460, %v5110, %v5122
    %5125 = vrot.lane.b32.xlu0 %v4488, 16
    %v5126 = vpop.permute.xlu0 %5125
    %v5128 = vmul.f32 %v5122, %v5126
    %5130 = vrot.lane.b32.xlu0 %v5128, 112
    %v5131 = vpop.permute.xlu0 %5130
    %v5133 = vadd.f32 %v5110, %v5131
    %v5134 = vsel %vm467, %v5133, 0.0
    %5135 = vadd.xlane.f32.xlu0 %v5134
    %v5136 = vpop.xlane.xlu0 %5135
    %v5137 = vmul.f32 %v5136, %v1144
    %v5138 = vsub.f32 %v5133, %v5137
    %v5139 = vmul.f32 %v5138, %v5138
    %v5140 = vsel %vm467, %v5139, 0.0
    %5141 = vadd.xlane.f32.xlu0 %v5140
    %v5142 = vpop.xlane.xlu0 %5141
    %v5143 = vmul.f32 %v5142, %v1144
    %v5144 = vadd.f32 %v5143, 1e-05
    %v5145 = vrsqrt.pop %v5144
    %v5146 = vmul.f32 %v5138, %v5145
    %v5147 = vmul.f32 %v5146, %v454
    %v5148 = vadd.f32 %v5147, %v455
    %5150 = vrot.lane.b32.xlu0 %v5039, 96
    %v5151 = vpop.permute.xlu0 %5150
    %v5152 = vsel %vm622, %v5151, 0
    %5154 = vmatprep.subr.mxu0 0.0
    %5155 = vmatpush1.msra.mxu0 %v449
    %5156 = vmatprep.subr.mxu0 0.0
    %5157 = vmatpush1.msra.mxu0 %v450
    %5158 = vmatprep.subr.mxu0 0.0
    %5159 = vmatpush1.msra.mxu0 %v451
    %5160 = vmatprep.subr.mxu0 0.0
    %5161 = vmatpush1.msra.mxu0 %v452
    %5162 = vmatprep.subr.mxu0 0.0
    %5163 = vmatpush1.msra.mxu0 0.0
    %5164 = vmatprep.subr.mxu0 0.0
    %5165 = vmatpush1.msra.mxu0 0.0
    %5166 = vmatprep.subr.mxu0 0.0
    %5167 = vmatpush1.msra.mxu0 0.0
    %5168 = vmatprep.subr.mxu0 0.0
    %5169 = vmatpush1.msra.mxu0 0.0
    %5170 = vmatprep.subr.mxu0 0.0
    %5171 = vmatpush1.msra.mxu0 0.0
    %5172 = vmatprep.subr.mxu0 0.0
    %5173 = vmatpush1.msra.mxu0 0.0
    %5174 = vmatprep.subr.mxu0 0.0
    %5175 = vmatpush1.msra.mxu0 0.0
    %5176 = vmatprep.subr.mxu0 0.0
    %5177 = vmatpush1.msra.mxu0 0.0
    %5178 = vmatprep.subr.mxu0 0.0
    %5179 = vmatpush1.msra.mxu0 0.0
    %5180 = vmatprep.subr.mxu0 0.0
    %5181 = vmatpush1.msra.mxu0 0.0
    %5182 = vmatprep.subr.mxu0 0.0
    %5183 = vmatpush1.msra.mxu0 0.0
    %5184 = vmatprep.subr.mxu0 0.0
    %5185 = vmatpush1.msra.mxu0 0.0
    %5186 = vmatprep.subr.mxu0 0.0
    %5187 = vmatpush1.msra.mxu0 0.0
    %5188 = vmatprep.subr.mxu0 0.0
    %5189 = vmatpush1.msra.mxu0 0.0
    %5190 = vmatprep.subr.mxu0 0.0
    %5191 = vmatpush1.msra.mxu0 0.0
    %5192 = vmatprep.subr.mxu0 0.0
    %5193 = vmatpush1.msra.mxu0 0.0
    %5194 = vmatprep.subr.mxu0 0.0
    %5195 = vmatpush1.msra.mxu0 0.0
    %5196 = vmatprep.subr.mxu0 0.0
    %5197 = vmatpush1.msra.mxu0 0.0
    %5198 = vmatprep.subr.mxu0 0.0
    %5199 = vmatpush1.msra.mxu0 0.0
    %5200 = vmatprep.subr.mxu0 0.0
    %5201 = vmatpush1.msra.mxu0 0.0
    %5202 = vmatprep.subr.mxu0 0.0
    %5203 = vmatpush1.msra.mxu0 0.0
    %5204 = vmatprep.subr.mxu0 0.0
    %5205 = vmatpush1.msra.mxu0 0.0
    %5206 = vmatprep.subr.mxu0 0.0
    %5207 = vmatpush1.msra.mxu0 0.0
    %5208 = vmatprep.subr.mxu0 0.0
    %5209 = vmatpush1.msra.mxu0 0.0
    %5210 = vmatprep.subr.mxu0 0.0
    %5211 = vmatpush1.msra.mxu0 0.0
    %5212 = vmatprep.subr.mxu0 0.0
    %5213 = vmatpush1.msra.mxu0 0.0
    %5214 = vmatprep.subr.mxu0 0.0
    %5215 = vmatpush1.msra.mxu0 0.0
    %5216 = vmatprep.subr.mxu0 0.0
    %5217 = vmatpush1.msra.mxu0 0.0
    %5218 = vmatprep.mubr.f32.mxu0 0.0
    %5219 = vmatmul.mubr.f32.gmra.mrb[0].mxu0 %v5152
    %v5220 = vpop.f32.mrb[0].mxu0
    %v5221 = vadd.f32 %v453, %v5220
    %v5222 = vpop.f32.mrb[0].mxu0
    %5223 = vdwg.mxu0
    %v5224 = vmax.f32 %v5221, 0.0
    %v5225 = vand.u32 2147483647, %v5221
    %v5226 = vsub.f32 0.0, %v5225
    %v5227 = vmul.f32 %v5226, 1.442695
    %v5228 = vpow.pop %v5227
    %v5229 = vadd.f32 %v5228, 1.0
    %v5230 = vlog2.pop %v5229
    %v5231 = vmul.f32 %v5230, 0.6931472
    %v5232 = vadd.f32 %v5224, %v5231
    %v5233 = vadd.f32 %v5232, 0.1
    %v5234 = vsel %vm460, %v5221, %v5233
    %5236 = vrot.lane.b32.xlu0 %v4490, 16
    %v5237 = vpop.permute.xlu0 %5236
    %v5239 = vmul.f32 %v5233, %v5237
    %5241 = vrot.lane.b32.xlu0 %v5239, 112
    %v5242 = vpop.permute.xlu0 %5241
    %v5244 = vadd.f32 %v5221, %v5242
    %v5245 = vsel %vm467, %v5244, 0.0
    %5246 = vadd.xlane.f32.xlu0 %v5245
    %v5247 = vpop.xlane.xlu0 %5246
    %v5248 = vmul.f32 %v5247, %v1144
    %v5249 = vsub.f32 %v5244, %v5248
    %v5250 = vmul.f32 %v5249, %v5249
    %v5251 = vsel %vm467, %v5250, 0.0
    %5252 = vadd.xlane.f32.xlu0 %v5251
    %v5253 = vpop.xlane.xlu0 %5252
    %v5254 = vmul.f32 %v5253, %v1144
    %v5255 = vadd.f32 %v5254, 1e-05
    %v5256 = vrsqrt.pop %v5255
    %v5257 = vmul.f32 %v5249, %v5256
    %v5258 = vmul.f32 %v5257, %v456
    %v5259 = vadd.f32 %v5258, %v457
    %5261 = vrot.lane.b32.xlu0 %v5148, 32
    %v5262 = vpop.permute.xlu0 %5261
    %5265 = vrot.lane.b32.xlu0 %v5234, 48
    %v5266 = vpop.permute.xlu0 %5265
    %5269 = vrot.lane.b32.xlu0 %v5259, 80
    %v5270 = vpop.permute.xlu0 %5269
    %5272 = vrot.lane.b32.xlu0 %v4834, 64
    %v5273 = vpop.permute.xlu0 %5272
    %v5275 = vsel %vm622, %v5123, %v5262
    %v5276 = vsel %vm1284, %v5275, %v5266
    %v5277 = vsel %vm1286, %v5276, %v5270
    %v5278 = vsel %vm1288, %v5277, %v5273
    %s5279 = scalar_lea.vmem [#allocation38], 40
    %5280 = vst [vmem:[%s5279] sm:$0xff] %v5278
    %s5281 = scalar_lea.vmem [#allocation2], 48
    %v5282 = vld [vmem:[%s5281] sm:$0xff]
    %s5283 = scalar_lea.vmem [#allocation5], 48
    %v5284 = vld [vmem:[%s5283] sm:$0xff]
    %s5285 = scalar_lea.vmem [#allocation7], 48
    %v5286 = vld [vmem:[%s5285] sm:$0xff]
    %s5287 = scalar_lea.vmem [#allocation8], 48
    %v5288 = vld [vmem:[%s5287] sm:$0xff]
    %v5289 = vsel %vm467, %v5259, 0
    %5291 = vmatprep.subr.mxu0 0.0
    %5292 = vmatpush1.msra.mxu0 %v415
    %5293 = vmatprep.subr.mxu0 0.0
    %5294 = vmatpush1.msra.mxu0 %v416
    %5295 = vmatprep.subr.mxu0 0.0
    %5296 = vmatpush1.msra.mxu0 0.0
    %5297 = vmatprep.subr.mxu0 0.0
    %5298 = vmatpush1.msra.mxu0 0.0
    %5299 = vmatprep.subr.mxu0 0.0
    %5300 = vmatpush1.msra.mxu0 0.0
    %5301 = vmatprep.subr.mxu0 0.0
    %5302 = vmatpush1.msra.mxu0 0.0
    %5303 = vmatprep.subr.mxu0 0.0
    %5304 = vmatpush1.msra.mxu0 0.0
    %5305 = vmatprep.subr.mxu0 0.0
    %5306 = vmatpush1.msra.mxu0 0.0
    %5307 = vmatprep.subr.mxu0 0.0
    %5308 = vmatpush1.msra.mxu0 0.0
    %5309 = vmatprep.subr.mxu0 0.0
    %5310 = vmatpush1.msra.mxu0 0.0
    %5311 = vmatprep.subr.mxu0 0.0
    %5312 = vmatpush1.msra.mxu0 0.0
    %5313 = vmatprep.subr.mxu0 0.0
    %5314 = vmatpush1.msra.mxu0 0.0
    %5315 = vmatprep.subr.mxu0 0.0
    %5316 = vmatpush1.msra.mxu0 0.0
    %5317 = vmatprep.subr.mxu0 0.0
    %5318 = vmatpush1.msra.mxu0 0.0
    %5319 = vmatprep.subr.mxu0 0.0
    %5320 = vmatpush1.msra.mxu0 0.0
    %5321 = vmatprep.subr.mxu0 0.0
    %5322 = vmatpush1.msra.mxu0 0.0
    %5323 = vmatprep.subr.mxu0 0.0
    %5324 = vmatpush1.msra.mxu0 0.0
    %5325 = vmatprep.subr.mxu0 0.0
    %5326 = vmatpush1.msra.mxu0 0.0
    %5327 = vmatprep.subr.mxu0 0.0
    %5328 = vmatpush1.msra.mxu0 0.0
    %5329 = vmatprep.subr.mxu0 0.0
    %5330 = vmatpush1.msra.mxu0 0.0
    %5331 = vmatprep.subr.mxu0 0.0
    %5332 = vmatpush1.msra.mxu0 0.0
    %5333 = vmatprep.subr.mxu0 0.0
    %5334 = vmatpush1.msra.mxu0 0.0
    %5335 = vmatprep.subr.mxu0 0.0
    %5336 = vmatpush1.msra.mxu0 0.0
    %5337 = vmatprep.subr.mxu0 0.0
    %5338 = vmatpush1.msra.mxu0 0.0
    %5339 = vmatprep.subr.mxu0 0.0
    %5340 = vmatpush1.msra.mxu0 0.0
    %5341 = vmatprep.subr.mxu0 0.0
    %5342 = vmatpush1.msra.mxu0 0.0
    %5343 = vmatprep.subr.mxu0 0.0
    %5344 = vmatpush1.msra.mxu0 0.0
    %5345 = vmatprep.subr.mxu0 0.0
    %5346 = vmatpush1.msra.mxu0 0.0
    %5347 = vmatprep.subr.mxu0 0.0
    %5348 = vmatpush1.msra.mxu0 0.0
    %5349 = vmatprep.subr.mxu0 0.0
    %5350 = vmatpush1.msra.mxu0 0.0
    %5351 = vmatprep.subr.mxu0 0.0
    %5352 = vmatpush1.msra.mxu0 0.0
    %5353 = vmatprep.subr.mxu0 0.0
    %5354 = vmatpush1.msra.mxu0 0.0
    %5355 = vmatprep.mubr.f32.mxu0 0.0
    %5356 = vmatmul.mubr.f32.gmra.mrb[0].mxu0 %v5289
    %v5357 = vpop.f32.mrb[0].mxu0
    %v5358 = vadd.f32 0.0, %v5357
    %v5359 = vpop.f32.mrb[0].mxu0
    %5360 = vdwg.mxu0
    %v5362 = vsel %vm541, %v5282, 0
    %5364 = vmatprep.subr.mxu0 0.0
    %5365 = vmatpush1.msra.mxu0 %v414
    %5366 = vmatprep.subr.mxu0 0.0
    %5367 = vmatpush1.msra.mxu0 0.0
    %5368 = vmatprep.subr.mxu0 0.0
    %5369 = vmatpush1.msra.mxu0 0.0
    %5370 = vmatprep.subr.mxu0 0.0
    %5371 = vmatpush1.msra.mxu0 0.0
    %5372 = vmatprep.subr.mxu0 0.0
    %5373 = vmatpush1.msra.mxu0 0.0
    %5374 = vmatprep.subr.mxu0 0.0
    %5375 = vmatpush1.msra.mxu0 0.0
    %5376 = vmatprep.subr.mxu0 0.0
    %5377 = vmatpush1.msra.mxu0 0.0
    %5378 = vmatprep.subr.mxu0 0.0
    %5379 = vmatpush1.msra.mxu0 0.0
    %5380 = vmatprep.subr.mxu0 0.0
    %5381 = vmatpush1.msra.mxu0 0.0
    %5382 = vmatprep.subr.mxu0 0.0
    %5383 = vmatpush1.msra.mxu0 0.0
    %5384 = vmatprep.subr.mxu0 0.0
    %5385 = vmatpush1.msra.mxu0 0.0
    %5386 = vmatprep.subr.mxu0 0.0
    %5387 = vmatpush1.msra.mxu0 0.0
    %5388 = vmatprep.subr.mxu0 0.0
    %5389 = vmatpush1.msra.mxu0 0.0
    %5390 = vmatprep.subr.mxu0 0.0
    %5391 = vmatpush1.msra.mxu0 0.0
    %5392 = vmatprep.subr.mxu0 0.0
    %5393 = vmatpush1.msra.mxu0 0.0
    %5394 = vmatprep.subr.mxu0 0.0
    %5395 = vmatpush1.msra.mxu0 0.0
    %5396 = vmatprep.subr.mxu0 0.0
    %5397 = vmatpush1.msra.mxu0 0.0
    %5398 = vmatprep.subr.mxu0 0.0
    %5399 = vmatpush1.msra.mxu0 0.0
    %5400 = vmatprep.subr.mxu0 0.0
    %5401 = vmatpush1.msra.mxu0 0.0
    %5402 = vmatprep.subr.mxu0 0.0
    %5403 = vmatpush1.msra.mxu0 0.0
    %5404 = vmatprep.subr.mxu0 0.0
    %5405 = vmatpush1.msra.mxu0 0.0
    %5406 = vmatprep.subr.mxu0 0.0
    %5407 = vmatpush1.msra.mxu0 0.0
    %5408 = vmatprep.subr.mxu0 0.0
    %5409 = vmatpush1.msra.mxu0 0.0
    %5410 = vmatprep.subr.mxu0 0.0
    %5411 = vmatpush1.msra.mxu0 0.0
    %5412 = vmatprep.subr.mxu0 0.0
    %5413 = vmatpush1.msra.mxu0 0.0
    %5414 = vmatprep.subr.mxu0 0.0
    %5415 = vmatpush1.msra.mxu0 0.0
    %5416 = vmatprep.subr.mxu0 0.0
    %5417 = vmatpush1.msra.mxu0 0.0
    %5418 = vmatprep.subr.mxu0 0.0
    %5419 = vmatpush1.msra.mxu0 0.0
    %5420 = vmatprep.subr.mxu0 0.0
    %5421 = vmatpush1.msra.mxu0 0.0
    %5422 = vmatprep.subr.mxu0 0.0
    %5423 = vmatpush1.msra.mxu0 0.0
    %5424 = vmatprep.subr.mxu0 0.0
    %5425 = vmatpush1.msra.mxu0 0.0
    %5426 = vmatprep.subr.mxu0 0.0
    %5427 = vmatpush1.msra.mxu0 0.0
    %5428 = vmatprep.mubr.f32.mxu0 0.0
    %5429 = vmatmul.mubr.f32.gmra.mrb[0].mxu0 %v5362
    %v5430 = vpop.f32.mrb[0].mxu0
    %v5431 = vadd.f32 %v5358, %v5430
    %v5432 = vpop.f32.mrb[0].mxu0
    %5433 = vdwg.mxu0
    %v5434 = vadd.f32 %v5431, %v417
    %vm5435 = vcmp.gt.f32.partialorder %v5434, 0.0
    %v5436 = vmin.f32 %v5434, 0.0
    %v5437 = vmul.f32 %v5436, 1.442695
    %v5438 = vpow.pop %v5437
    %v5439 = vsub.f32 %v5438, 1.0
    %v5440 = vsel %vm5435, %v5434, %v5439
    %v5442 = vsel %vm622, %v5440, 0
    %5444 = vmatprep.subr.mxu0 0.0
    %5445 = vmatpush1.msra.mxu0 %v418
    %5446 = vmatprep.subr.mxu0 0.0
    %5447 = vmatpush1.msra.mxu0 %v419
    %5448 = vmatprep.subr.mxu0 0.0
    %5449 = vmatpush1.msra.mxu0 %v420
    %5450 = vmatprep.subr.mxu0 0.0
    %5451 = vmatpush1.msra.mxu0 %v421
    %5452 = vmatprep.subr.mxu0 0.0
    %5453 = vmatpush1.msra.mxu0 0.0
    %5454 = vmatprep.subr.mxu0 0.0
    %5455 = vmatpush1.msra.mxu0 0.0
    %5456 = vmatprep.subr.mxu0 0.0
    %5457 = vmatpush1.msra.mxu0 0.0
    %5458 = vmatprep.subr.mxu0 0.0
    %5459 = vmatpush1.msra.mxu0 0.0
    %5460 = vmatprep.subr.mxu0 0.0
    %5461 = vmatpush1.msra.mxu0 0.0
    %5462 = vmatprep.subr.mxu0 0.0
    %5463 = vmatpush1.msra.mxu0 0.0
    %5464 = vmatprep.subr.mxu0 0.0
    %5465 = vmatpush1.msra.mxu0 0.0
    %5466 = vmatprep.subr.mxu0 0.0
    %5467 = vmatpush1.msra.mxu0 0.0
    %5468 = vmatprep.subr.mxu0 0.0
    %5469 = vmatpush1.msra.mxu0 0.0
    %5470 = vmatprep.subr.mxu0 0.0
    %5471 = vmatpush1.msra.mxu0 0.0
    %5472 = vmatprep.subr.mxu0 0.0
    %5473 = vmatpush1.msra.mxu0 0.0
    %5474 = vmatprep.subr.mxu0 0.0
    %5475 = vmatpush1.msra.mxu0 0.0
    %5476 = vmatprep.subr.mxu0 0.0
    %5477 = vmatpush1.msra.mxu0 0.0
    %5478 = vmatprep.subr.mxu0 0.0
    %5479 = vmatpush1.msra.mxu0 0.0
    %5480 = vmatprep.subr.mxu0 0.0
    %5481 = vmatpush1.msra.mxu0 0.0
    %5482 = vmatprep.subr.mxu0 0.0
    %5483 = vmatpush1.msra.mxu0 0.0
    %5484 = vmatprep.subr.mxu0 0.0
    %5485 = vmatpush1.msra.mxu0 0.0
    %5486 = vmatprep.subr.mxu0 0.0
    %5487 = vmatpush1.msra.mxu0 0.0
    %5488 = vmatprep.subr.mxu0 0.0
    %5489 = vmatpush1.msra.mxu0 0.0
    %5490 = vmatprep.subr.mxu0 0.0
    %5491 = vmatpush1.msra.mxu0 0.0
    %5492 = vmatprep.subr.mxu0 0.0
    %5493 = vmatpush1.msra.mxu0 0.0
    %5494 = vmatprep.subr.mxu0 0.0
    %5495 = vmatpush1.msra.mxu0 0.0
    %5496 = vmatprep.subr.mxu0 0.0
    %5497 = vmatpush1.msra.mxu0 0.0
    %5498 = vmatprep.subr.mxu0 0.0
    %5499 = vmatpush1.msra.mxu0 0.0
    %5500 = vmatprep.subr.mxu0 0.0
    %5501 = vmatpush1.msra.mxu0 0.0
    %5502 = vmatprep.subr.mxu0 0.0
    %5503 = vmatpush1.msra.mxu0 0.0
    %5504 = vmatprep.subr.mxu0 0.0
    %5505 = vmatpush1.msra.mxu0 0.0
    %5506 = vmatprep.subr.mxu0 0.0
    %5507 = vmatpush1.msra.mxu0 0.0
    %5508 = vmatprep.mubr.f32.mxu0 0.0
    %5509 = vmatmul.mubr.f32.gmra.mrb[0].mxu0 %v5442
    %v5510 = vpop.f32.mrb[0].mxu0
    %v5511 = vadd.f32 %v426, %v5510
    %v5512 = vpop.f32.mrb[0].mxu0
    %5513 = vdwg.mxu0
    %5514 = vmatprep.subr.mxu0 0.0
    %5515 = vmatpush1.msra.mxu0 %v422
    %5516 = vmatprep.subr.mxu0 0.0
    %5517 = vmatpush1.msra.mxu0 %v423
    %5518 = vmatprep.subr.mxu0 0.0
    %5519 = vmatpush1.msra.mxu0 %v424
    %5520 = vmatprep.subr.mxu0 0.0
    %5521 = vmatpush1.msra.mxu0 %v425
    %5522 = vmatprep.subr.mxu0 0.0
    %5523 = vmatpush1.msra.mxu0 0.0
    %5524 = vmatprep.subr.mxu0 0.0
    %5525 = vmatpush1.msra.mxu0 0.0
    %5526 = vmatprep.subr.mxu0 0.0
    %5527 = vmatpush1.msra.mxu0 0.0
    %5528 = vmatprep.subr.mxu0 0.0
    %5529 = vmatpush1.msra.mxu0 0.0
    %5530 = vmatprep.subr.mxu0 0.0
    %5531 = vmatpush1.msra.mxu0 0.0
    %5532 = vmatprep.subr.mxu0 0.0
    %5533 = vmatpush1.msra.mxu0 0.0
    %5534 = vmatprep.subr.mxu0 0.0
    %5535 = vmatpush1.msra.mxu0 0.0
    %5536 = vmatprep.subr.mxu0 0.0
    %5537 = vmatpush1.msra.mxu0 0.0
    %5538 = vmatprep.subr.mxu0 0.0
    %5539 = vmatpush1.msra.mxu0 0.0
    %5540 = vmatprep.subr.mxu0 0.0
    %5541 = vmatpush1.msra.mxu0 0.0
    %5542 = vmatprep.subr.mxu0 0.0
    %5543 = vmatpush1.msra.mxu0 0.0
    %5544 = vmatprep.subr.mxu0 0.0
    %5545 = vmatpush1.msra.mxu0 0.0
    %5546 = vmatprep.subr.mxu0 0.0
    %5547 = vmatpush1.msra.mxu0 0.0
    %5548 = vmatprep.subr.mxu0 0.0
    %5549 = vmatpush1.msra.mxu0 0.0
    %5550 = vmatprep.subr.mxu0 0.0
    %5551 = vmatpush1.msra.mxu0 0.0
    %5552 = vmatprep.subr.mxu0 0.0
    %5553 = vmatpush1.msra.mxu0 0.0
    %5554 = vmatprep.subr.mxu0 0.0
    %5555 = vmatpush1.msra.mxu0 0.0
    %5556 = vmatprep.subr.mxu0 0.0
    %5557 = vmatpush1.msra.mxu0 0.0
    %5558 = vmatprep.subr.mxu0 0.0
    %5559 = vmatpush1.msra.mxu0 0.0
    %5560 = vmatprep.subr.mxu0 0.0
    %5561 = vmatpush1.msra.mxu0 0.0
    %5562 = vmatprep.subr.mxu0 0.0
    %5563 = vmatpush1.msra.mxu0 0.0
    %5564 = vmatprep.subr.mxu0 0.0
    %5565 = vmatpush1.msra.mxu0 0.0
    %5566 = vmatprep.subr.mxu0 0.0
    %5567 = vmatpush1.msra.mxu0 0.0
    %5568 = vmatprep.subr.mxu0 0.0
    %5569 = vmatpush1.msra.mxu0 0.0
    %5570 = vmatprep.subr.mxu0 0.0
    %5571 = vmatpush1.msra.mxu0 0.0
    %5572 = vmatprep.subr.mxu0 0.0
    %5573 = vmatpush1.msra.mxu0 0.0
    %5574 = vmatprep.subr.mxu0 0.0
    %5575 = vmatpush1.msra.mxu0 0.0
    %5576 = vmatprep.subr.mxu0 0.0
    %5577 = vmatpush1.msra.mxu0 0.0
    %5578 = vmatprep.mubr.f32.mxu0 0.0
    %5579 = vmatmul.mubr.f32.gmra.mrb[0].mxu0 %v4838
    %v5580 = vpop.f32.mrb[0].mxu0
    %v5581 = vadd.f32 %v427, %v5580
    %v5582 = vpop.f32.mrb[0].mxu0
    %5583 = vdwg.mxu0
    %v5584 = vadd.f32 %v5511, %v5581
    %v5585 = vsub.f32 0.0, %v5584
    %v5586 = vmul.f32 %v5585, 1.442695
    %v5587 = vpow.pop %v5586
    %v5588 = vadd.f32 %v5587, 1.0
    %v5589 = vrcp.pop %v5588
    %v5590 = vmul.f32 1.0, %v5589
    %5592 = vrot.lane.b32.xlu0 %v5581, 64
    %v5593 = vpop.permute.xlu0 %5592
    %v5595 = vmul.f32 %v5590, %v5593
    %5597 = vrot.lane.b32.xlu0 %v5595, 64
    %v5598 = vpop.permute.xlu0 %5597
    %v5600 = vadd.f32 %v5511, %v5598
    %v5601 = vtanh.pop %v5600
    %v5602 = vsub.f32 1.0, %v5590
    %5604 = vrot.lane.b32.xlu0 %v5601, 96
    %v5605 = vpop.permute.xlu0 %5604
    %v5607 = vmul.f32 %v5602, %v5605
    %v5608 = vmul.f32 %v5590, %v4834
    %v5609 = vadd.f32 %v5607, %v5608
    %5611 = vrot.lane.b32.xlu0 %v5609, 96
    %v5612 = vpop.permute.xlu0 %5611
    %v5614 = vsel %vm622, %v5612, 0.0
    %5615 = vadd.xlane.f32.xlu0 %v5614
    %v5616 = vpop.xlane.xlu0 %5615
    %v5617 = vmul.f32 %v5616, %v805
    %v5618 = vsub.f32 %v5609, %v5617
    %v5619 = vmul.f32 %v5618, %v5618
    %5621 = vrot.lane.b32.xlu0 %v5619, 96
    %v5622 = vpop.permute.xlu0 %5621
    %v5624 = vsel %vm622, %v5622, 0.0
    %5625 = vadd.xlane.f32.xlu0 %v5624
    %v5626 = vpop.xlane.xlu0 %5625
    %v5627 = vmul.f32 %v5626, %v805
    %v5628 = vadd.f32 %v5627, 1e-05
    %v5629 = vrsqrt.pop %v5628
    %v5630 = vmul.f32 %v5618, %v5629
    %v5631 = vmul.f32 %v5630, %v822
    %v5632 = vadd.f32 %v5631, %v827
    %5634 = vrot.lane.b32.xlu0 %v5632, 96
    %v5635 = vpop.permute.xlu0 %5634
    %v5636 = vsel %vm622, %v5635, 0
    %5638 = vmatprep.subr.mxu0 0.0
    %5639 = vmatpush1.msra.mxu0 %v430
    %5640 = vmatprep.subr.mxu0 0.0
    %5641 = vmatpush1.msra.mxu0 %v431
    %5642 = vmatprep.subr.mxu0 0.0
    %5643 = vmatpush1.msra.mxu0 %v432
    %5644 = vmatprep.subr.mxu0 0.0
    %5645 = vmatpush1.msra.mxu0 %v433
    %5646 = vmatprep.subr.mxu0 0.0
    %5647 = vmatpush1.msra.mxu0 0.0
    %5648 = vmatprep.subr.mxu0 0.0
    %5649 = vmatpush1.msra.mxu0 0.0
    %5650 = vmatprep.subr.mxu0 0.0
    %5651 = vmatpush1.msra.mxu0 0.0
    %5652 = vmatprep.subr.mxu0 0.0
    %5653 = vmatpush1.msra.mxu0 0.0
    %5654 = vmatprep.subr.mxu0 0.0
    %5655 = vmatpush1.msra.mxu0 0.0
    %5656 = vmatprep.subr.mxu0 0.0
    %5657 = vmatpush1.msra.mxu0 0.0
    %5658 = vmatprep.subr.mxu0 0.0
    %5659 = vmatpush1.msra.mxu0 0.0
    %5660 = vmatprep.subr.mxu0 0.0
    %5661 = vmatpush1.msra.mxu0 0.0
    %5662 = vmatprep.subr.mxu0 0.0
    %5663 = vmatpush1.msra.mxu0 0.0
    %5664 = vmatprep.subr.mxu0 0.0
    %5665 = vmatpush1.msra.mxu0 0.0
    %5666 = vmatprep.subr.mxu0 0.0
    %5667 = vmatpush1.msra.mxu0 0.0
    %5668 = vmatprep.subr.mxu0 0.0
    %5669 = vmatpush1.msra.mxu0 0.0
    %5670 = vmatprep.subr.mxu0 0.0
    %5671 = vmatpush1.msra.mxu0 0.0
    %5672 = vmatprep.subr.mxu0 0.0
    %5673 = vmatpush1.msra.mxu0 0.0
    %5674 = vmatprep.subr.mxu0 0.0
    %5675 = vmatpush1.msra.mxu0 0.0
    %5676 = vmatprep.subr.mxu0 0.0
    %5677 = vmatpush1.msra.mxu0 0.0
    %5678 = vmatprep.subr.mxu0 0.0
    %5679 = vmatpush1.msra.mxu0 0.0
    %5680 = vmatprep.subr.mxu0 0.0
    %5681 = vmatpush1.msra.mxu0 0.0
    %5682 = vmatprep.subr.mxu0 0.0
    %5683 = vmatpush1.msra.mxu0 0.0
    %5684 = vmatprep.subr.mxu0 0.0
    %5685 = vmatpush1.msra.mxu0 0.0
    %5686 = vmatprep.subr.mxu0 0.0
    %5687 = vmatpush1.msra.mxu0 0.0
    %5688 = vmatprep.subr.mxu0 0.0
    %5689 = vmatpush1.msra.mxu0 0.0
    %5690 = vmatprep.subr.mxu0 0.0
    %5691 = vmatpush1.msra.mxu0 0.0
    %5692 = vmatprep.subr.mxu0 0.0
    %5693 = vmatpush1.msra.mxu0 0.0
    %5694 = vmatprep.subr.mxu0 0.0
    %5695 = vmatpush1.msra.mxu0 0.0
    %5696 = vmatprep.subr.mxu0 0.0
    %5697 = vmatpush1.msra.mxu0 0.0
    %5698 = vmatprep.subr.mxu0 0.0
    %5699 = vmatpush1.msra.mxu0 0.0
    %5700 = vmatprep.subr.mxu0 0.0
    %5701 = vmatpush1.msra.mxu0 0.0
    %5702 = vmatprep.mubr.f32.mxu0 0.0
    %5703 = vmatmul.mubr.f32.gmra.mrb[0].mxu0 %v5636
    %v5704 = vpop.f32.mrb[0].mxu0
    %v5705 = vadd.f32 0.0, %v5704
    %v5706 = vpop.f32.mrb[0].mxu0
    %5707 = vdwg.mxu0
    %v5708 = vadd.f32 %v5705, %v438
    %vm5709 = vcmp.gt.f32.partialorder %v5708, 0.0
    %v5710 = vmin.f32 %v5708, 0.0
    %v5711 = vmul.f32 %v5710, 1.442695
    %v5712 = vpow.pop %v5711
    %v5713 = vsub.f32 %v5712, 1.0
    %v5714 = vsel %vm5709, %v5708, %v5713
    %v5715 = vsel %vm622, %v5714, 0.0
    %5716 = vadd.xlane.f32.xlu0 %v5715
    %v5717 = vpop.xlane.xlu0 %5716
    %v5718 = vmul.f32 %v5717, %v805
    %v5719 = vsub.f32 %v5714, %v5718
    %v5720 = vmul.f32 %v5719, %v5719
    %v5721 = vsel %vm622, %v5720, 0.0
    %5722 = vadd.xlane.f32.xlu0 %v5721
    %v5723 = vpop.xlane.xlu0 %5722
    %v5724 = vmul.f32 %v5723, %v805
    %v5725 = vadd.f32 %v5724, 1e-05
    %v5726 = vrsqrt.pop %v5725
    %v5727 = vmul.f32 %v5719, %v5726
    %v5728 = vmul.f32 %v5727, %v440
    %v5729 = vadd.f32 %v5728, %v441
    %v5731 = vsel %vm622, %v5284, 0
    %5733 = vmatprep.subr.mxu0 0.0
    %5734 = vmatpush1.msra.mxu0 %v434
    %5735 = vmatprep.subr.mxu0 0.0
    %5736 = vmatpush1.msra.mxu0 %v435
    %5737 = vmatprep.subr.mxu0 0.0
    %5738 = vmatpush1.msra.mxu0 %v436
    %5739 = vmatprep.subr.mxu0 0.0
    %5740 = vmatpush1.msra.mxu0 %v437
    %5741 = vmatprep.subr.mxu0 0.0
    %5742 = vmatpush1.msra.mxu0 0.0
    %5743 = vmatprep.subr.mxu0 0.0
    %5744 = vmatpush1.msra.mxu0 0.0
    %5745 = vmatprep.subr.mxu0 0.0
    %5746 = vmatpush1.msra.mxu0 0.0
    %5747 = vmatprep.subr.mxu0 0.0
    %5748 = vmatpush1.msra.mxu0 0.0
    %5749 = vmatprep.subr.mxu0 0.0
    %5750 = vmatpush1.msra.mxu0 0.0
    %5751 = vmatprep.subr.mxu0 0.0
    %5752 = vmatpush1.msra.mxu0 0.0
    %5753 = vmatprep.subr.mxu0 0.0
    %5754 = vmatpush1.msra.mxu0 0.0
    %5755 = vmatprep.subr.mxu0 0.0
    %5756 = vmatpush1.msra.mxu0 0.0
    %5757 = vmatprep.subr.mxu0 0.0
    %5758 = vmatpush1.msra.mxu0 0.0
    %5759 = vmatprep.subr.mxu0 0.0
    %5760 = vmatpush1.msra.mxu0 0.0
    %5761 = vmatprep.subr.mxu0 0.0
    %5762 = vmatpush1.msra.mxu0 0.0
    %5763 = vmatprep.subr.mxu0 0.0
    %5764 = vmatpush1.msra.mxu0 0.0
    %5765 = vmatprep.subr.mxu0 0.0
    %5766 = vmatpush1.msra.mxu0 0.0
    %5767 = vmatprep.subr.mxu0 0.0
    %5768 = vmatpush1.msra.mxu0 0.0
    %5769 = vmatprep.subr.mxu0 0.0
    %5770 = vmatpush1.msra.mxu0 0.0
    %5771 = vmatprep.subr.mxu0 0.0
    %5772 = vmatpush1.msra.mxu0 0.0
    %5773 = vmatprep.subr.mxu0 0.0
    %5774 = vmatpush1.msra.mxu0 0.0
    %5775 = vmatprep.subr.mxu0 0.0
    %5776 = vmatpush1.msra.mxu0 0.0
    %5777 = vmatprep.subr.mxu0 0.0
    %5778 = vmatpush1.msra.mxu0 0.0
    %5779 = vmatprep.subr.mxu0 0.0
    %5780 = vmatpush1.msra.mxu0 0.0
    %5781 = vmatprep.subr.mxu0 0.0
    %5782 = vmatpush1.msra.mxu0 0.0
    %5783 = vmatprep.subr.mxu0 0.0
    %5784 = vmatpush1.msra.mxu0 0.0
    %5785 = vmatprep.subr.mxu0 0.0
    %5786 = vmatpush1.msra.mxu0 0.0
    %5787 = vmatprep.subr.mxu0 0.0
    %5788 = vmatpush1.msra.mxu0 0.0
    %5789 = vmatprep.subr.mxu0 0.0
    %5790 = vmatpush1.msra.mxu0 0.0
    %5791 = vmatprep.subr.mxu0 0.0
    %5792 = vmatpush1.msra.mxu0 0.0
    %5793 = vmatprep.subr.mxu0 0.0
    %5794 = vmatpush1.msra.mxu0 0.0
    %5795 = vmatprep.subr.mxu0 0.0
    %5796 = vmatpush1.msra.mxu0 0.0
    %5797 = vmatprep.mubr.f32.mxu0 0.0
    %5798 = vmatmul.mubr.f32.gmra.mrb[0].mxu0 %v5731
    %v5799 = vpop.f32.mrb[0].mxu0
    %v5800 = vadd.f32 0.0, %v5799
    %v5801 = vpop.f32.mrb[0].mxu0
    %5802 = vdwg.mxu0
    %5804 = vrot.lane.b32.xlu0 %v5800, 32
    %v5805 = vpop.permute.xlu0 %5804
    %v5807 = vadd.f32 %v5705, %v5805
    %v5808 = vadd.f32 %v5807, %v1007
    %vm5809 = vcmp.gt.f32.partialorder %v5808, 0.0
    %v5810 = vmin.f32 %v5808, 0.0
    %v5811 = vmul.f32 %v5810, 1.442695
    %v5812 = vpow.pop %v5811
    %v5813 = vsub.f32 %v5812, 1.0
    %v5814 = vsel %vm5809, %v5808, %v5813
    %5816 = vrot.lane.b32.xlu0 %v5814, 96
    %v5817 = vpop.permute.xlu0 %5816
    %v5819 = vsel %vm622, %v5817, 0.0
    %5820 = vadd.xlane.f32.xlu0 %v5819
    %v5821 = vpop.xlane.xlu0 %5820
    %v5822 = vmul.f32 %v5821, %v805
    %v5823 = vsub.f32 %v5814, %v5822
    %v5824 = vmul.f32 %v5823, %v5823
    %5826 = vrot.lane.b32.xlu0 %v5824, 96
    %v5827 = vpop.permute.xlu0 %5826
    %v5829 = vsel %vm622, %v5827, 0.0
    %5830 = vadd.xlane.f32.xlu0 %v5829
    %v5831 = vpop.xlane.xlu0 %5830
    %v5832 = vmul.f32 %v5831, %v805
    %v5833 = vadd.f32 %v5832, 1e-05
    %v5834 = vrsqrt.pop %v5833
    %v5835 = vmul.f32 %v5823, %v5834
    %v5836 = vmul.f32 %v5835, %v1039
    %v5837 = vadd.f32 %v5836, %v1044
    %v5839 = vsel %vm622, %v5729, 0
    %5841 = vmatprep.subr.mxu0 0.0
    %5842 = vmatpush1.msra.mxu0 %v444
    %5843 = vmatprep.subr.mxu0 0.0
    %5844 = vmatpush1.msra.mxu0 %v445
    %5845 = vmatprep.subr.mxu0 0.0
    %5846 = vmatpush1.msra.mxu0 %v446
    %5847 = vmatprep.subr.mxu0 0.0
    %5848 = vmatpush1.msra.mxu0 %v447
    %5849 = vmatprep.subr.mxu0 0.0
    %5850 = vmatpush1.msra.mxu0 0.0
    %5851 = vmatprep.subr.mxu0 0.0
    %5852 = vmatpush1.msra.mxu0 0.0
    %5853 = vmatprep.subr.mxu0 0.0
    %5854 = vmatpush1.msra.mxu0 0.0
    %5855 = vmatprep.subr.mxu0 0.0
    %5856 = vmatpush1.msra.mxu0 0.0
    %5857 = vmatprep.subr.mxu0 0.0
    %5858 = vmatpush1.msra.mxu0 0.0
    %5859 = vmatprep.subr.mxu0 0.0
    %5860 = vmatpush1.msra.mxu0 0.0
    %5861 = vmatprep.subr.mxu0 0.0
    %5862 = vmatpush1.msra.mxu0 0.0
    %5863 = vmatprep.subr.mxu0 0.0
    %5864 = vmatpush1.msra.mxu0 0.0
    %5865 = vmatprep.subr.mxu0 0.0
    %5866 = vmatpush1.msra.mxu0 0.0
    %5867 = vmatprep.subr.mxu0 0.0
    %5868 = vmatpush1.msra.mxu0 0.0
    %5869 = vmatprep.subr.mxu0 0.0
    %5870 = vmatpush1.msra.mxu0 0.0
    %5871 = vmatprep.subr.mxu0 0.0
    %5872 = vmatpush1.msra.mxu0 0.0
    %5873 = vmatprep.subr.mxu0 0.0
    %5874 = vmatpush1.msra.mxu0 0.0
    %5875 = vmatprep.subr.mxu0 0.0
    %5876 = vmatpush1.msra.mxu0 0.0
    %5877 = vmatprep.subr.mxu0 0.0
    %5878 = vmatpush1.msra.mxu0 0.0
    %5879 = vmatprep.subr.mxu0 0.0
    %5880 = vmatpush1.msra.mxu0 0.0
    %5881 = vmatprep.subr.mxu0 0.0
    %5882 = vmatpush1.msra.mxu0 0.0
    %5883 = vmatprep.subr.mxu0 0.0
    %5884 = vmatpush1.msra.mxu0 0.0
    %5885 = vmatprep.subr.mxu0 0.0
    %5886 = vmatpush1.msra.mxu0 0.0
    %5887 = vmatprep.subr.mxu0 0.0
    %5888 = vmatpush1.msra.mxu0 0.0
    %5889 = vmatprep.subr.mxu0 0.0
    %5890 = vmatpush1.msra.mxu0 0.0
    %5891 = vmatprep.subr.mxu0 0.0
    %5892 = vmatpush1.msra.mxu0 0.0
    %5893 = vmatprep.subr.mxu0 0.0
    %5894 = vmatpush1.msra.mxu0 0.0
    %5895 = vmatprep.subr.mxu0 0.0
    %5896 = vmatpush1.msra.mxu0 0.0
    %5897 = vmatprep.subr.mxu0 0.0
    %5898 = vmatpush1.msra.mxu0 0.0
    %5899 = vmatprep.subr.mxu0 0.0
    %5900 = vmatpush1.msra.mxu0 0.0
    %5901 = vmatprep.subr.mxu0 0.0
    %5902 = vmatpush1.msra.mxu0 0.0
    %5903 = vmatprep.subr.mxu0 0.0
    %5904 = vmatpush1.msra.mxu0 0.0
    %5905 = vmatprep.mubr.f32.mxu0 0.0
    %5906 = vmatmul.mubr.f32.gmra.mrb[0].mxu0 %v5839
    %v5907 = vpop.f32.mrb[0].mxu0
    %v5908 = vadd.f32 %v448, %v5907
    %v5909 = vpop.f32.mrb[0].mxu0
    %5910 = vdwg.mxu0
    %v5911 = vmax.f32 %v5908, 0.0
    %v5912 = vand.u32 2147483647, %v5908
    %v5913 = vsub.f32 0.0, %v5912
    %v5914 = vmul.f32 %v5913, 1.442695
    %v5915 = vpow.pop %v5914
    %v5916 = vadd.f32 %v5915, 1.0
    %v5917 = vlog2.pop %v5916
    %v5918 = vmul.f32 %v5917, 0.6931472
    %v5919 = vadd.f32 %v5911, %v5918
    %v5920 = vadd.f32 %v5919, 0.1
    %v5921 = vsel %vm460, %v5908, %v5920
    %5923 = vrot.lane.b32.xlu0 %v5286, 16
    %v5924 = vpop.permute.xlu0 %5923
    %v5926 = vmul.f32 %v5920, %v5924
    %5928 = vrot.lane.b32.xlu0 %v5926, 112
    %v5929 = vpop.permute.xlu0 %5928
    %v5931 = vadd.f32 %v5908, %v5929
    %v5932 = vsel %vm467, %v5931, 0.0
    %5933 = vadd.xlane.f32.xlu0 %v5932
    %v5934 = vpop.xlane.xlu0 %5933
    %v5935 = vmul.f32 %v5934, %v1144
    %v5936 = vsub.f32 %v5931, %v5935
    %v5937 = vmul.f32 %v5936, %v5936
    %v5938 = vsel %vm467, %v5937, 0.0
    %5939 = vadd.xlane.f32.xlu0 %v5938
    %v5940 = vpop.xlane.xlu0 %5939
    %v5941 = vmul.f32 %v5940, %v1144
    %v5942 = vadd.f32 %v5941, 1e-05
    %v5943 = vrsqrt.pop %v5942
    %v5944 = vmul.f32 %v5936, %v5943
    %v5945 = vmul.f32 %v5944, %v454
    %v5946 = vadd.f32 %v5945, %v455
    %5948 = vrot.lane.b32.xlu0 %v5837, 96
    %v5949 = vpop.permute.xlu0 %5948
    %v5950 = vsel %vm622, %v5949, 0
    %5952 = vmatprep.subr.mxu0 0.0
    %5953 = vmatpush1.msra.mxu0 %v449
    %5954 = vmatprep.subr.mxu0 0.0
    %5955 = vmatpush1.msra.mxu0 %v450
    %5956 = vmatprep.subr.mxu0 0.0
    %5957 = vmatpush1.msra.mxu0 %v451
    %5958 = vmatprep.subr.mxu0 0.0
    %5959 = vmatpush1.msra.mxu0 %v452
    %5960 = vmatprep.subr.mxu0 0.0
    %5961 = vmatpush1.msra.mxu0 0.0
    %5962 = vmatprep.subr.mxu0 0.0
    %5963 = vmatpush1.msra.mxu0 0.0
    %5964 = vmatprep.subr.mxu0 0.0
    %5965 = vmatpush1.msra.mxu0 0.0
    %5966 = vmatprep.subr.mxu0 0.0
    %5967 = vmatpush1.msra.mxu0 0.0
    %5968 = vmatprep.subr.mxu0 0.0
    %5969 = vmatpush1.msra.mxu0 0.0
    %5970 = vmatprep.subr.mxu0 0.0
    %5971 = vmatpush1.msra.mxu0 0.0
    %5972 = vmatprep.subr.mxu0 0.0
    %5973 = vmatpush1.msra.mxu0 0.0
    %5974 = vmatprep.subr.mxu0 0.0
    %5975 = vmatpush1.msra.mxu0 0.0
    %5976 = vmatprep.subr.mxu0 0.0
    %5977 = vmatpush1.msra.mxu0 0.0
    %5978 = vmatprep.subr.mxu0 0.0
    %5979 = vmatpush1.msra.mxu0 0.0
    %5980 = vmatprep.subr.mxu0 0.0
    %5981 = vmatpush1.msra.mxu0 0.0
    %5982 = vmatprep.subr.mxu0 0.0
    %5983 = vmatpush1.msra.mxu0 0.0
    %5984 = vmatprep.subr.mxu0 0.0
    %5985 = vmatpush1.msra.mxu0 0.0
    %5986 = vmatprep.subr.mxu0 0.0
    %5987 = vmatpush1.msra.mxu0 0.0
    %5988 = vmatprep.subr.mxu0 0.0
    %5989 = vmatpush1.msra.mxu0 0.0
    %5990 = vmatprep.subr.mxu0 0.0
    %5991 = vmatpush1.msra.mxu0 0.0
    %5992 = vmatprep.subr.mxu0 0.0
    %5993 = vmatpush1.msra.mxu0 0.0
    %5994 = vmatprep.subr.mxu0 0.0
    %5995 = vmatpush1.msra.mxu0 0.0
    %5996 = vmatprep.subr.mxu0 0.0
    %5997 = vmatpush1.msra.mxu0 0.0
    %5998 = vmatprep.subr.mxu0 0.0
    %5999 = vmatpush1.msra.mxu0 0.0
    %6000 = vmatprep.subr.mxu0 0.0
    %6001 = vmatpush1.msra.mxu0 0.0
    %6002 = vmatprep.subr.mxu0 0.0
    %6003 = vmatpush1.msra.mxu0 0.0
    %6004 = vmatprep.subr.mxu0 0.0
    %6005 = vmatpush1.msra.mxu0 0.0
    %6006 = vmatprep.subr.mxu0 0.0
    %6007 = vmatpush1.msra.mxu0 0.0
    %6008 = vmatprep.subr.mxu0 0.0
    %6009 = vmatpush1.msra.mxu0 0.0
    %6010 = vmatprep.subr.mxu0 0.0
    %6011 = vmatpush1.msra.mxu0 0.0
    %6012 = vmatprep.subr.mxu0 0.0
    %6013 = vmatpush1.msra.mxu0 0.0
    %6014 = vmatprep.subr.mxu0 0.0
    %6015 = vmatpush1.msra.mxu0 0.0
    %6016 = vmatprep.mubr.f32.mxu0 0.0
    %6017 = vmatmul.mubr.f32.gmra.mrb[0].mxu0 %v5950
    %v6018 = vpop.f32.mrb[0].mxu0
    %v6019 = vadd.f32 %v453, %v6018
    %v6020 = vpop.f32.mrb[0].mxu0
    %6021 = vdwg.mxu0
    %v6022 = vmax.f32 %v6019, 0.0
    %v6023 = vand.u32 2147483647, %v6019
    %v6024 = vsub.f32 0.0, %v6023
    %v6025 = vmul.f32 %v6024, 1.442695
    %v6026 = vpow.pop %v6025
    %v6027 = vadd.f32 %v6026, 1.0
    %v6028 = vlog2.pop %v6027
    %v6029 = vmul.f32 %v6028, 0.6931472
    %v6030 = vadd.f32 %v6022, %v6029
    %v6031 = vadd.f32 %v6030, 0.1
    %v6032 = vsel %vm460, %v6019, %v6031
    %6034 = vrot.lane.b32.xlu0 %v5288, 16
    %v6035 = vpop.permute.xlu0 %6034
    %v6037 = vmul.f32 %v6031, %v6035
    %6039 = vrot.lane.b32.xlu0 %v6037, 112
    %v6040 = vpop.permute.xlu0 %6039
    %v6042 = vadd.f32 %v6019, %v6040
    %v6043 = vsel %vm467, %v6042, 0.0
    %6044 = vadd.xlane.f32.xlu0 %v6043
    %v6045 = vpop.xlane.xlu0 %6044
    %v6046 = vmul.f32 %v6045, %v1144
    %v6047 = vsub.f32 %v6042, %v6046
    %v6048 = vmul.f32 %v6047, %v6047
    %v6049 = vsel %vm467, %v6048, 0.0
    %6050 = vadd.xlane.f32.xlu0 %v6049
    %v6051 = vpop.xlane.xlu0 %6050
    %v6052 = vmul.f32 %v6051, %v1144
    %v6053 = vadd.f32 %v6052, 1e-05
    %v6054 = vrsqrt.pop %v6053
    %v6055 = vmul.f32 %v6047, %v6054
    %v6056 = vmul.f32 %v6055, %v456
    %v6057 = vadd.f32 %v6056, %v457
    %6059 = vrot.lane.b32.xlu0 %v5946, 32
    %v6060 = vpop.permute.xlu0 %6059
    %6063 = vrot.lane.b32.xlu0 %v6032, 48
    %v6064 = vpop.permute.xlu0 %6063
    %6067 = vrot.lane.b32.xlu0 %v6057, 80
    %v6068 = vpop.permute.xlu0 %6067
    %6070 = vrot.lane.b32.xlu0 %v5632, 64
    %v6071 = vpop.permute.xlu0 %6070
    %v6073 = vsel %vm622, %v5921, %v6060
    %v6074 = vsel %vm1284, %v6073, %v6064
    %v6075 = vsel %vm1286, %v6074, %v6068
    %v6076 = vsel %vm1288, %v6075, %v6071
    %s6077 = scalar_lea.vmem [#allocation38], 48
    %6078 = vst [vmem:[%s6077] sm:$0xff] %v6076
    %s6079 = scalar_lea.vmem [#allocation2], 56
    %v6080 = vld [vmem:[%s6079] sm:$0xff]
    %s6081 = scalar_lea.vmem [#allocation5], 56
    %v6082 = vld [vmem:[%s6081] sm:$0xff]
    %s6083 = scalar_lea.vmem [#allocation7], 56
    %v6084 = vld [vmem:[%s6083] sm:$0xff]
    %s6085 = scalar_lea.vmem [#allocation8], 56
    %v6086 = vld [vmem:[%s6085] sm:$0xff]
    %v6087 = vsel %vm467, %v6057, 0
    %6089 = vmatprep.subr.mxu0 0.0
    %6090 = vmatpush1.msra.mxu0 %v415
    %6091 = vmatprep.subr.mxu0 0.0
    %6092 = vmatpush1.msra.mxu0 %v416
    %6093 = vmatprep.subr.mxu0 0.0
    %6094 = vmatpush1.msra.mxu0 0.0
    %6095 = vmatprep.subr.mxu0 0.0
    %6096 = vmatpush1.msra.mxu0 0.0
    %6097 = vmatprep.subr.mxu0 0.0
    %6098 = vmatpush1.msra.mxu0 0.0
    %6099 = vmatprep.subr.mxu0 0.0
    %6100 = vmatpush1.msra.mxu0 0.0
    %6101 = vmatprep.subr.mxu0 0.0
    %6102 = vmatpush1.msra.mxu0 0.0
    %6103 = vmatprep.subr.mxu0 0.0
    %6104 = vmatpush1.msra.mxu0 0.0
    %6105 = vmatprep.subr.mxu0 0.0
    %6106 = vmatpush1.msra.mxu0 0.0
    %6107 = vmatprep.subr.mxu0 0.0
    %6108 = vmatpush1.msra.mxu0 0.0
    %6109 = vmatprep.subr.mxu0 0.0
    %6110 = vmatpush1.msra.mxu0 0.0
    %6111 = vmatprep.subr.mxu0 0.0
    %6112 = vmatpush1.msra.mxu0 0.0
    %6113 = vmatprep.subr.mxu0 0.0
    %6114 = vmatpush1.msra.mxu0 0.0
    %6115 = vmatprep.subr.mxu0 0.0
    %6116 = vmatpush1.msra.mxu0 0.0
    %6117 = vmatprep.subr.mxu0 0.0
    %6118 = vmatpush1.msra.mxu0 0.0
    %6119 = vmatprep.subr.mxu0 0.0
    %6120 = vmatpush1.msra.mxu0 0.0
    %6121 = vmatprep.subr.mxu0 0.0
    %6122 = vmatpush1.msra.mxu0 0.0
    %6123 = vmatprep.subr.mxu0 0.0
    %6124 = vmatpush1.msra.mxu0 0.0
    %6125 = vmatprep.subr.mxu0 0.0
    %6126 = vmatpush1.msra.mxu0 0.0
    %6127 = vmatprep.subr.mxu0 0.0
    %6128 = vmatpush1.msra.mxu0 0.0
    %6129 = vmatprep.subr.mxu0 0.0
    %6130 = vmatpush1.msra.mxu0 0.0
    %6131 = vmatprep.subr.mxu0 0.0
    %6132 = vmatpush1.msra.mxu0 0.0
    %6133 = vmatprep.subr.mxu0 0.0
    %6134 = vmatpush1.msra.mxu0 0.0
    %6135 = vmatprep.subr.mxu0 0.0
    %6136 = vmatpush1.msra.mxu0 0.0
    %6137 = vmatprep.subr.mxu0 0.0
    %6138 = vmatpush1.msra.mxu0 0.0
    %6139 = vmatprep.subr.mxu0 0.0
    %6140 = vmatpush1.msra.mxu0 0.0
    %6141 = vmatprep.subr.mxu0 0.0
    %6142 = vmatpush1.msra.mxu0 0.0
    %6143 = vmatprep.subr.mxu0 0.0
    %6144 = vmatpush1.msra.mxu0 0.0
    %6145 = vmatprep.subr.mxu0 0.0
    %6146 = vmatpush1.msra.mxu0 0.0
    %6147 = vmatprep.subr.mxu0 0.0
    %6148 = vmatpush1.msra.mxu0 0.0
    %6149 = vmatprep.subr.mxu0 0.0
    %6150 = vmatpush1.msra.mxu0 0.0
    %6151 = vmatprep.subr.mxu0 0.0
    %6152 = vmatpush1.msra.mxu0 0.0
    %6153 = vmatprep.mubr.f32.mxu0 0.0
    %6154 = vmatmul.mubr.f32.gmra.mrb[0].mxu0 %v6087
    %v6155 = vpop.f32.mrb[0].mxu0
    %v6156 = vadd.f32 0.0, %v6155
    %v6157 = vpop.f32.mrb[0].mxu0
    %6158 = vdwg.mxu0
    %v6160 = vsel %vm541, %v6080, 0
    %6162 = vmatprep.subr.mxu0 0.0
    %6163 = vmatpush1.msra.mxu0 %v414
    %6164 = vmatprep.subr.mxu0 0.0
    %6165 = vmatpush1.msra.mxu0 0.0
    %6166 = vmatprep.subr.mxu0 0.0
    %6167 = vmatpush1.msra.mxu0 0.0
    %6168 = vmatprep.subr.mxu0 0.0
    %6169 = vmatpush1.msra.mxu0 0.0
    %6170 = vmatprep.subr.mxu0 0.0
    %6171 = vmatpush1.msra.mxu0 0.0
    %6172 = vmatprep.subr.mxu0 0.0
    %6173 = vmatpush1.msra.mxu0 0.0
    %6174 = vmatprep.subr.mxu0 0.0
    %6175 = vmatpush1.msra.mxu0 0.0
    %6176 = vmatprep.subr.mxu0 0.0
    %6177 = vmatpush1.msra.mxu0 0.0
    %6178 = vmatprep.subr.mxu0 0.0
    %6179 = vmatpush1.msra.mxu0 0.0
    %6180 = vmatprep.subr.mxu0 0.0
    %6181 = vmatpush1.msra.mxu0 0.0
    %6182 = vmatprep.subr.mxu0 0.0
    %6183 = vmatpush1.msra.mxu0 0.0
    %6184 = vmatprep.subr.mxu0 0.0
    %6185 = vmatpush1.msra.mxu0 0.0
    %6186 = vmatprep.subr.mxu0 0.0
    %6187 = vmatpush1.msra.mxu0 0.0
    %6188 = vmatprep.subr.mxu0 0.0
    %6189 = vmatpush1.msra.mxu0 0.0
    %6190 = vmatprep.subr.mxu0 0.0
    %6191 = vmatpush1.msra.mxu0 0.0
    %6192 = vmatprep.subr.mxu0 0.0
    %6193 = vmatpush1.msra.mxu0 0.0
    %6194 = vmatprep.subr.mxu0 0.0
    %6195 = vmatpush1.msra.mxu0 0.0
    %6196 = vmatprep.subr.mxu0 0.0
    %6197 = vmatpush1.msra.mxu0 0.0
    %6198 = vmatprep.subr.mxu0 0.0
    %6199 = vmatpush1.msra.mxu0 0.0
    %6200 = vmatprep.subr.mxu0 0.0
    %6201 = vmatpush1.msra.mxu0 0.0
    %6202 = vmatprep.subr.mxu0 0.0
    %6203 = vmatpush1.msra.mxu0 0.0
    %6204 = vmatprep.subr.mxu0 0.0
    %6205 = vmatpush1.msra.mxu0 0.0
    %6206 = vmatprep.subr.mxu0 0.0
    %6207 = vmatpush1.msra.mxu0 0.0
    %6208 = vmatprep.subr.mxu0 0.0
    %6209 = vmatpush1.msra.mxu0 0.0
    %6210 = vmatprep.subr.mxu0 0.0
    %6211 = vmatpush1.msra.mxu0 0.0
    %6212 = vmatprep.subr.mxu0 0.0
    %6213 = vmatpush1.msra.mxu0 0.0
    %6214 = vmatprep.subr.mxu0 0.0
    %6215 = vmatpush1.msra.mxu0 0.0
    %6216 = vmatprep.subr.mxu0 0.0
    %6217 = vmatpush1.msra.mxu0 0.0
    %6218 = vmatprep.subr.mxu0 0.0
    %6219 = vmatpush1.msra.mxu0 0.0
    %6220 = vmatprep.subr.mxu0 0.0
    %6221 = vmatpush1.msra.mxu0 0.0
    %6222 = vmatprep.subr.mxu0 0.0
    %6223 = vmatpush1.msra.mxu0 0.0
    %6224 = vmatprep.subr.mxu0 0.0
    %6225 = vmatpush1.msra.mxu0 0.0
    %6226 = vmatprep.mubr.f32.mxu0 0.0
    %6227 = vmatmul.mubr.f32.gmra.mrb[0].mxu0 %v6160
    %v6228 = vpop.f32.mrb[0].mxu0
    %v6229 = vadd.f32 %v6156, %v6228
    %v6230 = vpop.f32.mrb[0].mxu0
    %6231 = vdwg.mxu0
    %v6232 = vadd.f32 %v6229, %v417
    %vm6233 = vcmp.gt.f32.partialorder %v6232, 0.0
    %v6234 = vmin.f32 %v6232, 0.0
    %v6235 = vmul.f32 %v6234, 1.442695
    %v6236 = vpow.pop %v6235
    %v6237 = vsub.f32 %v6236, 1.0
    %v6238 = vsel %vm6233, %v6232, %v6237
    %v6240 = vsel %vm622, %v6238, 0
    %6242 = vmatprep.subr.mxu0 0.0
    %6243 = vmatpush1.msra.mxu0 %v418
    %6244 = vmatprep.subr.mxu0 0.0
    %6245 = vmatpush1.msra.mxu0 %v419
    %6246 = vmatprep.subr.mxu0 0.0
    %6247 = vmatpush1.msra.mxu0 %v420
    %6248 = vmatprep.subr.mxu0 0.0
    %6249 = vmatpush1.msra.mxu0 %v421
    %6250 = vmatprep.subr.mxu0 0.0
    %6251 = vmatpush1.msra.mxu0 0.0
    %6252 = vmatprep.subr.mxu0 0.0
    %6253 = vmatpush1.msra.mxu0 0.0
    %6254 = vmatprep.subr.mxu0 0.0
    %6255 = vmatpush1.msra.mxu0 0.0
    %6256 = vmatprep.subr.mxu0 0.0
    %6257 = vmatpush1.msra.mxu0 0.0
    %6258 = vmatprep.subr.mxu0 0.0
    %6259 = vmatpush1.msra.mxu0 0.0
    %6260 = vmatprep.subr.mxu0 0.0
    %6261 = vmatpush1.msra.mxu0 0.0
    %6262 = vmatprep.subr.mxu0 0.0
    %6263 = vmatpush1.msra.mxu0 0.0
    %6264 = vmatprep.subr.mxu0 0.0
    %6265 = vmatpush1.msra.mxu0 0.0
    %6266 = vmatprep.subr.mxu0 0.0
    %6267 = vmatpush1.msra.mxu0 0.0
    %6268 = vmatprep.subr.mxu0 0.0
    %6269 = vmatpush1.msra.mxu0 0.0
    %6270 = vmatprep.subr.mxu0 0.0
    %6271 = vmatpush1.msra.mxu0 0.0
    %6272 = vmatprep.subr.mxu0 0.0
    %6273 = vmatpush1.msra.mxu0 0.0
    %6274 = vmatprep.subr.mxu0 0.0
    %6275 = vmatpush1.msra.mxu0 0.0
    %6276 = vmatprep.subr.mxu0 0.0
    %6277 = vmatpush1.msra.mxu0 0.0
    %6278 = vmatprep.subr.mxu0 0.0
    %6279 = vmatpush1.msra.mxu0 0.0
    %6280 = vmatprep.subr.mxu0 0.0
    %6281 = vmatpush1.msra.mxu0 0.0
    %6282 = vmatprep.subr.mxu0 0.0
    %6283 = vmatpush1.msra.mxu0 0.0
    %6284 = vmatprep.subr.mxu0 0.0
    %6285 = vmatpush1.msra.mxu0 0.0
    %6286 = vmatprep.subr.mxu0 0.0
    %6287 = vmatpush1.msra.mxu0 0.0
    %6288 = vmatprep.subr.mxu0 0.0
    %6289 = vmatpush1.msra.mxu0 0.0
    %6290 = vmatprep.subr.mxu0 0.0
    %6291 = vmatpush1.msra.mxu0 0.0
    %6292 = vmatprep.subr.mxu0 0.0
    %6293 = vmatpush1.msra.mxu0 0.0
    %6294 = vmatprep.subr.mxu0 0.0
    %6295 = vmatpush1.msra.mxu0 0.0
    %6296 = vmatprep.subr.mxu0 0.0
    %6297 = vmatpush1.msra.mxu0 0.0
    %6298 = vmatprep.subr.mxu0 0.0
    %6299 = vmatpush1.msra.mxu0 0.0
    %6300 = vmatprep.subr.mxu0 0.0
    %6301 = vmatpush1.msra.mxu0 0.0
    %6302 = vmatprep.subr.mxu0 0.0
    %6303 = vmatpush1.msra.mxu0 0.0
    %6304 = vmatprep.subr.mxu0 0.0
    %6305 = vmatpush1.msra.mxu0 0.0
    %6306 = vmatprep.mubr.f32.mxu0 0.0
    %6307 = vmatmul.mubr.f32.gmra.mrb[0].mxu0 %v6240
    %v6308 = vpop.f32.mrb[0].mxu0
    %v6309 = vadd.f32 %v426, %v6308
    %v6310 = vpop.f32.mrb[0].mxu0
    %6311 = vdwg.mxu0
    %6312 = vmatprep.subr.mxu0 0.0
    %6313 = vmatpush1.msra.mxu0 %v422
    %6314 = vmatprep.subr.mxu0 0.0
    %6315 = vmatpush1.msra.mxu0 %v423
    %6316 = vmatprep.subr.mxu0 0.0
    %6317 = vmatpush1.msra.mxu0 %v424
    %6318 = vmatprep.subr.mxu0 0.0
    %6319 = vmatpush1.msra.mxu0 %v425
    %6320 = vmatprep.subr.mxu0 0.0
    %6321 = vmatpush1.msra.mxu0 0.0
    %6322 = vmatprep.subr.mxu0 0.0
    %6323 = vmatpush1.msra.mxu0 0.0
    %6324 = vmatprep.subr.mxu0 0.0
    %6325 = vmatpush1.msra.mxu0 0.0
    %6326 = vmatprep.subr.mxu0 0.0
    %6327 = vmatpush1.msra.mxu0 0.0
    %6328 = vmatprep.subr.mxu0 0.0
    %6329 = vmatpush1.msra.mxu0 0.0
    %6330 = vmatprep.subr.mxu0 0.0
    %6331 = vmatpush1.msra.mxu0 0.0
    %6332 = vmatprep.subr.mxu0 0.0
    %6333 = vmatpush1.msra.mxu0 0.0
    %6334 = vmatprep.subr.mxu0 0.0
    %6335 = vmatpush1.msra.mxu0 0.0
    %6336 = vmatprep.subr.mxu0 0.0
    %6337 = vmatpush1.msra.mxu0 0.0
    %6338 = vmatprep.subr.mxu0 0.0
    %6339 = vmatpush1.msra.mxu0 0.0
    %6340 = vmatprep.subr.mxu0 0.0
    %6341 = vmatpush1.msra.mxu0 0.0
    %6342 = vmatprep.subr.mxu0 0.0
    %6343 = vmatpush1.msra.mxu0 0.0
    %6344 = vmatprep.subr.mxu0 0.0
    %6345 = vmatpush1.msra.mxu0 0.0
    %6346 = vmatprep.subr.mxu0 0.0
    %6347 = vmatpush1.msra.mxu0 0.0
    %6348 = vmatprep.subr.mxu0 0.0
    %6349 = vmatpush1.msra.mxu0 0.0
    %6350 = vmatprep.subr.mxu0 0.0
    %6351 = vmatpush1.msra.mxu0 0.0
    %6352 = vmatprep.subr.mxu0 0.0
    %6353 = vmatpush1.msra.mxu0 0.0
    %6354 = vmatprep.subr.mxu0 0.0
    %6355 = vmatpush1.msra.mxu0 0.0
    %6356 = vmatprep.subr.mxu0 0.0
    %6357 = vmatpush1.msra.mxu0 0.0
    %6358 = vmatprep.subr.mxu0 0.0
    %6359 = vmatpush1.msra.mxu0 0.0
    %6360 = vmatprep.subr.mxu0 0.0
    %6361 = vmatpush1.msra.mxu0 0.0
    %6362 = vmatprep.subr.mxu0 0.0
    %6363 = vmatpush1.msra.mxu0 0.0
    %6364 = vmatprep.subr.mxu0 0.0
    %6365 = vmatpush1.msra.mxu0 0.0
    %6366 = vmatprep.subr.mxu0 0.0
    %6367 = vmatpush1.msra.mxu0 0.0
    %6368 = vmatprep.subr.mxu0 0.0
    %6369 = vmatpush1.msra.mxu0 0.0
    %6370 = vmatprep.subr.mxu0 0.0
    %6371 = vmatpush1.msra.mxu0 0.0
    %6372 = vmatprep.subr.mxu0 0.0
    %6373 = vmatpush1.msra.mxu0 0.0
    %6374 = vmatprep.subr.mxu0 0.0
    %6375 = vmatpush1.msra.mxu0 0.0
    %6376 = vmatprep.mubr.f32.mxu0 0.0
    %6377 = vmatmul.mubr.f32.gmra.mrb[0].mxu0 %v5636
    %v6378 = vpop.f32.mrb[0].mxu0
    %v6379 = vadd.f32 %v427, %v6378
    %v6380 = vpop.f32.mrb[0].mxu0
    %6381 = vdwg.mxu0
    %v6382 = vadd.f32 %v6309, %v6379
    %v6383 = vsub.f32 0.0, %v6382
    %v6384 = vmul.f32 %v6383, 1.442695
    %v6385 = vpow.pop %v6384
    %v6386 = vadd.f32 %v6385, 1.0
    %v6387 = vrcp.pop %v6386
    %v6388 = vmul.f32 1.0, %v6387
    %6390 = vrot.lane.b32.xlu0 %v6379, 64
    %v6391 = vpop.permute.xlu0 %6390
    %v6393 = vmul.f32 %v6388, %v6391
    %6395 = vrot.lane.b32.xlu0 %v6393, 64
    %v6396 = vpop.permute.xlu0 %6395
    %v6398 = vadd.f32 %v6309, %v6396
    %v6399 = vtanh.pop %v6398
    %v6400 = vsub.f32 1.0, %v6388
    %6402 = vrot.lane.b32.xlu0 %v6399, 96
    %v6403 = vpop.permute.xlu0 %6402
    %v6405 = vmul.f32 %v6400, %v6403
    %v6406 = vmul.f32 %v6388, %v5632
    %v6407 = vadd.f32 %v6405, %v6406
    %6409 = vrot.lane.b32.xlu0 %v6407, 96
    %v6410 = vpop.permute.xlu0 %6409
    %v6412 = vsel %vm622, %v6410, 0.0
    %6413 = vadd.xlane.f32.xlu0 %v6412
    %v6414 = vpop.xlane.xlu0 %6413
    %v6415 = vmul.f32 %v6414, %v805
    %v6416 = vsub.f32 %v6407, %v6415
    %v6417 = vmul.f32 %v6416, %v6416
    %6419 = vrot.lane.b32.xlu0 %v6417, 96
    %v6420 = vpop.permute.xlu0 %6419
    %v6422 = vsel %vm622, %v6420, 0.0
    %6423 = vadd.xlane.f32.xlu0 %v6422
    %v6424 = vpop.xlane.xlu0 %6423
    %v6425 = vmul.f32 %v6424, %v805
    %v6426 = vadd.f32 %v6425, 1e-05
    %v6427 = vrsqrt.pop %v6426
    %v6428 = vmul.f32 %v6416, %v6427
    %v6429 = vmul.f32 %v6428, %v822
    %v6430 = vadd.f32 %v6429, %v827
    %6432 = vrot.lane.b32.xlu0 %v6430, 96
    %v6433 = vpop.permute.xlu0 %6432
    %v6434 = vsel %vm622, %v6433, 0
    %6436 = vmatprep.subr.mxu0 0.0
    %6437 = vmatpush1.msra.mxu0 %v430
    %6438 = vmatprep.subr.mxu0 0.0
    %6439 = vmatpush1.msra.mxu0 %v431
    %6440 = vmatprep.subr.mxu0 0.0
    %6441 = vmatpush1.msra.mxu0 %v432
    %6442 = vmatprep.subr.mxu0 0.0
    %6443 = vmatpush1.msra.mxu0 %v433
    %6444 = vmatprep.subr.mxu0 0.0
    %6445 = vmatpush1.msra.mxu0 0.0
    %6446 = vmatprep.subr.mxu0 0.0
    %6447 = vmatpush1.msra.mxu0 0.0
    %6448 = vmatprep.subr.mxu0 0.0
    %6449 = vmatpush1.msra.mxu0 0.0
    %6450 = vmatprep.subr.mxu0 0.0
    %6451 = vmatpush1.msra.mxu0 0.0
    %6452 = vmatprep.subr.mxu0 0.0
    %6453 = vmatpush1.msra.mxu0 0.0
    %6454 = vmatprep.subr.mxu0 0.0
    %6455 = vmatpush1.msra.mxu0 0.0
    %6456 = vmatprep.subr.mxu0 0.0
    %6457 = vmatpush1.msra.mxu0 0.0
    %6458 = vmatprep.subr.mxu0 0.0
    %6459 = vmatpush1.msra.mxu0 0.0
    %6460 = vmatprep.subr.mxu0 0.0
    %6461 = vmatpush1.msra.mxu0 0.0
    %6462 = vmatprep.subr.mxu0 0.0
    %6463 = vmatpush1.msra.mxu0 0.0
    %6464 = vmatprep.subr.mxu0 0.0
    %6465 = vmatpush1.msra.mxu0 0.0
    %6466 = vmatprep.subr.mxu0 0.0
    %6467 = vmatpush1.msra.mxu0 0.0
    %6468 = vmatprep.subr.mxu0 0.0
    %6469 = vmatpush1.msra.mxu0 0.0
    %6470 = vmatprep.subr.mxu0 0.0
    %6471 = vmatpush1.msra.mxu0 0.0
    %6472 = vmatprep.subr.mxu0 0.0
    %6473 = vmatpush1.msra.mxu0 0.0
    %6474 = vmatprep.subr.mxu0 0.0
    %6475 = vmatpush1.msra.mxu0 0.0
    %6476 = vmatprep.subr.mxu0 0.0
    %6477 = vmatpush1.msra.mxu0 0.0
    %6478 = vmatprep.subr.mxu0 0.0
    %6479 = vmatpush1.msra.mxu0 0.0
    %6480 = vmatprep.subr.mxu0 0.0
    %6481 = vmatpush1.msra.mxu0 0.0
    %6482 = vmatprep.subr.mxu0 0.0
    %6483 = vmatpush1.msra.mxu0 0.0
    %6484 = vmatprep.subr.mxu0 0.0
    %6485 = vmatpush1.msra.mxu0 0.0
    %6486 = vmatprep.subr.mxu0 0.0
    %6487 = vmatpush1.msra.mxu0 0.0
    %6488 = vmatprep.subr.mxu0 0.0
    %6489 = vmatpush1.msra.mxu0 0.0
    %6490 = vmatprep.subr.mxu0 0.0
    %6491 = vmatpush1.msra.mxu0 0.0
    %6492 = vmatprep.subr.mxu0 0.0
    %6493 = vmatpush1.msra.mxu0 0.0
    %6494 = vmatprep.subr.mxu0 0.0
    %6495 = vmatpush1.msra.mxu0 0.0
    %6496 = vmatprep.subr.mxu0 0.0
    %6497 = vmatpush1.msra.mxu0 0.0
    %6498 = vmatprep.subr.mxu0 0.0
    %6499 = vmatpush1.msra.mxu0 0.0
    %6500 = vmatprep.mubr.f32.mxu0 0.0
    %6501 = vmatmul.mubr.f32.gmra.mrb[0].mxu0 %v6434
    %v6502 = vpop.f32.mrb[0].mxu0
    %v6503 = vadd.f32 0.0, %v6502
    %v6504 = vpop.f32.mrb[0].mxu0
    %6505 = vdwg.mxu0
    %v6506 = vadd.f32 %v6503, %v438
    %vm6507 = vcmp.gt.f32.partialorder %v6506, 0.0
    %v6508 = vmin.f32 %v6506, 0.0
    %v6509 = vmul.f32 %v6508, 1.442695
    %v6510 = vpow.pop %v6509
    %v6511 = vsub.f32 %v6510, 1.0
    %v6512 = vsel %vm6507, %v6506, %v6511
    %v6513 = vsel %vm622, %v6512, 0.0
    %6514 = vadd.xlane.f32.xlu0 %v6513
    %v6515 = vpop.xlane.xlu0 %6514
    %v6516 = vmul.f32 %v6515, %v805
    %v6517 = vsub.f32 %v6512, %v6516
    %v6518 = vmul.f32 %v6517, %v6517
    %v6519 = vsel %vm622, %v6518, 0.0
    %6520 = vadd.xlane.f32.xlu0 %v6519
    %v6521 = vpop.xlane.xlu0 %6520
    %v6522 = vmul.f32 %v6521, %v805
    %v6523 = vadd.f32 %v6522, 1e-05
    %v6524 = vrsqrt.pop %v6523
    %v6525 = vmul.f32 %v6517, %v6524
    %v6526 = vmul.f32 %v6525, %v440
    %v6527 = vadd.f32 %v6526, %v441
    %v6529 = vsel %vm622, %v6082, 0
    %6531 = vmatprep.subr.mxu0 0.0
    %6532 = vmatpush1.msra.mxu0 %v434
    %6533 = vmatprep.subr.mxu0 0.0
    %6534 = vmatpush1.msra.mxu0 %v435
    %6535 = vmatprep.subr.mxu0 0.0
    %6536 = vmatpush1.msra.mxu0 %v436
    %6537 = vmatprep.subr.mxu0 0.0
    %6538 = vmatpush1.msra.mxu0 %v437
    %6539 = vmatprep.subr.mxu0 0.0
    %6540 = vmatpush1.msra.mxu0 0.0
    %6541 = vmatprep.subr.mxu0 0.0
    %6542 = vmatpush1.msra.mxu0 0.0
    %6543 = vmatprep.subr.mxu0 0.0
    %6544 = vmatpush1.msra.mxu0 0.0
    %6545 = vmatprep.subr.mxu0 0.0
    %6546 = vmatpush1.msra.mxu0 0.0
    %6547 = vmatprep.subr.mxu0 0.0
    %6548 = vmatpush1.msra.mxu0 0.0
    %6549 = vmatprep.subr.mxu0 0.0
    %6550 = vmatpush1.msra.mxu0 0.0
    %6551 = vmatprep.subr.mxu0 0.0
    %6552 = vmatpush1.msra.mxu0 0.0
    %6553 = vmatprep.subr.mxu0 0.0
    %6554 = vmatpush1.msra.mxu0 0.0
    %6555 = vmatprep.subr.mxu0 0.0
    %6556 = vmatpush1.msra.mxu0 0.0
    %6557 = vmatprep.subr.mxu0 0.0
    %6558 = vmatpush1.msra.mxu0 0.0
    %6559 = vmatprep.subr.mxu0 0.0
    %6560 = vmatpush1.msra.mxu0 0.0
    %6561 = vmatprep.subr.mxu0 0.0
    %6562 = vmatpush1.msra.mxu0 0.0
    %6563 = vmatprep.subr.mxu0 0.0
    %6564 = vmatpush1.msra.mxu0 0.0
    %6565 = vmatprep.subr.mxu0 0.0
    %6566 = vmatpush1.msra.mxu0 0.0
    %6567 = vmatprep.subr.mxu0 0.0
    %6568 = vmatpush1.msra.mxu0 0.0
    %6569 = vmatprep.subr.mxu0 0.0
    %6570 = vmatpush1.msra.mxu0 0.0
    %6571 = vmatprep.subr.mxu0 0.0
    %6572 = vmatpush1.msra.mxu0 0.0
    %6573 = vmatprep.subr.mxu0 0.0
    %6574 = vmatpush1.msra.mxu0 0.0
    %6575 = vmatprep.subr.mxu0 0.0
    %6576 = vmatpush1.msra.mxu0 0.0
    %6577 = vmatprep.subr.mxu0 0.0
    %6578 = vmatpush1.msra.mxu0 0.0
    %6579 = vmatprep.subr.mxu0 0.0
    %6580 = vmatpush1.msra.mxu0 0.0
    %6581 = vmatprep.subr.mxu0 0.0
    %6582 = vmatpush1.msra.mxu0 0.0
    %6583 = vmatprep.subr.mxu0 0.0
    %6584 = vmatpush1.msra.mxu0 0.0
    %6585 = vmatprep.subr.mxu0 0.0
    %6586 = vmatpush1.msra.mxu0 0.0
    %6587 = vmatprep.subr.mxu0 0.0
    %6588 = vmatpush1.msra.mxu0 0.0
    %6589 = vmatprep.subr.mxu0 0.0
    %6590 = vmatpush1.msra.mxu0 0.0
    %6591 = vmatprep.subr.mxu0 0.0
    %6592 = vmatpush1.msra.mxu0 0.0
    %6593 = vmatprep.subr.mxu0 0.0
    %6594 = vmatpush1.msra.mxu0 0.0
    %6595 = vmatprep.mubr.f32.mxu0 0.0
    %6596 = vmatmul.mubr.f32.gmra.mrb[0].mxu0 %v6529
    %v6597 = vpop.f32.mrb[0].mxu0
    %v6598 = vadd.f32 0.0, %v6597
    %v6599 = vpop.f32.mrb[0].mxu0
    %6600 = vdwg.mxu0
    %6602 = vrot.lane.b32.xlu0 %v6598, 32
    %v6603 = vpop.permute.xlu0 %6602
    %v6605 = vadd.f32 %v6503, %v6603
    %v6606 = vadd.f32 %v6605, %v1007
    %vm6607 = vcmp.gt.f32.partialorder %v6606, 0.0
    %v6608 = vmin.f32 %v6606, 0.0
    %v6609 = vmul.f32 %v6608, 1.442695
    %v6610 = vpow.pop %v6609
    %v6611 = vsub.f32 %v6610, 1.0
    %v6612 = vsel %vm6607, %v6606, %v6611
    %6614 = vrot.lane.b32.xlu0 %v6612, 96
    %v6615 = vpop.permute.xlu0 %6614
    %v6617 = vsel %vm622, %v6615, 0.0
    %6618 = vadd.xlane.f32.xlu0 %v6617
    %v6619 = vpop.xlane.xlu0 %6618
    %v6620 = vmul.f32 %v6619, %v805
    %v6621 = vsub.f32 %v6612, %v6620
    %v6622 = vmul.f32 %v6621, %v6621
    %6624 = vrot.lane.b32.xlu0 %v6622, 96
    %v6625 = vpop.permute.xlu0 %6624
    %v6627 = vsel %vm622, %v6625, 0.0
    %6628 = vadd.xlane.f32.xlu0 %v6627
    %v6629 = vpop.xlane.xlu0 %6628
    %v6630 = vmul.f32 %v6629, %v805
    %v6631 = vadd.f32 %v6630, 1e-05
    %v6632 = vrsqrt.pop %v6631
    %v6633 = vmul.f32 %v6621, %v6632
    %v6634 = vmul.f32 %v6633, %v1039
    %v6635 = vadd.f32 %v6634, %v1044
    %v6637 = vsel %vm622, %v6527, 0
    %6639 = vmatprep.subr.mxu0 0.0
    %6640 = vmatpush1.msra.mxu0 %v444
    %6641 = vmatprep.subr.mxu0 0.0
    %6642 = vmatpush1.msra.mxu0 %v445
    %6643 = vmatprep.subr.mxu0 0.0
    %6644 = vmatpush1.msra.mxu0 %v446
    %6645 = vmatprep.subr.mxu0 0.0
    %6646 = vmatpush1.msra.mxu0 %v447
    %6647 = vmatprep.subr.mxu0 0.0
    %6648 = vmatpush1.msra.mxu0 0.0
    %6649 = vmatprep.subr.mxu0 0.0
    %6650 = vmatpush1.msra.mxu0 0.0
    %6651 = vmatprep.subr.mxu0 0.0
    %6652 = vmatpush1.msra.mxu0 0.0
    %6653 = vmatprep.subr.mxu0 0.0
    %6654 = vmatpush1.msra.mxu0 0.0
    %6655 = vmatprep.subr.mxu0 0.0
    %6656 = vmatpush1.msra.mxu0 0.0
    %6657 = vmatprep.subr.mxu0 0.0
    %6658 = vmatpush1.msra.mxu0 0.0
    %6659 = vmatprep.subr.mxu0 0.0
    %6660 = vmatpush1.msra.mxu0 0.0
    %6661 = vmatprep.subr.mxu0 0.0
    %6662 = vmatpush1.msra.mxu0 0.0
    %6663 = vmatprep.subr.mxu0 0.0
    %6664 = vmatpush1.msra.mxu0 0.0
    %6665 = vmatprep.subr.mxu0 0.0
    %6666 = vmatpush1.msra.mxu0 0.0
    %6667 = vmatprep.subr.mxu0 0.0
    %6668 = vmatpush1.msra.mxu0 0.0
    %6669 = vmatprep.subr.mxu0 0.0
    %6670 = vmatpush1.msra.mxu0 0.0
    %6671 = vmatprep.subr.mxu0 0.0
    %6672 = vmatpush1.msra.mxu0 0.0
    %6673 = vmatprep.subr.mxu0 0.0
    %6674 = vmatpush1.msra.mxu0 0.0
    %6675 = vmatprep.subr.mxu0 0.0
    %6676 = vmatpush1.msra.mxu0 0.0
    %6677 = vmatprep.subr.mxu0 0.0
    %6678 = vmatpush1.msra.mxu0 0.0
    %6679 = vmatprep.subr.mxu0 0.0
    %6680 = vmatpush1.msra.mxu0 0.0
    %6681 = vmatprep.subr.mxu0 0.0
    %6682 = vmatpush1.msra.mxu0 0.0
    %6683 = vmatprep.subr.mxu0 0.0
    %6684 = vmatpush1.msra.mxu0 0.0
    %6685 = vmatprep.subr.mxu0 0.0
    %6686 = vmatpush1.msra.mxu0 0.0
    %6687 = vmatprep.subr.mxu0 0.0
    %6688 = vmatpush1.msra.mxu0 0.0
    %6689 = vmatprep.subr.mxu0 0.0
    %6690 = vmatpush1.msra.mxu0 0.0
    %6691 = vmatprep.subr.mxu0 0.0
    %6692 = vmatpush1.msra.mxu0 0.0
    %6693 = vmatprep.subr.mxu0 0.0
    %6694 = vmatpush1.msra.mxu0 0.0
    %6695 = vmatprep.subr.mxu0 0.0
    %6696 = vmatpush1.msra.mxu0 0.0
    %6697 = vmatprep.subr.mxu0 0.0
    %6698 = vmatpush1.msra.mxu0 0.0
    %6699 = vmatprep.subr.mxu0 0.0
    %6700 = vmatpush1.msra.mxu0 0.0
    %6701 = vmatprep.subr.mxu0 0.0
    %6702 = vmatpush1.msra.mxu0 0.0
    %6703 = vmatprep.mubr.f32.mxu0 0.0
    %6704 = vmatmul.mubr.f32.gmra.mrb[0].mxu0 %v6637
    %v6705 = vpop.f32.mrb[0].mxu0
    %v6706 = vadd.f32 %v448, %v6705
    %v6707 = vpop.f32.mrb[0].mxu0
    %6708 = vdwg.mxu0
    %v6709 = vmax.f32 %v6706, 0.0
    %v6710 = vand.u32 2147483647, %v6706
    %v6711 = vsub.f32 0.0, %v6710
    %v6712 = vmul.f32 %v6711, 1.442695
    %v6713 = vpow.pop %v6712
    %v6714 = vadd.f32 %v6713, 1.0
    %v6715 = vlog2.pop %v6714
    %v6716 = vmul.f32 %v6715, 0.6931472
    %v6717 = vadd.f32 %v6709, %v6716
    %v6718 = vadd.f32 %v6717, 0.1
    %v6719 = vsel %vm460, %v6706, %v6718
    %6721 = vrot.lane.b32.xlu0 %v6084, 16
    %v6722 = vpop.permute.xlu0 %6721
    %v6724 = vmul.f32 %v6718, %v6722
    %6726 = vrot.lane.b32.xlu0 %v6724, 112
    %v6727 = vpop.permute.xlu0 %6726
    %v6729 = vadd.f32 %v6706, %v6727
    %v6730 = vsel %vm467, %v6729, 0.0
    %6731 = vadd.xlane.f32.xlu0 %v6730
    %v6732 = vpop.xlane.xlu0 %6731
    %v6733 = vmul.f32 %v6732, %v1144
    %v6734 = vsub.f32 %v6729, %v6733
    %v6735 = vmul.f32 %v6734, %v6734
    %v6736 = vsel %vm467, %v6735, 0.0
    %6737 = vadd.xlane.f32.xlu0 %v6736
    %v6738 = vpop.xlane.xlu0 %6737
    %v6739 = vmul.f32 %v6738, %v1144
    %v6740 = vadd.f32 %v6739, 1e-05
    %v6741 = vrsqrt.pop %v6740
    %v6742 = vmul.f32 %v6734, %v6741
    %v6743 = vmul.f32 %v6742, %v454
    %v6744 = vadd.f32 %v6743, %v455
    %6746 = vrot.lane.b32.xlu0 %v6635, 96
    %v6747 = vpop.permute.xlu0 %6746
    %v6748 = vsel %vm622, %v6747, 0
    %6750 = vmatprep.subr.mxu0 0.0
    %6751 = vmatpush1.msra.mxu0 %v449
    %6752 = vmatprep.subr.mxu0 0.0
    %6753 = vmatpush1.msra.mxu0 %v450
    %6754 = vmatprep.subr.mxu0 0.0
    %6755 = vmatpush1.msra.mxu0 %v451
    %6756 = vmatprep.subr.mxu0 0.0
    %6757 = vmatpush1.msra.mxu0 %v452
    %6758 = vmatprep.subr.mxu0 0.0
    %6759 = vmatpush1.msra.mxu0 0.0
    %6760 = vmatprep.subr.mxu0 0.0
    %6761 = vmatpush1.msra.mxu0 0.0
    %6762 = vmatprep.subr.mxu0 0.0
    %6763 = vmatpush1.msra.mxu0 0.0
    %6764 = vmatprep.subr.mxu0 0.0
    %6765 = vmatpush1.msra.mxu0 0.0
    %6766 = vmatprep.subr.mxu0 0.0
    %6767 = vmatpush1.msra.mxu0 0.0
    %6768 = vmatprep.subr.mxu0 0.0
    %6769 = vmatpush1.msra.mxu0 0.0
    %6770 = vmatprep.subr.mxu0 0.0
    %6771 = vmatpush1.msra.mxu0 0.0
    %6772 = vmatprep.subr.mxu0 0.0
    %6773 = vmatpush1.msra.mxu0 0.0
    %6774 = vmatprep.subr.mxu0 0.0
    %6775 = vmatpush1.msra.mxu0 0.0
    %6776 = vmatprep.subr.mxu0 0.0
    %6777 = vmatpush1.msra.mxu0 0.0
    %6778 = vmatprep.subr.mxu0 0.0
    %6779 = vmatpush1.msra.mxu0 0.0
    %6780 = vmatprep.subr.mxu0 0.0
    %6781 = vmatpush1.msra.mxu0 0.0
    %6782 = vmatprep.subr.mxu0 0.0
    %6783 = vmatpush1.msra.mxu0 0.0
    %6784 = vmatprep.subr.mxu0 0.0
    %6785 = vmatpush1.msra.mxu0 0.0
    %6786 = vmatprep.subr.mxu0 0.0
    %6787 = vmatpush1.msra.mxu0 0.0
    %6788 = vmatprep.subr.mxu0 0.0
    %6789 = vmatpush1.msra.mxu0 0.0
    %6790 = vmatprep.subr.mxu0 0.0
    %6791 = vmatpush1.msra.mxu0 0.0
    %6792 = vmatprep.subr.mxu0 0.0
    %6793 = vmatpush1.msra.mxu0 0.0
    %6794 = vmatprep.subr.mxu0 0.0
    %6795 = vmatpush1.msra.mxu0 0.0
    %6796 = vmatprep.subr.mxu0 0.0
    %6797 = vmatpush1.msra.mxu0 0.0
    %6798 = vmatprep.subr.mxu0 0.0
    %6799 = vmatpush1.msra.mxu0 0.0
    %6800 = vmatprep.subr.mxu0 0.0
    %6801 = vmatpush1.msra.mxu0 0.0
    %6802 = vmatprep.subr.mxu0 0.0
    %6803 = vmatpush1.msra.mxu0 0.0
    %6804 = vmatprep.subr.mxu0 0.0
    %6805 = vmatpush1.msra.mxu0 0.0
    %6806 = vmatprep.subr.mxu0 0.0
    %6807 = vmatpush1.msra.mxu0 0.0
    %6808 = vmatprep.subr.mxu0 0.0
    %6809 = vmatpush1.msra.mxu0 0.0
    %6810 = vmatprep.subr.mxu0 0.0
    %6811 = vmatpush1.msra.mxu0 0.0
    %6812 = vmatprep.subr.mxu0 0.0
    %6813 = vmatpush1.msra.mxu0 0.0
    %6814 = vmatprep.mubr.f32.mxu0 0.0
    %6815 = vmatmul.mubr.f32.gmra.mrb[0].mxu0 %v6748
    %v6816 = vpop.f32.mrb[0].mxu0
    %v6817 = vadd.f32 %v453, %v6816
    %v6818 = vpop.f32.mrb[0].mxu0
    %6819 = vdwg.mxu0
    %v6820 = vmax.f32 %v6817, 0.0
    %v6821 = vand.u32 2147483647, %v6817
    %v6822 = vsub.f32 0.0, %v6821
    %v6823 = vmul.f32 %v6822, 1.442695
    %v6824 = vpow.pop %v6823
    %v6825 = vadd.f32 %v6824, 1.0
    %v6826 = vlog2.pop %v6825
    %v6827 = vmul.f32 %v6826, 0.6931472
    %v6828 = vadd.f32 %v6820, %v6827
    %v6829 = vadd.f32 %v6828, 0.1
    %v6830 = vsel %vm460, %v6817, %v6829
    %6832 = vrot.lane.b32.xlu0 %v6086, 16
    %v6833 = vpop.permute.xlu0 %6832
    %v6835 = vmul.f32 %v6829, %v6833
    %6837 = vrot.lane.b32.xlu0 %v6835, 112
    %v6838 = vpop.permute.xlu0 %6837
    %v6840 = vadd.f32 %v6817, %v6838
    %v6841 = vsel %vm467, %v6840, 0.0
    %6842 = vadd.xlane.f32.xlu0 %v6841
    %v6843 = vpop.xlane.xlu0 %6842
    %v6844 = vmul.f32 %v6843, %v1144
    %v6845 = vsub.f32 %v6840, %v6844
    %v6846 = vmul.f32 %v6845, %v6845
    %v6847 = vsel %vm467, %v6846, 0.0
    %6848 = vadd.xlane.f32.xlu0 %v6847
    %v6849 = vpop.xlane.xlu0 %6848
    %v6850 = vmul.f32 %v6849, %v1144
    %v6851 = vadd.f32 %v6850, 1e-05
    %v6852 = vrsqrt.pop %v6851
    %v6853 = vmul.f32 %v6845, %v6852
    %v6854 = vmul.f32 %v6853, %v456
    %v6855 = vadd.f32 %v6854, %v457
    %6857 = vrot.lane.b32.xlu0 %v6744, 32
    %v6858 = vpop.permute.xlu0 %6857
    %6861 = vrot.lane.b32.xlu0 %v6830, 48
    %v6862 = vpop.permute.xlu0 %6861
    %6865 = vrot.lane.b32.xlu0 %v6855, 80
    %v6866 = vpop.permute.xlu0 %6865
    %6868 = vrot.lane.b32.xlu0 %v6430, 64
    %v6869 = vpop.permute.xlu0 %6868
    %v6871 = vsel %vm622, %v6719, %v6858
    %v6872 = vsel %vm1284, %v6871, %v6862
    %v6873 = vsel %vm1286, %v6872, %v6866
    %v6874 = vsel %vm1288, %v6873, %v6869
    %s6875 = scalar_lea.vmem [#allocation38], 56
    %6876 = vst [vmem:[%s6875] sm:$0xff] %v6874
    // Predicated region
    $region218: #{tpu_custom_call.1} parent=1 // pred_check
      _
    $region219: #{tpu_custom_call.1} parent=1 // pred_check_branch
      %6878 = sbr.rel (0) target = $region221
    $region220: #{tpu_custom_call.1} parent=1 // pred_region
      %s6880 = ssub.s32 1024, 1024
      %6881 = vsyncadd [#allocation4], %s6880
      %s6882 = sshll.u32 [#allocation38], 4
      %s6883 = int_to_ptr.vmem [resolvable:$true] %s6882
      %6888 = dma.vmem_to_hbm [thread:$0]  %s6883, 1024, %s63, [#allocation4], 128, 128, 8
    $region221: #{tpu_custom_call.1} parent=1 // pred_fallthru
      _
    // Predicated region
    $region222: #{tpu_custom_call.1} parent=1 // pred_check
      _
    $region223: #{tpu_custom_call.1} parent=1 // pred_check_branch
      %6890 = sbr.rel (0) target = $region225
    $region224: #{tpu_custom_call.1} parent=1 // pred_region
      %6891 = dma.done [#allocation4], 1024
    $region225: #{tpu_custom_call.1} parent=1 // pred_fallthru
      _
    %6892 = vsyncpa [#allocation3], 1
    %6893 = vsyncpa [#allocation6], 1
    %6894 = vsyncpa [#allocation9], 1
    %6895 = vsyncpa [#allocation12], 1
    %6896 = vsyncpa [#allocation15], 1
    %6897 = vsyncpa [#allocation18], 1
    %6898 = vsyncpa [#allocation21], 1
    %6899 = vsyncpa [#allocation24], 1
    %6900 = vsyncpa [#allocation27], 1
    %6901 = vsyncpa [#allocation30], 1
    %6902 = vsyncpa [#allocation33], 1
    %6903 = vsyncpa [#allocation36], 1
    %6904 = vsyncpa [#allocation4], 1

</llo_original>
